<compile_context>
chip_gen: v7x
topology: tpu7x:2x2x1
jax: 0.10.0
libtpu: 0.0.40
codegen_flags: <defaults>
</compile_context>

<pallas_src>
import math

import numpy as np
import jax
import jax.numpy as jnp
from jax.experimental import pallas as pl
from jax.experimental.pallas import tpu as pltpu

D_MODEL = 32
N_HEADS = 4
D_HEAD = D_MODEL // N_HEADS
D_FF = 64
SEQ = 6
TGT_VOCAB = 6
LN_EPS = 1e-5
SCALE = 1.0 / math.sqrt(D_HEAD)

# Ordered parameter table: (name, shape).  The fused kernel receives them in
# this exact order after (x, pe, mask).
PARAM_DEFS = [
    # encoder layer
    ("enc_wqkv", (D_MODEL, 3 * D_MODEL)), ("enc_bqkv", (1, 3 * D_MODEL)),
    ("enc_wo", (D_MODEL, D_MODEL)), ("enc_bo", (1, D_MODEL)),
    ("enc_ln1_g", (1, D_MODEL)), ("enc_ln1_b", (1, D_MODEL)),
    ("enc_ffn_w1", (D_MODEL, D_FF)), ("enc_ffn_b1", (1, D_FF)),
    ("enc_ffn_w2", (D_FF, D_MODEL)), ("enc_ffn_b2", (1, D_MODEL)),
    ("enc_ln2_g", (1, D_MODEL)), ("enc_ln2_b", (1, D_MODEL)),
    # decoder self-attention
    ("dec_wqkv", (D_MODEL, 3 * D_MODEL)), ("dec_bqkv", (1, 3 * D_MODEL)),
    ("dec_wo", (D_MODEL, D_MODEL)), ("dec_bo", (1, D_MODEL)),
    ("dec_ln1_g", (1, D_MODEL)), ("dec_ln1_b", (1, D_MODEL)),
    # decoder cross-attention (q from decoder state, k/v fused from encoder out)
    ("crs_wq", (D_MODEL, D_MODEL)), ("crs_bq", (1, D_MODEL)),
    ("crs_wkv", (D_MODEL, 2 * D_MODEL)), ("crs_bkv", (1, 2 * D_MODEL)),
    ("crs_wo", (D_MODEL, D_MODEL)), ("crs_bo", (1, D_MODEL)),
    ("dec_ln2_g", (1, D_MODEL)), ("dec_ln2_b", (1, D_MODEL)),
    # decoder FFN
    ("dec_ffn_w1", (D_MODEL, D_FF)), ("dec_ffn_b1", (1, D_FF)),
    ("dec_ffn_w2", (D_FF, D_MODEL)), ("dec_ffn_b2", (1, D_MODEL)),
    ("dec_ln3_g", (1, D_MODEL)), ("dec_ln3_b", (1, D_MODEL)),
    # final projection to tgt "vocab" (6) -> transformer output (S, 6)
    ("proj_w", (D_MODEL, TGT_VOCAB)), ("proj_b", (1, TGT_VOCAB)),
    # Transf head: encoder MLP -> decoder MLP -> L1
    ("h_w1", (36, 18)), ("h_b1", (1, 18)),
    ("h_w2", (18, 6)), ("h_b2", (1, 6)),
    ("h_w3", (6, 18)), ("h_b3", (1, 18)),
    ("h_w4", (18, 36)), ("h_b4", (1, 36)),
    ("h_w5", (36, 1)), ("h_b5", (1, 1)),
]


# ----------------------------------------------------------------------------
# Host-side constants (hoisted out of the per-call path).
# ----------------------------------------------------------------------------
def _make_pe(S, D):
    pos = np.arange(S, dtype=np.float32)[:, None]
    i = np.arange(D)[None, :]
    angle = pos / np.power(10000.0, (2 * (i // 2)).astype(np.float32) / D)
    return np.where(i % 2 == 0, np.sin(angle), np.cos(angle)).astype(np.float32)


_PE_NP = _make_pe(SEQ, D_MODEL)                                       # (6, 32)
_MASK_NP = np.where(np.triu(np.ones((SEQ, SEQ), np.float32), k=1) > 0,
                    np.float32(-1e9), np.float32(0.0)).astype(np.float32)  # (6, 6)


# ----------------------------------------------------------------------------
# Fused forward kernel: one grid step == one example, everything in VMEM.
# ----------------------------------------------------------------------------
def _fused_kernel(*refs):
    x_ref, pe_ref, mask_ref = refs[0], refs[1], refs[2]
    o_ref = refs[-1]
    p = {name: refs[3 + i] for i, (name, _) in enumerate(PARAM_DEFS)}

    def linear(v, wname, bname, relu=False):
        y = jnp.dot(v, p[wname][...], preferred_element_type=jnp.float32)
        y = y + p[bname][...]
        return jnp.maximum(y, 0.0) if relu else y

    def layernorm(v, gname, bname):
        mu = jnp.mean(v, axis=-1, keepdims=True)
        vc = v - mu
        var = jnp.mean(vc * vc, axis=-1, keepdims=True)
        return vc * jax.lax.rsqrt(var + LN_EPS) * p[gname][...] + p[bname][...]

    def attend(q, k, v, mask):
        # q, k, v: (S, D_MODEL); heads are 8-lane slices of the feature dim.
        outs = []
        for h in range(N_HEADS):
            sl = slice(h * D_HEAD, (h + 1) * D_HEAD)
            qh, kh, vh = q[:, sl], k[:, sl], v[:, sl]
            s = jax.lax.dot_general(
                qh, kh, (((1,), (1,)), ((), ())),
                preferred_element_type=jnp.float32) * SCALE          # (S, S)
            if mask is not None:
                s = s + mask
            m = jnp.max(s, axis=-1, keepdims=True)
            e = jnp.exp(s - m)
            l = jnp.sum(e, axis=-1, keepdims=True)
            ctx = jnp.dot(e, vh, preferred_element_type=jnp.float32)  # (S, Dh)
            outs.append(ctx * pl.reciprocal(l, approx=True))
        return jnp.concatenate(outs, axis=-1)                         # (S, D)

    x = x_ref[...] + pe_ref[...]          # (S, D) : input + positional encoding
    causal = mask_ref[...]                # (S, S) additive causal mask

    # ---------------- encoder layer (post-LN) ----------------
    qkv = linear(x, "enc_wqkv", "enc_bqkv")                           # (S, 96)
    ctx = attend(qkv[:, :D_MODEL], qkv[:, D_MODEL:2 * D_MODEL],
                 qkv[:, 2 * D_MODEL:], None)
    a = linear(ctx, "enc_wo", "enc_bo")
    e1 = layernorm(x + a, "enc_ln1_g", "enc_ln1_b")
    f = linear(linear(e1, "enc_ffn_w1", "enc_ffn_b1", relu=True),
               "enc_ffn_w2", "enc_ffn_b2")
    enc = layernorm(e1 + f, "enc_ln2_g", "enc_ln2_b")

    # ---------------- decoder layer (post-LN) ----------------
    qkv = linear(x, "dec_wqkv", "dec_bqkv")
    ctx = attend(qkv[:, :D_MODEL], qkv[:, D_MODEL:2 * D_MODEL],
                 qkv[:, 2 * D_MODEL:], causal)
    a = linear(ctx, "dec_wo", "dec_bo")
    d1 = layernorm(x + a, "dec_ln1_g", "dec_ln1_b")

    q = linear(d1, "crs_wq", "crs_bq")
    kv = linear(enc, "crs_wkv", "crs_bkv")                            # (S, 64)
    ctx = attend(q, kv[:, :D_MODEL], kv[:, D_MODEL:], None)
    a = linear(ctx, "crs_wo", "crs_bo")
    d2 = layernorm(d1 + a, "dec_ln2_g", "dec_ln2_b")

    f = linear(linear(d2, "dec_ffn_w1", "dec_ffn_b1", relu=True),
               "dec_ffn_w2", "dec_ffn_b2")
    d3 = layernorm(d2 + f, "dec_ln3_g", "dec_ln3_b")

    logits = linear(d3, "proj_w", "proj_b")                           # (S, 6)

    # torch.reshape(out, (len(X), 36)): row-major flatten of the (S, 6) slab.
    flat = jnp.concatenate([logits[i:i + 1, :] for i in range(SEQ)], axis=1)

    # ---------------- Transf head: encoder -> decoder -> L1 ----------------
    h = linear(flat, "h_w1", "h_b1", relu=True)   # Linear(36,18) + ReLU
    h = linear(h, "h_w2", "h_b2", relu=True)      # Linear(18,6)  + ReLU
    h = linear(h, "h_w3", "h_b3", relu=True)      # Linear(6,18)  + ReLU
    h = linear(h, "h_w4", "h_b4")                 # Linear(18,36)
    h = jnp.tanh(h)                               # Tanh
    h = linear(h, "h_w5", "h_b5")                 # Linear(36,1)
    o_ref[...] = jax.nn.sigmoid(h)                # Sigmoid -> (1, 1)


# ----------------------------------------------------------------------------
# Wrapper: one pallas_call for the whole forward pass.
# ----------------------------------------------------------------------------
def transf_forward(X, params):
    B, S, D = X.shape
    assert S == SEQ and D == D_MODEL

    args = [X, jnp.asarray(_PE_NP), jnp.asarray(_MASK_NP)]
    in_specs = [
        pl.BlockSpec((None, SEQ, D_MODEL), lambda b: (b, 0, 0)),   # per-example
        pl.BlockSpec((SEQ, D_MODEL), lambda b: (0, 0)),            # PE (resident)
        pl.BlockSpec((SEQ, SEQ), lambda b: (0, 0)),                # causal mask
    ]
    for name, shape in PARAM_DEFS:
        args.append(params[name])
        in_specs.append(pl.BlockSpec(shape, lambda b: (0, 0)))     # resident weight

    out = pl.pallas_call(
        _fused_kernel,
        grid=(B,),
        in_specs=in_specs,
        out_specs=pl.BlockSpec((None, 1, 1), lambda b: (b, 0, 0)),
        out_shape=jax.ShapeDtypeStruct((B, 1, 1), jnp.float32),
        compiler_params=pltpu.CompilerParams(
            dimension_semantics=("parallel",)),
    )(*args)
    return out.reshape(B, 1)


# ----------------------------------------------------------------------------
# Deterministic parameter init (PyTorch Linear-style uniform).
# ----------------------------------------------------------------------------
def init_params(key):
    keys = iter(jax.random.split(key, 32))
    p = {}

    def add_lin(wname, bname, fi, fo):
        k1, k2 = jax.random.split(next(keys))
        bound = 1.0 / math.sqrt(fi)
        p[wname] = jax.random.uniform(k1, (fi, fo), jnp.float32, -bound, bound)
        p[bname] = jax.random.uniform(k2, (1, fo), jnp.float32, -bound, bound)

    def add_ln(gname, bname):
        p[gname] = jnp.ones((1, D_MODEL), jnp.float32)
        p[bname] = jnp.zeros((1, D_MODEL), jnp.float32)

    add_lin("enc_wqkv", "enc_bqkv", D_MODEL, 3 * D_MODEL)
    add_lin("enc_wo", "enc_bo", D_MODEL, D_MODEL)
    add_ln("enc_ln1_g", "enc_ln1_b")
    add_lin("enc_ffn_w1", "enc_ffn_b1", D_MODEL, D_FF)
    add_lin("enc_ffn_w2", "enc_ffn_b2", D_FF, D_MODEL)
    add_ln("enc_ln2_g", "enc_ln2_b")
    add_lin("dec_wqkv", "dec_bqkv", D_MODEL, 3 * D_MODEL)
    add_lin("dec_wo", "dec_bo", D_MODEL, D_MODEL)
    add_ln("dec_ln1_g", "dec_ln1_b")
    add_lin("crs_wq", "crs_bq", D_MODEL, D_MODEL)
    add_lin("crs_wkv", "crs_bkv", D_MODEL, 2 * D_MODEL)
    add_lin("crs_wo", "crs_bo", D_MODEL, D_MODEL)
    add_ln("dec_ln2_g", "dec_ln2_b")
    add_lin("dec_ffn_w1", "dec_ffn_b1", D_MODEL, D_FF)
    add_lin("dec_ffn_w2", "dec_ffn_b2", D_FF, D_MODEL)
    add_ln("dec_ln3_g", "dec_ln3_b")
    add_lin("proj_w", "proj_b", D_MODEL, TGT_VOCAB)
    add_lin("h_w1", "h_b1", 36, 18)
    add_lin("h_w2", "h_b2", 18, 6)
    add_lin("h_w3", "h_b3", 6, 18)
    add_lin("h_w4", "h_b4", 18, 36)
    add_lin("h_w5", "h_b5", 36, 1)

    # sanity: every declared parameter got initialized with the declared shape
    for name, shape in PARAM_DEFS:
        assert p[name].shape == shape, (name, p[name].shape, shape)
    return p


# ----------------------------------------------------------------------------
if __name__ == "__main__":
    key = jax.random.PRNGKey(0)
    pkey, xkey = jax.random.split(key)
    params = init_params(pkey)

    B = 2
    X = jax.random.normal(xkey, (B, SEQ, D_MODEL), jnp.float32)

    fwd = jax.jit(lambda x: transf_forward(x, params))
    out = fwd(X)
    jax.block_until_ready(out)

    assert out.shape == (B, 1), out.shape
    assert bool(jnp.all((out >= 0.0) & (out <= 1.0)))  # sigmoid output range
    assert bool(jnp.all(jnp.isfinite(out)))
    print("KERNEL_OK")
</pallas_src>

<mosaic_0001>
module attributes {stable_mosaic.version = 11 : i64} {
  func.func @_fused_kernel(%arg0: i32, %arg1: memref<1x6x32xf32, #tpu.memory_space<vmem>>, %arg2: memref<6x32xf32, #tpu.memory_space<vmem>>, %arg3: memref<6x6xf32, #tpu.memory_space<vmem>>, %arg4: memref<32x96xf32, #tpu.memory_space<vmem>>, %arg5: memref<1x96xf32, #tpu.memory_space<vmem>>, %arg6: memref<32x32xf32, #tpu.memory_space<vmem>>, %arg7: memref<1x32xf32, #tpu.memory_space<vmem>>, %arg8: memref<1x32xf32, #tpu.memory_space<vmem>>, %arg9: memref<1x32xf32, #tpu.memory_space<vmem>>, %arg10: memref<32x64xf32, #tpu.memory_space<vmem>>, %arg11: memref<1x64xf32, #tpu.memory_space<vmem>>, %arg12: memref<64x32xf32, #tpu.memory_space<vmem>>, %arg13: memref<1x32xf32, #tpu.memory_space<vmem>>, %arg14: memref<1x32xf32, #tpu.memory_space<vmem>>, %arg15: memref<1x32xf32, #tpu.memory_space<vmem>>, %arg16: memref<32x96xf32, #tpu.memory_space<vmem>>, %arg17: memref<1x96xf32, #tpu.memory_space<vmem>>, %arg18: memref<32x32xf32, #tpu.memory_space<vmem>>, %arg19: memref<1x32xf32, #tpu.memory_space<vmem>>, %arg20: memref<1x32xf32, #tpu.memory_space<vmem>>, %arg21: memref<1x32xf32, #tpu.memory_space<vmem>>, %arg22: memref<32x32xf32, #tpu.memory_space<vmem>>, %arg23: memref<1x32xf32, #tpu.memory_space<vmem>>, %arg24: memref<32x64xf32, #tpu.memory_space<vmem>>, %arg25: memref<1x64xf32, #tpu.memory_space<vmem>>, %arg26: memref<32x32xf32, #tpu.memory_space<vmem>>, %arg27: memref<1x32xf32, #tpu.memory_space<vmem>>, %arg28: memref<1x32xf32, #tpu.memory_space<vmem>>, %arg29: memref<1x32xf32, #tpu.memory_space<vmem>>, %arg30: memref<32x64xf32, #tpu.memory_space<vmem>>, %arg31: memref<1x64xf32, #tpu.memory_space<vmem>>, %arg32: memref<64x32xf32, #tpu.memory_space<vmem>>, %arg33: memref<1x32xf32, #tpu.memory_space<vmem>>, %arg34: memref<1x32xf32, #tpu.memory_space<vmem>>, %arg35: memref<1x32xf32, #tpu.memory_space<vmem>>, %arg36: memref<32x6xf32, #tpu.memory_space<vmem>>, %arg37: memref<1x6xf32, #tpu.memory_space<vmem>>, %arg38: memref<36x18xf32, #tpu.memory_space<vmem>>, %arg39: memref<1x18xf32, #tpu.memory_space<vmem>>, %arg40: memref<18x6xf32, #tpu.memory_space<vmem>>, %arg41: memref<1x6xf32, #tpu.memory_space<vmem>>, %arg42: memref<6x18xf32, #tpu.memory_space<vmem>>, %arg43: memref<1x18xf32, #tpu.memory_space<vmem>>, %arg44: memref<18x36xf32, #tpu.memory_space<vmem>>, %arg45: memref<1x36xf32, #tpu.memory_space<vmem>>, %arg46: memref<36x1xf32, #tpu.memory_space<vmem>>, %arg47: memref<1x1xf32, #tpu.memory_space<vmem>>, %arg48: memref<1x1x1xf32, #tpu.memory_space<vmem>>) attributes {dimension_semantics = [#tpu.dimension_semantics<parallel>], iteration_bounds = array<i64: 2>, scalar_prefetch = 0 : i64, scratch_operands = 0 : i64, tpu.core_type = #tpu.core_type<tc>, window_params = [{transform_indices = @transform_0, window_bounds = array<i64: 1, 6, 32>}, {pipeline_mode = #tpu.pipeline_mode<synchronous>, transform_indices = @transform_1, window_bounds = array<i64: 6, 32>}, {pipeline_mode = #tpu.pipeline_mode<synchronous>, transform_indices = @transform_2, window_bounds = array<i64: 6, 6>}, {pipeline_mode = #tpu.pipeline_mode<synchronous>, transform_indices = @transform_3, window_bounds = array<i64: 32, 96>}, {pipeline_mode = #tpu.pipeline_mode<synchronous>, transform_indices = @transform_4, window_bounds = array<i64: 1, 96>}, {pipeline_mode = #tpu.pipeline_mode<synchronous>, transform_indices = @transform_5, window_bounds = array<i64: 32, 32>}, {pipeline_mode = #tpu.pipeline_mode<synchronous>, transform_indices = @transform_6, window_bounds = array<i64: 1, 32>}, {pipeline_mode = #tpu.pipeline_mode<synchronous>, transform_indices = @transform_7, window_bounds = array<i64: 1, 32>}, {pipeline_mode = #tpu.pipeline_mode<synchronous>, transform_indices = @transform_8, window_bounds = array<i64: 1, 32>}, {pipeline_mode = #tpu.pipeline_mode<synchronous>, transform_indices = @transform_9, window_bounds = array<i64: 32, 64>}, {pipeline_mode = #tpu.pipeline_mode<synchronous>, transform_indices = @transform_10, window_bounds = array<i64: 1, 64>}, {pipeline_mode = #tpu.pipeline_mode<synchronous>, transform_indices = @transform_11, window_bounds = array<i64: 64, 32>}, {pipeline_mode = #tpu.pipeline_mode<synchronous>, transform_indices = @transform_12, window_bounds = array<i64: 1, 32>}, {pipeline_mode = #tpu.pipeline_mode<synchronous>, transform_indices = @transform_13, window_bounds = array<i64: 1, 32>}, {pipeline_mode = #tpu.pipeline_mode<synchronous>, transform_indices = @transform_14, window_bounds = array<i64: 1, 32>}, {pipeline_mode = #tpu.pipeline_mode<synchronous>, transform_indices = @transform_15, window_bounds = array<i64: 32, 96>}, {pipeline_mode = #tpu.pipeline_mode<synchronous>, transform_indices = @transform_16, window_bounds = array<i64: 1, 96>}, {pipeline_mode = #tpu.pipeline_mode<synchronous>, transform_indices = @transform_17, window_bounds = array<i64: 32, 32>}, {pipeline_mode = #tpu.pipeline_mode<synchronous>, transform_indices = @transform_18, window_bounds = array<i64: 1, 32>}, {pipeline_mode = #tpu.pipeline_mode<synchronous>, transform_indices = @transform_19, window_bounds = array<i64: 1, 32>}, {pipeline_mode = #tpu.pipeline_mode<synchronous>, transform_indices = @transform_20, window_bounds = array<i64: 1, 32>}, {pipeline_mode = #tpu.pipeline_mode<synchronous>, transform_indices = @transform_21, window_bounds = array<i64: 32, 32>}, {pipeline_mode = #tpu.pipeline_mode<synchronous>, transform_indices = @transform_22, window_bounds = array<i64: 1, 32>}, {pipeline_mode = #tpu.pipeline_mode<synchronous>, transform_indices = @transform_23, window_bounds = array<i64: 32, 64>}, {pipeline_mode = #tpu.pipeline_mode<synchronous>, transform_indices = @transform_24, window_bounds = array<i64: 1, 64>}, {pipeline_mode = #tpu.pipeline_mode<synchronous>, transform_indices = @transform_25, window_bounds = array<i64: 32, 32>}, {pipeline_mode = #tpu.pipeline_mode<synchronous>, transform_indices = @transform_26, window_bounds = array<i64: 1, 32>}, {pipeline_mode = #tpu.pipeline_mode<synchronous>, transform_indices = @transform_27, window_bounds = array<i64: 1, 32>}, {pipeline_mode = #tpu.pipeline_mode<synchronous>, transform_indices = @transform_28, window_bounds = array<i64: 1, 32>}, {pipeline_mode = #tpu.pipeline_mode<synchronous>, transform_indices = @transform_29, window_bounds = array<i64: 32, 64>}, {pipeline_mode = #tpu.pipeline_mode<synchronous>, transform_indices = @transform_30, window_bounds = array<i64: 1, 64>}, {pipeline_mode = #tpu.pipeline_mode<synchronous>, transform_indices = @transform_31, window_bounds = array<i64: 64, 32>}, {pipeline_mode = #tpu.pipeline_mode<synchronous>, transform_indices = @transform_32, window_bounds = array<i64: 1, 32>}, {pipeline_mode = #tpu.pipeline_mode<synchronous>, transform_indices = @transform_33, window_bounds = array<i64: 1, 32>}, {pipeline_mode = #tpu.pipeline_mode<synchronous>, transform_indices = @transform_34, window_bounds = array<i64: 1, 32>}, {pipeline_mode = #tpu.pipeline_mode<synchronous>, transform_indices = @transform_35, window_bounds = array<i64: 32, 6>}, {pipeline_mode = #tpu.pipeline_mode<synchronous>, transform_indices = @transform_36, window_bounds = array<i64: 1, 6>}, {pipeline_mode = #tpu.pipeline_mode<synchronous>, transform_indices = @transform_37, window_bounds = array<i64: 36, 18>}, {pipeline_mode = #tpu.pipeline_mode<synchronous>, transform_indices = @transform_38, window_bounds = array<i64: 1, 18>}, {pipeline_mode = #tpu.pipeline_mode<synchronous>, transform_indices = @transform_39, window_bounds = array<i64: 18, 6>}, {pipeline_mode = #tpu.pipeline_mode<synchronous>, transform_indices = @transform_40, window_bounds = array<i64: 1, 6>}, {pipeline_mode = #tpu.pipeline_mode<synchronous>, transform_indices = @transform_41, window_bounds = array<i64: 6, 18>}, {pipeline_mode = #tpu.pipeline_mode<synchronous>, transform_indices = @transform_42, window_bounds = array<i64: 1, 18>}, {pipeline_mode = #tpu.pipeline_mode<synchronous>, transform_indices = @transform_43, window_bounds = array<i64: 18, 36>}, {pipeline_mode = #tpu.pipeline_mode<synchronous>, transform_indices = @transform_44, window_bounds = array<i64: 1, 36>}, {pipeline_mode = #tpu.pipeline_mode<synchronous>, transform_indices = @transform_45, window_bounds = array<i64: 36, 1>}, {pipeline_mode = #tpu.pipeline_mode<synchronous>, transform_indices = @transform_46, window_bounds = array<i64: 1, 1>}, {transform_indices = @transform_47, window_bounds = array<i64: 1, 1, 1>}]} {
    %c0 = arith.constant 0 : index
    %c0_0 = arith.constant 0 : index
    %c0_1 = arith.constant 0 : index
    %0 = vector.load %arg1[%c0, %c0_0, %c0_1] : memref<1x6x32xf32, #tpu.memory_space<vmem>>, vector<1x6x32xf32>
    %1 = vector.shape_cast %0 : vector<1x6x32xf32> to vector<6x32xf32>
    %c0_2 = arith.constant 0 : index
    %c0_3 = arith.constant 0 : index
    %2 = vector.load %arg2[%c0_2, %c0_3] : memref<6x32xf32, #tpu.memory_space<vmem>>, vector<6x32xf32>
    %3 = arith.addf %1, %2 : vector<6x32xf32>
    %c0_4 = arith.constant 0 : index
    %c0_5 = arith.constant 0 : index
    %4 = vector.load %arg3[%c0_4, %c0_5] : memref<6x6xf32, #tpu.memory_space<vmem>>, vector<6x6xf32>
    %c0_6 = arith.constant 0 : index
    %c0_7 = arith.constant 0 : index
    %5 = vector.load %arg4[%c0_6, %c0_7] : memref<32x96xf32, #tpu.memory_space<vmem>>, vector<32x96xf32>
    %cst = arith.constant dense<0.000000e+00> : vector<6x96xf32>
    %6 = tpu.matmul %3, %5, %cst {dimension_numbers = #tpu.dot_dimension_numbers<[1], [0], [0], [1], [0, 0, 1, 1], [], []>} : vector<6x32xf32>, vector<32x96xf32>, vector<6x96xf32> -> vector<6x96xf32>
    %c0_8 = arith.constant 0 : index
    %c0_9 = arith.constant 0 : index
    %7 = vector.load %arg5[%c0_8, %c0_9] : memref<1x96xf32, #tpu.memory_space<vmem>>, vector<1x96xf32>
    %8 = vector.broadcast %7 : vector<1x96xf32> to vector<6x96xf32>
    %9 = arith.addf %6, %8 : vector<6x96xf32>
    %10 = vector.extract_strided_slice %9 {offsets = [0, 0], sizes = [6, 32], strides = [1, 1]} : vector<6x96xf32> to vector<6x32xf32>
    %11 = vector.extract_strided_slice %9 {offsets = [0, 32], sizes = [6, 32], strides = [1, 1]} : vector<6x96xf32> to vector<6x32xf32>
    %12 = vector.extract_strided_slice %9 {offsets = [0, 64], sizes = [6, 32], strides = [1, 1]} : vector<6x96xf32> to vector<6x32xf32>
    %13 = vector.extract_strided_slice %10 {offsets = [0, 0], sizes = [6, 8], strides = [1, 1]} : vector<6x32xf32> to vector<6x8xf32>
    %14 = vector.extract_strided_slice %11 {offsets = [0, 0], sizes = [6, 8], strides = [1, 1]} : vector<6x32xf32> to vector<6x8xf32>
    %15 = vector.extract_strided_slice %12 {offsets = [0, 0], sizes = [6, 8], strides = [1, 1]} : vector<6x32xf32> to vector<6x8xf32>
    %cst_10 = arith.constant dense<0.000000e+00> : vector<6x6xf32>
    %16 = tpu.matmul %13, %14, %cst_10 {dimension_numbers = #tpu.dot_dimension_numbers<[1], [1], [0], [0], [0, 0, 1, 0], [], []>} : vector<6x8xf32>, vector<6x8xf32>, vector<6x6xf32> -> vector<6x6xf32>
    %cst_11 = arith.constant 0.353553385 : f32
    %17 = vector.broadcast %cst_11 : f32 to vector<6x6xf32>
    %18 = arith.mulf %16, %17 : vector<6x6xf32>
    %cst_12 = arith.constant dense<0xFF800000> : vector<6xf32>
    %19 = vector.multi_reduction <maximumf>, %18, %cst_12 [1] : vector<6x6xf32> to vector<6xf32>
    %20 = vector.shape_cast %19 : vector<6xf32> to vector<6x1xf32>
    %21 = vector.broadcast %20 : vector<6x1xf32> to vector<6x6xf32>
    %22 = arith.subf %18, %21 : vector<6x6xf32>
    %23 = math.exp %22 : vector<6x6xf32>
    %cst_13 = arith.constant dense<0.000000e+00> : vector<6xf32>
    %24 = vector.multi_reduction <add>, %23, %cst_13 [1] : vector<6x6xf32> to vector<6xf32>
    %25 = vector.shape_cast %24 : vector<6xf32> to vector<6x1xf32>
    %cst_14 = arith.constant dense<0.000000e+00> : vector<6x8xf32>
    %26 = tpu.matmul %23, %15, %cst_14 {dimension_numbers = #tpu.dot_dimension_numbers<[1], [0], [0], [1], [0, 0, 1, 1], [], []>} : vector<6x6xf32>, vector<6x8xf32>, vector<6x8xf32> -> vector<6x8xf32>
    %27 = tpu.reciprocal %25 {approx = true} : vector<6x1xf32> -> vector<6x1xf32>
    %28 = vector.broadcast %27 : vector<6x1xf32> to vector<6x8xf32>
    %29 = arith.mulf %26, %28 : vector<6x8xf32>
    %30 = vector.extract_strided_slice %10 {offsets = [0, 8], sizes = [6, 8], strides = [1, 1]} : vector<6x32xf32> to vector<6x8xf32>
    %31 = vector.extract_strided_slice %11 {offsets = [0, 8], sizes = [6, 8], strides = [1, 1]} : vector<6x32xf32> to vector<6x8xf32>
    %32 = vector.extract_strided_slice %12 {offsets = [0, 8], sizes = [6, 8], strides = [1, 1]} : vector<6x32xf32> to vector<6x8xf32>
    %cst_15 = arith.constant dense<0.000000e+00> : vector<6x6xf32>
    %33 = tpu.matmul %30, %31, %cst_15 {dimension_numbers = #tpu.dot_dimension_numbers<[1], [1], [0], [0], [0, 0, 1, 0], [], []>} : vector<6x8xf32>, vector<6x8xf32>, vector<6x6xf32> -> vector<6x6xf32>
    %cst_16 = arith.constant 0.353553385 : f32
    %34 = vector.broadcast %cst_16 : f32 to vector<6x6xf32>
    %35 = arith.mulf %33, %34 : vector<6x6xf32>
    %cst_17 = arith.constant dense<0xFF800000> : vector<6xf32>
    %36 = vector.multi_reduction <maximumf>, %35, %cst_17 [1] : vector<6x6xf32> to vector<6xf32>
    %37 = vector.shape_cast %36 : vector<6xf32> to vector<6x1xf32>
    %38 = vector.broadcast %37 : vector<6x1xf32> to vector<6x6xf32>
    %39 = arith.subf %35, %38 : vector<6x6xf32>
    %40 = math.exp %39 : vector<6x6xf32>
    %cst_18 = arith.constant dense<0.000000e+00> : vector<6xf32>
    %41 = vector.multi_reduction <add>, %40, %cst_18 [1] : vector<6x6xf32> to vector<6xf32>
    %42 = vector.shape_cast %41 : vector<6xf32> to vector<6x1xf32>
    %cst_19 = arith.constant dense<0.000000e+00> : vector<6x8xf32>
    %43 = tpu.matmul %40, %32, %cst_19 {dimension_numbers = #tpu.dot_dimension_numbers<[1], [0], [0], [1], [0, 0, 1, 1], [], []>} : vector<6x6xf32>, vector<6x8xf32>, vector<6x8xf32> -> vector<6x8xf32>
    %44 = tpu.reciprocal %42 {approx = true} : vector<6x1xf32> -> vector<6x1xf32>
    %45 = vector.broadcast %44 : vector<6x1xf32> to vector<6x8xf32>
    %46 = arith.mulf %43, %45 : vector<6x8xf32>
    %47 = vector.extract_strided_slice %10 {offsets = [0, 16], sizes = [6, 8], strides = [1, 1]} : vector<6x32xf32> to vector<6x8xf32>
    %48 = vector.extract_strided_slice %11 {offsets = [0, 16], sizes = [6, 8], strides = [1, 1]} : vector<6x32xf32> to vector<6x8xf32>
    %49 = vector.extract_strided_slice %12 {offsets = [0, 16], sizes = [6, 8], strides = [1, 1]} : vector<6x32xf32> to vector<6x8xf32>
    %cst_20 = arith.constant dense<0.000000e+00> : vector<6x6xf32>
    %50 = tpu.matmul %47, %48, %cst_20 {dimension_numbers = #tpu.dot_dimension_numbers<[1], [1], [0], [0], [0, 0, 1, 0], [], []>} : vector<6x8xf32>, vector<6x8xf32>, vector<6x6xf32> -> vector<6x6xf32>
    %cst_21 = arith.constant 0.353553385 : f32
    %51 = vector.broadcast %cst_21 : f32 to vector<6x6xf32>
    %52 = arith.mulf %50, %51 : vector<6x6xf32>
    %cst_22 = arith.constant dense<0xFF800000> : vector<6xf32>
    %53 = vector.multi_reduction <maximumf>, %52, %cst_22 [1] : vector<6x6xf32> to vector<6xf32>
    %54 = vector.shape_cast %53 : vector<6xf32> to vector<6x1xf32>
    %55 = vector.broadcast %54 : vector<6x1xf32> to vector<6x6xf32>
    %56 = arith.subf %52, %55 : vector<6x6xf32>
    %57 = math.exp %56 : vector<6x6xf32>
    %cst_23 = arith.constant dense<0.000000e+00> : vector<6xf32>
    %58 = vector.multi_reduction <add>, %57, %cst_23 [1] : vector<6x6xf32> to vector<6xf32>
    %59 = vector.shape_cast %58 : vector<6xf32> to vector<6x1xf32>
    %cst_24 = arith.constant dense<0.000000e+00> : vector<6x8xf32>
    %60 = tpu.matmul %57, %49, %cst_24 {dimension_numbers = #tpu.dot_dimension_numbers<[1], [0], [0], [1], [0, 0, 1, 1], [], []>} : vector<6x6xf32>, vector<6x8xf32>, vector<6x8xf32> -> vector<6x8xf32>
    %61 = tpu.reciprocal %59 {approx = true} : vector<6x1xf32> -> vector<6x1xf32>
    %62 = vector.broadcast %61 : vector<6x1xf32> to vector<6x8xf32>
    %63 = arith.mulf %60, %62 : vector<6x8xf32>
    %64 = vector.extract_strided_slice %10 {offsets = [0, 24], sizes = [6, 8], strides = [1, 1]} : vector<6x32xf32> to vector<6x8xf32>
    %65 = vector.extract_strided_slice %11 {offsets = [0, 24], sizes = [6, 8], strides = [1, 1]} : vector<6x32xf32> to vector<6x8xf32>
    %66 = vector.extract_strided_slice %12 {offsets = [0, 24], sizes = [6, 8], strides = [1, 1]} : vector<6x32xf32> to vector<6x8xf32>
    %cst_25 = arith.constant dense<0.000000e+00> : vector<6x6xf32>
    %67 = tpu.matmul %64, %65, %cst_25 {dimension_numbers = #tpu.dot_dimension_numbers<[1], [1], [0], [0], [0, 0, 1, 0], [], []>} : vector<6x8xf32>, vector<6x8xf32>, vector<6x6xf32> -> vector<6x6xf32>
    %cst_26 = arith.constant 0.353553385 : f32
    %68 = vector.broadcast %cst_26 : f32 to vector<6x6xf32>
    %69 = arith.mulf %67, %68 : vector<6x6xf32>
    %cst_27 = arith.constant dense<0xFF800000> : vector<6xf32>
    %70 = vector.multi_reduction <maximumf>, %69, %cst_27 [1] : vector<6x6xf32> to vector<6xf32>
    %71 = vector.shape_cast %70 : vector<6xf32> to vector<6x1xf32>
    %72 = vector.broadcast %71 : vector<6x1xf32> to vector<6x6xf32>
    %73 = arith.subf %69, %72 : vector<6x6xf32>
    %74 = math.exp %73 : vector<6x6xf32>
    %cst_28 = arith.constant dense<0.000000e+00> : vector<6xf32>
    %75 = vector.multi_reduction <add>, %74, %cst_28 [1] : vector<6x6xf32> to vector<6xf32>
    %76 = vector.shape_cast %75 : vector<6xf32> to vector<6x1xf32>
    %cst_29 = arith.constant dense<0.000000e+00> : vector<6x8xf32>
    %77 = tpu.matmul %74, %66, %cst_29 {dimension_numbers = #tpu.dot_dimension_numbers<[1], [0], [0], [1], [0, 0, 1, 1], [], []>} : vector<6x6xf32>, vector<6x8xf32>, vector<6x8xf32> -> vector<6x8xf32>
    %78 = tpu.reciprocal %76 {approx = true} : vector<6x1xf32> -> vector<6x1xf32>
    %79 = vector.broadcast %78 : vector<6x1xf32> to vector<6x8xf32>
    %80 = arith.mulf %77, %79 : vector<6x8xf32>
    %81 = tpu.concatenate %29, %46, %63, %80 in 1 : vector<6x8xf32>, vector<6x8xf32>, vector<6x8xf32>, vector<6x8xf32> -> vector<6x32xf32>
    %c0_30 = arith.constant 0 : index
    %c0_31 = arith.constant 0 : index
    %82 = vector.load %arg6[%c0_30, %c0_31] : memref<32x32xf32, #tpu.memory_space<vmem>>, vector<32x32xf32>
    %cst_32 = arith.constant dense<0.000000e+00> : vector<6x32xf32>
    %83 = tpu.matmul %81, %82, %cst_32 {dimension_numbers = #tpu.dot_dimension_numbers<[1], [0], [0], [1], [0, 0, 1, 1], [], []>} : vector<6x32xf32>, vector<32x32xf32>, vector<6x32xf32> -> vector<6x32xf32>
    %c0_33 = arith.constant 0 : index
    %c0_34 = arith.constant 0 : index
    %84 = vector.load %arg7[%c0_33, %c0_34] : memref<1x32xf32, #tpu.memory_space<vmem>>, vector<1x32xf32>
    %85 = vector.broadcast %84 : vector<1x32xf32> to vector<6x32xf32>
    %86 = arith.addf %83, %85 : vector<6x32xf32>
    %87 = arith.addf %3, %86 : vector<6x32xf32>
    %cst_35 = arith.constant dense<0.000000e+00> : vector<6xf32>
    %88 = vector.multi_reduction <add>, %87, %cst_35 [1] : vector<6x32xf32> to vector<6xf32>
    %89 = vector.shape_cast %88 : vector<6xf32> to vector<6x1xf32>
    %cst_36 = arith.constant 3.200000e+01 : f32
    %90 = vector.broadcast %cst_36 : f32 to vector<6x1xf32>
    %91 = arith.divf %89, %90 : vector<6x1xf32>
    %92 = vector.broadcast %91 : vector<6x1xf32> to vector<6x32xf32>
    %93 = arith.subf %87, %92 : vector<6x32xf32>
    %94 = arith.mulf %93, %93 : vector<6x32xf32>
    %cst_37 = arith.constant dense<0.000000e+00> : vector<6xf32>
    %95 = vector.multi_reduction <add>, %94, %cst_37 [1] : vector<6x32xf32> to vector<6xf32>
    %96 = vector.shape_cast %95 : vector<6xf32> to vector<6x1xf32>
    %cst_38 = arith.constant 3.200000e+01 : f32
    %97 = vector.broadcast %cst_38 : f32 to vector<6x1xf32>
    %98 = arith.divf %96, %97 : vector<6x1xf32>
    %cst_39 = arith.constant 9.99999974E-6 : f32
    %99 = vector.broadcast %cst_39 : f32 to vector<6x1xf32>
    %100 = arith.addf %98, %99 : vector<6x1xf32>
    %101 = math.rsqrt %100 : vector<6x1xf32>
    %102 = vector.broadcast %101 : vector<6x1xf32> to vector<6x32xf32>
    %103 = arith.mulf %93, %102 : vector<6x32xf32>
    %c0_40 = arith.constant 0 : index
    %c0_41 = arith.constant 0 : index
    %104 = vector.load %arg8[%c0_40, %c0_41] : memref<1x32xf32, #tpu.memory_space<vmem>>, vector<1x32xf32>
    %105 = vector.broadcast %104 : vector<1x32xf32> to vector<6x32xf32>
    %106 = arith.mulf %103, %105 : vector<6x32xf32>
    %c0_42 = arith.constant 0 : index
    %c0_43 = arith.constant 0 : index
    %107 = vector.load %arg9[%c0_42, %c0_43] : memref<1x32xf32, #tpu.memory_space<vmem>>, vector<1x32xf32>
    %108 = vector.broadcast %107 : vector<1x32xf32> to vector<6x32xf32>
    %109 = arith.addf %106, %108 : vector<6x32xf32>
    %c0_44 = arith.constant 0 : index
    %c0_45 = arith.constant 0 : index
    %110 = vector.load %arg10[%c0_44, %c0_45] : memref<32x64xf32, #tpu.memory_space<vmem>>, vector<32x64xf32>
    %cst_46 = arith.constant dense<0.000000e+00> : vector<6x64xf32>
    %111 = tpu.matmul %109, %110, %cst_46 {dimension_numbers = #tpu.dot_dimension_numbers<[1], [0], [0], [1], [0, 0, 1, 1], [], []>} : vector<6x32xf32>, vector<32x64xf32>, vector<6x64xf32> -> vector<6x64xf32>
    %c0_47 = arith.constant 0 : index
    %c0_48 = arith.constant 0 : index
    %112 = vector.load %arg11[%c0_47, %c0_48] : memref<1x64xf32, #tpu.memory_space<vmem>>, vector<1x64xf32>
    %113 = vector.broadcast %112 : vector<1x64xf32> to vector<6x64xf32>
    %114 = arith.addf %111, %113 : vector<6x64xf32>
    %cst_49 = arith.constant 0.000000e+00 : f32
    %115 = vector.broadcast %cst_49 : f32 to vector<6x64xf32>
    %116 = arith.maximumf %114, %115 : vector<6x64xf32>
    %c0_50 = arith.constant 0 : index
    %c0_51 = arith.constant 0 : index
    %117 = vector.load %arg12[%c0_50, %c0_51] : memref<64x32xf32, #tpu.memory_space<vmem>>, vector<64x32xf32>
    %cst_52 = arith.constant dense<0.000000e+00> : vector<6x32xf32>
    %118 = tpu.matmul %116, %117, %cst_52 {dimension_numbers = #tpu.dot_dimension_numbers<[1], [0], [0], [1], [0, 0, 1, 1], [], []>} : vector<6x64xf32>, vector<64x32xf32>, vector<6x32xf32> -> vector<6x32xf32>
    %c0_53 = arith.constant 0 : index
    %c0_54 = arith.constant 0 : index
    %119 = vector.load %arg13[%c0_53, %c0_54] : memref<1x32xf32, #tpu.memory_space<vmem>>, vector<1x32xf32>
    %120 = vector.broadcast %119 : vector<1x32xf32> to vector<6x32xf32>
    %121 = arith.addf %118, %120 : vector<6x32xf32>
    %122 = arith.addf %109, %121 : vector<6x32xf32>
    %cst_55 = arith.constant dense<0.000000e+00> : vector<6xf32>
    %123 = vector.multi_reduction <add>, %122, %cst_55 [1] : vector<6x32xf32> to vector<6xf32>
    %124 = vector.shape_cast %123 : vector<6xf32> to vector<6x1xf32>
    %cst_56 = arith.constant 3.200000e+01 : f32
    %125 = vector.broadcast %cst_56 : f32 to vector<6x1xf32>
    %126 = arith.divf %124, %125 : vector<6x1xf32>
    %127 = vector.broadcast %126 : vector<6x1xf32> to vector<6x32xf32>
    %128 = arith.subf %122, %127 : vector<6x32xf32>
    %129 = arith.mulf %128, %128 : vector<6x32xf32>
    %cst_57 = arith.constant dense<0.000000e+00> : vector<6xf32>
    %130 = vector.multi_reduction <add>, %129, %cst_57 [1] : vector<6x32xf32> to vector<6xf32>
    %131 = vector.shape_cast %130 : vector<6xf32> to vector<6x1xf32>
    %cst_58 = arith.constant 3.200000e+01 : f32
    %132 = vector.broadcast %cst_58 : f32 to vector<6x1xf32>
    %133 = arith.divf %131, %132 : vector<6x1xf32>
    %cst_59 = arith.constant 9.99999974E-6 : f32
    %134 = vector.broadcast %cst_59 : f32 to vector<6x1xf32>
    %135 = arith.addf %133, %134 : vector<6x1xf32>
    %136 = math.rsqrt %135 : vector<6x1xf32>
    %137 = vector.broadcast %136 : vector<6x1xf32> to vector<6x32xf32>
    %138 = arith.mulf %128, %137 : vector<6x32xf32>
    %c0_60 = arith.constant 0 : index
    %c0_61 = arith.constant 0 : index
    %139 = vector.load %arg14[%c0_60, %c0_61] : memref<1x32xf32, #tpu.memory_space<vmem>>, vector<1x32xf32>
    %140 = vector.broadcast %139 : vector<1x32xf32> to vector<6x32xf32>
    %141 = arith.mulf %138, %140 : vector<6x32xf32>
    %c0_62 = arith.constant 0 : index
    %c0_63 = arith.constant 0 : index
    %142 = vector.load %arg15[%c0_62, %c0_63] : memref<1x32xf32, #tpu.memory_space<vmem>>, vector<1x32xf32>
    %143 = vector.broadcast %142 : vector<1x32xf32> to vector<6x32xf32>
    %144 = arith.addf %141, %143 : vector<6x32xf32>
    %c0_64 = arith.constant 0 : index
    %c0_65 = arith.constant 0 : index
    %145 = vector.load %arg16[%c0_64, %c0_65] : memref<32x96xf32, #tpu.memory_space<vmem>>, vector<32x96xf32>
    %cst_66 = arith.constant dense<0.000000e+00> : vector<6x96xf32>
    %146 = tpu.matmul %3, %145, %cst_66 {dimension_numbers = #tpu.dot_dimension_numbers<[1], [0], [0], [1], [0, 0, 1, 1], [], []>} : vector<6x32xf32>, vector<32x96xf32>, vector<6x96xf32> -> vector<6x96xf32>
    %c0_67 = arith.constant 0 : index
    %c0_68 = arith.constant 0 : index
    %147 = vector.load %arg17[%c0_67, %c0_68] : memref<1x96xf32, #tpu.memory_space<vmem>>, vector<1x96xf32>
    %148 = vector.broadcast %147 : vector<1x96xf32> to vector<6x96xf32>
    %149 = arith.addf %146, %148 : vector<6x96xf32>
    %150 = vector.extract_strided_slice %149 {offsets = [0, 0], sizes = [6, 32], strides = [1, 1]} : vector<6x96xf32> to vector<6x32xf32>
    %151 = vector.extract_strided_slice %149 {offsets = [0, 32], sizes = [6, 32], strides = [1, 1]} : vector<6x96xf32> to vector<6x32xf32>
    %152 = vector.extract_strided_slice %149 {offsets = [0, 64], sizes = [6, 32], strides = [1, 1]} : vector<6x96xf32> to vector<6x32xf32>
    %153 = vector.extract_strided_slice %150 {offsets = [0, 0], sizes = [6, 8], strides = [1, 1]} : vector<6x32xf32> to vector<6x8xf32>
    %154 = vector.extract_strided_slice %151 {offsets = [0, 0], sizes = [6, 8], strides = [1, 1]} : vector<6x32xf32> to vector<6x8xf32>
    %155 = vector.extract_strided_slice %152 {offsets = [0, 0], sizes = [6, 8], strides = [1, 1]} : vector<6x32xf32> to vector<6x8xf32>
    %cst_69 = arith.constant dense<0.000000e+00> : vector<6x6xf32>
    %156 = tpu.matmul %153, %154, %cst_69 {dimension_numbers = #tpu.dot_dimension_numbers<[1], [1], [0], [0], [0, 0, 1, 0], [], []>} : vector<6x8xf32>, vector<6x8xf32>, vector<6x6xf32> -> vector<6x6xf32>
    %cst_70 = arith.constant 0.353553385 : f32
    %157 = vector.broadcast %cst_70 : f32 to vector<6x6xf32>
    %158 = arith.mulf %156, %157 : vector<6x6xf32>
    %159 = arith.addf %158, %4 : vector<6x6xf32>
    %cst_71 = arith.constant dense<0xFF800000> : vector<6xf32>
    %160 = vector.multi_reduction <maximumf>, %159, %cst_71 [1] : vector<6x6xf32> to vector<6xf32>
    %161 = vector.shape_cast %160 : vector<6xf32> to vector<6x1xf32>
    %162 = vector.broadcast %161 : vector<6x1xf32> to vector<6x6xf32>
    %163 = arith.subf %159, %162 : vector<6x6xf32>
    %164 = math.exp %163 : vector<6x6xf32>
    %cst_72 = arith.constant dense<0.000000e+00> : vector<6xf32>
    %165 = vector.multi_reduction <add>, %164, %cst_72 [1] : vector<6x6xf32> to vector<6xf32>
    %166 = vector.shape_cast %165 : vector<6xf32> to vector<6x1xf32>
    %cst_73 = arith.constant dense<0.000000e+00> : vector<6x8xf32>
    %167 = tpu.matmul %164, %155, %cst_73 {dimension_numbers = #tpu.dot_dimension_numbers<[1], [0], [0], [1], [0, 0, 1, 1], [], []>} : vector<6x6xf32>, vector<6x8xf32>, vector<6x8xf32> -> vector<6x8xf32>
    %168 = tpu.reciprocal %166 {approx = true} : vector<6x1xf32> -> vector<6x1xf32>
    %169 = vector.broadcast %168 : vector<6x1xf32> to vector<6x8xf32>
    %170 = arith.mulf %167, %169 : vector<6x8xf32>
    %171 = vector.extract_strided_slice %150 {offsets = [0, 8], sizes = [6, 8], strides = [1, 1]} : vector<6x32xf32> to vector<6x8xf32>
    %172 = vector.extract_strided_slice %151 {offsets = [0, 8], sizes = [6, 8], strides = [1, 1]} : vector<6x32xf32> to vector<6x8xf32>
    %173 = vector.extract_strided_slice %152 {offsets = [0, 8], sizes = [6, 8], strides = [1, 1]} : vector<6x32xf32> to vector<6x8xf32>
    %cst_74 = arith.constant dense<0.000000e+00> : vector<6x6xf32>
    %174 = tpu.matmul %171, %172, %cst_74 {dimension_numbers = #tpu.dot_dimension_numbers<[1], [1], [0], [0], [0, 0, 1, 0], [], []>} : vector<6x8xf32>, vector<6x8xf32>, vector<6x6xf32> -> vector<6x6xf32>
    %cst_75 = arith.constant 0.353553385 : f32
    %175 = vector.broadcast %cst_75 : f32 to vector<6x6xf32>
    %176 = arith.mulf %174, %175 : vector<6x6xf32>
    %177 = arith.addf %176, %4 : vector<6x6xf32>
    %cst_76 = arith.constant dense<0xFF800000> : vector<6xf32>
    %178 = vector.multi_reduction <maximumf>, %177, %cst_76 [1] : vector<6x6xf32> to vector<6xf32>
    %179 = vector.shape_cast %178 : vector<6xf32> to vector<6x1xf32>
    %180 = vector.broadcast %179 : vector<6x1xf32> to vector<6x6xf32>
    %181 = arith.subf %177, %180 : vector<6x6xf32>
    %182 = math.exp %181 : vector<6x6xf32>
    %cst_77 = arith.constant dense<0.000000e+00> : vector<6xf32>
    %183 = vector.multi_reduction <add>, %182, %cst_77 [1] : vector<6x6xf32> to vector<6xf32>
    %184 = vector.shape_cast %183 : vector<6xf32> to vector<6x1xf32>
    %cst_78 = arith.constant dense<0.000000e+00> : vector<6x8xf32>
    %185 = tpu.matmul %182, %173, %cst_78 {dimension_numbers = #tpu.dot_dimension_numbers<[1], [0], [0], [1], [0, 0, 1, 1], [], []>} : vector<6x6xf32>, vector<6x8xf32>, vector<6x8xf32> -> vector<6x8xf32>
    %186 = tpu.reciprocal %184 {approx = true} : vector<6x1xf32> -> vector<6x1xf32>
    %187 = vector.broadcast %186 : vector<6x1xf32> to vector<6x8xf32>
    %188 = arith.mulf %185, %187 : vector<6x8xf32>
    %189 = vector.extract_strided_slice %150 {offsets = [0, 16], sizes = [6, 8], strides = [1, 1]} : vector<6x32xf32> to vector<6x8xf32>
    %190 = vector.extract_strided_slice %151 {offsets = [0, 16], sizes = [6, 8], strides = [1, 1]} : vector<6x32xf32> to vector<6x8xf32>
    %191 = vector.extract_strided_slice %152 {offsets = [0, 16], sizes = [6, 8], strides = [1, 1]} : vector<6x32xf32> to vector<6x8xf32>
    %cst_79 = arith.constant dense<0.000000e+00> : vector<6x6xf32>
    %192 = tpu.matmul %189, %190, %cst_79 {dimension_numbers = #tpu.dot_dimension_numbers<[1], [1], [0], [0], [0, 0, 1, 0], [], []>} : vector<6x8xf32>, vector<6x8xf32>, vector<6x6xf32> -> vector<6x6xf32>
    %cst_80 = arith.constant 0.353553385 : f32
    %193 = vector.broadcast %cst_80 : f32 to vector<6x6xf32>
    %194 = arith.mulf %192, %193 : vector<6x6xf32>
    %195 = arith.addf %194, %4 : vector<6x6xf32>
    %cst_81 = arith.constant dense<0xFF800000> : vector<6xf32>
    %196 = vector.multi_reduction <maximumf>, %195, %cst_81 [1] : vector<6x6xf32> to vector<6xf32>
    %197 = vector.shape_cast %196 : vector<6xf32> to vector<6x1xf32>
    %198 = vector.broadcast %197 : vector<6x1xf32> to vector<6x6xf32>
    %199 = arith.subf %195, %198 : vector<6x6xf32>
    %200 = math.exp %199 : vector<6x6xf32>
    %cst_82 = arith.constant dense<0.000000e+00> : vector<6xf32>
    %201 = vector.multi_reduction <add>, %200, %cst_82 [1] : vector<6x6xf32> to vector<6xf32>
    %202 = vector.shape_cast %201 : vector<6xf32> to vector<6x1xf32>
    %cst_83 = arith.constant dense<0.000000e+00> : vector<6x8xf32>
    %203 = tpu.matmul %200, %191, %cst_83 {dimension_numbers = #tpu.dot_dimension_numbers<[1], [0], [0], [1], [0, 0, 1, 1], [], []>} : vector<6x6xf32>, vector<6x8xf32>, vector<6x8xf32> -> vector<6x8xf32>
    %204 = tpu.reciprocal %202 {approx = true} : vector<6x1xf32> -> vector<6x1xf32>
    %205 = vector.broadcast %204 : vector<6x1xf32> to vector<6x8xf32>
    %206 = arith.mulf %203, %205 : vector<6x8xf32>
    %207 = vector.extract_strided_slice %150 {offsets = [0, 24], sizes = [6, 8], strides = [1, 1]} : vector<6x32xf32> to vector<6x8xf32>
    %208 = vector.extract_strided_slice %151 {offsets = [0, 24], sizes = [6, 8], strides = [1, 1]} : vector<6x32xf32> to vector<6x8xf32>
    %209 = vector.extract_strided_slice %152 {offsets = [0, 24], sizes = [6, 8], strides = [1, 1]} : vector<6x32xf32> to vector<6x8xf32>
    %cst_84 = arith.constant dense<0.000000e+00> : vector<6x6xf32>
    %210 = tpu.matmul %207, %208, %cst_84 {dimension_numbers = #tpu.dot_dimension_numbers<[1], [1], [0], [0], [0, 0, 1, 0], [], []>} : vector<6x8xf32>, vector<6x8xf32>, vector<6x6xf32> -> vector<6x6xf32>
    %cst_85 = arith.constant 0.353553385 : f32
    %211 = vector.broadcast %cst_85 : f32 to vector<6x6xf32>
    %212 = arith.mulf %210, %211 : vector<6x6xf32>
    %213 = arith.addf %212, %4 : vector<6x6xf32>
    %cst_86 = arith.constant dense<0xFF800000> : vector<6xf32>
    %214 = vector.multi_reduction <maximumf>, %213, %cst_86 [1] : vector<6x6xf32> to vector<6xf32>
    %215 = vector.shape_cast %214 : vector<6xf32> to vector<6x1xf32>
    %216 = vector.broadcast %215 : vector<6x1xf32> to vector<6x6xf32>
    %217 = arith.subf %213, %216 : vector<6x6xf32>
    %218 = math.exp %217 : vector<6x6xf32>
    %cst_87 = arith.constant dense<0.000000e+00> : vector<6xf32>
    %219 = vector.multi_reduction <add>, %218, %cst_87 [1] : vector<6x6xf32> to vector<6xf32>
    %220 = vector.shape_cast %219 : vector<6xf32> to vector<6x1xf32>
    %cst_88 = arith.constant dense<0.000000e+00> : vector<6x8xf32>
    %221 = tpu.matmul %218, %209, %cst_88 {dimension_numbers = #tpu.dot_dimension_numbers<[1], [0], [0], [1], [0, 0, 1, 1], [], []>} : vector<6x6xf32>, vector<6x8xf32>, vector<6x8xf32> -> vector<6x8xf32>
    %222 = tpu.reciprocal %220 {approx = true} : vector<6x1xf32> -> vector<6x1xf32>
    %223 = vector.broadcast %222 : vector<6x1xf32> to vector<6x8xf32>
    %224 = arith.mulf %221, %223 : vector<6x8xf32>
    %225 = tpu.concatenate %170, %188, %206, %224 in 1 : vector<6x8xf32>, vector<6x8xf32>, vector<6x8xf32>, vector<6x8xf32> -> vector<6x32xf32>
    %c0_89 = arith.constant 0 : index
    %c0_90 = arith.constant 0 : index
    %226 = vector.load %arg18[%c0_89, %c0_90] : memref<32x32xf32, #tpu.memory_space<vmem>>, vector<32x32xf32>
    %cst_91 = arith.constant dense<0.000000e+00> : vector<6x32xf32>
    %227 = tpu.matmul %225, %226, %cst_91 {dimension_numbers = #tpu.dot_dimension_numbers<[1], [0], [0], [1], [0, 0, 1, 1], [], []>} : vector<6x32xf32>, vector<32x32xf32>, vector<6x32xf32> -> vector<6x32xf32>
    %c0_92 = arith.constant 0 : index
    %c0_93 = arith.constant 0 : index
    %228 = vector.load %arg19[%c0_92, %c0_93] : memref<1x32xf32, #tpu.memory_space<vmem>>, vector<1x32xf32>
    %229 = vector.broadcast %228 : vector<1x32xf32> to vector<6x32xf32>
    %230 = arith.addf %227, %229 : vector<6x32xf32>
    %231 = arith.addf %3, %230 : vector<6x32xf32>
    %cst_94 = arith.constant dense<0.000000e+00> : vector<6xf32>
    %232 = vector.multi_reduction <add>, %231, %cst_94 [1] : vector<6x32xf32> to vector<6xf32>
    %233 = vector.shape_cast %232 : vector<6xf32> to vector<6x1xf32>
    %cst_95 = arith.constant 3.200000e+01 : f32
    %234 = vector.broadcast %cst_95 : f32 to vector<6x1xf32>
    %235 = arith.divf %233, %234 : vector<6x1xf32>
    %236 = vector.broadcast %235 : vector<6x1xf32> to vector<6x32xf32>
    %237 = arith.subf %231, %236 : vector<6x32xf32>
    %238 = arith.mulf %237, %237 : vector<6x32xf32>
    %cst_96 = arith.constant dense<0.000000e+00> : vector<6xf32>
    %239 = vector.multi_reduction <add>, %238, %cst_96 [1] : vector<6x32xf32> to vector<6xf32>
    %240 = vector.shape_cast %239 : vector<6xf32> to vector<6x1xf32>
    %cst_97 = arith.constant 3.200000e+01 : f32
    %241 = vector.broadcast %cst_97 : f32 to vector<6x1xf32>
    %242 = arith.divf %240, %241 : vector<6x1xf32>
    %cst_98 = arith.constant 9.99999974E-6 : f32
    %243 = vector.broadcast %cst_98 : f32 to vector<6x1xf32>
    %244 = arith.addf %242, %243 : vector<6x1xf32>
    %245 = math.rsqrt %244 : vector<6x1xf32>
    %246 = vector.broadcast %245 : vector<6x1xf32> to vector<6x32xf32>
    %247 = arith.mulf %237, %246 : vector<6x32xf32>
    %c0_99 = arith.constant 0 : index
    %c0_100 = arith.constant 0 : index
    %248 = vector.load %arg20[%c0_99, %c0_100] : memref<1x32xf32, #tpu.memory_space<vmem>>, vector<1x32xf32>
    %249 = vector.broadcast %248 : vector<1x32xf32> to vector<6x32xf32>
    %250 = arith.mulf %247, %249 : vector<6x32xf32>
    %c0_101 = arith.constant 0 : index
    %c0_102 = arith.constant 0 : index
    %251 = vector.load %arg21[%c0_101, %c0_102] : memref<1x32xf32, #tpu.memory_space<vmem>>, vector<1x32xf32>
    %252 = vector.broadcast %251 : vector<1x32xf32> to vector<6x32xf32>
    %253 = arith.addf %250, %252 : vector<6x32xf32>
    %c0_103 = arith.constant 0 : index
    %c0_104 = arith.constant 0 : index
    %254 = vector.load %arg22[%c0_103, %c0_104] : memref<32x32xf32, #tpu.memory_space<vmem>>, vector<32x32xf32>
    %cst_105 = arith.constant dense<0.000000e+00> : vector<6x32xf32>
    %255 = tpu.matmul %253, %254, %cst_105 {dimension_numbers = #tpu.dot_dimension_numbers<[1], [0], [0], [1], [0, 0, 1, 1], [], []>} : vector<6x32xf32>, vector<32x32xf32>, vector<6x32xf32> -> vector<6x32xf32>
    %c0_106 = arith.constant 0 : index
    %c0_107 = arith.constant 0 : index
    %256 = vector.load %arg23[%c0_106, %c0_107] : memref<1x32xf32, #tpu.memory_space<vmem>>, vector<1x32xf32>
    %257 = vector.broadcast %256 : vector<1x32xf32> to vector<6x32xf32>
    %258 = arith.addf %255, %257 : vector<6x32xf32>
    %c0_108 = arith.constant 0 : index
    %c0_109 = arith.constant 0 : index
    %259 = vector.load %arg24[%c0_108, %c0_109] : memref<32x64xf32, #tpu.memory_space<vmem>>, vector<32x64xf32>
    %cst_110 = arith.constant dense<0.000000e+00> : vector<6x64xf32>
    %260 = tpu.matmul %144, %259, %cst_110 {dimension_numbers = #tpu.dot_dimension_numbers<[1], [0], [0], [1], [0, 0, 1, 1], [], []>} : vector<6x32xf32>, vector<32x64xf32>, vector<6x64xf32> -> vector<6x64xf32>
    %c0_111 = arith.constant 0 : index
    %c0_112 = arith.constant 0 : index
    %261 = vector.load %arg25[%c0_111, %c0_112] : memref<1x64xf32, #tpu.memory_space<vmem>>, vector<1x64xf32>
    %262 = vector.broadcast %261 : vector<1x64xf32> to vector<6x64xf32>
    %263 = arith.addf %260, %262 : vector<6x64xf32>
    %264 = vector.extract_strided_slice %263 {offsets = [0, 0], sizes = [6, 32], strides = [1, 1]} : vector<6x64xf32> to vector<6x32xf32>
    %265 = vector.extract_strided_slice %263 {offsets = [0, 32], sizes = [6, 32], strides = [1, 1]} : vector<6x64xf32> to vector<6x32xf32>
    %266 = vector.extract_strided_slice %258 {offsets = [0, 0], sizes = [6, 8], strides = [1, 1]} : vector<6x32xf32> to vector<6x8xf32>
    %267 = vector.extract_strided_slice %264 {offsets = [0, 0], sizes = [6, 8], strides = [1, 1]} : vector<6x32xf32> to vector<6x8xf32>
    %268 = vector.extract_strided_slice %265 {offsets = [0, 0], sizes = [6, 8], strides = [1, 1]} : vector<6x32xf32> to vector<6x8xf32>
    %cst_113 = arith.constant dense<0.000000e+00> : vector<6x6xf32>
    %269 = tpu.matmul %266, %267, %cst_113 {dimension_numbers = #tpu.dot_dimension_numbers<[1], [1], [0], [0], [0, 0, 1, 0], [], []>} : vector<6x8xf32>, vector<6x8xf32>, vector<6x6xf32> -> vector<6x6xf32>
    %cst_114 = arith.constant 0.353553385 : f32
    %270 = vector.broadcast %cst_114 : f32 to vector<6x6xf32>
    %271 = arith.mulf %269, %270 : vector<6x6xf32>
    %cst_115 = arith.constant dense<0xFF800000> : vector<6xf32>
    %272 = vector.multi_reduction <maximumf>, %271, %cst_115 [1] : vector<6x6xf32> to vector<6xf32>
    %273 = vector.shape_cast %272 : vector<6xf32> to vector<6x1xf32>
    %274 = vector.broadcast %273 : vector<6x1xf32> to vector<6x6xf32>
    %275 = arith.subf %271, %274 : vector<6x6xf32>
    %276 = math.exp %275 : vector<6x6xf32>
    %cst_116 = arith.constant dense<0.000000e+00> : vector<6xf32>
    %277 = vector.multi_reduction <add>, %276, %cst_116 [1] : vector<6x6xf32> to vector<6xf32>
    %278 = vector.shape_cast %277 : vector<6xf32> to vector<6x1xf32>
    %cst_117 = arith.constant dense<0.000000e+00> : vector<6x8xf32>
    %279 = tpu.matmul %276, %268, %cst_117 {dimension_numbers = #tpu.dot_dimension_numbers<[1], [0], [0], [1], [0, 0, 1, 1], [], []>} : vector<6x6xf32>, vector<6x8xf32>, vector<6x8xf32> -> vector<6x8xf32>
    %280 = tpu.reciprocal %278 {approx = true} : vector<6x1xf32> -> vector<6x1xf32>
    %281 = vector.broadcast %280 : vector<6x1xf32> to vector<6x8xf32>
    %282 = arith.mulf %279, %281 : vector<6x8xf32>
    %283 = vector.extract_strided_slice %258 {offsets = [0, 8], sizes = [6, 8], strides = [1, 1]} : vector<6x32xf32> to vector<6x8xf32>
    %284 = vector.extract_strided_slice %264 {offsets = [0, 8], sizes = [6, 8], strides = [1, 1]} : vector<6x32xf32> to vector<6x8xf32>
    %285 = vector.extract_strided_slice %265 {offsets = [0, 8], sizes = [6, 8], strides = [1, 1]} : vector<6x32xf32> to vector<6x8xf32>
    %cst_118 = arith.constant dense<0.000000e+00> : vector<6x6xf32>
    %286 = tpu.matmul %283, %284, %cst_118 {dimension_numbers = #tpu.dot_dimension_numbers<[1], [1], [0], [0], [0, 0, 1, 0], [], []>} : vector<6x8xf32>, vector<6x8xf32>, vector<6x6xf32> -> vector<6x6xf32>
    %cst_119 = arith.constant 0.353553385 : f32
    %287 = vector.broadcast %cst_119 : f32 to vector<6x6xf32>
    %288 = arith.mulf %286, %287 : vector<6x6xf32>
    %cst_120 = arith.constant dense<0xFF800000> : vector<6xf32>
    %289 = vector.multi_reduction <maximumf>, %288, %cst_120 [1] : vector<6x6xf32> to vector<6xf32>
    %290 = vector.shape_cast %289 : vector<6xf32> to vector<6x1xf32>
    %291 = vector.broadcast %290 : vector<6x1xf32> to vector<6x6xf32>
    %292 = arith.subf %288, %291 : vector<6x6xf32>
    %293 = math.exp %292 : vector<6x6xf32>
    %cst_121 = arith.constant dense<0.000000e+00> : vector<6xf32>
    %294 = vector.multi_reduction <add>, %293, %cst_121 [1] : vector<6x6xf32> to vector<6xf32>
    %295 = vector.shape_cast %294 : vector<6xf32> to vector<6x1xf32>
    %cst_122 = arith.constant dense<0.000000e+00> : vector<6x8xf32>
    %296 = tpu.matmul %293, %285, %cst_122 {dimension_numbers = #tpu.dot_dimension_numbers<[1], [0], [0], [1], [0, 0, 1, 1], [], []>} : vector<6x6xf32>, vector<6x8xf32>, vector<6x8xf32> -> vector<6x8xf32>
    %297 = tpu.reciprocal %295 {approx = true} : vector<6x1xf32> -> vector<6x1xf32>
    %298 = vector.broadcast %297 : vector<6x1xf32> to vector<6x8xf32>
    %299 = arith.mulf %296, %298 : vector<6x8xf32>
    %300 = vector.extract_strided_slice %258 {offsets = [0, 16], sizes = [6, 8], strides = [1, 1]} : vector<6x32xf32> to vector<6x8xf32>
    %301 = vector.extract_strided_slice %264 {offsets = [0, 16], sizes = [6, 8], strides = [1, 1]} : vector<6x32xf32> to vector<6x8xf32>
    %302 = vector.extract_strided_slice %265 {offsets = [0, 16], sizes = [6, 8], strides = [1, 1]} : vector<6x32xf32> to vector<6x8xf32>
    %cst_123 = arith.constant dense<0.000000e+00> : vector<6x6xf32>
    %303 = tpu.matmul %300, %301, %cst_123 {dimension_numbers = #tpu.dot_dimension_numbers<[1], [1], [0], [0], [0, 0, 1, 0], [], []>} : vector<6x8xf32>, vector<6x8xf32>, vector<6x6xf32> -> vector<6x6xf32>
    %cst_124 = arith.constant 0.353553385 : f32
    %304 = vector.broadcast %cst_124 : f32 to vector<6x6xf32>
    %305 = arith.mulf %303, %304 : vector<6x6xf32>
    %cst_125 = arith.constant dense<0xFF800000> : vector<6xf32>
    %306 = vector.multi_reduction <maximumf>, %305, %cst_125 [1] : vector<6x6xf32> to vector<6xf32>
    %307 = vector.shape_cast %306 : vector<6xf32> to vector<6x1xf32>
    %308 = vector.broadcast %307 : vector<6x1xf32> to vector<6x6xf32>
    %309 = arith.subf %305, %308 : vector<6x6xf32>
    %310 = math.exp %309 : vector<6x6xf32>
    %cst_126 = arith.constant dense<0.000000e+00> : vector<6xf32>
    %311 = vector.multi_reduction <add>, %310, %cst_126 [1] : vector<6x6xf32> to vector<6xf32>
    %312 = vector.shape_cast %311 : vector<6xf32> to vector<6x1xf32>
    %cst_127 = arith.constant dense<0.000000e+00> : vector<6x8xf32>
    %313 = tpu.matmul %310, %302, %cst_127 {dimension_numbers = #tpu.dot_dimension_numbers<[1], [0], [0], [1], [0, 0, 1, 1], [], []>} : vector<6x6xf32>, vector<6x8xf32>, vector<6x8xf32> -> vector<6x8xf32>
    %314 = tpu.reciprocal %312 {approx = true} : vector<6x1xf32> -> vector<6x1xf32>
    %315 = vector.broadcast %314 : vector<6x1xf32> to vector<6x8xf32>
    %316 = arith.mulf %313, %315 : vector<6x8xf32>
    %317 = vector.extract_strided_slice %258 {offsets = [0, 24], sizes = [6, 8], strides = [1, 1]} : vector<6x32xf32> to vector<6x8xf32>
    %318 = vector.extract_strided_slice %264 {offsets = [0, 24], sizes = [6, 8], strides = [1, 1]} : vector<6x32xf32> to vector<6x8xf32>
    %319 = vector.extract_strided_slice %265 {offsets = [0, 24], sizes = [6, 8], strides = [1, 1]} : vector<6x32xf32> to vector<6x8xf32>
    %cst_128 = arith.constant dense<0.000000e+00> : vector<6x6xf32>
    %320 = tpu.matmul %317, %318, %cst_128 {dimension_numbers = #tpu.dot_dimension_numbers<[1], [1], [0], [0], [0, 0, 1, 0], [], []>} : vector<6x8xf32>, vector<6x8xf32>, vector<6x6xf32> -> vector<6x6xf32>
    %cst_129 = arith.constant 0.353553385 : f32
    %321 = vector.broadcast %cst_129 : f32 to vector<6x6xf32>
    %322 = arith.mulf %320, %321 : vector<6x6xf32>
    %cst_130 = arith.constant dense<0xFF800000> : vector<6xf32>
    %323 = vector.multi_reduction <maximumf>, %322, %cst_130 [1] : vector<6x6xf32> to vector<6xf32>
    %324 = vector.shape_cast %323 : vector<6xf32> to vector<6x1xf32>
    %325 = vector.broadcast %324 : vector<6x1xf32> to vector<6x6xf32>
    %326 = arith.subf %322, %325 : vector<6x6xf32>
    %327 = math.exp %326 : vector<6x6xf32>
    %cst_131 = arith.constant dense<0.000000e+00> : vector<6xf32>
    %328 = vector.multi_reduction <add>, %327, %cst_131 [1] : vector<6x6xf32> to vector<6xf32>
    %329 = vector.shape_cast %328 : vector<6xf32> to vector<6x1xf32>
    %cst_132 = arith.constant dense<0.000000e+00> : vector<6x8xf32>
    %330 = tpu.matmul %327, %319, %cst_132 {dimension_numbers = #tpu.dot_dimension_numbers<[1], [0], [0], [1], [0, 0, 1, 1], [], []>} : vector<6x6xf32>, vector<6x8xf32>, vector<6x8xf32> -> vector<6x8xf32>
    %331 = tpu.reciprocal %329 {approx = true} : vector<6x1xf32> -> vector<6x1xf32>
    %332 = vector.broadcast %331 : vector<6x1xf32> to vector<6x8xf32>
    %333 = arith.mulf %330, %332 : vector<6x8xf32>
    %334 = tpu.concatenate %282, %299, %316, %333 in 1 : vector<6x8xf32>, vector<6x8xf32>, vector<6x8xf32>, vector<6x8xf32> -> vector<6x32xf32>
    %c0_133 = arith.constant 0 : index
    %c0_134 = arith.constant 0 : index
    %335 = vector.load %arg26[%c0_133, %c0_134] : memref<32x32xf32, #tpu.memory_space<vmem>>, vector<32x32xf32>
    %cst_135 = arith.constant dense<0.000000e+00> : vector<6x32xf32>
    %336 = tpu.matmul %334, %335, %cst_135 {dimension_numbers = #tpu.dot_dimension_numbers<[1], [0], [0], [1], [0, 0, 1, 1], [], []>} : vector<6x32xf32>, vector<32x32xf32>, vector<6x32xf32> -> vector<6x32xf32>
    %c0_136 = arith.constant 0 : index
    %c0_137 = arith.constant 0 : index
    %337 = vector.load %arg27[%c0_136, %c0_137] : memref<1x32xf32, #tpu.memory_space<vmem>>, vector<1x32xf32>
    %338 = vector.broadcast %337 : vector<1x32xf32> to vector<6x32xf32>
    %339 = arith.addf %336, %338 : vector<6x32xf32>
    %340 = arith.addf %253, %339 : vector<6x32xf32>
    %cst_138 = arith.constant dense<0.000000e+00> : vector<6xf32>
    %341 = vector.multi_reduction <add>, %340, %cst_138 [1] : vector<6x32xf32> to vector<6xf32>
    %342 = vector.shape_cast %341 : vector<6xf32> to vector<6x1xf32>
    %cst_139 = arith.constant 3.200000e+01 : f32
    %343 = vector.broadcast %cst_139 : f32 to vector<6x1xf32>
    %344 = arith.divf %342, %343 : vector<6x1xf32>
    %345 = vector.broadcast %344 : vector<6x1xf32> to vector<6x32xf32>
    %346 = arith.subf %340, %345 : vector<6x32xf32>
    %347 = arith.mulf %346, %346 : vector<6x32xf32>
    %cst_140 = arith.constant dense<0.000000e+00> : vector<6xf32>
    %348 = vector.multi_reduction <add>, %347, %cst_140 [1] : vector<6x32xf32> to vector<6xf32>
    %349 = vector.shape_cast %348 : vector<6xf32> to vector<6x1xf32>
    %cst_141 = arith.constant 3.200000e+01 : f32
    %350 = vector.broadcast %cst_141 : f32 to vector<6x1xf32>
    %351 = arith.divf %349, %350 : vector<6x1xf32>
    %cst_142 = arith.constant 9.99999974E-6 : f32
    %352 = vector.broadcast %cst_142 : f32 to vector<6x1xf32>
    %353 = arith.addf %351, %352 : vector<6x1xf32>
    %354 = math.rsqrt %353 : vector<6x1xf32>
    %355 = vector.broadcast %354 : vector<6x1xf32> to vector<6x32xf32>
    %356 = arith.mulf %346, %355 : vector<6x32xf32>
    %c0_143 = arith.constant 0 : index
    %c0_144 = arith.constant 0 : index
    %357 = vector.load %arg28[%c0_143, %c0_144] : memref<1x32xf32, #tpu.memory_space<vmem>>, vector<1x32xf32>
    %358 = vector.broadcast %357 : vector<1x32xf32> to vector<6x32xf32>
    %359 = arith.mulf %356, %358 : vector<6x32xf32>
    %c0_145 = arith.constant 0 : index
    %c0_146 = arith.constant 0 : index
    %360 = vector.load %arg29[%c0_145, %c0_146] : memref<1x32xf32, #tpu.memory_space<vmem>>, vector<1x32xf32>
    %361 = vector.broadcast %360 : vector<1x32xf32> to vector<6x32xf32>
    %362 = arith.addf %359, %361 : vector<6x32xf32>
    %c0_147 = arith.constant 0 : index
    %c0_148 = arith.constant 0 : index
    %363 = vector.load %arg30[%c0_147, %c0_148] : memref<32x64xf32, #tpu.memory_space<vmem>>, vector<32x64xf32>
    %cst_149 = arith.constant dense<0.000000e+00> : vector<6x64xf32>
    %364 = tpu.matmul %362, %363, %cst_149 {dimension_numbers = #tpu.dot_dimension_numbers<[1], [0], [0], [1], [0, 0, 1, 1], [], []>} : vector<6x32xf32>, vector<32x64xf32>, vector<6x64xf32> -> vector<6x64xf32>
    %c0_150 = arith.constant 0 : index
    %c0_151 = arith.constant 0 : index
    %365 = vector.load %arg31[%c0_150, %c0_151] : memref<1x64xf32, #tpu.memory_space<vmem>>, vector<1x64xf32>
    %366 = vector.broadcast %365 : vector<1x64xf32> to vector<6x64xf32>
    %367 = arith.addf %364, %366 : vector<6x64xf32>
    %cst_152 = arith.constant 0.000000e+00 : f32
    %368 = vector.broadcast %cst_152 : f32 to vector<6x64xf32>
    %369 = arith.maximumf %367, %368 : vector<6x64xf32>
    %c0_153 = arith.constant 0 : index
    %c0_154 = arith.constant 0 : index
    %370 = vector.load %arg32[%c0_153, %c0_154] : memref<64x32xf32, #tpu.memory_space<vmem>>, vector<64x32xf32>
    %cst_155 = arith.constant dense<0.000000e+00> : vector<6x32xf32>
    %371 = tpu.matmul %369, %370, %cst_155 {dimension_numbers = #tpu.dot_dimension_numbers<[1], [0], [0], [1], [0, 0, 1, 1], [], []>} : vector<6x64xf32>, vector<64x32xf32>, vector<6x32xf32> -> vector<6x32xf32>
    %c0_156 = arith.constant 0 : index
    %c0_157 = arith.constant 0 : index
    %372 = vector.load %arg33[%c0_156, %c0_157] : memref<1x32xf32, #tpu.memory_space<vmem>>, vector<1x32xf32>
    %373 = vector.broadcast %372 : vector<1x32xf32> to vector<6x32xf32>
    %374 = arith.addf %371, %373 : vector<6x32xf32>
    %375 = arith.addf %362, %374 : vector<6x32xf32>
    %cst_158 = arith.constant dense<0.000000e+00> : vector<6xf32>
    %376 = vector.multi_reduction <add>, %375, %cst_158 [1] : vector<6x32xf32> to vector<6xf32>
    %377 = vector.shape_cast %376 : vector<6xf32> to vector<6x1xf32>
    %cst_159 = arith.constant 3.200000e+01 : f32
    %378 = vector.broadcast %cst_159 : f32 to vector<6x1xf32>
    %379 = arith.divf %377, %378 : vector<6x1xf32>
    %380 = vector.broadcast %379 : vector<6x1xf32> to vector<6x32xf32>
    %381 = arith.subf %375, %380 : vector<6x32xf32>
    %382 = arith.mulf %381, %381 : vector<6x32xf32>
    %cst_160 = arith.constant dense<0.000000e+00> : vector<6xf32>
    %383 = vector.multi_reduction <add>, %382, %cst_160 [1] : vector<6x32xf32> to vector<6xf32>
    %384 = vector.shape_cast %383 : vector<6xf32> to vector<6x1xf32>
    %cst_161 = arith.constant 3.200000e+01 : f32
    %385 = vector.broadcast %cst_161 : f32 to vector<6x1xf32>
    %386 = arith.divf %384, %385 : vector<6x1xf32>
    %cst_162 = arith.constant 9.99999974E-6 : f32
    %387 = vector.broadcast %cst_162 : f32 to vector<6x1xf32>
    %388 = arith.addf %386, %387 : vector<6x1xf32>
    %389 = math.rsqrt %388 : vector<6x1xf32>
    %390 = vector.broadcast %389 : vector<6x1xf32> to vector<6x32xf32>
    %391 = arith.mulf %381, %390 : vector<6x32xf32>
    %c0_163 = arith.constant 0 : index
    %c0_164 = arith.constant 0 : index
    %392 = vector.load %arg34[%c0_163, %c0_164] : memref<1x32xf32, #tpu.memory_space<vmem>>, vector<1x32xf32>
    %393 = vector.broadcast %392 : vector<1x32xf32> to vector<6x32xf32>
    %394 = arith.mulf %391, %393 : vector<6x32xf32>
    %c0_165 = arith.constant 0 : index
    %c0_166 = arith.constant 0 : index
    %395 = vector.load %arg35[%c0_165, %c0_166] : memref<1x32xf32, #tpu.memory_space<vmem>>, vector<1x32xf32>
    %396 = vector.broadcast %395 : vector<1x32xf32> to vector<6x32xf32>
    %397 = arith.addf %394, %396 : vector<6x32xf32>
    %c0_167 = arith.constant 0 : index
    %c0_168 = arith.constant 0 : index
    %398 = vector.load %arg36[%c0_167, %c0_168] : memref<32x6xf32, #tpu.memory_space<vmem>>, vector<32x6xf32>
    %cst_169 = arith.constant dense<0.000000e+00> : vector<6x6xf32>
    %399 = tpu.matmul %397, %398, %cst_169 {dimension_numbers = #tpu.dot_dimension_numbers<[1], [0], [0], [1], [0, 0, 1, 1], [], []>} : vector<6x32xf32>, vector<32x6xf32>, vector<6x6xf32> -> vector<6x6xf32>
    %c0_170 = arith.constant 0 : index
    %c0_171 = arith.constant 0 : index
    %400 = vector.load %arg37[%c0_170, %c0_171] : memref<1x6xf32, #tpu.memory_space<vmem>>, vector<1x6xf32>
    %401 = vector.broadcast %400 : vector<1x6xf32> to vector<6x6xf32>
    %402 = arith.addf %399, %401 : vector<6x6xf32>
    %403 = vector.extract_strided_slice %402 {offsets = [0, 0], sizes = [1, 6], strides = [1, 1]} : vector<6x6xf32> to vector<1x6xf32>
    %404 = vector.extract_strided_slice %402 {offsets = [1, 0], sizes = [1, 6], strides = [1, 1]} : vector<6x6xf32> to vector<1x6xf32>
    %405 = vector.extract_strided_slice %402 {offsets = [2, 0], sizes = [1, 6], strides = [1, 1]} : vector<6x6xf32> to vector<1x6xf32>
    %406 = vector.extract_strided_slice %402 {offsets = [3, 0], sizes = [1, 6], strides = [1, 1]} : vector<6x6xf32> to vector<1x6xf32>
    %407 = vector.extract_strided_slice %402 {offsets = [4, 0], sizes = [1, 6], strides = [1, 1]} : vector<6x6xf32> to vector<1x6xf32>
    %408 = vector.extract_strided_slice %402 {offsets = [5, 0], sizes = [1, 6], strides = [1, 1]} : vector<6x6xf32> to vector<1x6xf32>
    %409 = tpu.concatenate %403, %404, %405, %406, %407, %408 in 1 : vector<1x6xf32>, vector<1x6xf32>, vector<1x6xf32>, vector<1x6xf32>, vector<1x6xf32>, vector<1x6xf32> -> vector<1x36xf32>
    %c0_172 = arith.constant 0 : index
    %c0_173 = arith.constant 0 : index
    %410 = vector.load %arg38[%c0_172, %c0_173] : memref<36x18xf32, #tpu.memory_space<vmem>>, vector<36x18xf32>
    %cst_174 = arith.constant dense<0.000000e+00> : vector<1x18xf32>
    %411 = tpu.matmul %409, %410, %cst_174 {dimension_numbers = #tpu.dot_dimension_numbers<[1], [0], [0], [1], [0, 0, 1, 1], [], []>} : vector<1x36xf32>, vector<36x18xf32>, vector<1x18xf32> -> vector<1x18xf32>
    %c0_175 = arith.constant 0 : index
    %c0_176 = arith.constant 0 : index
    %412 = vector.load %arg39[%c0_175, %c0_176] : memref<1x18xf32, #tpu.memory_space<vmem>>, vector<1x18xf32>
    %413 = arith.addf %411, %412 : vector<1x18xf32>
    %cst_177 = arith.constant 0.000000e+00 : f32
    %414 = vector.broadcast %cst_177 : f32 to vector<1x18xf32>
    %415 = arith.maximumf %413, %414 : vector<1x18xf32>
    %c0_178 = arith.constant 0 : index
    %c0_179 = arith.constant 0 : index
    %416 = vector.load %arg40[%c0_178, %c0_179] : memref<18x6xf32, #tpu.memory_space<vmem>>, vector<18x6xf32>
    %cst_180 = arith.constant dense<0.000000e+00> : vector<1x6xf32>
    %417 = tpu.matmul %415, %416, %cst_180 {dimension_numbers = #tpu.dot_dimension_numbers<[1], [0], [0], [1], [0, 0, 1, 1], [], []>} : vector<1x18xf32>, vector<18x6xf32>, vector<1x6xf32> -> vector<1x6xf32>
    %c0_181 = arith.constant 0 : index
    %c0_182 = arith.constant 0 : index
    %418 = vector.load %arg41[%c0_181, %c0_182] : memref<1x6xf32, #tpu.memory_space<vmem>>, vector<1x6xf32>
    %419 = arith.addf %417, %418 : vector<1x6xf32>
    %cst_183 = arith.constant 0.000000e+00 : f32
    %420 = vector.broadcast %cst_183 : f32 to vector<1x6xf32>
    %421 = arith.maximumf %419, %420 : vector<1x6xf32>
    %c0_184 = arith.constant 0 : index
    %c0_185 = arith.constant 0 : index
    %422 = vector.load %arg42[%c0_184, %c0_185] : memref<6x18xf32, #tpu.memory_space<vmem>>, vector<6x18xf32>
    %cst_186 = arith.constant dense<0.000000e+00> : vector<1x18xf32>
    %423 = tpu.matmul %421, %422, %cst_186 {dimension_numbers = #tpu.dot_dimension_numbers<[1], [0], [0], [1], [0, 0, 1, 1], [], []>} : vector<1x6xf32>, vector<6x18xf32>, vector<1x18xf32> -> vector<1x18xf32>
    %c0_187 = arith.constant 0 : index
    %c0_188 = arith.constant 0 : index
    %424 = vector.load %arg43[%c0_187, %c0_188] : memref<1x18xf32, #tpu.memory_space<vmem>>, vector<1x18xf32>
    %425 = arith.addf %423, %424 : vector<1x18xf32>
    %cst_189 = arith.constant 0.000000e+00 : f32
    %426 = vector.broadcast %cst_189 : f32 to vector<1x18xf32>
    %427 = arith.maximumf %425, %426 : vector<1x18xf32>
    %c0_190 = arith.constant 0 : index
    %c0_191 = arith.constant 0 : index
    %428 = vector.load %arg44[%c0_190, %c0_191] : memref<18x36xf32, #tpu.memory_space<vmem>>, vector<18x36xf32>
    %cst_192 = arith.constant dense<0.000000e+00> : vector<1x36xf32>
    %429 = tpu.matmul %427, %428, %cst_192 {dimension_numbers = #tpu.dot_dimension_numbers<[1], [0], [0], [1], [0, 0, 1, 1], [], []>} : vector<1x18xf32>, vector<18x36xf32>, vector<1x36xf32> -> vector<1x36xf32>
    %c0_193 = arith.constant 0 : index
    %c0_194 = arith.constant 0 : index
    %430 = vector.load %arg45[%c0_193, %c0_194] : memref<1x36xf32, #tpu.memory_space<vmem>>, vector<1x36xf32>
    %431 = arith.addf %429, %430 : vector<1x36xf32>
    %432 = math.tanh %431 : vector<1x36xf32>
    %c0_195 = arith.constant 0 : index
    %c0_196 = arith.constant 0 : index
    %433 = vector.load %arg46[%c0_195, %c0_196] : memref<36x1xf32, #tpu.memory_space<vmem>>, vector<36x1xf32>
    %cst_197 = arith.constant dense<0.000000e+00> : vector<1x1xf32>
    %434 = tpu.matmul %432, %433, %cst_197 {dimension_numbers = #tpu.dot_dimension_numbers<[1], [0], [0], [1], [0, 0, 1, 1], [], []>} : vector<1x36xf32>, vector<36x1xf32>, vector<1x1xf32> -> vector<1x1xf32>
    %c0_198 = arith.constant 0 : index
    %c0_199 = arith.constant 0 : index
    %435 = vector.load %arg47[%c0_198, %c0_199] : memref<1x1xf32, #tpu.memory_space<vmem>>, vector<1x1xf32>
    %436 = arith.addf %434, %435 : vector<1x1xf32>
    %437 = arith.negf %436 : vector<1x1xf32>
    %438 = math.exp %437 : vector<1x1xf32>
    %cst_200 = arith.constant 1.000000e+00 : f32
    %439 = vector.broadcast %cst_200 : f32 to vector<1x1xf32>
    %440 = arith.addf %439, %438 : vector<1x1xf32>
    %441 = arith.divf %439, %440 : vector<1x1xf32>
    %c0_201 = arith.constant 0 : index
    %c0_202 = arith.constant 0 : index
    %c0_203 = arith.constant 0 : index
    %442 = vector.load %arg48[%c0_201, %c0_202, %c0_203] : memref<1x1x1xf32, #tpu.memory_space<vmem>>, vector<1x1x1xf32>
    %443 = vector.shape_cast %442 : vector<1x1x1xf32> to vector<1x1xf32>
    %444 = vector.shape_cast %441 : vector<1x1xf32> to vector<1x1x1xf32>
    tpu.vector_store %arg48[%c0_201, %c0_202, %c0_203], %444 {strides = array<i32>} : memref<1x1x1xf32, #tpu.memory_space<vmem>>, vector<1x1x1xf32>,
    return
  }
  func.func @transform_0(%arg0: i32) -> (i32, i32, i32) {
    %c0_i32 = arith.constant 0 : i32
    %c0_i32_0 = arith.constant 0 : i32
    %c0_i32_1 = arith.constant 0 : i32
    return %arg0, %c0_i32, %c0_i32_0 : i32, i32, i32
  }
  func.func @transform_1(%arg0: i32) -> (i32, i32) {
    %c0_i32 = arith.constant 0 : i32
    %c0_i32_0 = arith.constant 0 : i32
    %c0_i32_1 = arith.constant 0 : i32
    return %c0_i32, %c0_i32_0 : i32, i32
  }
  func.func @transform_2(%arg0: i32) -> (i32, i32) {
    %c0_i32 = arith.constant 0 : i32
    %c0_i32_0 = arith.constant 0 : i32
    %c0_i32_1 = arith.constant 0 : i32
    return %c0_i32, %c0_i32_0 : i32, i32
  }
  func.func @transform_3(%arg0: i32) -> (i32, i32) {
    %c0_i32 = arith.constant 0 : i32
    %c0_i32_0 = arith.constant 0 : i32
    %c0_i32_1 = arith.constant 0 : i32
    return %c0_i32, %c0_i32_0 : i32, i32
  }
  func.func @transform_4(%arg0: i32) -> (i32, i32) {
    %c0_i32 = arith.constant 0 : i32
    %c0_i32_0 = arith.constant 0 : i32
    %c0_i32_1 = arith.constant 0 : i32
    return %c0_i32, %c0_i32_0 : i32, i32
  }
  func.func @transform_5(%arg0: i32) -> (i32, i32) {
    %c0_i32 = arith.constant 0 : i32
    %c0_i32_0 = arith.constant 0 : i32
    %c0_i32_1 = arith.constant 0 : i32
    return %c0_i32, %c0_i32_0 : i32, i32
  }
  func.func @transform_6(%arg0: i32) -> (i32, i32) {
    %c0_i32 = arith.constant 0 : i32
    %c0_i32_0 = arith.constant 0 : i32
    %c0_i32_1 = arith.constant 0 : i32
    return %c0_i32, %c0_i32_0 : i32, i32
  }
  func.func @transform_7(%arg0: i32) -> (i32, i32) {
    %c0_i32 = arith.constant 0 : i32
    %c0_i32_0 = arith.constant 0 : i32
    %c0_i32_1 = arith.constant 0 : i32
    return %c0_i32, %c0_i32_0 : i32, i32
  }
  func.func @transform_8(%arg0: i32) -> (i32, i32) {
    %c0_i32 = arith.constant 0 : i32
    %c0_i32_0 = arith.constant 0 : i32
    %c0_i32_1 = arith.constant 0 : i32
    return %c0_i32, %c0_i32_0 : i32, i32
  }
  func.func @transform_9(%arg0: i32) -> (i32, i32) {
    %c0_i32 = arith.constant 0 : i32
    %c0_i32_0 = arith.constant 0 : i32
    %c0_i32_1 = arith.constant 0 : i32
    return %c0_i32, %c0_i32_0 : i32, i32
  }
  func.func @transform_10(%arg0: i32) -> (i32, i32) {
    %c0_i32 = arith.constant 0 : i32
    %c0_i32_0 = arith.constant 0 : i32
    %c0_i32_1 = arith.constant 0 : i32
    return %c0_i32, %c0_i32_0 : i32, i32
  }
  func.func @transform_11(%arg0: i32) -> (i32, i32) {
    %c0_i32 = arith.constant 0 : i32
    %c0_i32_0 = arith.constant 0 : i32
    %c0_i32_1 = arith.constant 0 : i32
    return %c0_i32, %c0_i32_0 : i32, i32
  }
  func.func @transform_12(%arg0: i32) -> (i32, i32) {
    %c0_i32 = arith.constant 0 : i32
    %c0_i32_0 = arith.constant 0 : i32
    %c0_i32_1 = arith.constant 0 : i32
    return %c0_i32, %c0_i32_0 : i32, i32
  }
  func.func @transform_13(%arg0: i32) -> (i32, i32) {
    %c0_i32 = arith.constant 0 : i32
    %c0_i32_0 = arith.constant 0 : i32
    %c0_i32_1 = arith.constant 0 : i32
    return %c0_i32, %c0_i32_0 : i32, i32
  }
  func.func @transform_14(%arg0: i32) -> (i32, i32) {
    %c0_i32 = arith.constant 0 : i32
    %c0_i32_0 = arith.constant 0 : i32
    %c0_i32_1 = arith.constant 0 : i32
    return %c0_i32, %c0_i32_0 : i32, i32
  }
  func.func @transform_15(%arg0: i32) -> (i32, i32) {
    %c0_i32 = arith.constant 0 : i32
    %c0_i32_0 = arith.constant 0 : i32
    %c0_i32_1 = arith.constant 0 : i32
    return %c0_i32, %c0_i32_0 : i32, i32
  }
  func.func @transform_16(%arg0: i32) -> (i32, i32) {
    %c0_i32 = arith.constant 0 : i32
    %c0_i32_0 = arith.constant 0 : i32
    %c0_i32_1 = arith.constant 0 : i32
    return %c0_i32, %c0_i32_0 : i32, i32
  }
  func.func @transform_17(%arg0: i32) -> (i32, i32) {
    %c0_i32 = arith.constant 0 : i32
    %c0_i32_0 = arith.constant 0 : i32
    %c0_i32_1 = arith.constant 0 : i32
    return %c0_i32, %c0_i32_0 : i32, i32
  }
  func.func @transform_18(%arg0: i32) -> (i32, i32) {
    %c0_i32 = arith.constant 0 : i32
    %c0_i32_0 = arith.constant 0 : i32
    %c0_i32_1 = arith.constant 0 : i32
    return %c0_i32, %c0_i32_0 : i32, i32
  }
  func.func @transform_19(%arg0: i32) -> (i32, i32) {
    %c0_i32 = arith.constant 0 : i32
    %c0_i32_0 = arith.constant 0 : i32
    %c0_i32_1 = arith.constant 0 : i32
    return %c0_i32, %c0_i32_0 : i32, i32
  }
  func.func @transform_20(%arg0: i32) -> (i32, i32) {
    %c0_i32 = arith.constant 0 : i32
    %c0_i32_0 = arith.constant 0 : i32
    %c0_i32_1 = arith.constant 0 : i32
    return %c0_i32, %c0_i32_0 : i32, i32
  }
  func.func @transform_21(%arg0: i32) -> (i32, i32) {
    %c0_i32 = arith.constant 0 : i32
    %c0_i32_0 = arith.constant 0 : i32
    %c0_i32_1 = arith.constant 0 : i32
    return %c0_i32, %c0_i32_0 : i32, i32
  }
  func.func @transform_22(%arg0: i32) -> (i32, i32) {
    %c0_i32 = arith.constant 0 : i32
    %c0_i32_0 = arith.constant 0 : i32
    %c0_i32_1 = arith.constant 0 : i32
    return %c0_i32, %c0_i32_0 : i32, i32
  }
  func.func @transform_23(%arg0: i32) -> (i32, i32) {
    %c0_i32 = arith.constant 0 : i32
    %c0_i32_0 = arith.constant 0 : i32
    %c0_i32_1 = arith.constant 0 : i32
    return %c0_i32, %c0_i32_0 : i32, i32
  }
  func.func @transform_24(%arg0: i32) -> (i32, i32) {
    %c0_i32 = arith.constant 0 : i32
    %c0_i32_0 = arith.constant 0 : i32
    %c0_i32_1 = arith.constant 0 : i32
    return %c0_i32, %c0_i32_0 : i32, i32
  }
  func.func @transform_25(%arg0: i32) -> (i32, i32) {
    %c0_i32 = arith.constant 0 : i32
    %c0_i32_0 = arith.constant 0 : i32
    %c0_i32_1 = arith.constant 0 : i32
    return %c0_i32, %c0_i32_0 : i32, i32
  }
  func.func @transform_26(%arg0: i32) -> (i32, i32) {
    %c0_i32 = arith.constant 0 : i32
    %c0_i32_0 = arith.constant 0 : i32
    %c0_i32_1 = arith.constant 0 : i32
    return %c0_i32, %c0_i32_0 : i32, i32
  }
  func.func @transform_27(%arg0: i32) -> (i32, i32) {
    %c0_i32 = arith.constant 0 : i32
    %c0_i32_0 = arith.constant 0 : i32
    %c0_i32_1 = arith.constant 0 : i32
    return %c0_i32, %c0_i32_0 : i32, i32
  }
  func.func @transform_28(%arg0: i32) -> (i32, i32) {
    %c0_i32 = arith.constant 0 : i32
    %c0_i32_0 = arith.constant 0 : i32
    %c0_i32_1 = arith.constant 0 : i32
    return %c0_i32, %c0_i32_0 : i32, i32
  }
  func.func @transform_29(%arg0: i32) -> (i32, i32) {
    %c0_i32 = arith.constant 0 : i32
    %c0_i32_0 = arith.constant 0 : i32
    %c0_i32_1 = arith.constant 0 : i32
    return %c0_i32, %c0_i32_0 : i32, i32
  }
  func.func @transform_30(%arg0: i32) -> (i32, i32) {
    %c0_i32 = arith.constant 0 : i32
    %c0_i32_0 = arith.constant 0 : i32
    %c0_i32_1 = arith.constant 0 : i32
    return %c0_i32, %c0_i32_0 : i32, i32
  }
  func.func @transform_31(%arg0: i32) -> (i32, i32) {
    %c0_i32 = arith.constant 0 : i32
    %c0_i32_0 = arith.constant 0 : i32
    %c0_i32_1 = arith.constant 0 : i32
    return %c0_i32, %c0_i32_0 : i32, i32
  }
  func.func @transform_32(%arg0: i32) -> (i32, i32) {
    %c0_i32 = arith.constant 0 : i32
    %c0_i32_0 = arith.constant 0 : i32
    %c0_i32_1 = arith.constant 0 : i32
    return %c0_i32, %c0_i32_0 : i32, i32
  }
  func.func @transform_33(%arg0: i32) -> (i32, i32) {
    %c0_i32 = arith.constant 0 : i32
    %c0_i32_0 = arith.constant 0 : i32
    %c0_i32_1 = arith.constant 0 : i32
    return %c0_i32, %c0_i32_0 : i32, i32
  }
  func.func @transform_34(%arg0: i32) -> (i32, i32) {
    %c0_i32 = arith.constant 0 : i32
    %c0_i32_0 = arith.constant 0 : i32
    %c0_i32_1 = arith.constant 0 : i32
    return %c0_i32, %c0_i32_0 : i32, i32
  }
  func.func @transform_35(%arg0: i32) -> (i32, i32) {
    %c0_i32 = arith.constant 0 : i32
    %c0_i32_0 = arith.constant 0 : i32
    %c0_i32_1 = arith.constant 0 : i32
    return %c0_i32, %c0_i32_0 : i32, i32
  }
  func.func @transform_36(%arg0: i32) -> (i32, i32) {
    %c0_i32 = arith.constant 0 : i32
    %c0_i32_0 = arith.constant 0 : i32
    %c0_i32_1 = arith.constant 0 : i32
    return %c0_i32, %c0_i32_0 : i32, i32
  }
  func.func @transform_37(%arg0: i32) -> (i32, i32) {
    %c0_i32 = arith.constant 0 : i32
    %c0_i32_0 = arith.constant 0 : i32
    %c0_i32_1 = arith.constant 0 : i32
    return %c0_i32, %c0_i32_0 : i32, i32
  }
  func.func @transform_38(%arg0: i32) -> (i32, i32) {
    %c0_i32 = arith.constant 0 : i32
    %c0_i32_0 = arith.constant 0 : i32
    %c0_i32_1 = arith.constant 0 : i32
    return %c0_i32, %c0_i32_0 : i32, i32
  }
  func.func @transform_39(%arg0: i32) -> (i32, i32) {
    %c0_i32 = arith.constant 0 : i32
    %c0_i32_0 = arith.constant 0 : i32
    %c0_i32_1 = arith.constant 0 : i32
    return %c0_i32, %c0_i32_0 : i32, i32
  }
  func.func @transform_40(%arg0: i32) -> (i32, i32) {
    %c0_i32 = arith.constant 0 : i32
    %c0_i32_0 = arith.constant 0 : i32
    %c0_i32_1 = arith.constant 0 : i32
    return %c0_i32, %c0_i32_0 : i32, i32
  }
  func.func @transform_41(%arg0: i32) -> (i32, i32) {
    %c0_i32 = arith.constant 0 : i32
    %c0_i32_0 = arith.constant 0 : i32
    %c0_i32_1 = arith.constant 0 : i32
    return %c0_i32, %c0_i32_0 : i32, i32
  }
  func.func @transform_42(%arg0: i32) -> (i32, i32) {
    %c0_i32 = arith.constant 0 : i32
    %c0_i32_0 = arith.constant 0 : i32
    %c0_i32_1 = arith.constant 0 : i32
    return %c0_i32, %c0_i32_0 : i32, i32
  }
  func.func @transform_43(%arg0: i32) -> (i32, i32) {
    %c0_i32 = arith.constant 0 : i32
    %c0_i32_0 = arith.constant 0 : i32
    %c0_i32_1 = arith.constant 0 : i32
    return %c0_i32, %c0_i32_0 : i32, i32
  }
  func.func @transform_44(%arg0: i32) -> (i32, i32) {
    %c0_i32 = arith.constant 0 : i32
    %c0_i32_0 = arith.constant 0 : i32
    %c0_i32_1 = arith.constant 0 : i32
    return %c0_i32, %c0_i32_0 : i32, i32
  }
  func.func @transform_45(%arg0: i32) -> (i32, i32) {
    %c0_i32 = arith.constant 0 : i32
    %c0_i32_0 = arith.constant 0 : i32
    %c0_i32_1 = arith.constant 0 : i32
    return %c0_i32, %c0_i32_0 : i32, i32
  }
  func.func @transform_46(%arg0: i32) -> (i32, i32) {
    %c0_i32 = arith.constant 0 : i32
    %c0_i32_0 = arith.constant 0 : i32
    %c0_i32_1 = arith.constant 0 : i32
    return %c0_i32, %c0_i32_0 : i32, i32
  }
  func.func @transform_47(%arg0: i32) -> (i32, i32, i32) {
    %c0_i32 = arith.constant 0 : i32
    %c0_i32_0 = arith.constant 0 : i32
    %c0_i32_1 = arith.constant 0 : i32
    return %arg0, %c0_i32, %c0_i32_0 : i32, i32, i32
  }
}

</mosaic_0001>

<llo_original>
// kernel: _lambda_.1
$region0: #{_lambda_.1}
  #allocation0 [shape = 'u32[]', space=smem, size = 0x4, offset = 0x4, fixed_abs, tag = 'smem constant byte address 0x4 - core index']
  #allocation1 [shape = 'u32[144,128]{1,0:T(1,128)}', space=vmem, size = 0x12000, scoped, tag = 'internal scratch']
  #allocation2 [shape = 'f32[1,1]{1,0:T(1,128)S(1)}', space=vmem, size = 0x200, scoped, tag = 'scoped memory for _lambda_.1']
  %s0 = inlined_call_operand.smem [shape: u32[48], index: -1, kind: input, shape index: {}]
  %s1 = sld [smem:[%s0]]
  %s2 = scalar_lea.smem %s0, 1
  %s3 = sld [smem:[%s2]]
  %s4 = scalar_lea.smem %s0, 2
  %s5 = sld [smem:[%s4]]
  %s6 = scalar_lea.smem %s0, 3
  %s7 = sld [smem:[%s6]]
  %s8 = scalar_lea.smem %s0, 4
  %s9 = sld [smem:[%s8]]
  %s10 = scalar_lea.smem %s0, 5
  %s11 = sld [smem:[%s10]]
  %s12 = scalar_lea.smem %s0, 6
  %s13 = sld [smem:[%s12]]
  %s14 = scalar_lea.smem %s0, 7
  %s15 = sld [smem:[%s14]]
  %s16 = scalar_lea.smem %s0, 8
  %s17 = sld [smem:[%s16]]
  %s18 = scalar_lea.smem %s0, 9
  %s19 = sld [smem:[%s18]]
  %s20 = scalar_lea.smem %s0, 10
  %s21 = sld [smem:[%s20]]
  %s22 = scalar_lea.smem %s0, 11
  %s23 = sld [smem:[%s22]]
  %s24 = scalar_lea.smem %s0, 12
  %s25 = sld [smem:[%s24]]
  %s26 = scalar_lea.smem %s0, 13
  %s27 = sld [smem:[%s26]]
  %s28 = scalar_lea.smem %s0, 14
  %s29 = sld [smem:[%s28]]
  %s30 = scalar_lea.smem %s0, 15
  %s31 = sld [smem:[%s30]]
  %s32 = scalar_lea.smem %s0, 16
  %s33 = sld [smem:[%s32]]
  %s34 = scalar_lea.smem %s0, 17
  %s35 = sld [smem:[%s34]]
  %s36 = scalar_lea.smem %s0, 18
  %s37 = sld [smem:[%s36]]
  %s38 = scalar_lea.smem %s0, 19
  %s39 = sld [smem:[%s38]]
  %s40 = scalar_lea.smem %s0, 20
  %s41 = sld [smem:[%s40]]
  %s42 = scalar_lea.smem %s0, 21
  %s43 = sld [smem:[%s42]]
  %s44 = scalar_lea.smem %s0, 22
  %s45 = sld [smem:[%s44]]
  %s46 = scalar_lea.smem %s0, 23
  %s47 = sld [smem:[%s46]]
  %s48 = scalar_lea.smem %s0, 24
  %s49 = sld [smem:[%s48]]
  %s50 = scalar_lea.smem %s0, 25
  %s51 = sld [smem:[%s50]]
  %s52 = scalar_lea.smem %s0, 26
  %s53 = sld [smem:[%s52]]
  %s54 = scalar_lea.smem %s0, 27
  %s55 = sld [smem:[%s54]]
  %s56 = scalar_lea.smem %s0, 28
  %s57 = sld [smem:[%s56]]
  %s58 = scalar_lea.smem %s0, 29
  %s59 = sld [smem:[%s58]]
  %s60 = scalar_lea.smem %s0, 30
  %s61 = sld [smem:[%s60]]
  %s62 = scalar_lea.smem %s0, 31
  %s63 = sld [smem:[%s62]]
  %s64 = scalar_lea.smem %s0, 32
  %s65 = sld [smem:[%s64]]
  %s66 = scalar_lea.smem %s0, 33
  %s67 = sld [smem:[%s66]]
  %s68 = scalar_lea.smem %s0, 34
  %s69 = sld [smem:[%s68]]
  %s70 = scalar_lea.smem %s0, 35
  %s71 = sld [smem:[%s70]]
  %s72 = scalar_lea.smem %s0, 36
  %s73 = sld [smem:[%s72]]
  %s74 = scalar_lea.smem %s0, 37
  %s75 = sld [smem:[%s74]]
  %s76 = scalar_lea.smem %s0, 38
  %s77 = sld [smem:[%s76]]
  %s78 = scalar_lea.smem %s0, 39
  %s79 = sld [smem:[%s78]]
  %s80 = scalar_lea.smem %s0, 40
  %s81 = sld [smem:[%s80]]
  %s82 = scalar_lea.smem %s0, 41
  %s83 = sld [smem:[%s82]]
  %s84 = scalar_lea.smem %s0, 42
  %s85 = sld [smem:[%s84]]
  %s86 = scalar_lea.smem %s0, 43
  %s87 = sld [smem:[%s86]]
  %s88 = scalar_lea.smem %s0, 44
  %s89 = sld [smem:[%s88]]
  %s90 = scalar_lea.smem %s0, 45
  %s91 = sld [smem:[%s90]]
  %s92 = scalar_lea.smem %s0, 46
  %s93 = sld [smem:[%s92]]
  %s94 = scalar_lea.smem %s0, 47
  %s95 = sld [smem:[%s94]]
  %s96 = sld [smem:[#allocation0]]
  $region341: #{_lambda_.1} parent=0
    _
  %s98 = ssub.s32 1, %s96
  %s99 = scalar_select 0, %s98, %s96
  %v100 = vstv %s93
  %101 = vst [vmem:[#allocation2] sm:$0x1] %v100
  $region1: #{_lambda_.1} parent=0
    #allocation3 [shape = 'u8[4096]{0}', space=vmem, size = 0x1000, scoped, tag = 'input window, operand 1, single buffered']
    #allocation4 [shape = 's32[2]{0}', space=sflag, size = 0x8, scoped, tag = 'scoped memory for _lambda_.1']
    #allocation5 [shape = 'u8[4096]{0}', space=vmem, size = 0x1000, scoped, tag = 'input window, operand 2, single buffered']
    #allocation6 [shape = 's32[1]{0}', space=sflag, size = 0x4, scoped, tag = 'scoped memory for _lambda_.1']
    #allocation7 [shape = 'u8[16384]{0}', space=vmem, size = 0x4000, scoped, tag = 'input window, operand 3, single buffered']
    #allocation8 [shape = 'u8[512]{0}', space=vmem, size = 0x400, scoped, tag = 'input window, operand 4, single buffered']
    #allocation9 [shape = 's32[1]{0}', space=sflag, size = 0x4, scoped, tag = 'scoped memory for _lambda_.1']
    #allocation10 [shape = 'u8[16384]{0}', space=vmem, size = 0x4000, scoped, tag = 'input window, operand 5, single buffered']
    #allocation11 [shape = 'u8[512]{0}', space=vmem, size = 0x400, scoped, tag = 'input window, operand 6, single buffered']
    #allocation12 [shape = 's32[1]{0}', space=sflag, size = 0x4, scoped, tag = 'scoped memory for _lambda_.1']
    #allocation13 [shape = 'u8[16384]{0}', space=vmem, size = 0x4000, scoped, tag = 'input window, operand 9, single buffered']
    #allocation14 [shape = 'u8[512]{0}', space=vmem, size = 0x400, scoped, tag = 'input window, operand 10, single buffered']
    #allocation15 [shape = 's32[1]{0}', space=sflag, size = 0x4, scoped, tag = 'scoped memory for _lambda_.1']
    #allocation16 [shape = 'u8[32768]{0}', space=vmem, size = 0x8000, scoped, tag = 'input window, operand 11, single buffered']
    #allocation17 [shape = 'u8[512]{0}', space=vmem, size = 0x400, scoped, tag = 'input window, operand 12, single buffered']
    #allocation18 [shape = 's32[1]{0}', space=sflag, size = 0x4, scoped, tag = 'scoped memory for _lambda_.1']
    #allocation19 [shape = 'u8[16384]{0}', space=vmem, size = 0x4000, scoped, tag = 'input window, operand 15, single buffered']
    #allocation20 [shape = 'u8[512]{0}', space=vmem, size = 0x400, scoped, tag = 'input window, operand 16, single buffered']
    #allocation21 [shape = 's32[1]{0}', space=sflag, size = 0x4, scoped, tag = 'scoped memory for _lambda_.1']
    #allocation22 [shape = 'u8[16384]{0}', space=vmem, size = 0x4000, scoped, tag = 'input window, operand 17, single buffered']
    #allocation23 [shape = 'u8[512]{0}', space=vmem, size = 0x400, scoped, tag = 'input window, operand 18, single buffered']
    #allocation24 [shape = 's32[1]{0}', space=sflag, size = 0x4, scoped, tag = 'scoped memory for _lambda_.1']
    #allocation25 [shape = 'u8[16384]{0}', space=vmem, size = 0x4000, scoped, tag = 'input window, operand 21, single buffered']
    #allocation26 [shape = 'u8[512]{0}', space=vmem, size = 0x400, scoped, tag = 'input window, operand 22, single buffered']
    #allocation27 [shape = 's32[1]{0}', space=sflag, size = 0x4, scoped, tag = 'scoped memory for _lambda_.1']
    #allocation28 [shape = 'u8[16384]{0}', space=vmem, size = 0x4000, scoped, tag = 'input window, operand 23, single buffered']
    #allocation29 [shape = 'u8[512]{0}', space=vmem, size = 0x400, scoped, tag = 'input window, operand 24, single buffered']
    #allocation30 [shape = 's32[1]{0}', space=sflag, size = 0x4, scoped, tag = 'scoped memory for _lambda_.1']
    #allocation31 [shape = 'u8[16384]{0}', space=vmem, size = 0x4000, scoped, tag = 'input window, operand 25, single buffered']
    #allocation32 [shape = 'u8[512]{0}', space=vmem, size = 0x400, scoped, tag = 'input window, operand 26, single buffered']
    #allocation33 [shape = 's32[1]{0}', space=sflag, size = 0x4, scoped, tag = 'scoped memory for _lambda_.1']
    #allocation34 [shape = 'u8[16384]{0}', space=vmem, size = 0x4000, scoped, tag = 'input window, operand 29, single buffered']
    #allocation35 [shape = 'u8[512]{0}', space=vmem, size = 0x400, scoped, tag = 'input window, operand 30, single buffered']
    #allocation36 [shape = 's32[1]{0}', space=sflag, size = 0x4, scoped, tag = 'scoped memory for _lambda_.1']
    #allocation37 [shape = 'u8[512]{0}', space=vmem, size = 0x400, scoped, tag = 'input window, operand 32, single buffered']
    #allocation38 [shape = 'u8[16384]{0}', space=vmem, size = 0x4000, scoped, tag = 'input window, operand 35, single buffered']
    #allocation39 [shape = 's32[1]{0}', space=sflag, size = 0x4, scoped, tag = 'scoped memory for _lambda_.1']
    #allocation40 [shape = 'u8[512]{0}', space=vmem, size = 0x400, scoped, tag = 'input window, operand 36, single buffered']
    #allocation41 [shape = 'u8[512]{0}', space=vmem, size = 0x400, scoped, tag = 'input window, operand 38, single buffered']
    #allocation42 [shape = 's32[1]{0}', space=sflag, size = 0x4, scoped, tag = 'scoped memory for _lambda_.1']
    #allocation43 [shape = 'u8[12288]{0}', space=vmem, size = 0x3000, scoped, tag = 'input window, operand 39, single buffered']
    #allocation44 [shape = 'u8[512]{0}', space=vmem, size = 0x400, scoped, tag = 'input window, operand 40, single buffered']
    #allocation45 [shape = 's32[1]{0}', space=sflag, size = 0x4, scoped, tag = 'scoped memory for _lambda_.1']
    #allocation46 [shape = 'u8[4096]{0}', space=vmem, size = 0x1000, scoped, tag = 'input window, operand 41, single buffered']
    #allocation47 [shape = 'u8[512]{0}', space=vmem, size = 0x400, scoped, tag = 'input window, operand 42, single buffered']
    #allocation48 [shape = 's32[1]{0}', space=sflag, size = 0x4, scoped, tag = 'scoped memory for _lambda_.1']
    %102 = vsyncpa [#allocation4], 0
    %103 = vsyncpa [#allocation6], 0
    %104 = vsyncpa [#allocation9], 0
    %105 = vsyncpa [#allocation12], 0
    %106 = vsyncpa [#allocation15], 0
    %107 = vsyncpa [#allocation18], 0
    %108 = vsyncpa [#allocation21], 0
    %109 = vsyncpa [#allocation24], 0
    %110 = vsyncpa [#allocation27], 0
    %111 = vsyncpa [#allocation30], 0
    %112 = vsyncpa [#allocation33], 0
    %113 = vsyncpa [#allocation36], 0
    %114 = vsyncpa [#allocation39], 0
    %115 = vsyncpa [#allocation42], 0
    %116 = vsyncpa [#allocation45], 0
    %117 = vsyncpa [#allocation48], 0
    loop: start=0, step=1, limit=4
    $region2: #{_lambda_.1} parent=1 // loop_pre_header
      _
    $region3: #{_lambda_.1} parent=1 // loop_header
      %s119 = sphi 0, %s123
      %p120 = scmp.ge.s32.totalorder %s119, 4
      %s129 = sphi 0, %s131
      %s132 = sphi 0, %s129
      %s133 = sphi 0, %s132
      %s149 = sphi 0, %s133
      %s153 = sphi 0, %s153
      %s155 = sphi 0, %s153
      %s156 = sphi 0, %s155
      %s170 = sphi 0, %s156
      %s174 = sphi 0, %s174
      %s176 = sphi 0, %s174
      %s177 = sphi 0, %s176
      %s191 = sphi 0, %s177
      %s195 = sphi 0, %s195
      %s197 = sphi 0, %s195
      %s198 = sphi 0, %s197
      %s212 = sphi 0, %s198
      %s216 = sphi 0, %s216
      %s218 = sphi 0, %s216
      %s219 = sphi 0, %s218
      %s233 = sphi 0, %s219
      %s237 = sphi 0, %s237
      %s239 = sphi 0, %s237
      %s240 = sphi 0, %s239
      %s254 = sphi 0, %s240
      %s258 = sphi 0, %s258
      %s260 = sphi 0, %s258
      %s261 = sphi 0, %s260
      %s275 = sphi 0, %s261
      %s279 = sphi 0, %s279
      %s281 = sphi 0, %s279
      %s282 = sphi 0, %s281
      %s296 = sphi 0, %s282
      %s300 = sphi 0, %s300
      %s302 = sphi 0, %s300
      %s303 = sphi 0, %s302
      %s317 = sphi 0, %s303
      %s321 = sphi 0, %s321
      %s323 = sphi 0, %s321
      %s324 = sphi 0, %s323
      %s338 = sphi 0, %s324
      %s342 = sphi 0, %s342
      %s344 = sphi 0, %s342
      %s345 = sphi 0, %s344
      %s359 = sphi 0, %s345
      %s363 = sphi 0, %s363
      %s365 = sphi 0, %s363
      %s366 = sphi 0, %s365
      %s380 = sphi 0, %s366
      %s384 = sphi 0, %s384
      %s386 = sphi 0, %s384
      %s387 = sphi 0, %s386
      %s401 = sphi 0, %s387
      %s405 = sphi 0, %s405
      %s407 = sphi 0, %s405
      %s408 = sphi 0, %s407
      %s422 = sphi 0, %s408
      %s426 = sphi 0, %s426
      %s428 = sphi 0, %s426
      %s429 = sphi 0, %s428
      %s443 = sphi 0, %s429
      %s447 = sphi 0, %s447
      %s449 = sphi 0, %s447
      %s450 = sphi 0, %s449
      %s464 = sphi 0, %s450
      %s468 = sphi 0, %s468
      %s470 = sphi 0, %s468
      %s471 = sphi 0, %s470
      %s485 = sphi 0, %s471
      %s489 = sphi 0, %s489
      %s491 = sphi 0, %s489
      %s492 = sphi 0, %s491
      %s506 = sphi 0, %s492
      %s510 = sphi 0, %s510
      %s512 = sphi 0, %s510
      %s513 = sphi 0, %s512
      %s527 = sphi 0, %s513
      %s531 = sphi 0, %s531
      %s533 = sphi 0, %s531
      %s534 = sphi 0, %s533
      %s548 = sphi 0, %s534
      %s552 = sphi 0, %s552
      %s554 = sphi 0, %s552
      %s555 = sphi 0, %s554
      %s569 = sphi 0, %s555
      %s573 = sphi 0, %s573
      %s575 = sphi 0, %s573
      %s576 = sphi 0, %s575
      %s590 = sphi 0, %s576
      %s594 = sphi 0, %s594
      %s596 = sphi 0, %s594
      %s597 = sphi 0, %s596
      %s611 = sphi 0, %s597
      %s615 = sphi 0, %s615
      %s617 = sphi 0, %s615
      %s618 = sphi 0, %s617
      %s632 = sphi 0, %s618
      %s636 = sphi 0, %s636
      %s638 = sphi 0, %s636
      %s639 = sphi 0, %s638
      %s653 = sphi 0, %s639
      %s657 = sphi 0, %s657
      %s659 = sphi 0, %s657
      %s660 = sphi 0, %s659
      %s674 = sphi 0, %s660
      %s678 = sphi 0, %s678
      %s680 = sphi 0, %s678
      %s681 = sphi 0, %s680
      %s695 = sphi 0, %s681
      %s699 = sphi 0, %s699
      %s701 = sphi 0, %s699
      %s702 = sphi 0, %s701
      %s716 = sphi 0, %s702
      %s720 = sphi 0, %s720
      %s722 = sphi 0, %s720
      %s723 = sphi 0, %s722
      %s737 = sphi 0, %s723
      %s741 = sphi 0, %s741
      %s743 = sphi 0, %s741
      %s744 = sphi 0, %s743
      %s758 = sphi 0, %s744
      %s762 = sphi 0, %s762
      %s764 = sphi 0, %s762
      %s765 = sphi 0, %s764
      %s779 = sphi 0, %s765
      %s783 = sphi 0, %s783
      %s785 = sphi 0, %s783
      %s786 = sphi 0, %s785
      %s800 = sphi 0, %s786
      %s804 = sphi 0, %s804
      %s806 = sphi 0, %s804
      %s807 = sphi 0, %s806
      %s821 = sphi 0, %s807
      %s825 = sphi 0, %s825
      %s827 = sphi 0, %s825
      %s828 = sphi 0, %s827
      %s842 = sphi 0, %s828
      %s846 = sphi 0, %s846
      %s848 = sphi 0, %s846
      %s849 = sphi 0, %s848
      %s863 = sphi 0, %s849
      %s867 = sphi 0, %s867
      %s869 = sphi 0, %s867
      %s870 = sphi 0, %s869
      %s884 = sphi 0, %s870
      %s888 = sphi 0, %s888
      %s890 = sphi 0, %s888
      %s891 = sphi 0, %s890
      %s905 = sphi 0, %s891
      %s909 = sphi 0, %s909
      %s911 = sphi 0, %s909
      %s912 = sphi 0, %s911
      %s926 = sphi 0, %s912
      %s930 = sphi 0, %s930
      %s932 = sphi 0, %s930
      %s933 = sphi 0, %s932
      %s947 = sphi 0, %s933
      %s951 = sphi 0, %s951
      %s953 = sphi 0, %s951
      %s954 = sphi 0, %s953
      %s968 = sphi 0, %s954
      %s972 = sphi 0, %s972
      %s974 = sphi 0, %s972
      %s975 = sphi 0, %s974
      %s989 = sphi 0, %s975
      %s993 = sphi 0, %s993
      %s995 = sphi 0, %s993
      %s996 = sphi 0, %s995
      %s1010 = sphi 0, %s996
      %s1014 = sphi 0, %s1014
      %s1016 = sphi 0, %s1014
      %s1017 = sphi 0, %s1016
      %s1031 = sphi 0, %s1017
      %s1035 = sphi 0, %s1035
      %s1037 = sphi 0, %s1035
      %s1038 = sphi 0, %s1037
      %s1052 = sphi 0, %s1038
      %s1056 = sphi 0, %s1056
      %s1058 = sphi 0, %s1056
      %s1059 = sphi 0, %s1058
      %s1073 = sphi 0, %s1059
      %s1077 = sphi 0, %s1077
      %s1079 = sphi 0, %s1077
      %s1080 = sphi 0, %s1079
      %s1094 = sphi 0, %s1080
      %s1098 = sphi 0, %s1098
      %s1100 = sphi 0, %s1098
      %s1101 = sphi 0, %s1100
      %s1115 = sphi 0, %s1101
      %s1121 = sphi 0, %s1123
      %s1124 = sphi 0, %s1121
      %s1125 = sphi 0, %s1124
      %s1141 = sphi 0, %s1125
    $region4: #{_lambda_.1} parent=1 // loop_header_branch
      %122 = sbr.rel (%p120) target = $region8
    $region5: #{_lambda_.1} parent=1 // loop_body
      %s124 = ssub.s32 %s119, 1
      %s125 = ssub.s32 %s119, 2
      %s126 = sadd.s32 %s119, 1
      %s127 = ssub.s32 %s119, %s126
      %p128 = scmp.eq.s32.totalorder %s127, 0
      %s130 = sadd.s32 %s129, 1
      %s131 = scalar_select %p128, %s129, %s130
      %p134 = pneg %p128
      %p135 = scmp.eq.s32.totalorder %s119, 1
      %p136 = por %p134, %p135
      %p137 = scmp.ne.s32.totalorder %s129, %s132
      %p138 = scmp.eq.s32.totalorder %s119, 0
      %p139 = por %p137, %p138
      %p140 = scmp.ne.s32.totalorder %s129, %s132
      %p141 = scmp.eq.s32.totalorder %s124, 1
      %p142 = por %p140, %p141
      %p143 = scmp.ne.s32.totalorder %s132, %s133
      %p144 = scmp.eq.s32.totalorder %s124, 0
      %p145 = por %p143, %p144
      %p146 = scmp.ne.s32.totalorder %s132, %s133
      %p147 = scmp.eq.s32.totalorder %s125, 1
      %p148 = por %p146, %p147
      %p150 = scmp.ne.s32.totalorder %s133, %s149
      %p151 = scmp.eq.s32.totalorder %s125, 0
      %p152 = por %p150, %p151
      %s154 = sadd.s32 %s153, 1
      %p157 = scmp.eq.s32.totalorder %s119, 1
      %p158 = scmp.ne.s32.totalorder %s153, %s155
      %p159 = scmp.eq.s32.totalorder %s119, 0
      %p160 = por %p158, %p159
      %p161 = scmp.ne.s32.totalorder %s153, %s155
      %p162 = scmp.eq.s32.totalorder %s124, 1
      %p163 = por %p161, %p162
      %p164 = scmp.ne.s32.totalorder %s155, %s156
      %p165 = scmp.eq.s32.totalorder %s124, 0
      %p166 = por %p164, %p165
      %p167 = scmp.ne.s32.totalorder %s155, %s156
      %p168 = scmp.eq.s32.totalorder %s125, 1
      %p169 = por %p167, %p168
      %p171 = scmp.ne.s32.totalorder %s156, %s170
      %p172 = scmp.eq.s32.totalorder %s125, 0
      %p173 = por %p171, %p172
      %s175 = sadd.s32 %s174, 1
      %p178 = scmp.eq.s32.totalorder %s119, 1
      %p179 = scmp.ne.s32.totalorder %s174, %s176
      %p180 = scmp.eq.s32.totalorder %s119, 0
      %p181 = por %p179, %p180
      %p182 = scmp.ne.s32.totalorder %s174, %s176
      %p183 = scmp.eq.s32.totalorder %s124, 1
      %p184 = por %p182, %p183
      %p185 = scmp.ne.s32.totalorder %s176, %s177
      %p186 = scmp.eq.s32.totalorder %s124, 0
      %p187 = por %p185, %p186
      %p188 = scmp.ne.s32.totalorder %s176, %s177
      %p189 = scmp.eq.s32.totalorder %s125, 1
      %p190 = por %p188, %p189
      %p192 = scmp.ne.s32.totalorder %s177, %s191
      %p193 = scmp.eq.s32.totalorder %s125, 0
      %p194 = por %p192, %p193
      %s196 = sadd.s32 %s195, 1
      %p199 = scmp.eq.s32.totalorder %s119, 1
      %p200 = scmp.ne.s32.totalorder %s195, %s197
      %p201 = scmp.eq.s32.totalorder %s119, 0
      %p202 = por %p200, %p201
      %p203 = scmp.ne.s32.totalorder %s195, %s197
      %p204 = scmp.eq.s32.totalorder %s124, 1
      %p205 = por %p203, %p204
      %p206 = scmp.ne.s32.totalorder %s197, %s198
      %p207 = scmp.eq.s32.totalorder %s124, 0
      %p208 = por %p206, %p207
      %p209 = scmp.ne.s32.totalorder %s197, %s198
      %p210 = scmp.eq.s32.totalorder %s125, 1
      %p211 = por %p209, %p210
      %p213 = scmp.ne.s32.totalorder %s198, %s212
      %p214 = scmp.eq.s32.totalorder %s125, 0
      %p215 = por %p213, %p214
      %s217 = sadd.s32 %s216, 1
      %p220 = scmp.eq.s32.totalorder %s119, 1
      %p221 = scmp.ne.s32.totalorder %s216, %s218
      %p222 = scmp.eq.s32.totalorder %s119, 0
      %p223 = por %p221, %p222
      %p224 = scmp.ne.s32.totalorder %s216, %s218
      %p225 = scmp.eq.s32.totalorder %s124, 1
      %p226 = por %p224, %p225
      %p227 = scmp.ne.s32.totalorder %s218, %s219
      %p228 = scmp.eq.s32.totalorder %s124, 0
      %p229 = por %p227, %p228
      %p230 = scmp.ne.s32.totalorder %s218, %s219
      %p231 = scmp.eq.s32.totalorder %s125, 1
      %p232 = por %p230, %p231
      %p234 = scmp.ne.s32.totalorder %s219, %s233
      %p235 = scmp.eq.s32.totalorder %s125, 0
      %p236 = por %p234, %p235
      %s238 = sadd.s32 %s237, 1
      %p241 = scmp.eq.s32.totalorder %s119, 1
      %p242 = scmp.ne.s32.totalorder %s237, %s239
      %p243 = scmp.eq.s32.totalorder %s119, 0
      %p244 = por %p242, %p243
      %p245 = scmp.ne.s32.totalorder %s237, %s239
      %p246 = scmp.eq.s32.totalorder %s124, 1
      %p247 = por %p245, %p246
      %p248 = scmp.ne.s32.totalorder %s239, %s240
      %p249 = scmp.eq.s32.totalorder %s124, 0
      %p250 = por %p248, %p249
      %p251 = scmp.ne.s32.totalorder %s239, %s240
      %p252 = scmp.eq.s32.totalorder %s125, 1
      %p253 = por %p251, %p252
      %p255 = scmp.ne.s32.totalorder %s240, %s254
      %p256 = scmp.eq.s32.totalorder %s125, 0
      %p257 = por %p255, %p256
      %s259 = sadd.s32 %s258, 1
      %p262 = scmp.eq.s32.totalorder %s119, 1
      %p263 = scmp.ne.s32.totalorder %s258, %s260
      %p264 = scmp.eq.s32.totalorder %s119, 0
      %p265 = por %p263, %p264
      %p266 = scmp.ne.s32.totalorder %s258, %s260
      %p267 = scmp.eq.s32.totalorder %s124, 1
      %p268 = por %p266, %p267
      %p269 = scmp.ne.s32.totalorder %s260, %s261
      %p270 = scmp.eq.s32.totalorder %s124, 0
      %p271 = por %p269, %p270
      %p272 = scmp.ne.s32.totalorder %s260, %s261
      %p273 = scmp.eq.s32.totalorder %s125, 1
      %p274 = por %p272, %p273
      %p276 = scmp.ne.s32.totalorder %s261, %s275
      %p277 = scmp.eq.s32.totalorder %s125, 0
      %p278 = por %p276, %p277
      %s280 = sadd.s32 %s279, 1
      %p283 = scmp.eq.s32.totalorder %s119, 1
      %p284 = scmp.ne.s32.totalorder %s279, %s281
      %p285 = scmp.eq.s32.totalorder %s119, 0
      %p286 = por %p284, %p285
      %p287 = scmp.ne.s32.totalorder %s279, %s281
      %p288 = scmp.eq.s32.totalorder %s124, 1
      %p289 = por %p287, %p288
      %p290 = scmp.ne.s32.totalorder %s281, %s282
      %p291 = scmp.eq.s32.totalorder %s124, 0
      %p292 = por %p290, %p291
      %p293 = scmp.ne.s32.totalorder %s281, %s282
      %p294 = scmp.eq.s32.totalorder %s125, 1
      %p295 = por %p293, %p294
      %p297 = scmp.ne.s32.totalorder %s282, %s296
      %p298 = scmp.eq.s32.totalorder %s125, 0
      %p299 = por %p297, %p298
      %s301 = sadd.s32 %s300, 1
      %p304 = scmp.eq.s32.totalorder %s119, 1
      %p305 = scmp.ne.s32.totalorder %s300, %s302
      %p306 = scmp.eq.s32.totalorder %s119, 0
      %p307 = por %p305, %p306
      %p308 = scmp.ne.s32.totalorder %s300, %s302
      %p309 = scmp.eq.s32.totalorder %s124, 1
      %p310 = por %p308, %p309
      %p311 = scmp.ne.s32.totalorder %s302, %s303
      %p312 = scmp.eq.s32.totalorder %s124, 0
      %p313 = por %p311, %p312
      %p314 = scmp.ne.s32.totalorder %s302, %s303
      %p315 = scmp.eq.s32.totalorder %s125, 1
      %p316 = por %p314, %p315
      %p318 = scmp.ne.s32.totalorder %s303, %s317
      %p319 = scmp.eq.s32.totalorder %s125, 0
      %p320 = por %p318, %p319
      %s322 = sadd.s32 %s321, 1
      %p325 = scmp.eq.s32.totalorder %s119, 1
      %p326 = scmp.ne.s32.totalorder %s321, %s323
      %p327 = scmp.eq.s32.totalorder %s119, 0
      %p328 = por %p326, %p327
      %p329 = scmp.ne.s32.totalorder %s321, %s323
      %p330 = scmp.eq.s32.totalorder %s124, 1
      %p331 = por %p329, %p330
      %p332 = scmp.ne.s32.totalorder %s323, %s324
      %p333 = scmp.eq.s32.totalorder %s124, 0
      %p334 = por %p332, %p333
      %p335 = scmp.ne.s32.totalorder %s323, %s324
      %p336 = scmp.eq.s32.totalorder %s125, 1
      %p337 = por %p335, %p336
      %p339 = scmp.ne.s32.totalorder %s324, %s338
      %p340 = scmp.eq.s32.totalorder %s125, 0
      %p341 = por %p339, %p340
      %s343 = sadd.s32 %s342, 1
      %p346 = scmp.eq.s32.totalorder %s119, 1
      %p347 = scmp.ne.s32.totalorder %s342, %s344
      %p348 = scmp.eq.s32.totalorder %s119, 0
      %p349 = por %p347, %p348
      %p350 = scmp.ne.s32.totalorder %s342, %s344
      %p351 = scmp.eq.s32.totalorder %s124, 1
      %p352 = por %p350, %p351
      %p353 = scmp.ne.s32.totalorder %s344, %s345
      %p354 = scmp.eq.s32.totalorder %s124, 0
      %p355 = por %p353, %p354
      %p356 = scmp.ne.s32.totalorder %s344, %s345
      %p357 = scmp.eq.s32.totalorder %s125, 1
      %p358 = por %p356, %p357
      %p360 = scmp.ne.s32.totalorder %s345, %s359
      %p361 = scmp.eq.s32.totalorder %s125, 0
      %p362 = por %p360, %p361
      %s364 = sadd.s32 %s363, 1
      %p367 = scmp.eq.s32.totalorder %s119, 1
      %p368 = scmp.ne.s32.totalorder %s363, %s365
      %p369 = scmp.eq.s32.totalorder %s119, 0
      %p370 = por %p368, %p369
      %p371 = scmp.ne.s32.totalorder %s363, %s365
      %p372 = scmp.eq.s32.totalorder %s124, 1
      %p373 = por %p371, %p372
      %p374 = scmp.ne.s32.totalorder %s365, %s366
      %p375 = scmp.eq.s32.totalorder %s124, 0
      %p376 = por %p374, %p375
      %p377 = scmp.ne.s32.totalorder %s365, %s366
      %p378 = scmp.eq.s32.totalorder %s125, 1
      %p379 = por %p377, %p378
      %p381 = scmp.ne.s32.totalorder %s366, %s380
      %p382 = scmp.eq.s32.totalorder %s125, 0
      %p383 = por %p381, %p382
      %s385 = sadd.s32 %s384, 1
      %p388 = scmp.eq.s32.totalorder %s119, 1
      %p389 = scmp.ne.s32.totalorder %s384, %s386
      %p390 = scmp.eq.s32.totalorder %s119, 0
      %p391 = por %p389, %p390
      %p392 = scmp.ne.s32.totalorder %s384, %s386
      %p393 = scmp.eq.s32.totalorder %s124, 1
      %p394 = por %p392, %p393
      %p395 = scmp.ne.s32.totalorder %s386, %s387
      %p396 = scmp.eq.s32.totalorder %s124, 0
      %p397 = por %p395, %p396
      %p398 = scmp.ne.s32.totalorder %s386, %s387
      %p399 = scmp.eq.s32.totalorder %s125, 1
      %p400 = por %p398, %p399
      %p402 = scmp.ne.s32.totalorder %s387, %s401
      %p403 = scmp.eq.s32.totalorder %s125, 0
      %p404 = por %p402, %p403
      %s406 = sadd.s32 %s405, 1
      %p409 = scmp.eq.s32.totalorder %s119, 1
      %p410 = scmp.ne.s32.totalorder %s405, %s407
      %p411 = scmp.eq.s32.totalorder %s119, 0
      %p412 = por %p410, %p411
      %p413 = scmp.ne.s32.totalorder %s405, %s407
      %p414 = scmp.eq.s32.totalorder %s124, 1
      %p415 = por %p413, %p414
      %p416 = scmp.ne.s32.totalorder %s407, %s408
      %p417 = scmp.eq.s32.totalorder %s124, 0
      %p418 = por %p416, %p417
      %p419 = scmp.ne.s32.totalorder %s407, %s408
      %p420 = scmp.eq.s32.totalorder %s125, 1
      %p421 = por %p419, %p420
      %p423 = scmp.ne.s32.totalorder %s408, %s422
      %p424 = scmp.eq.s32.totalorder %s125, 0
      %p425 = por %p423, %p424
      %s427 = sadd.s32 %s426, 1
      %p430 = scmp.eq.s32.totalorder %s119, 1
      %p431 = scmp.ne.s32.totalorder %s426, %s428
      %p432 = scmp.eq.s32.totalorder %s119, 0
      %p433 = por %p431, %p432
      %p434 = scmp.ne.s32.totalorder %s426, %s428
      %p435 = scmp.eq.s32.totalorder %s124, 1
      %p436 = por %p434, %p435
      %p437 = scmp.ne.s32.totalorder %s428, %s429
      %p438 = scmp.eq.s32.totalorder %s124, 0
      %p439 = por %p437, %p438
      %p440 = scmp.ne.s32.totalorder %s428, %s429
      %p441 = scmp.eq.s32.totalorder %s125, 1
      %p442 = por %p440, %p441
      %p444 = scmp.ne.s32.totalorder %s429, %s443
      %p445 = scmp.eq.s32.totalorder %s125, 0
      %p446 = por %p444, %p445
      %s448 = sadd.s32 %s447, 1
      %p451 = scmp.eq.s32.totalorder %s119, 1
      %p452 = scmp.ne.s32.totalorder %s447, %s449
      %p453 = scmp.eq.s32.totalorder %s119, 0
      %p454 = por %p452, %p453
      %p455 = scmp.ne.s32.totalorder %s447, %s449
      %p456 = scmp.eq.s32.totalorder %s124, 1
      %p457 = por %p455, %p456
      %p458 = scmp.ne.s32.totalorder %s449, %s450
      %p459 = scmp.eq.s32.totalorder %s124, 0
      %p460 = por %p458, %p459
      %p461 = scmp.ne.s32.totalorder %s449, %s450
      %p462 = scmp.eq.s32.totalorder %s125, 1
      %p463 = por %p461, %p462
      %p465 = scmp.ne.s32.totalorder %s450, %s464
      %p466 = scmp.eq.s32.totalorder %s125, 0
      %p467 = por %p465, %p466
      %s469 = sadd.s32 %s468, 1
      %p472 = scmp.eq.s32.totalorder %s119, 1
      %p473 = scmp.ne.s32.totalorder %s468, %s470
      %p474 = scmp.eq.s32.totalorder %s119, 0
      %p475 = por %p473, %p474
      %p476 = scmp.ne.s32.totalorder %s468, %s470
      %p477 = scmp.eq.s32.totalorder %s124, 1
      %p478 = por %p476, %p477
      %p479 = scmp.ne.s32.totalorder %s470, %s471
      %p480 = scmp.eq.s32.totalorder %s124, 0
      %p481 = por %p479, %p480
      %p482 = scmp.ne.s32.totalorder %s470, %s471
      %p483 = scmp.eq.s32.totalorder %s125, 1
      %p484 = por %p482, %p483
      %p486 = scmp.ne.s32.totalorder %s471, %s485
      %p487 = scmp.eq.s32.totalorder %s125, 0
      %p488 = por %p486, %p487
      %s490 = sadd.s32 %s489, 1
      %p493 = scmp.eq.s32.totalorder %s119, 1
      %p494 = scmp.ne.s32.totalorder %s489, %s491
      %p495 = scmp.eq.s32.totalorder %s119, 0
      %p496 = por %p494, %p495
      %p497 = scmp.ne.s32.totalorder %s489, %s491
      %p498 = scmp.eq.s32.totalorder %s124, 1
      %p499 = por %p497, %p498
      %p500 = scmp.ne.s32.totalorder %s491, %s492
      %p501 = scmp.eq.s32.totalorder %s124, 0
      %p502 = por %p500, %p501
      %p503 = scmp.ne.s32.totalorder %s491, %s492
      %p504 = scmp.eq.s32.totalorder %s125, 1
      %p505 = por %p503, %p504
      %p507 = scmp.ne.s32.totalorder %s492, %s506
      %p508 = scmp.eq.s32.totalorder %s125, 0
      %p509 = por %p507, %p508
      %s511 = sadd.s32 %s510, 1
      %p514 = scmp.eq.s32.totalorder %s119, 1
      %p515 = scmp.ne.s32.totalorder %s510, %s512
      %p516 = scmp.eq.s32.totalorder %s119, 0
      %p517 = por %p515, %p516
      %p518 = scmp.ne.s32.totalorder %s510, %s512
      %p519 = scmp.eq.s32.totalorder %s124, 1
      %p520 = por %p518, %p519
      %p521 = scmp.ne.s32.totalorder %s512, %s513
      %p522 = scmp.eq.s32.totalorder %s124, 0
      %p523 = por %p521, %p522
      %p524 = scmp.ne.s32.totalorder %s512, %s513
      %p525 = scmp.eq.s32.totalorder %s125, 1
      %p526 = por %p524, %p525
      %p528 = scmp.ne.s32.totalorder %s513, %s527
      %p529 = scmp.eq.s32.totalorder %s125, 0
      %p530 = por %p528, %p529
      %s532 = sadd.s32 %s531, 1
      %p535 = scmp.eq.s32.totalorder %s119, 1
      %p536 = scmp.ne.s32.totalorder %s531, %s533
      %p537 = scmp.eq.s32.totalorder %s119, 0
      %p538 = por %p536, %p537
      %p539 = scmp.ne.s32.totalorder %s531, %s533
      %p540 = scmp.eq.s32.totalorder %s124, 1
      %p541 = por %p539, %p540
      %p542 = scmp.ne.s32.totalorder %s533, %s534
      %p543 = scmp.eq.s32.totalorder %s124, 0
      %p544 = por %p542, %p543
      %p545 = scmp.ne.s32.totalorder %s533, %s534
      %p546 = scmp.eq.s32.totalorder %s125, 1
      %p547 = por %p545, %p546
      %p549 = scmp.ne.s32.totalorder %s534, %s548
      %p550 = scmp.eq.s32.totalorder %s125, 0
      %p551 = por %p549, %p550
      %s553 = sadd.s32 %s552, 1
      %p556 = scmp.eq.s32.totalorder %s119, 1
      %p557 = scmp.ne.s32.totalorder %s552, %s554
      %p558 = scmp.eq.s32.totalorder %s119, 0
      %p559 = por %p557, %p558
      %p560 = scmp.ne.s32.totalorder %s552, %s554
      %p561 = scmp.eq.s32.totalorder %s124, 1
      %p562 = por %p560, %p561
      %p563 = scmp.ne.s32.totalorder %s554, %s555
      %p564 = scmp.eq.s32.totalorder %s124, 0
      %p565 = por %p563, %p564
      %p566 = scmp.ne.s32.totalorder %s554, %s555
      %p567 = scmp.eq.s32.totalorder %s125, 1
      %p568 = por %p566, %p567
      %p570 = scmp.ne.s32.totalorder %s555, %s569
      %p571 = scmp.eq.s32.totalorder %s125, 0
      %p572 = por %p570, %p571
      %s574 = sadd.s32 %s573, 1
      %p577 = scmp.eq.s32.totalorder %s119, 1
      %p578 = scmp.ne.s32.totalorder %s573, %s575
      %p579 = scmp.eq.s32.totalorder %s119, 0
      %p580 = por %p578, %p579
      %p581 = scmp.ne.s32.totalorder %s573, %s575
      %p582 = scmp.eq.s32.totalorder %s124, 1
      %p583 = por %p581, %p582
      %p584 = scmp.ne.s32.totalorder %s575, %s576
      %p585 = scmp.eq.s32.totalorder %s124, 0
      %p586 = por %p584, %p585
      %p587 = scmp.ne.s32.totalorder %s575, %s576
      %p588 = scmp.eq.s32.totalorder %s125, 1
      %p589 = por %p587, %p588
      %p591 = scmp.ne.s32.totalorder %s576, %s590
      %p592 = scmp.eq.s32.totalorder %s125, 0
      %p593 = por %p591, %p592
      %s595 = sadd.s32 %s594, 1
      %p598 = scmp.eq.s32.totalorder %s119, 1
      %p599 = scmp.ne.s32.totalorder %s594, %s596
      %p600 = scmp.eq.s32.totalorder %s119, 0
      %p601 = por %p599, %p600
      %p602 = scmp.ne.s32.totalorder %s594, %s596
      %p603 = scmp.eq.s32.totalorder %s124, 1
      %p604 = por %p602, %p603
      %p605 = scmp.ne.s32.totalorder %s596, %s597
      %p606 = scmp.eq.s32.totalorder %s124, 0
      %p607 = por %p605, %p606
      %p608 = scmp.ne.s32.totalorder %s596, %s597
      %p609 = scmp.eq.s32.totalorder %s125, 1
      %p610 = por %p608, %p609
      %p612 = scmp.ne.s32.totalorder %s597, %s611
      %p613 = scmp.eq.s32.totalorder %s125, 0
      %p614 = por %p612, %p613
      %s616 = sadd.s32 %s615, 1
      %p619 = scmp.eq.s32.totalorder %s119, 1
      %p620 = scmp.ne.s32.totalorder %s615, %s617
      %p621 = scmp.eq.s32.totalorder %s119, 0
      %p622 = por %p620, %p621
      %p623 = scmp.ne.s32.totalorder %s615, %s617
      %p624 = scmp.eq.s32.totalorder %s124, 1
      %p625 = por %p623, %p624
      %p626 = scmp.ne.s32.totalorder %s617, %s618
      %p627 = scmp.eq.s32.totalorder %s124, 0
      %p628 = por %p626, %p627
      %p629 = scmp.ne.s32.totalorder %s617, %s618
      %p630 = scmp.eq.s32.totalorder %s125, 1
      %p631 = por %p629, %p630
      %p633 = scmp.ne.s32.totalorder %s618, %s632
      %p634 = scmp.eq.s32.totalorder %s125, 0
      %p635 = por %p633, %p634
      %s637 = sadd.s32 %s636, 1
      %p640 = scmp.eq.s32.totalorder %s119, 1
      %p641 = scmp.ne.s32.totalorder %s636, %s638
      %p642 = scmp.eq.s32.totalorder %s119, 0
      %p643 = por %p641, %p642
      %p644 = scmp.ne.s32.totalorder %s636, %s638
      %p645 = scmp.eq.s32.totalorder %s124, 1
      %p646 = por %p644, %p645
      %p647 = scmp.ne.s32.totalorder %s638, %s639
      %p648 = scmp.eq.s32.totalorder %s124, 0
      %p649 = por %p647, %p648
      %p650 = scmp.ne.s32.totalorder %s638, %s639
      %p651 = scmp.eq.s32.totalorder %s125, 1
      %p652 = por %p650, %p651
      %p654 = scmp.ne.s32.totalorder %s639, %s653
      %p655 = scmp.eq.s32.totalorder %s125, 0
      %p656 = por %p654, %p655
      %s658 = sadd.s32 %s657, 1
      %p661 = scmp.eq.s32.totalorder %s119, 1
      %p662 = scmp.ne.s32.totalorder %s657, %s659
      %p663 = scmp.eq.s32.totalorder %s119, 0
      %p664 = por %p662, %p663
      %p665 = scmp.ne.s32.totalorder %s657, %s659
      %p666 = scmp.eq.s32.totalorder %s124, 1
      %p667 = por %p665, %p666
      %p668 = scmp.ne.s32.totalorder %s659, %s660
      %p669 = scmp.eq.s32.totalorder %s124, 0
      %p670 = por %p668, %p669
      %p671 = scmp.ne.s32.totalorder %s659, %s660
      %p672 = scmp.eq.s32.totalorder %s125, 1
      %p673 = por %p671, %p672
      %p675 = scmp.ne.s32.totalorder %s660, %s674
      %p676 = scmp.eq.s32.totalorder %s125, 0
      %p677 = por %p675, %p676
      %s679 = sadd.s32 %s678, 1
      %p682 = scmp.eq.s32.totalorder %s119, 1
      %p683 = scmp.ne.s32.totalorder %s678, %s680
      %p684 = scmp.eq.s32.totalorder %s119, 0
      %p685 = por %p683, %p684
      %p686 = scmp.ne.s32.totalorder %s678, %s680
      %p687 = scmp.eq.s32.totalorder %s124, 1
      %p688 = por %p686, %p687
      %p689 = scmp.ne.s32.totalorder %s680, %s681
      %p690 = scmp.eq.s32.totalorder %s124, 0
      %p691 = por %p689, %p690
      %p692 = scmp.ne.s32.totalorder %s680, %s681
      %p693 = scmp.eq.s32.totalorder %s125, 1
      %p694 = por %p692, %p693
      %p696 = scmp.ne.s32.totalorder %s681, %s695
      %p697 = scmp.eq.s32.totalorder %s125, 0
      %p698 = por %p696, %p697
      %s700 = sadd.s32 %s699, 1
      %p703 = scmp.eq.s32.totalorder %s119, 1
      %p704 = scmp.ne.s32.totalorder %s699, %s701
      %p705 = scmp.eq.s32.totalorder %s119, 0
      %p706 = por %p704, %p705
      %p707 = scmp.ne.s32.totalorder %s699, %s701
      %p708 = scmp.eq.s32.totalorder %s124, 1
      %p709 = por %p707, %p708
      %p710 = scmp.ne.s32.totalorder %s701, %s702
      %p711 = scmp.eq.s32.totalorder %s124, 0
      %p712 = por %p710, %p711
      %p713 = scmp.ne.s32.totalorder %s701, %s702
      %p714 = scmp.eq.s32.totalorder %s125, 1
      %p715 = por %p713, %p714
      %p717 = scmp.ne.s32.totalorder %s702, %s716
      %p718 = scmp.eq.s32.totalorder %s125, 0
      %p719 = por %p717, %p718
      %s721 = sadd.s32 %s720, 1
      %p724 = scmp.eq.s32.totalorder %s119, 1
      %p725 = scmp.ne.s32.totalorder %s720, %s722
      %p726 = scmp.eq.s32.totalorder %s119, 0
      %p727 = por %p725, %p726
      %p728 = scmp.ne.s32.totalorder %s720, %s722
      %p729 = scmp.eq.s32.totalorder %s124, 1
      %p730 = por %p728, %p729
      %p731 = scmp.ne.s32.totalorder %s722, %s723
      %p732 = scmp.eq.s32.totalorder %s124, 0
      %p733 = por %p731, %p732
      %p734 = scmp.ne.s32.totalorder %s722, %s723
      %p735 = scmp.eq.s32.totalorder %s125, 1
      %p736 = por %p734, %p735
      %p738 = scmp.ne.s32.totalorder %s723, %s737
      %p739 = scmp.eq.s32.totalorder %s125, 0
      %p740 = por %p738, %p739
      %s742 = sadd.s32 %s741, 1
      %p745 = scmp.eq.s32.totalorder %s119, 1
      %p746 = scmp.ne.s32.totalorder %s741, %s743
      %p747 = scmp.eq.s32.totalorder %s119, 0
      %p748 = por %p746, %p747
      %p749 = scmp.ne.s32.totalorder %s741, %s743
      %p750 = scmp.eq.s32.totalorder %s124, 1
      %p751 = por %p749, %p750
      %p752 = scmp.ne.s32.totalorder %s743, %s744
      %p753 = scmp.eq.s32.totalorder %s124, 0
      %p754 = por %p752, %p753
      %p755 = scmp.ne.s32.totalorder %s743, %s744
      %p756 = scmp.eq.s32.totalorder %s125, 1
      %p757 = por %p755, %p756
      %p759 = scmp.ne.s32.totalorder %s744, %s758
      %p760 = scmp.eq.s32.totalorder %s125, 0
      %p761 = por %p759, %p760
      %s763 = sadd.s32 %s762, 1
      %p766 = scmp.eq.s32.totalorder %s119, 1
      %p767 = scmp.ne.s32.totalorder %s762, %s764
      %p768 = scmp.eq.s32.totalorder %s119, 0
      %p769 = por %p767, %p768
      %p770 = scmp.ne.s32.totalorder %s762, %s764
      %p771 = scmp.eq.s32.totalorder %s124, 1
      %p772 = por %p770, %p771
      %p773 = scmp.ne.s32.totalorder %s764, %s765
      %p774 = scmp.eq.s32.totalorder %s124, 0
      %p775 = por %p773, %p774
      %p776 = scmp.ne.s32.totalorder %s764, %s765
      %p777 = scmp.eq.s32.totalorder %s125, 1
      %p778 = por %p776, %p777
      %p780 = scmp.ne.s32.totalorder %s765, %s779
      %p781 = scmp.eq.s32.totalorder %s125, 0
      %p782 = por %p780, %p781
      %s784 = sadd.s32 %s783, 1
      %p787 = scmp.eq.s32.totalorder %s119, 1
      %p788 = scmp.ne.s32.totalorder %s783, %s785
      %p789 = scmp.eq.s32.totalorder %s119, 0
      %p790 = por %p788, %p789
      %p791 = scmp.ne.s32.totalorder %s783, %s785
      %p792 = scmp.eq.s32.totalorder %s124, 1
      %p793 = por %p791, %p792
      %p794 = scmp.ne.s32.totalorder %s785, %s786
      %p795 = scmp.eq.s32.totalorder %s124, 0
      %p796 = por %p794, %p795
      %p797 = scmp.ne.s32.totalorder %s785, %s786
      %p798 = scmp.eq.s32.totalorder %s125, 1
      %p799 = por %p797, %p798
      %p801 = scmp.ne.s32.totalorder %s786, %s800
      %p802 = scmp.eq.s32.totalorder %s125, 0
      %p803 = por %p801, %p802
      %s805 = sadd.s32 %s804, 1
      %p808 = scmp.eq.s32.totalorder %s119, 1
      %p809 = scmp.ne.s32.totalorder %s804, %s806
      %p810 = scmp.eq.s32.totalorder %s119, 0
      %p811 = por %p809, %p810
      %p812 = scmp.ne.s32.totalorder %s804, %s806
      %p813 = scmp.eq.s32.totalorder %s124, 1
      %p814 = por %p812, %p813
      %p815 = scmp.ne.s32.totalorder %s806, %s807
      %p816 = scmp.eq.s32.totalorder %s124, 0
      %p817 = por %p815, %p816
      %p818 = scmp.ne.s32.totalorder %s806, %s807
      %p819 = scmp.eq.s32.totalorder %s125, 1
      %p820 = por %p818, %p819
      %p822 = scmp.ne.s32.totalorder %s807, %s821
      %p823 = scmp.eq.s32.totalorder %s125, 0
      %p824 = por %p822, %p823
      %s826 = sadd.s32 %s825, 1
      %p829 = scmp.eq.s32.totalorder %s119, 1
      %p830 = scmp.ne.s32.totalorder %s825, %s827
      %p831 = scmp.eq.s32.totalorder %s119, 0
      %p832 = por %p830, %p831
      %p833 = scmp.ne.s32.totalorder %s825, %s827
      %p834 = scmp.eq.s32.totalorder %s124, 1
      %p835 = por %p833, %p834
      %p836 = scmp.ne.s32.totalorder %s827, %s828
      %p837 = scmp.eq.s32.totalorder %s124, 0
      %p838 = por %p836, %p837
      %p839 = scmp.ne.s32.totalorder %s827, %s828
      %p840 = scmp.eq.s32.totalorder %s125, 1
      %p841 = por %p839, %p840
      %p843 = scmp.ne.s32.totalorder %s828, %s842
      %p844 = scmp.eq.s32.totalorder %s125, 0
      %p845 = por %p843, %p844
      %s847 = sadd.s32 %s846, 1
      %p850 = scmp.eq.s32.totalorder %s119, 1
      %p851 = scmp.ne.s32.totalorder %s846, %s848
      %p852 = scmp.eq.s32.totalorder %s119, 0
      %p853 = por %p851, %p852
      %p854 = scmp.ne.s32.totalorder %s846, %s848
      %p855 = scmp.eq.s32.totalorder %s124, 1
      %p856 = por %p854, %p855
      %p857 = scmp.ne.s32.totalorder %s848, %s849
      %p858 = scmp.eq.s32.totalorder %s124, 0
      %p859 = por %p857, %p858
      %p860 = scmp.ne.s32.totalorder %s848, %s849
      %p861 = scmp.eq.s32.totalorder %s125, 1
      %p862 = por %p860, %p861
      %p864 = scmp.ne.s32.totalorder %s849, %s863
      %p865 = scmp.eq.s32.totalorder %s125, 0
      %p866 = por %p864, %p865
      %s868 = sadd.s32 %s867, 1
      %p871 = scmp.eq.s32.totalorder %s119, 1
      %p872 = scmp.ne.s32.totalorder %s867, %s869
      %p873 = scmp.eq.s32.totalorder %s119, 0
      %p874 = por %p872, %p873
      %p875 = scmp.ne.s32.totalorder %s867, %s869
      %p876 = scmp.eq.s32.totalorder %s124, 1
      %p877 = por %p875, %p876
      %p878 = scmp.ne.s32.totalorder %s869, %s870
      %p879 = scmp.eq.s32.totalorder %s124, 0
      %p880 = por %p878, %p879
      %p881 = scmp.ne.s32.totalorder %s869, %s870
      %p882 = scmp.eq.s32.totalorder %s125, 1
      %p883 = por %p881, %p882
      %p885 = scmp.ne.s32.totalorder %s870, %s884
      %p886 = scmp.eq.s32.totalorder %s125, 0
      %p887 = por %p885, %p886
      %s889 = sadd.s32 %s888, 1
      %p892 = scmp.eq.s32.totalorder %s119, 1
      %p893 = scmp.ne.s32.totalorder %s888, %s890
      %p894 = scmp.eq.s32.totalorder %s119, 0
      %p895 = por %p893, %p894
      %p896 = scmp.ne.s32.totalorder %s888, %s890
      %p897 = scmp.eq.s32.totalorder %s124, 1
      %p898 = por %p896, %p897
      %p899 = scmp.ne.s32.totalorder %s890, %s891
      %p900 = scmp.eq.s32.totalorder %s124, 0
      %p901 = por %p899, %p900
      %p902 = scmp.ne.s32.totalorder %s890, %s891
      %p903 = scmp.eq.s32.totalorder %s125, 1
      %p904 = por %p902, %p903
      %p906 = scmp.ne.s32.totalorder %s891, %s905
      %p907 = scmp.eq.s32.totalorder %s125, 0
      %p908 = por %p906, %p907
      %s910 = sadd.s32 %s909, 1
      %p913 = scmp.eq.s32.totalorder %s119, 1
      %p914 = scmp.ne.s32.totalorder %s909, %s911
      %p915 = scmp.eq.s32.totalorder %s119, 0
      %p916 = por %p914, %p915
      %p917 = scmp.ne.s32.totalorder %s909, %s911
      %p918 = scmp.eq.s32.totalorder %s124, 1
      %p919 = por %p917, %p918
      %p920 = scmp.ne.s32.totalorder %s911, %s912
      %p921 = scmp.eq.s32.totalorder %s124, 0
      %p922 = por %p920, %p921
      %p923 = scmp.ne.s32.totalorder %s911, %s912
      %p924 = scmp.eq.s32.totalorder %s125, 1
      %p925 = por %p923, %p924
      %p927 = scmp.ne.s32.totalorder %s912, %s926
      %p928 = scmp.eq.s32.totalorder %s125, 0
      %p929 = por %p927, %p928
      %s931 = sadd.s32 %s930, 1
      %p934 = scmp.eq.s32.totalorder %s119, 1
      %p935 = scmp.ne.s32.totalorder %s930, %s932
      %p936 = scmp.eq.s32.totalorder %s119, 0
      %p937 = por %p935, %p936
      %p938 = scmp.ne.s32.totalorder %s930, %s932
      %p939 = scmp.eq.s32.totalorder %s124, 1
      %p940 = por %p938, %p939
      %p941 = scmp.ne.s32.totalorder %s932, %s933
      %p942 = scmp.eq.s32.totalorder %s124, 0
      %p943 = por %p941, %p942
      %p944 = scmp.ne.s32.totalorder %s932, %s933
      %p945 = scmp.eq.s32.totalorder %s125, 1
      %p946 = por %p944, %p945
      %p948 = scmp.ne.s32.totalorder %s933, %s947
      %p949 = scmp.eq.s32.totalorder %s125, 0
      %p950 = por %p948, %p949
      %s952 = sadd.s32 %s951, 1
      %p955 = scmp.eq.s32.totalorder %s119, 1
      %p956 = scmp.ne.s32.totalorder %s951, %s953
      %p957 = scmp.eq.s32.totalorder %s119, 0
      %p958 = por %p956, %p957
      %p959 = scmp.ne.s32.totalorder %s951, %s953
      %p960 = scmp.eq.s32.totalorder %s124, 1
      %p961 = por %p959, %p960
      %p962 = scmp.ne.s32.totalorder %s953, %s954
      %p963 = scmp.eq.s32.totalorder %s124, 0
      %p964 = por %p962, %p963
      %p965 = scmp.ne.s32.totalorder %s953, %s954
      %p966 = scmp.eq.s32.totalorder %s125, 1
      %p967 = por %p965, %p966
      %p969 = scmp.ne.s32.totalorder %s954, %s968
      %p970 = scmp.eq.s32.totalorder %s125, 0
      %p971 = por %p969, %p970
      %s973 = sadd.s32 %s972, 1
      %p976 = scmp.eq.s32.totalorder %s119, 1
      %p977 = scmp.ne.s32.totalorder %s972, %s974
      %p978 = scmp.eq.s32.totalorder %s119, 0
      %p979 = por %p977, %p978
      %p980 = scmp.ne.s32.totalorder %s972, %s974
      %p981 = scmp.eq.s32.totalorder %s124, 1
      %p982 = por %p980, %p981
      %p983 = scmp.ne.s32.totalorder %s974, %s975
      %p984 = scmp.eq.s32.totalorder %s124, 0
      %p985 = por %p983, %p984
      %p986 = scmp.ne.s32.totalorder %s974, %s975
      %p987 = scmp.eq.s32.totalorder %s125, 1
      %p988 = por %p986, %p987
      %p990 = scmp.ne.s32.totalorder %s975, %s989
      %p991 = scmp.eq.s32.totalorder %s125, 0
      %p992 = por %p990, %p991
      %s994 = sadd.s32 %s993, 1
      %p997 = scmp.eq.s32.totalorder %s119, 1
      %p998 = scmp.ne.s32.totalorder %s993, %s995
      %p999 = scmp.eq.s32.totalorder %s119, 0
      %p1000 = por %p998, %p999
      %p1001 = scmp.ne.s32.totalorder %s993, %s995
      %p1002 = scmp.eq.s32.totalorder %s124, 1
      %p1003 = por %p1001, %p1002
      %p1004 = scmp.ne.s32.totalorder %s995, %s996
      %p1005 = scmp.eq.s32.totalorder %s124, 0
      %p1006 = por %p1004, %p1005
      %p1007 = scmp.ne.s32.totalorder %s995, %s996
      %p1008 = scmp.eq.s32.totalorder %s125, 1
      %p1009 = por %p1007, %p1008
      %p1011 = scmp.ne.s32.totalorder %s996, %s1010
      %p1012 = scmp.eq.s32.totalorder %s125, 0
      %p1013 = por %p1011, %p1012
      %s1015 = sadd.s32 %s1014, 1
      %p1018 = scmp.eq.s32.totalorder %s119, 1
      %p1019 = scmp.ne.s32.totalorder %s1014, %s1016
      %p1020 = scmp.eq.s32.totalorder %s119, 0
      %p1021 = por %p1019, %p1020
      %p1022 = scmp.ne.s32.totalorder %s1014, %s1016
      %p1023 = scmp.eq.s32.totalorder %s124, 1
      %p1024 = por %p1022, %p1023
      %p1025 = scmp.ne.s32.totalorder %s1016, %s1017
      %p1026 = scmp.eq.s32.totalorder %s124, 0
      %p1027 = por %p1025, %p1026
      %p1028 = scmp.ne.s32.totalorder %s1016, %s1017
      %p1029 = scmp.eq.s32.totalorder %s125, 1
      %p1030 = por %p1028, %p1029
      %p1032 = scmp.ne.s32.totalorder %s1017, %s1031
      %p1033 = scmp.eq.s32.totalorder %s125, 0
      %p1034 = por %p1032, %p1033
      %s1036 = sadd.s32 %s1035, 1
      %p1039 = scmp.eq.s32.totalorder %s119, 1
      %p1040 = scmp.ne.s32.totalorder %s1035, %s1037
      %p1041 = scmp.eq.s32.totalorder %s119, 0
      %p1042 = por %p1040, %p1041
      %p1043 = scmp.ne.s32.totalorder %s1035, %s1037
      %p1044 = scmp.eq.s32.totalorder %s124, 1
      %p1045 = por %p1043, %p1044
      %p1046 = scmp.ne.s32.totalorder %s1037, %s1038
      %p1047 = scmp.eq.s32.totalorder %s124, 0
      %p1048 = por %p1046, %p1047
      %p1049 = scmp.ne.s32.totalorder %s1037, %s1038
      %p1050 = scmp.eq.s32.totalorder %s125, 1
      %p1051 = por %p1049, %p1050
      %p1053 = scmp.ne.s32.totalorder %s1038, %s1052
      %p1054 = scmp.eq.s32.totalorder %s125, 0
      %p1055 = por %p1053, %p1054
      %s1057 = sadd.s32 %s1056, 1
      %p1060 = scmp.eq.s32.totalorder %s119, 1
      %p1061 = scmp.ne.s32.totalorder %s1056, %s1058
      %p1062 = scmp.eq.s32.totalorder %s119, 0
      %p1063 = por %p1061, %p1062
      %p1064 = scmp.ne.s32.totalorder %s1056, %s1058
      %p1065 = scmp.eq.s32.totalorder %s124, 1
      %p1066 = por %p1064, %p1065
      %p1067 = scmp.ne.s32.totalorder %s1058, %s1059
      %p1068 = scmp.eq.s32.totalorder %s124, 0
      %p1069 = por %p1067, %p1068
      %p1070 = scmp.ne.s32.totalorder %s1058, %s1059
      %p1071 = scmp.eq.s32.totalorder %s125, 1
      %p1072 = por %p1070, %p1071
      %p1074 = scmp.ne.s32.totalorder %s1059, %s1073
      %p1075 = scmp.eq.s32.totalorder %s125, 0
      %p1076 = por %p1074, %p1075
      %s1078 = sadd.s32 %s1077, 1
      %p1081 = scmp.eq.s32.totalorder %s119, 1
      %p1082 = scmp.ne.s32.totalorder %s1077, %s1079
      %p1083 = scmp.eq.s32.totalorder %s119, 0
      %p1084 = por %p1082, %p1083
      %p1085 = scmp.ne.s32.totalorder %s1077, %s1079
      %p1086 = scmp.eq.s32.totalorder %s124, 1
      %p1087 = por %p1085, %p1086
      %p1088 = scmp.ne.s32.totalorder %s1079, %s1080
      %p1089 = scmp.eq.s32.totalorder %s124, 0
      %p1090 = por %p1088, %p1089
      %p1091 = scmp.ne.s32.totalorder %s1079, %s1080
      %p1092 = scmp.eq.s32.totalorder %s125, 1
      %p1093 = por %p1091, %p1092
      %p1095 = scmp.ne.s32.totalorder %s1080, %s1094
      %p1096 = scmp.eq.s32.totalorder %s125, 0
      %p1097 = por %p1095, %p1096
      %s1099 = sadd.s32 %s1098, 1
      %p1102 = scmp.eq.s32.totalorder %s119, 1
      %p1103 = scmp.ne.s32.totalorder %s1098, %s1100
      %p1104 = scmp.eq.s32.totalorder %s119, 0
      %p1105 = por %p1103, %p1104
      %p1106 = scmp.ne.s32.totalorder %s1098, %s1100
      %p1107 = scmp.eq.s32.totalorder %s124, 1
      %p1108 = por %p1106, %p1107
      %p1109 = scmp.ne.s32.totalorder %s1100, %s1101
      %p1110 = scmp.eq.s32.totalorder %s124, 0
      %p1111 = por %p1109, %p1110
      %p1112 = scmp.ne.s32.totalorder %s1100, %s1101
      %p1113 = scmp.eq.s32.totalorder %s125, 1
      %p1114 = por %p1112, %p1113
      %p1116 = scmp.ne.s32.totalorder %s1101, %s1115
      %p1117 = scmp.eq.s32.totalorder %s125, 0
      %p1118 = por %p1116, %p1117
      %s1119 = ssub.s32 %s119, %s126
      %p1120 = scmp.eq.s32.totalorder %s1119, 0
      %s1122 = sadd.s32 %s1121, 1
      %s1123 = scalar_select %p1120, %s1121, %s1122
      %p1126 = pneg %p1120
      %p1127 = scmp.eq.s32.totalorder %s119, 1
      %p1128 = por %p1126, %p1127
      %p1129 = scmp.ne.s32.totalorder %s1121, %s1124
      %p1130 = scmp.eq.s32.totalorder %s119, 0
      %p1131 = por %p1129, %p1130
      %p1132 = scmp.ne.s32.totalorder %s1121, %s1124
      %p1133 = scmp.eq.s32.totalorder %s124, 1
      %p1134 = por %p1132, %p1133
      %p1135 = scmp.ne.s32.totalorder %s1124, %s1125
      %p1136 = scmp.eq.s32.totalorder %s124, 0
      %p1137 = por %p1135, %p1136
      %p1138 = scmp.ne.s32.totalorder %s1124, %s1125
      %p1139 = scmp.eq.s32.totalorder %s125, 1
      %p1140 = por %p1138, %p1139
      %p1142 = scmp.ne.s32.totalorder %s1125, %s1141
      %p1143 = scmp.eq.s32.totalorder %s125, 0
      %p1144 = por %p1142, %p1143
      %p1145 = scmp.le.s32.totalorder 1, %s119
      %p1146 = scmp.lt.s32.totalorder %s119, 3
      %p1147 = pnand %p1145, %p1146
      %p1148 = pneg %p1147
      // Predicated region
      $region9: #{_lambda_.1} parent=5 // pred_check
        _
      $region10: #{_lambda_.1} parent=5 // pred_check_branch
        %1150 = sbr.rel (%p1147) target = $region12
      $region11: #{_lambda_.1} parent=5 // pred_region
        %s1151 = ssub.s32 %s119, 1
        // Predicated region
        $region13: #{_lambda_.1} parent=11 // pred_check
          %p1152 = pneg %p166
        $region14: #{_lambda_.1} parent=11 // pred_check_branch
          %1154 = sbr.rel (%p1152) target = $region16
        $region15: #{_lambda_.1} parent=11 // pred_region
          %s1156 = ssub.s32 128, 128
          %1157 = vsyncadd [#allocation4], %s1156
          %s1159 = sshll.u32 [#allocation3], 4
          %s1160 = int_to_ptr.vmem [resolvable:$true] %s1159
          %1162 = dma.hbm_to_vmem [thread:$0]  %s3, 128, %s1160, [#allocation4]
        $region16: #{_lambda_.1} parent=11 // pred_fallthru
          _
        // Predicated region
        $region17: #{_lambda_.1} parent=11 // pred_check
          %p1163 = pneg %p187
        $region18: #{_lambda_.1} parent=11 // pred_check_branch
          %1165 = sbr.rel (%p1163) target = $region20
        $region19: #{_lambda_.1} parent=11 // pred_region
          %s1167 = ssub.s32 128, 128
          %1168 = vsyncadd [#allocation6], %s1167
          %s1170 = sshll.u32 [#allocation5], 4
          %s1171 = int_to_ptr.vmem [resolvable:$true] %s1170
          %1173 = dma.hbm_to_vmem [thread:$0]  %s5, 128, %s1171, [#allocation6]
        $region20: #{_lambda_.1} parent=11 // pred_fallthru
          _
        // Predicated region
        $region21: #{_lambda_.1} parent=11 // pred_check
          %p1174 = pneg %p208
        $region22: #{_lambda_.1} parent=11 // pred_check_branch
          %1176 = sbr.rel (%p1174) target = $region24
        $region23: #{_lambda_.1} parent=11 // pred_region
          %s1178 = ssub.s32 512, 512
          %1179 = vsyncadd [#allocation6], %s1178
          %s1180 = sshll.u32 [#allocation7], 4
          %s1181 = int_to_ptr.vmem [resolvable:$true] %s1180
          %1186 = dma.hbm_to_vmem [thread:$0]  %s7, 512, %s1181, [#allocation6], 128, 128, 8
        $region24: #{_lambda_.1} parent=11 // pred_fallthru
          _
        // Predicated region
        $region25: #{_lambda_.1} parent=11 // pred_check
          %p1187 = pneg %p229
        $region26: #{_lambda_.1} parent=11 // pred_check_branch
          %1189 = sbr.rel (%p1187) target = $region28
        $region27: #{_lambda_.1} parent=11 // pred_region
          %s1191 = ssub.s32 16, 16
          %1192 = vsyncadd [#allocation9], %s1191
          %s1194 = sshll.u32 [#allocation8], 4
          %s1195 = int_to_ptr.vmem [resolvable:$true] %s1194
          %1197 = dma.hbm_to_vmem [thread:$0]  %s9, 16, %s1195, [#allocation9]
        $region28: #{_lambda_.1} parent=11 // pred_fallthru
          _
        // Predicated region
        $region29: #{_lambda_.1} parent=11 // pred_check
          %p1198 = pneg %p250
        $region30: #{_lambda_.1} parent=11 // pred_check_branch
          %1200 = sbr.rel (%p1198) target = $region32
        $region31: #{_lambda_.1} parent=11 // pred_region
          %s1202 = ssub.s32 512, 512
          %1203 = vsyncadd [#allocation9], %s1202
          %s1204 = sshll.u32 [#allocation10], 4
          %s1205 = int_to_ptr.vmem [resolvable:$true] %s1204
          %1210 = dma.hbm_to_vmem [thread:$0]  %s11, 512, %s1205, [#allocation9], 128, 128, 8
        $region32: #{_lambda_.1} parent=11 // pred_fallthru
          _
        // Predicated region
        $region33: #{_lambda_.1} parent=11 // pred_check
          %p1211 = pneg %p271
        $region34: #{_lambda_.1} parent=11 // pred_check_branch
          %1213 = sbr.rel (%p1211) target = $region36
        $region35: #{_lambda_.1} parent=11 // pred_region
          %s1215 = ssub.s32 16, 16
          %1216 = vsyncadd [#allocation12], %s1215
          %s1218 = sshll.u32 [#allocation11], 4
          %s1219 = int_to_ptr.vmem [resolvable:$true] %s1218
          %1221 = dma.hbm_to_vmem [thread:$0]  %s13, 16, %s1219, [#allocation12]
        $region36: #{_lambda_.1} parent=11 // pred_fallthru
          _
        // Predicated region
        $region37: #{_lambda_.1} parent=11 // pred_check
          %p1222 = pneg %p292
        $region38: #{_lambda_.1} parent=11 // pred_check_branch
          %1224 = sbr.rel (%p1222) target = $region40
        $region39: #{_lambda_.1} parent=11 // pred_region
          _
        $region40: #{_lambda_.1} parent=11 // pred_fallthru
          _
        // Predicated region
        $region41: #{_lambda_.1} parent=11 // pred_check
          %p1225 = pneg %p313
        $region42: #{_lambda_.1} parent=11 // pred_check_branch
          %1227 = sbr.rel (%p1225) target = $region44
        $region43: #{_lambda_.1} parent=11 // pred_region
          _
        $region44: #{_lambda_.1} parent=11 // pred_fallthru
          _
        // Predicated region
        $region45: #{_lambda_.1} parent=11 // pred_check
          %p1228 = pneg %p334
        $region46: #{_lambda_.1} parent=11 // pred_check_branch
          %1230 = sbr.rel (%p1228) target = $region48
        $region47: #{_lambda_.1} parent=11 // pred_region
          %s1232 = ssub.s32 512, 512
          %1233 = vsyncadd [#allocation12], %s1232
          %s1234 = sshll.u32 [#allocation13], 4
          %s1235 = int_to_ptr.vmem [resolvable:$true] %s1234
          %1240 = dma.hbm_to_vmem [thread:$0]  %s19, 512, %s1235, [#allocation12], 128, 128, 8
        $region48: #{_lambda_.1} parent=11 // pred_fallthru
          _
        // Predicated region
        $region49: #{_lambda_.1} parent=11 // pred_check
          %p1241 = pneg %p355
        $region50: #{_lambda_.1} parent=11 // pred_check_branch
          %1243 = sbr.rel (%p1241) target = $region52
        $region51: #{_lambda_.1} parent=11 // pred_region
          %s1245 = ssub.s32 16, 16
          %1246 = vsyncadd [#allocation15], %s1245
          %s1248 = sshll.u32 [#allocation14], 4
          %s1249 = int_to_ptr.vmem [resolvable:$true] %s1248
          %1251 = dma.hbm_to_vmem [thread:$0]  %s21, 16, %s1249, [#allocation15]
        $region52: #{_lambda_.1} parent=11 // pred_fallthru
          _
        // Predicated region
        $region53: #{_lambda_.1} parent=11 // pred_check
          %p1252 = pneg %p376
        $region54: #{_lambda_.1} parent=11 // pred_check_branch
          %1254 = sbr.rel (%p1252) target = $region56
        $region55: #{_lambda_.1} parent=11 // pred_region
          %s1256 = ssub.s32 1024, 1024
          %1257 = vsyncadd [#allocation15], %s1256
          %s1258 = sshll.u32 [#allocation16], 4
          %s1259 = int_to_ptr.vmem [resolvable:$true] %s1258
          %1264 = dma.hbm_to_vmem [thread:$0]  %s23, 1024, %s1259, [#allocation15], 128, 128, 8
        $region56: #{_lambda_.1} parent=11 // pred_fallthru
          _
        // Predicated region
        $region57: #{_lambda_.1} parent=11 // pred_check
          %p1265 = pneg %p397
        $region58: #{_lambda_.1} parent=11 // pred_check_branch
          %1267 = sbr.rel (%p1265) target = $region60
        $region59: #{_lambda_.1} parent=11 // pred_region
          %s1269 = ssub.s32 16, 16
          %1270 = vsyncadd [#allocation18], %s1269
          %s1272 = sshll.u32 [#allocation17], 4
          %s1273 = int_to_ptr.vmem [resolvable:$true] %s1272
          %1275 = dma.hbm_to_vmem [thread:$0]  %s25, 16, %s1273, [#allocation18]
        $region60: #{_lambda_.1} parent=11 // pred_fallthru
          _
        // Predicated region
        $region61: #{_lambda_.1} parent=11 // pred_check
          %p1276 = pneg %p418
        $region62: #{_lambda_.1} parent=11 // pred_check_branch
          %1278 = sbr.rel (%p1276) target = $region64
        $region63: #{_lambda_.1} parent=11 // pred_region
          _
        $region64: #{_lambda_.1} parent=11 // pred_fallthru
          _
        // Predicated region
        $region65: #{_lambda_.1} parent=11 // pred_check
          %p1279 = pneg %p439
        $region66: #{_lambda_.1} parent=11 // pred_check_branch
          %1281 = sbr.rel (%p1279) target = $region68
        $region67: #{_lambda_.1} parent=11 // pred_region
          _
        $region68: #{_lambda_.1} parent=11 // pred_fallthru
          _
        // Predicated region
        $region69: #{_lambda_.1} parent=11 // pred_check
          %p1282 = pneg %p460
        $region70: #{_lambda_.1} parent=11 // pred_check_branch
          %1284 = sbr.rel (%p1282) target = $region72
        $region71: #{_lambda_.1} parent=11 // pred_region
          %s1286 = ssub.s32 512, 512
          %1287 = vsyncadd [#allocation18], %s1286
          %s1288 = sshll.u32 [#allocation19], 4
          %s1289 = int_to_ptr.vmem [resolvable:$true] %s1288
          %1294 = dma.hbm_to_vmem [thread:$0]  %s31, 512, %s1289, [#allocation18], 128, 128, 8
        $region72: #{_lambda_.1} parent=11 // pred_fallthru
          _
        // Predicated region
        $region73: #{_lambda_.1} parent=11 // pred_check
          %p1295 = pneg %p481
        $region74: #{_lambda_.1} parent=11 // pred_check_branch
          %1297 = sbr.rel (%p1295) target = $region76
        $region75: #{_lambda_.1} parent=11 // pred_region
          %s1299 = ssub.s32 16, 16
          %1300 = vsyncadd [#allocation21], %s1299
          %s1302 = sshll.u32 [#allocation20], 4
          %s1303 = int_to_ptr.vmem [resolvable:$true] %s1302
          %1305 = dma.hbm_to_vmem [thread:$0]  %s33, 16, %s1303, [#allocation21]
        $region76: #{_lambda_.1} parent=11 // pred_fallthru
          _
        // Predicated region
        $region77: #{_lambda_.1} parent=11 // pred_check
          %p1306 = pneg %p502
        $region78: #{_lambda_.1} parent=11 // pred_check_branch
          %1308 = sbr.rel (%p1306) target = $region80
        $region79: #{_lambda_.1} parent=11 // pred_region
          %s1310 = ssub.s32 512, 512
          %1311 = vsyncadd [#allocation21], %s1310
          %s1312 = sshll.u32 [#allocation22], 4
          %s1313 = int_to_ptr.vmem [resolvable:$true] %s1312
          %1318 = dma.hbm_to_vmem [thread:$0]  %s35, 512, %s1313, [#allocation21], 128, 128, 8
        $region80: #{_lambda_.1} parent=11 // pred_fallthru
          _
        // Predicated region
        $region81: #{_lambda_.1} parent=11 // pred_check
          %p1319 = pneg %p523
        $region82: #{_lambda_.1} parent=11 // pred_check_branch
          %1321 = sbr.rel (%p1319) target = $region84
        $region83: #{_lambda_.1} parent=11 // pred_region
          %s1323 = ssub.s32 16, 16
          %1324 = vsyncadd [#allocation24], %s1323
          %s1326 = sshll.u32 [#allocation23], 4
          %s1327 = int_to_ptr.vmem [resolvable:$true] %s1326
          %1329 = dma.hbm_to_vmem [thread:$0]  %s37, 16, %s1327, [#allocation24]
        $region84: #{_lambda_.1} parent=11 // pred_fallthru
          _
        // Predicated region
        $region85: #{_lambda_.1} parent=11 // pred_check
          %p1330 = pneg %p544
        $region86: #{_lambda_.1} parent=11 // pred_check_branch
          %1332 = sbr.rel (%p1330) target = $region88
        $region87: #{_lambda_.1} parent=11 // pred_region
          _
        $region88: #{_lambda_.1} parent=11 // pred_fallthru
          _
        // Predicated region
        $region89: #{_lambda_.1} parent=11 // pred_check
          %p1333 = pneg %p565
        $region90: #{_lambda_.1} parent=11 // pred_check_branch
          %1335 = sbr.rel (%p1333) target = $region92
        $region91: #{_lambda_.1} parent=11 // pred_region
          _
        $region92: #{_lambda_.1} parent=11 // pred_fallthru
          _
        // Predicated region
        $region93: #{_lambda_.1} parent=11 // pred_check
          %p1336 = pneg %p586
        $region94: #{_lambda_.1} parent=11 // pred_check_branch
          %1338 = sbr.rel (%p1336) target = $region96
        $region95: #{_lambda_.1} parent=11 // pred_region
          %s1340 = ssub.s32 512, 512
          %1341 = vsyncadd [#allocation24], %s1340
          %s1342 = sshll.u32 [#allocation25], 4
          %s1343 = int_to_ptr.vmem [resolvable:$true] %s1342
          %1348 = dma.hbm_to_vmem [thread:$0]  %s43, 512, %s1343, [#allocation24], 128, 128, 8
        $region96: #{_lambda_.1} parent=11 // pred_fallthru
          _
        // Predicated region
        $region97: #{_lambda_.1} parent=11 // pred_check
          %p1349 = pneg %p607
        $region98: #{_lambda_.1} parent=11 // pred_check_branch
          %1351 = sbr.rel (%p1349) target = $region100
        $region99: #{_lambda_.1} parent=11 // pred_region
          %s1353 = ssub.s32 16, 16
          %1354 = vsyncadd [#allocation27], %s1353
          %s1356 = sshll.u32 [#allocation26], 4
          %s1357 = int_to_ptr.vmem [resolvable:$true] %s1356
          %1359 = dma.hbm_to_vmem [thread:$0]  %s45, 16, %s1357, [#allocation27]
        $region100: #{_lambda_.1} parent=11 // pred_fallthru
          _
        // Predicated region
        $region101: #{_lambda_.1} parent=11 // pred_check
          %p1360 = pneg %p628
        $region102: #{_lambda_.1} parent=11 // pred_check_branch
          %1362 = sbr.rel (%p1360) target = $region104
        $region103: #{_lambda_.1} parent=11 // pred_region
          %s1364 = ssub.s32 512, 512
          %1365 = vsyncadd [#allocation27], %s1364
          %s1366 = sshll.u32 [#allocation28], 4
          %s1367 = int_to_ptr.vmem [resolvable:$true] %s1366
          %1372 = dma.hbm_to_vmem [thread:$0]  %s47, 512, %s1367, [#allocation27], 128, 128, 8
        $region104: #{_lambda_.1} parent=11 // pred_fallthru
          _
        // Predicated region
        $region105: #{_lambda_.1} parent=11 // pred_check
          %p1373 = pneg %p649
        $region106: #{_lambda_.1} parent=11 // pred_check_branch
          %1375 = sbr.rel (%p1373) target = $region108
        $region107: #{_lambda_.1} parent=11 // pred_region
          %s1377 = ssub.s32 16, 16
          %1378 = vsyncadd [#allocation30], %s1377
          %s1380 = sshll.u32 [#allocation29], 4
          %s1381 = int_to_ptr.vmem [resolvable:$true] %s1380
          %1383 = dma.hbm_to_vmem [thread:$0]  %s49, 16, %s1381, [#allocation30]
        $region108: #{_lambda_.1} parent=11 // pred_fallthru
          _
        // Predicated region
        $region109: #{_lambda_.1} parent=11 // pred_check
          %p1384 = pneg %p670
        $region110: #{_lambda_.1} parent=11 // pred_check_branch
          %1386 = sbr.rel (%p1384) target = $region112
        $region111: #{_lambda_.1} parent=11 // pred_region
          %s1388 = ssub.s32 512, 512
          %1389 = vsyncadd [#allocation30], %s1388
          %s1390 = sshll.u32 [#allocation31], 4
          %s1391 = int_to_ptr.vmem [resolvable:$true] %s1390
          %1396 = dma.hbm_to_vmem [thread:$0]  %s51, 512, %s1391, [#allocation30], 128, 128, 8
        $region112: #{_lambda_.1} parent=11 // pred_fallthru
          _
        // Predicated region
        $region113: #{_lambda_.1} parent=11 // pred_check
          %p1397 = pneg %p691
        $region114: #{_lambda_.1} parent=11 // pred_check_branch
          %1399 = sbr.rel (%p1397) target = $region116
        $region115: #{_lambda_.1} parent=11 // pred_region
          %s1401 = ssub.s32 16, 16
          %1402 = vsyncadd [#allocation33], %s1401
          %s1404 = sshll.u32 [#allocation32], 4
          %s1405 = int_to_ptr.vmem [resolvable:$true] %s1404
          %1407 = dma.hbm_to_vmem [thread:$0]  %s53, 16, %s1405, [#allocation33]
        $region116: #{_lambda_.1} parent=11 // pred_fallthru
          _
        // Predicated region
        $region117: #{_lambda_.1} parent=11 // pred_check
          %p1408 = pneg %p712
        $region118: #{_lambda_.1} parent=11 // pred_check_branch
          %1410 = sbr.rel (%p1408) target = $region120
        $region119: #{_lambda_.1} parent=11 // pred_region
          _
        $region120: #{_lambda_.1} parent=11 // pred_fallthru
          _
        // Predicated region
        $region121: #{_lambda_.1} parent=11 // pred_check
          %p1411 = pneg %p733
        $region122: #{_lambda_.1} parent=11 // pred_check_branch
          %1413 = sbr.rel (%p1411) target = $region124
        $region123: #{_lambda_.1} parent=11 // pred_region
          _
        $region124: #{_lambda_.1} parent=11 // pred_fallthru
          _
        // Predicated region
        $region125: #{_lambda_.1} parent=11 // pred_check
          %p1414 = pneg %p754
        $region126: #{_lambda_.1} parent=11 // pred_check_branch
          %1416 = sbr.rel (%p1414) target = $region128
        $region127: #{_lambda_.1} parent=11 // pred_region
          %s1418 = ssub.s32 512, 512
          %1419 = vsyncadd [#allocation33], %s1418
          %s1420 = sshll.u32 [#allocation34], 4
          %s1421 = int_to_ptr.vmem [resolvable:$true] %s1420
          %1426 = dma.hbm_to_vmem [thread:$0]  %s59, 512, %s1421, [#allocation33], 128, 128, 8
        $region128: #{_lambda_.1} parent=11 // pred_fallthru
          _
        // Predicated region
        $region129: #{_lambda_.1} parent=11 // pred_check
          %p1427 = pneg %p775
        $region130: #{_lambda_.1} parent=11 // pred_check_branch
          %1429 = sbr.rel (%p1427) target = $region132
        $region131: #{_lambda_.1} parent=11 // pred_region
          %s1431 = ssub.s32 16, 16
          %1432 = vsyncadd [#allocation36], %s1431
          %s1434 = sshll.u32 [#allocation35], 4
          %s1435 = int_to_ptr.vmem [resolvable:$true] %s1434
          %1437 = dma.hbm_to_vmem [thread:$0]  %s61, 16, %s1435, [#allocation36]
        $region132: #{_lambda_.1} parent=11 // pred_fallthru
          _
        // Predicated region
        $region133: #{_lambda_.1} parent=11 // pred_check
          %p1438 = pneg %p796
        $region134: #{_lambda_.1} parent=11 // pred_check_branch
          %1440 = sbr.rel (%p1438) target = $region136
        $region135: #{_lambda_.1} parent=11 // pred_region
          _
        $region136: #{_lambda_.1} parent=11 // pred_fallthru
          _
        // Predicated region
        $region137: #{_lambda_.1} parent=11 // pred_check
          %p1441 = pneg %p817
        $region138: #{_lambda_.1} parent=11 // pred_check_branch
          %1443 = sbr.rel (%p1441) target = $region140
        $region139: #{_lambda_.1} parent=11 // pred_region
          %s1445 = ssub.s32 16, 16
          %1446 = vsyncadd [#allocation36], %s1445
          %s1448 = sshll.u32 [#allocation37], 4
          %s1449 = int_to_ptr.vmem [resolvable:$true] %s1448
          %1451 = dma.hbm_to_vmem [thread:$0]  %s65, 16, %s1449, [#allocation36]
        $region140: #{_lambda_.1} parent=11 // pred_fallthru
          _
        // Predicated region
        $region141: #{_lambda_.1} parent=11 // pred_check
          %p1452 = pneg %p838
        $region142: #{_lambda_.1} parent=11 // pred_check_branch
          %1454 = sbr.rel (%p1452) target = $region144
        $region143: #{_lambda_.1} parent=11 // pred_region
          _
        $region144: #{_lambda_.1} parent=11 // pred_fallthru
          _
        // Predicated region
        $region145: #{_lambda_.1} parent=11 // pred_check
          %p1455 = pneg %p859
        $region146: #{_lambda_.1} parent=11 // pred_check_branch
          %1457 = sbr.rel (%p1455) target = $region148
        $region147: #{_lambda_.1} parent=11 // pred_region
          _
        $region148: #{_lambda_.1} parent=11 // pred_fallthru
          _
        // Predicated region
        $region149: #{_lambda_.1} parent=11 // pred_check
          %p1458 = pneg %p880
        $region150: #{_lambda_.1} parent=11 // pred_check_branch
          %1460 = sbr.rel (%p1458) target = $region152
        $region151: #{_lambda_.1} parent=11 // pred_region
          %s1462 = ssub.s32 512, 512
          %1463 = vsyncadd [#allocation39], %s1462
          %s1464 = sshll.u32 [#allocation38], 4
          %s1465 = int_to_ptr.vmem [resolvable:$true] %s1464
          %1470 = dma.hbm_to_vmem [thread:$0]  %s71, 512, %s1465, [#allocation39], 128, 128, 8
        $region152: #{_lambda_.1} parent=11 // pred_fallthru
          _
        // Predicated region
        $region153: #{_lambda_.1} parent=11 // pred_check
          %p1471 = pneg %p901
        $region154: #{_lambda_.1} parent=11 // pred_check_branch
          %1473 = sbr.rel (%p1471) target = $region156
        $region155: #{_lambda_.1} parent=11 // pred_region
          %s1475 = ssub.s32 16, 16
          %1476 = vsyncadd [#allocation39], %s1475
          %s1478 = sshll.u32 [#allocation40], 4
          %s1479 = int_to_ptr.vmem [resolvable:$true] %s1478
          %1481 = dma.hbm_to_vmem [thread:$0]  %s73, 16, %s1479, [#allocation39]
        $region156: #{_lambda_.1} parent=11 // pred_fallthru
          _
        // Predicated region
        $region157: #{_lambda_.1} parent=11 // pred_check
          %p1482 = pneg %p922
        $region158: #{_lambda_.1} parent=11 // pred_check_branch
          %1484 = sbr.rel (%p1482) target = $region160
        $region159: #{_lambda_.1} parent=11 // pred_region
          _
        $region160: #{_lambda_.1} parent=11 // pred_fallthru
          _
        // Predicated region
        $region161: #{_lambda_.1} parent=11 // pred_check
          %p1485 = pneg %p943
        $region162: #{_lambda_.1} parent=11 // pred_check_branch
          %1487 = sbr.rel (%p1485) target = $region164
        $region163: #{_lambda_.1} parent=11 // pred_region
          %s1489 = ssub.s32 16, 16
          %1490 = vsyncadd [#allocation42], %s1489
          %s1492 = sshll.u32 [#allocation41], 4
          %s1493 = int_to_ptr.vmem [resolvable:$true] %s1492
          %1495 = dma.hbm_to_vmem [thread:$0]  %s77, 16, %s1493, [#allocation42]
        $region164: #{_lambda_.1} parent=11 // pred_fallthru
          _
        // Predicated region
        $region165: #{_lambda_.1} parent=11 // pred_check
          %p1496 = pneg %p964
        $region166: #{_lambda_.1} parent=11 // pred_check_branch
          %1498 = sbr.rel (%p1496) target = $region168
        $region167: #{_lambda_.1} parent=11 // pred_region
          %s1500 = ssub.s32 384, 384
          %1501 = vsyncadd [#allocation42], %s1500
          %s1502 = sshll.u32 [#allocation43], 4
          %s1503 = int_to_ptr.vmem [resolvable:$true] %s1502
          %1508 = dma.hbm_to_vmem [thread:$0]  %s79, 384, %s1503, [#allocation42], 128, 128, 8
        $region168: #{_lambda_.1} parent=11 // pred_fallthru
          _
        // Predicated region
        $region169: #{_lambda_.1} parent=11 // pred_check
          %p1509 = pneg %p985
        $region170: #{_lambda_.1} parent=11 // pred_check_branch
          %1511 = sbr.rel (%p1509) target = $region172
        $region171: #{_lambda_.1} parent=11 // pred_region
          %s1513 = ssub.s32 16, 16
          %1514 = vsyncadd [#allocation45], %s1513
          %s1516 = sshll.u32 [#allocation44], 4
          %s1517 = int_to_ptr.vmem [resolvable:$true] %s1516
          %1519 = dma.hbm_to_vmem [thread:$0]  %s81, 16, %s1517, [#allocation45]
        $region172: #{_lambda_.1} parent=11 // pred_fallthru
          _
        // Predicated region
        $region173: #{_lambda_.1} parent=11 // pred_check
          %p1520 = pneg %p1006
        $region174: #{_lambda_.1} parent=11 // pred_check_branch
          %1522 = sbr.rel (%p1520) target = $region176
        $region175: #{_lambda_.1} parent=11 // pred_region
          %s1524 = ssub.s32 128, 128
          %1525 = vsyncadd [#allocation45], %s1524
          %s1527 = sshll.u32 [#allocation46], 4
          %s1528 = int_to_ptr.vmem [resolvable:$true] %s1527
          %1530 = dma.hbm_to_vmem [thread:$0]  %s83, 128, %s1528, [#allocation45]
        $region176: #{_lambda_.1} parent=11 // pred_fallthru
          _
        // Predicated region
        $region177: #{_lambda_.1} parent=11 // pred_check
          %p1531 = pneg %p1027
        $region178: #{_lambda_.1} parent=11 // pred_check_branch
          %1533 = sbr.rel (%p1531) target = $region180
        $region179: #{_lambda_.1} parent=11 // pred_region
          %s1535 = ssub.s32 16, 16
          %1536 = vsyncadd [#allocation48], %s1535
          %s1538 = sshll.u32 [#allocation47], 4
          %s1539 = int_to_ptr.vmem [resolvable:$true] %s1538
          %1541 = dma.hbm_to_vmem [thread:$0]  %s85, 16, %s1539, [#allocation48]
        $region180: #{_lambda_.1} parent=11 // pred_fallthru
          _
        // Predicated region
        $region181: #{_lambda_.1} parent=11 // pred_check
          %p1542 = pneg %p1048
        $region182: #{_lambda_.1} parent=11 // pred_check_branch
          %1544 = sbr.rel (%p1542) target = $region184
        $region183: #{_lambda_.1} parent=11 // pred_region
          _
        $region184: #{_lambda_.1} parent=11 // pred_fallthru
          _
        // Predicated region
        $region185: #{_lambda_.1} parent=11 // pred_check
          %p1545 = pneg %p1069
        $region186: #{_lambda_.1} parent=11 // pred_check_branch
          %1547 = sbr.rel (%p1545) target = $region188
        $region187: #{_lambda_.1} parent=11 // pred_region
          _
        $region188: #{_lambda_.1} parent=11 // pred_fallthru
          _
        // Predicated region
        $region189: #{_lambda_.1} parent=11 // pred_check
          %p1548 = pneg %p1090
        $region190: #{_lambda_.1} parent=11 // pred_check_branch
          %1550 = sbr.rel (%p1548) target = $region192
        $region191: #{_lambda_.1} parent=11 // pred_region
          _
        $region192: #{_lambda_.1} parent=11 // pred_fallthru
          _
        // Predicated region
        $region193: #{_lambda_.1} parent=11 // pred_check
          %p1551 = pneg %p1111
        $region194: #{_lambda_.1} parent=11 // pred_check_branch
          %1553 = sbr.rel (%p1551) target = $region196
        $region195: #{_lambda_.1} parent=11 // pred_region
          _
        $region196: #{_lambda_.1} parent=11 // pred_fallthru
          _
      $region12: #{_lambda_.1} parent=5 // pred_fallthru
        _
      %p1554 = scmp.lt.s32.totalorder %s119, 2
      // Predicated region
      $region197: #{_lambda_.1} parent=5 // pred_check
        %p1555 = pneg %p1554
      $region198: #{_lambda_.1} parent=5 // pred_check_branch
        %1557 = sbr.rel (%p1555) target = $region200
      $region199: #{_lambda_.1} parent=5 // pred_region
        // Predicated region
        $region201: #{_lambda_.1} parent=199 // pred_check
          %p1558 = pneg %p139
        $region202: #{_lambda_.1} parent=199 // pred_check_branch
          %1560 = sbr.rel (%p1558) target = $region204
        $region203: #{_lambda_.1} parent=199 // pred_region
          %p1561 = scmp.lt.s32.totalorder %s119, 1
          %s1562 = scalar_select %p1561, %s119, 1
          %s1563 = smul.addr %s1562, 8
          %s1564 = scalar_lea.vmem %s1, %s1563
        $region204: #{_lambda_.1} parent=199 // pred_fallthru
          _
      $region200: #{_lambda_.1} parent=5 // pred_fallthru
        _
      %p1565 = scmp.le.s32.totalorder 1, %s119
      %p1566 = scmp.lt.s32.totalorder %s119, 3
      %p1567 = pnand %p1565, %p1566
      %p1568 = pneg %p1567
      // Predicated region
      $region205: #{_lambda_.1} parent=5 // pred_check
        _
      $region206: #{_lambda_.1} parent=5 // pred_check_branch
        %1570 = sbr.rel (%p1567) target = $region208
      $region207: #{_lambda_.1} parent=5 // pred_region
        %s1571 = ssub.s32 %s119, 1
        // Predicated region
        $region209: #{_lambda_.1} parent=207 // pred_check
          %p1572 = pneg %p166
        $region210: #{_lambda_.1} parent=207 // pred_check_branch
          %1574 = sbr.rel (%p1572) target = $region212
        $region211: #{_lambda_.1} parent=207 // pred_region
          %1575 = dma.done [#allocation4], 128
        $region212: #{_lambda_.1} parent=207 // pred_fallthru
          _
        // Predicated region
        $region213: #{_lambda_.1} parent=207 // pred_check
          %p1576 = pneg %p187
        $region214: #{_lambda_.1} parent=207 // pred_check_branch
          %1578 = sbr.rel (%p1576) target = $region216
        $region215: #{_lambda_.1} parent=207 // pred_region
          %1579 = dma.done [#allocation6], 128
        $region216: #{_lambda_.1} parent=207 // pred_fallthru
          _
        // Predicated region
        $region217: #{_lambda_.1} parent=207 // pred_check
          %p1580 = pneg %p208
        $region218: #{_lambda_.1} parent=207 // pred_check_branch
          %1582 = sbr.rel (%p1580) target = $region220
        $region219: #{_lambda_.1} parent=207 // pred_region
          %1583 = dma.done [#allocation6], 512
        $region220: #{_lambda_.1} parent=207 // pred_fallthru
          _
        // Predicated region
        $region221: #{_lambda_.1} parent=207 // pred_check
          %p1584 = pneg %p229
        $region222: #{_lambda_.1} parent=207 // pred_check_branch
          %1586 = sbr.rel (%p1584) target = $region224
        $region223: #{_lambda_.1} parent=207 // pred_region
          %1587 = dma.done [#allocation9], 16
        $region224: #{_lambda_.1} parent=207 // pred_fallthru
          _
        // Predicated region
        $region225: #{_lambda_.1} parent=207 // pred_check
          %p1588 = pneg %p250
        $region226: #{_lambda_.1} parent=207 // pred_check_branch
          %1590 = sbr.rel (%p1588) target = $region228
        $region227: #{_lambda_.1} parent=207 // pred_region
          %1591 = dma.done [#allocation9], 512
        $region228: #{_lambda_.1} parent=207 // pred_fallthru
          _
        // Predicated region
        $region229: #{_lambda_.1} parent=207 // pred_check
          %p1592 = pneg %p271
        $region230: #{_lambda_.1} parent=207 // pred_check_branch
          %1594 = sbr.rel (%p1592) target = $region232
        $region231: #{_lambda_.1} parent=207 // pred_region
          %1595 = dma.done [#allocation12], 16
        $region232: #{_lambda_.1} parent=207 // pred_fallthru
          _
        // Predicated region
        $region233: #{_lambda_.1} parent=207 // pred_check
          %p1596 = pneg %p334
        $region234: #{_lambda_.1} parent=207 // pred_check_branch
          %1598 = sbr.rel (%p1596) target = $region236
        $region235: #{_lambda_.1} parent=207 // pred_region
          %1599 = dma.done [#allocation12], 512
        $region236: #{_lambda_.1} parent=207 // pred_fallthru
          _
        // Predicated region
        $region237: #{_lambda_.1} parent=207 // pred_check
          %p1600 = pneg %p355
        $region238: #{_lambda_.1} parent=207 // pred_check_branch
          %1602 = sbr.rel (%p1600) target = $region240
        $region239: #{_lambda_.1} parent=207 // pred_region
          %1603 = dma.done [#allocation15], 16
        $region240: #{_lambda_.1} parent=207 // pred_fallthru
          _
        // Predicated region
        $region241: #{_lambda_.1} parent=207 // pred_check
          %p1604 = pneg %p376
        $region242: #{_lambda_.1} parent=207 // pred_check_branch
          %1606 = sbr.rel (%p1604) target = $region244
        $region243: #{_lambda_.1} parent=207 // pred_region
          %1607 = dma.done [#allocation15], 1024
        $region244: #{_lambda_.1} parent=207 // pred_fallthru
          _
        // Predicated region
        $region245: #{_lambda_.1} parent=207 // pred_check
          %p1608 = pneg %p397
        $region246: #{_lambda_.1} parent=207 // pred_check_branch
          %1610 = sbr.rel (%p1608) target = $region248
        $region247: #{_lambda_.1} parent=207 // pred_region
          %1611 = dma.done [#allocation18], 16
        $region248: #{_lambda_.1} parent=207 // pred_fallthru
          _
        // Predicated region
        $region249: #{_lambda_.1} parent=207 // pred_check
          %p1612 = pneg %p460
        $region250: #{_lambda_.1} parent=207 // pred_check_branch
          %1614 = sbr.rel (%p1612) target = $region252
        $region251: #{_lambda_.1} parent=207 // pred_region
          %1615 = dma.done [#allocation18], 512
        $region252: #{_lambda_.1} parent=207 // pred_fallthru
          _
        // Predicated region
        $region253: #{_lambda_.1} parent=207 // pred_check
          %p1616 = pneg %p481
        $region254: #{_lambda_.1} parent=207 // pred_check_branch
          %1618 = sbr.rel (%p1616) target = $region256
        $region255: #{_lambda_.1} parent=207 // pred_region
          %1619 = dma.done [#allocation21], 16
        $region256: #{_lambda_.1} parent=207 // pred_fallthru
          _
        // Predicated region
        $region257: #{_lambda_.1} parent=207 // pred_check
          %p1620 = pneg %p502
        $region258: #{_lambda_.1} parent=207 // pred_check_branch
          %1622 = sbr.rel (%p1620) target = $region260
        $region259: #{_lambda_.1} parent=207 // pred_region
          %1623 = dma.done [#allocation21], 512
        $region260: #{_lambda_.1} parent=207 // pred_fallthru
          _
        // Predicated region
        $region261: #{_lambda_.1} parent=207 // pred_check
          %p1624 = pneg %p523
        $region262: #{_lambda_.1} parent=207 // pred_check_branch
          %1626 = sbr.rel (%p1624) target = $region264
        $region263: #{_lambda_.1} parent=207 // pred_region
          %1627 = dma.done [#allocation24], 16
        $region264: #{_lambda_.1} parent=207 // pred_fallthru
          _
        // Predicated region
        $region265: #{_lambda_.1} parent=207 // pred_check
          %p1628 = pneg %p586
        $region266: #{_lambda_.1} parent=207 // pred_check_branch
          %1630 = sbr.rel (%p1628) target = $region268
        $region267: #{_lambda_.1} parent=207 // pred_region
          %1631 = dma.done [#allocation24], 512
        $region268: #{_lambda_.1} parent=207 // pred_fallthru
          _
        // Predicated region
        $region269: #{_lambda_.1} parent=207 // pred_check
          %p1632 = pneg %p607
        $region270: #{_lambda_.1} parent=207 // pred_check_branch
          %1634 = sbr.rel (%p1632) target = $region272
        $region271: #{_lambda_.1} parent=207 // pred_region
          %1635 = dma.done [#allocation27], 16
        $region272: #{_lambda_.1} parent=207 // pred_fallthru
          _
        // Predicated region
        $region273: #{_lambda_.1} parent=207 // pred_check
          %p1636 = pneg %p628
        $region274: #{_lambda_.1} parent=207 // pred_check_branch
          %1638 = sbr.rel (%p1636) target = $region276
        $region275: #{_lambda_.1} parent=207 // pred_region
          %1639 = dma.done [#allocation27], 512
        $region276: #{_lambda_.1} parent=207 // pred_fallthru
          _
        // Predicated region
        $region277: #{_lambda_.1} parent=207 // pred_check
          %p1640 = pneg %p649
        $region278: #{_lambda_.1} parent=207 // pred_check_branch
          %1642 = sbr.rel (%p1640) target = $region280
        $region279: #{_lambda_.1} parent=207 // pred_region
          %1643 = dma.done [#allocation30], 16
        $region280: #{_lambda_.1} parent=207 // pred_fallthru
          _
        // Predicated region
        $region281: #{_lambda_.1} parent=207 // pred_check
          %p1644 = pneg %p670
        $region282: #{_lambda_.1} parent=207 // pred_check_branch
          %1646 = sbr.rel (%p1644) target = $region284
        $region283: #{_lambda_.1} parent=207 // pred_region
          %1647 = dma.done [#allocation30], 512
        $region284: #{_lambda_.1} parent=207 // pred_fallthru
          _
        // Predicated region
        $region285: #{_lambda_.1} parent=207 // pred_check
          %p1648 = pneg %p691
        $region286: #{_lambda_.1} parent=207 // pred_check_branch
          %1650 = sbr.rel (%p1648) target = $region288
        $region287: #{_lambda_.1} parent=207 // pred_region
          %1651 = dma.done [#allocation33], 16
        $region288: #{_lambda_.1} parent=207 // pred_fallthru
          _
        // Predicated region
        $region289: #{_lambda_.1} parent=207 // pred_check
          %p1652 = pneg %p754
        $region290: #{_lambda_.1} parent=207 // pred_check_branch
          %1654 = sbr.rel (%p1652) target = $region292
        $region291: #{_lambda_.1} parent=207 // pred_region
          %1655 = dma.done [#allocation33], 512
        $region292: #{_lambda_.1} parent=207 // pred_fallthru
          _
        // Predicated region
        $region293: #{_lambda_.1} parent=207 // pred_check
          %p1656 = pneg %p775
        $region294: #{_lambda_.1} parent=207 // pred_check_branch
          %1658 = sbr.rel (%p1656) target = $region296
        $region295: #{_lambda_.1} parent=207 // pred_region
          %1659 = dma.done [#allocation36], 16
        $region296: #{_lambda_.1} parent=207 // pred_fallthru
          _
        // Predicated region
        $region297: #{_lambda_.1} parent=207 // pred_check
          %p1660 = pneg %p817
        $region298: #{_lambda_.1} parent=207 // pred_check_branch
          %1662 = sbr.rel (%p1660) target = $region300
        $region299: #{_lambda_.1} parent=207 // pred_region
          %1663 = dma.done [#allocation36], 16
        $region300: #{_lambda_.1} parent=207 // pred_fallthru
          _
        // Predicated region
        $region301: #{_lambda_.1} parent=207 // pred_check
          %p1664 = pneg %p880
        $region302: #{_lambda_.1} parent=207 // pred_check_branch
          %1666 = sbr.rel (%p1664) target = $region304
        $region303: #{_lambda_.1} parent=207 // pred_region
          %1667 = dma.done [#allocation39], 512
        $region304: #{_lambda_.1} parent=207 // pred_fallthru
          _
        // Predicated region
        $region305: #{_lambda_.1} parent=207 // pred_check
          %p1668 = pneg %p901
        $region306: #{_lambda_.1} parent=207 // pred_check_branch
          %1670 = sbr.rel (%p1668) target = $region308
        $region307: #{_lambda_.1} parent=207 // pred_region
          %1671 = dma.done [#allocation39], 16
        $region308: #{_lambda_.1} parent=207 // pred_fallthru
          _
        // Predicated region
        $region309: #{_lambda_.1} parent=207 // pred_check
          %p1672 = pneg %p943
        $region310: #{_lambda_.1} parent=207 // pred_check_branch
          %1674 = sbr.rel (%p1672) target = $region312
        $region311: #{_lambda_.1} parent=207 // pred_region
          %1675 = dma.done [#allocation42], 16
        $region312: #{_lambda_.1} parent=207 // pred_fallthru
          _
        // Predicated region
        $region313: #{_lambda_.1} parent=207 // pred_check
          %p1676 = pneg %p964
        $region314: #{_lambda_.1} parent=207 // pred_check_branch
          %1678 = sbr.rel (%p1676) target = $region316
        $region315: #{_lambda_.1} parent=207 // pred_region
          %1679 = dma.done [#allocation42], 384
        $region316: #{_lambda_.1} parent=207 // pred_fallthru
          _
        // Predicated region
        $region317: #{_lambda_.1} parent=207 // pred_check
          %p1680 = pneg %p985
        $region318: #{_lambda_.1} parent=207 // pred_check_branch
          %1682 = sbr.rel (%p1680) target = $region320
        $region319: #{_lambda_.1} parent=207 // pred_region
          %1683 = dma.done [#allocation45], 16
        $region320: #{_lambda_.1} parent=207 // pred_fallthru
          _
        // Predicated region
        $region321: #{_lambda_.1} parent=207 // pred_check
          %p1684 = pneg %p1006
        $region322: #{_lambda_.1} parent=207 // pred_check_branch
          %1686 = sbr.rel (%p1684) target = $region324
        $region323: #{_lambda_.1} parent=207 // pred_region
          %1687 = dma.done [#allocation45], 128
        $region324: #{_lambda_.1} parent=207 // pred_fallthru
          _
        // Predicated region
        $region325: #{_lambda_.1} parent=207 // pred_check
          %p1688 = pneg %p1027
        $region326: #{_lambda_.1} parent=207 // pred_check_branch
          %1690 = sbr.rel (%p1688) target = $region328
        $region327: #{_lambda_.1} parent=207 // pred_region
          %1691 = dma.done [#allocation48], 16
        $region328: #{_lambda_.1} parent=207 // pred_fallthru
          _
        %p1692 = scmp.lt.s32.totalorder %s124, 1
        %s1693 = scalar_select %p1692, %s124, 1
        %s1694 = smul.addr %s1693, 8
        %s1695 = scalar_lea.vmem %s1, %s1694
        %p1696 = pneg %p145
        %p1697 = pneg %p142
        %p1698 = pneg %p166
        %p1699 = pneg %p163
        %p1700 = pneg %p187
        %p1701 = pneg %p184
        %p1702 = pneg %p208
        %p1703 = pneg %p205
        %p1704 = pneg %p229
        %p1705 = pneg %p226
        %p1706 = pneg %p250
        %p1707 = pneg %p247
        %p1708 = pneg %p271
        %p1709 = pneg %p268
        %p1710 = pneg %p292
        %p1711 = pneg %p289
        %p1712 = pneg %p313
        %p1713 = pneg %p310
        %p1714 = pneg %p334
        %p1715 = pneg %p331
        %p1716 = pneg %p355
        %p1717 = pneg %p352
        %p1718 = pneg %p376
        %p1719 = pneg %p373
        %p1720 = pneg %p397
        %p1721 = pneg %p394
        %p1722 = pneg %p418
        %p1723 = pneg %p415
        %p1724 = pneg %p439
        %p1725 = pneg %p436
        %p1726 = pneg %p460
        %p1727 = pneg %p457
        %p1728 = pneg %p481
        %p1729 = pneg %p478
        %p1730 = pneg %p502
        %p1731 = pneg %p499
        %p1732 = pneg %p523
        %p1733 = pneg %p520
        %p1734 = pneg %p544
        %p1735 = pneg %p541
        %p1736 = pneg %p565
        %p1737 = pneg %p562
        %p1738 = pneg %p586
        %p1739 = pneg %p583
        %p1740 = pneg %p607
        %p1741 = pneg %p604
        %p1742 = pneg %p628
        %p1743 = pneg %p625
        %p1744 = pneg %p649
        %p1745 = pneg %p646
        %p1746 = pneg %p670
        %p1747 = pneg %p667
        %p1748 = pneg %p691
        %p1749 = pneg %p688
        %p1750 = pneg %p712
        %p1751 = pneg %p709
        %p1752 = pneg %p733
        %p1753 = pneg %p730
        %p1754 = pneg %p754
        %p1755 = pneg %p751
        %p1756 = pneg %p775
        %p1757 = pneg %p772
        %p1758 = pneg %p796
        %p1759 = pneg %p793
        %p1760 = pneg %p817
        %p1761 = pneg %p814
        %p1762 = pneg %p838
        %p1763 = pneg %p835
        %p1764 = pneg %p859
        %p1765 = pneg %p856
        %p1766 = pneg %p880
        %p1767 = pneg %p877
        %p1768 = pneg %p901
        %p1769 = pneg %p898
        %p1770 = pneg %p922
        %p1771 = pneg %p919
        %p1772 = pneg %p943
        %p1773 = pneg %p940
        %p1774 = pneg %p964
        %p1775 = pneg %p961
        %p1776 = pneg %p985
        %p1777 = pneg %p982
        %p1778 = pneg %p1006
        %p1779 = pneg %p1003
        %p1780 = pneg %p1027
        %p1781 = pneg %p1024
        %p1782 = pneg %p1048
        %p1783 = pneg %p1045
        %p1784 = pneg %p1069
        %p1785 = pneg %p1066
        %p1786 = pneg %p1090
        %p1787 = pneg %p1087
        %p1788 = pneg %p1111
        %p1789 = pneg %p1108
        %p1790 = pneg %p1137
        %p1791 = pneg %p1134
        %p1792 = scmp.lt.s32.totalorder %s124, 1
        %s1793 = scalar_select %p1792, %s124, 1
        %s1794 = scalar_lea.vmem %s95, %s1793
        %p1795 = scmp.lt.s32.totalorder %s124, 1
        %s1796 = scalar_select %p1795, %s124, 1
        %s1797 = smul.addr %s1796, 8
        %s1798 = scalar_lea.vmem %s1, %s1797
        %p1799 = scmp.lt.s32.totalorder %s124, 1
        %s1800 = scalar_select %p1799, %s124, 1
        %s1801 = scalar_lea.vmem %s95, %s1800
        %v1802 = vld [vmem:[%s1798] sm:$0x3f]
        %v1803 = vld [vmem:[#allocation3] sm:$0x3f]
        %v1804 = vadd.f32 %v1802, %v1803
        %v1805 = vld [vmem:[#allocation5] sm:$0x3f]
        %v1806 = vld [vmem:[#allocation7] sm:$0xff]
        %v1807 = vld [vmem:[#allocation7 + $0x8] sm:$0xff]
        %v1808 = vld [vmem:[#allocation7 + $0x10] sm:$0xff]
        %v1809 = vld [vmem:[#allocation7 + $0x18] sm:$0xff]
        %v1810 = vld [vmem:[#allocation8] sm:$0x1]
        %v1812 = vlaneseq
        %v1813 = vshrl.u32 %v1812, 7
        %v1814 = vsub.s32 0, %v1813
        %v1815 = vrot.slane %v1810, %v1814
        %vm1817 = vcmask 261120
        %v1819 = vsel %vm1817, %v1804, 0
        %1821 = vmatprep.subr.mxu0 0.0
        %1822 = vmatpush1.msra.mxu0 %v1806
        %1823 = vmatprep.subr.mxu0 0.0
        %1824 = vmatpush1.msra.mxu0 %v1807
        %1825 = vmatprep.subr.mxu0 0.0
        %1826 = vmatpush1.msra.mxu0 %v1808
        %1827 = vmatprep.subr.mxu0 0.0
        %1828 = vmatpush1.msra.mxu0 %v1809
        %1829 = vmatprep.subr.mxu0 0.0
        %1830 = vmatpush1.msra.mxu0 0.0
        %1831 = vmatprep.subr.mxu0 0.0
        %1832 = vmatpush1.msra.mxu0 0.0
        %1833 = vmatprep.subr.mxu0 0.0
        %1834 = vmatpush1.msra.mxu0 0.0
        %1835 = vmatprep.subr.mxu0 0.0
        %1836 = vmatpush1.msra.mxu0 0.0
        %1837 = vmatprep.subr.mxu0 0.0
        %1838 = vmatpush1.msra.mxu0 0.0
        %1839 = vmatprep.subr.mxu0 0.0
        %1840 = vmatpush1.msra.mxu0 0.0
        %1841 = vmatprep.subr.mxu0 0.0
        %1842 = vmatpush1.msra.mxu0 0.0
        %1843 = vmatprep.subr.mxu0 0.0
        %1844 = vmatpush1.msra.mxu0 0.0
        %1845 = vmatprep.subr.mxu0 0.0
        %1846 = vmatpush1.msra.mxu0 0.0
        %1847 = vmatprep.subr.mxu0 0.0
        %1848 = vmatpush1.msra.mxu0 0.0
        %1849 = vmatprep.subr.mxu0 0.0
        %1850 = vmatpush1.msra.mxu0 0.0
        %1851 = vmatprep.subr.mxu0 0.0
        %1852 = vmatpush1.msra.mxu0 0.0
        %1853 = vmatprep.subr.mxu0 0.0
        %1854 = vmatpush1.msra.mxu0 0.0
        %1855 = vmatprep.subr.mxu0 0.0
        %1856 = vmatpush1.msra.mxu0 0.0
        %1857 = vmatprep.subr.mxu0 0.0
        %1858 = vmatpush1.msra.mxu0 0.0
        %1859 = vmatprep.subr.mxu0 0.0
        %1860 = vmatpush1.msra.mxu0 0.0
        %1861 = vmatprep.subr.mxu0 0.0
        %1862 = vmatpush1.msra.mxu0 0.0
        %1863 = vmatprep.subr.mxu0 0.0
        %1864 = vmatpush1.msra.mxu0 0.0
        %1865 = vmatprep.subr.mxu0 0.0
        %1866 = vmatpush1.msra.mxu0 0.0
        %1867 = vmatprep.subr.mxu0 0.0
        %1868 = vmatpush1.msra.mxu0 0.0
        %1869 = vmatprep.subr.mxu0 0.0
        %1870 = vmatpush1.msra.mxu0 0.0
        %1871 = vmatprep.subr.mxu0 0.0
        %1872 = vmatpush1.msra.mxu0 0.0
        %1873 = vmatprep.subr.mxu0 0.0
        %1874 = vmatpush1.msra.mxu0 0.0
        %1875 = vmatprep.subr.mxu0 0.0
        %1876 = vmatpush1.msra.mxu0 0.0
        %1877 = vmatprep.subr.mxu0 0.0
        %1878 = vmatpush1.msra.mxu0 0.0
        %1879 = vmatprep.subr.mxu0 0.0
        %1880 = vmatpush1.msra.mxu0 0.0
        %1881 = vmatprep.subr.mxu0 0.0
        %1882 = vmatpush1.msra.mxu0 0.0
        %1883 = vmatprep.subr.mxu0 0.0
        %1884 = vmatpush1.msra.mxu0 0.0
        %1885 = vmatprep.mubr.f32.mxu0 0.0
        %1886 = vmatmul.mubr.f32.gmra.mrb[0].mxu0 %v1819
        %v1887 = vpop.f32.mrb[0].mxu0
        %v1888 = vadd.f32 %v1815, %v1887
        %v1889 = vpop.f32.mrb[0].mxu0
        %1890 = vdwg.mxu0
        %1892 = vrot.lane.b32.xlu0 %v1888, 96
        %v1893 = vpop.permute.xlu0 %1892
        %vm1894 = vcmask 64512
        %v1895 = vsel %vm1894, %v1888, 0
        %v1897 = vsel %vm1894, %v1893, 0
        %1899 = vmatprep.subr.mxu0 0.0
        %1900 = vmatpush1.xpose.msra.mxu0 %v1897
        %1901 = vmatprep.subr.mxu0 0.0
        %1902 = vmatpush1.xpose.msra.mxu0 0.0
        %1903 = vmatprep.subr.mxu0 0.0
        %1904 = vmatpush1.xpose.msra.mxu0 0.0
        %1905 = vmatprep.subr.mxu0 0.0
        %1906 = vmatpush1.xpose.msra.mxu0 0.0
        %1907 = vmatprep.subr.mxu0 0.0
        %1908 = vmatpush1.xpose.msra.mxu0 0.0
        %1909 = vmatprep.subr.mxu0 0.0
        %1910 = vmatpush1.xpose.msra.mxu0 0.0
        %1911 = vmatprep.subr.mxu0 0.0
        %1912 = vmatpush1.xpose.msra.mxu0 0.0
        %1913 = vmatprep.subr.mxu0 0.0
        %1914 = vmatpush1.xpose.msra.mxu0 0.0
        %1915 = vmatprep.subr.mxu0 0.0
        %1916 = vmatpush1.xpose.msra.mxu0 0.0
        %1917 = vmatprep.subr.mxu0 0.0
        %1918 = vmatpush1.xpose.msra.mxu0 0.0
        %1919 = vmatprep.subr.mxu0 0.0
        %1920 = vmatpush1.xpose.msra.mxu0 0.0
        %1921 = vmatprep.subr.mxu0 0.0
        %1922 = vmatpush1.xpose.msra.mxu0 0.0
        %1923 = vmatprep.subr.mxu0 0.0
        %1924 = vmatpush1.xpose.msra.mxu0 0.0
        %1925 = vmatprep.subr.mxu0 0.0
        %1926 = vmatpush1.xpose.msra.mxu0 0.0
        %1927 = vmatprep.subr.mxu0 0.0
        %1928 = vmatpush1.xpose.msra.mxu0 0.0
        %1929 = vmatprep.subr.mxu0 0.0
        %1930 = vmatpush1.xpose.msra.mxu0 0.0
        %1931 = vmatprep.subr.mxu0 0.0
        %1932 = vmatpush1.xpose.msra.mxu0 0.0
        %1933 = vmatprep.subr.mxu0 0.0
        %1934 = vmatpush1.xpose.msra.mxu0 0.0
        %1935 = vmatprep.subr.mxu0 0.0
        %1936 = vmatpush1.xpose.msra.mxu0 0.0
        %1937 = vmatprep.subr.mxu0 0.0
        %1938 = vmatpush1.xpose.msra.mxu0 0.0
        %1939 = vmatprep.subr.mxu0 0.0
        %1940 = vmatpush1.xpose.msra.mxu0 0.0
        %1941 = vmatprep.subr.mxu0 0.0
        %1942 = vmatpush1.xpose.msra.mxu0 0.0
        %1943 = vmatprep.subr.mxu0 0.0
        %1944 = vmatpush1.xpose.msra.mxu0 0.0
        %1945 = vmatprep.subr.mxu0 0.0
        %1946 = vmatpush1.xpose.msra.mxu0 0.0
        %1947 = vmatprep.subr.mxu0 0.0
        %1948 = vmatpush1.xpose.msra.mxu0 0.0
        %1949 = vmatprep.subr.mxu0 0.0
        %1950 = vmatpush1.xpose.msra.mxu0 0.0
        %1951 = vmatprep.subr.mxu0 0.0
        %1952 = vmatpush1.xpose.msra.mxu0 0.0
        %1953 = vmatprep.subr.mxu0 0.0
        %1954 = vmatpush1.xpose.msra.mxu0 0.0
        %1955 = vmatprep.subr.mxu0 0.0
        %1956 = vmatpush1.xpose.msra.mxu0 0.0
        %1957 = vmatprep.subr.mxu0 0.0
        %1958 = vmatpush1.xpose.msra.mxu0 0.0
        %1959 = vmatprep.subr.mxu0 0.0
        %1960 = vmatpush1.xpose.msra.mxu0 0.0
        %1961 = vmatprep.subr.mxu0 0.0
        %1962 = vmatpush1.xpose.msra.mxu0 0.0
        %1963 = vmatprep.mubr.f32.mxu0 0.0
        %1964 = vmatmul.mubr.f32.gmra.mrb[0].mxu0 %v1895
        %v1965 = vpop.f32.mrb[0].mxu0
        %v1966 = vadd.f32 0.0, %v1965
        %v1967 = vpop.f32.mrb[0].mxu0
        %1968 = vdwg.mxu0
        %v1969 = vmul.f32 %v1966, 0.35355338
        %vm1970 = vcmask 46080
        %v1971 = vsel %vm1970, %v1969, -inf
        %1972 = vmax.xlane.f32.xlu0 %v1971
        %v1973 = vpop.xlane.xlu0 %1972
        %v1974 = vsub.f32 %v1969, %v1973
        %v1975 = vmul.f32 %v1974, 1.442695
        %v1976 = vpow.pop %v1975
        %v1977 = vsel %vm1970, %v1976, 0.0
        %1978 = vadd.xlane.f32.xlu0 %v1977
        %v1979 = vpop.xlane.xlu0 %1978
        %1980 = vrot.lane.b32.xlu0 %v1888, 64
        %v1981 = vpop.permute.xlu0 %1980
        %vm1982 = vcmask 48128
        %v1984 = vsel %vm1982, %v1976, 0
        %vm1986 = vcmask 1045504
        %v1987 = vsel %vm1986, %v1981, 0
        %1989 = vmatprep.subr.mxu0 0.0
        %1990 = vmatpush1.msra.mxu0 %v1987
        %1991 = vmatprep.subr.mxu0 0.0
        %1992 = vmatpush1.msra.mxu0 0.0
        %1993 = vmatprep.subr.mxu0 0.0
        %1994 = vmatpush1.msra.mxu0 0.0
        %1995 = vmatprep.subr.mxu0 0.0
        %1996 = vmatpush1.msra.mxu0 0.0
        %1997 = vmatprep.subr.mxu0 0.0
        %1998 = vmatpush1.msra.mxu0 0.0
        %1999 = vmatprep.subr.mxu0 0.0
        %2000 = vmatpush1.msra.mxu0 0.0
        %2001 = vmatprep.subr.mxu0 0.0
        %2002 = vmatpush1.msra.mxu0 0.0
        %2003 = vmatprep.subr.mxu0 0.0
        %2004 = vmatpush1.msra.mxu0 0.0
        %2005 = vmatprep.subr.mxu0 0.0
        %2006 = vmatpush1.msra.mxu0 0.0
        %2007 = vmatprep.subr.mxu0 0.0
        %2008 = vmatpush1.msra.mxu0 0.0
        %2009 = vmatprep.subr.mxu0 0.0
        %2010 = vmatpush1.msra.mxu0 0.0
        %2011 = vmatprep.subr.mxu0 0.0
        %2012 = vmatpush1.msra.mxu0 0.0
        %2013 = vmatprep.subr.mxu0 0.0
        %2014 = vmatpush1.msra.mxu0 0.0
        %2015 = vmatprep.subr.mxu0 0.0
        %2016 = vmatpush1.msra.mxu0 0.0
        %2017 = vmatprep.subr.mxu0 0.0
        %2018 = vmatpush1.msra.mxu0 0.0
        %2019 = vmatprep.subr.mxu0 0.0
        %2020 = vmatpush1.msra.mxu0 0.0
        %2021 = vmatprep.subr.mxu0 0.0
        %2022 = vmatpush1.msra.mxu0 0.0
        %2023 = vmatprep.subr.mxu0 0.0
        %2024 = vmatpush1.msra.mxu0 0.0
        %2025 = vmatprep.subr.mxu0 0.0
        %2026 = vmatpush1.msra.mxu0 0.0
        %2027 = vmatprep.subr.mxu0 0.0
        %2028 = vmatpush1.msra.mxu0 0.0
        %2029 = vmatprep.subr.mxu0 0.0
        %2030 = vmatpush1.msra.mxu0 0.0
        %2031 = vmatprep.subr.mxu0 0.0
        %2032 = vmatpush1.msra.mxu0 0.0
        %2033 = vmatprep.subr.mxu0 0.0
        %2034 = vmatpush1.msra.mxu0 0.0
        %2035 = vmatprep.subr.mxu0 0.0
        %2036 = vmatpush1.msra.mxu0 0.0
        %2037 = vmatprep.subr.mxu0 0.0
        %2038 = vmatpush1.msra.mxu0 0.0
        %2039 = vmatprep.subr.mxu0 0.0
        %2040 = vmatpush1.msra.mxu0 0.0
        %2041 = vmatprep.subr.mxu0 0.0
        %2042 = vmatpush1.msra.mxu0 0.0
        %2043 = vmatprep.subr.mxu0 0.0
        %2044 = vmatpush1.msra.mxu0 0.0
        %2045 = vmatprep.subr.mxu0 0.0
        %2046 = vmatpush1.msra.mxu0 0.0
        %2047 = vmatprep.subr.mxu0 0.0
        %2048 = vmatpush1.msra.mxu0 0.0
        %2049 = vmatprep.subr.mxu0 0.0
        %2050 = vmatpush1.msra.mxu0 0.0
        %2051 = vmatprep.subr.mxu0 0.0
        %2052 = vmatpush1.msra.mxu0 0.0
        %2053 = vmatprep.mubr.f32.mxu0 0.0
        %2054 = vmatmul.mubr.f32.gmra.mrb[0].mxu0 %v1984
        %v2055 = vpop.f32.mrb[0].mxu0
        %v2056 = vadd.f32 0.0, %v2055
        %v2057 = vpop.f32.mrb[0].mxu0
        %2058 = vdwg.mxu0
        %v2059 = vrcp.pop %v1979
        %v2060 = vmul.f32 %v2056, %v2059
        %2061 = vrot.lane.b32.xlu0 %v1888, 120
        %v2062 = vpop.permute.xlu0 %2061
        %2063 = vrot.lane.b32.xlu0 %v1888, 88
        %v2064 = vpop.permute.xlu0 %2063
        %v2065 = vsel %vm1894, %v2062, 0
        %v2067 = vsel %vm1894, %v2064, 0
        %2069 = vmatprep.subr.mxu0 0.0
        %2070 = vmatpush1.xpose.msra.mxu0 %v2067
        %2071 = vmatprep.subr.mxu0 0.0
        %2072 = vmatpush1.xpose.msra.mxu0 0.0
        %2073 = vmatprep.subr.mxu0 0.0
        %2074 = vmatpush1.xpose.msra.mxu0 0.0
        %2075 = vmatprep.subr.mxu0 0.0
        %2076 = vmatpush1.xpose.msra.mxu0 0.0
        %2077 = vmatprep.subr.mxu0 0.0
        %2078 = vmatpush1.xpose.msra.mxu0 0.0
        %2079 = vmatprep.subr.mxu0 0.0
        %2080 = vmatpush1.xpose.msra.mxu0 0.0
        %2081 = vmatprep.subr.mxu0 0.0
        %2082 = vmatpush1.xpose.msra.mxu0 0.0
        %2083 = vmatprep.subr.mxu0 0.0
        %2084 = vmatpush1.xpose.msra.mxu0 0.0
        %2085 = vmatprep.subr.mxu0 0.0
        %2086 = vmatpush1.xpose.msra.mxu0 0.0
        %2087 = vmatprep.subr.mxu0 0.0
        %2088 = vmatpush1.xpose.msra.mxu0 0.0
        %2089 = vmatprep.subr.mxu0 0.0
        %2090 = vmatpush1.xpose.msra.mxu0 0.0
        %2091 = vmatprep.subr.mxu0 0.0
        %2092 = vmatpush1.xpose.msra.mxu0 0.0
        %2093 = vmatprep.subr.mxu0 0.0
        %2094 = vmatpush1.xpose.msra.mxu0 0.0
        %2095 = vmatprep.subr.mxu0 0.0
        %2096 = vmatpush1.xpose.msra.mxu0 0.0
        %2097 = vmatprep.subr.mxu0 0.0
        %2098 = vmatpush1.xpose.msra.mxu0 0.0
        %2099 = vmatprep.subr.mxu0 0.0
        %2100 = vmatpush1.xpose.msra.mxu0 0.0
        %2101 = vmatprep.subr.mxu0 0.0
        %2102 = vmatpush1.xpose.msra.mxu0 0.0
        %2103 = vmatprep.subr.mxu0 0.0
        %2104 = vmatpush1.xpose.msra.mxu0 0.0
        %2105 = vmatprep.subr.mxu0 0.0
        %2106 = vmatpush1.xpose.msra.mxu0 0.0
        %2107 = vmatprep.subr.mxu0 0.0
        %2108 = vmatpush1.xpose.msra.mxu0 0.0
        %2109 = vmatprep.subr.mxu0 0.0
        %2110 = vmatpush1.xpose.msra.mxu0 0.0
        %2111 = vmatprep.subr.mxu0 0.0
        %2112 = vmatpush1.xpose.msra.mxu0 0.0
        %2113 = vmatprep.subr.mxu0 0.0
        %2114 = vmatpush1.xpose.msra.mxu0 0.0
        %2115 = vmatprep.subr.mxu0 0.0
        %2116 = vmatpush1.xpose.msra.mxu0 0.0
        %2117 = vmatprep.subr.mxu0 0.0
        %2118 = vmatpush1.xpose.msra.mxu0 0.0
        %2119 = vmatprep.subr.mxu0 0.0
        %2120 = vmatpush1.xpose.msra.mxu0 0.0
        %2121 = vmatprep.subr.mxu0 0.0
        %2122 = vmatpush1.xpose.msra.mxu0 0.0
        %2123 = vmatprep.subr.mxu0 0.0
        %2124 = vmatpush1.xpose.msra.mxu0 0.0
        %2125 = vmatprep.subr.mxu0 0.0
        %2126 = vmatpush1.xpose.msra.mxu0 0.0
        %2127 = vmatprep.subr.mxu0 0.0
        %2128 = vmatpush1.xpose.msra.mxu0 0.0
        %2129 = vmatprep.subr.mxu0 0.0
        %2130 = vmatpush1.xpose.msra.mxu0 0.0
        %2131 = vmatprep.subr.mxu0 0.0
        %2132 = vmatpush1.xpose.msra.mxu0 0.0
        %2133 = vmatprep.mubr.f32.mxu0 0.0
        %2134 = vmatmul.mubr.f32.gmra.mrb[0].mxu0 %v2065
        %v2135 = vpop.f32.mrb[0].mxu0
        %v2136 = vadd.f32 0.0, %v2135
        %v2137 = vpop.f32.mrb[0].mxu0
        %2138 = vdwg.mxu0
        %v2139 = vmul.f32 %v2136, 0.35355338
        %v2140 = vsel %vm1970, %v2139, -inf
        %2141 = vmax.xlane.f32.xlu0 %v2140
        %v2142 = vpop.xlane.xlu0 %2141
        %v2143 = vsub.f32 %v2139, %v2142
        %v2144 = vmul.f32 %v2143, 1.442695
        %v2145 = vpow.pop %v2144
        %v2146 = vsel %vm1970, %v2145, 0.0
        %2147 = vadd.xlane.f32.xlu0 %v2146
        %v2148 = vpop.xlane.xlu0 %2147
        %2149 = vrot.lane.b32.xlu0 %v1888, 56
        %v2150 = vpop.permute.xlu0 %2149
        %v2152 = vsel %vm1982, %v2145, 0
        %v2154 = vsel %vm1986, %v2150, 0
        %2156 = vmatprep.subr.mxu0 0.0
        %2157 = vmatpush1.msra.mxu0 %v2154
        %2158 = vmatprep.subr.mxu0 0.0
        %2159 = vmatpush1.msra.mxu0 0.0
        %2160 = vmatprep.subr.mxu0 0.0
        %2161 = vmatpush1.msra.mxu0 0.0
        %2162 = vmatprep.subr.mxu0 0.0
        %2163 = vmatpush1.msra.mxu0 0.0
        %2164 = vmatprep.subr.mxu0 0.0
        %2165 = vmatpush1.msra.mxu0 0.0
        %2166 = vmatprep.subr.mxu0 0.0
        %2167 = vmatpush1.msra.mxu0 0.0
        %2168 = vmatprep.subr.mxu0 0.0
        %2169 = vmatpush1.msra.mxu0 0.0
        %2170 = vmatprep.subr.mxu0 0.0
        %2171 = vmatpush1.msra.mxu0 0.0
        %2172 = vmatprep.subr.mxu0 0.0
        %2173 = vmatpush1.msra.mxu0 0.0
        %2174 = vmatprep.subr.mxu0 0.0
        %2175 = vmatpush1.msra.mxu0 0.0
        %2176 = vmatprep.subr.mxu0 0.0
        %2177 = vmatpush1.msra.mxu0 0.0
        %2178 = vmatprep.subr.mxu0 0.0
        %2179 = vmatpush1.msra.mxu0 0.0
        %2180 = vmatprep.subr.mxu0 0.0
        %2181 = vmatpush1.msra.mxu0 0.0
        %2182 = vmatprep.subr.mxu0 0.0
        %2183 = vmatpush1.msra.mxu0 0.0
        %2184 = vmatprep.subr.mxu0 0.0
        %2185 = vmatpush1.msra.mxu0 0.0
        %2186 = vmatprep.subr.mxu0 0.0
        %2187 = vmatpush1.msra.mxu0 0.0
        %2188 = vmatprep.subr.mxu0 0.0
        %2189 = vmatpush1.msra.mxu0 0.0
        %2190 = vmatprep.subr.mxu0 0.0
        %2191 = vmatpush1.msra.mxu0 0.0
        %2192 = vmatprep.subr.mxu0 0.0
        %2193 = vmatpush1.msra.mxu0 0.0
        %2194 = vmatprep.subr.mxu0 0.0
        %2195 = vmatpush1.msra.mxu0 0.0
        %2196 = vmatprep.subr.mxu0 0.0
        %2197 = vmatpush1.msra.mxu0 0.0
        %2198 = vmatprep.subr.mxu0 0.0
        %2199 = vmatpush1.msra.mxu0 0.0
        %2200 = vmatprep.subr.mxu0 0.0
        %2201 = vmatpush1.msra.mxu0 0.0
        %2202 = vmatprep.subr.mxu0 0.0
        %2203 = vmatpush1.msra.mxu0 0.0
        %2204 = vmatprep.subr.mxu0 0.0
        %2205 = vmatpush1.msra.mxu0 0.0
        %2206 = vmatprep.subr.mxu0 0.0
        %2207 = vmatpush1.msra.mxu0 0.0
        %2208 = vmatprep.subr.mxu0 0.0
        %2209 = vmatpush1.msra.mxu0 0.0
        %2210 = vmatprep.subr.mxu0 0.0
        %2211 = vmatpush1.msra.mxu0 0.0
        %2212 = vmatprep.subr.mxu0 0.0
        %2213 = vmatpush1.msra.mxu0 0.0
        %2214 = vmatprep.subr.mxu0 0.0
        %2215 = vmatpush1.msra.mxu0 0.0
        %2216 = vmatprep.subr.mxu0 0.0
        %2217 = vmatpush1.msra.mxu0 0.0
        %2218 = vmatprep.subr.mxu0 0.0
        %2219 = vmatpush1.msra.mxu0 0.0
        %2220 = vmatprep.mubr.f32.mxu0 0.0
        %2221 = vmatmul.mubr.f32.gmra.mrb[0].mxu0 %v2152
        %v2222 = vpop.f32.mrb[0].mxu0
        %v2223 = vadd.f32 0.0, %v2222
        %v2224 = vpop.f32.mrb[0].mxu0
        %2225 = vdwg.mxu0
        %v2226 = vrcp.pop %v2148
        %v2227 = vmul.f32 %v2223, %v2226
        %2228 = vrot.lane.b32.xlu0 %v1888, 112
        %v2229 = vpop.permute.xlu0 %2228
        %2230 = vrot.lane.b32.xlu0 %v1888, 80
        %v2231 = vpop.permute.xlu0 %2230
        %v2232 = vsel %vm1894, %v2229, 0
        %v2234 = vsel %vm1894, %v2231, 0
        %2236 = vmatprep.subr.mxu0 0.0
        %2237 = vmatpush1.xpose.msra.mxu0 %v2234
        %2238 = vmatprep.subr.mxu0 0.0
        %2239 = vmatpush1.xpose.msra.mxu0 0.0
        %2240 = vmatprep.subr.mxu0 0.0
        %2241 = vmatpush1.xpose.msra.mxu0 0.0
        %2242 = vmatprep.subr.mxu0 0.0
        %2243 = vmatpush1.xpose.msra.mxu0 0.0
        %2244 = vmatprep.subr.mxu0 0.0
        %2245 = vmatpush1.xpose.msra.mxu0 0.0
        %2246 = vmatprep.subr.mxu0 0.0
        %2247 = vmatpush1.xpose.msra.mxu0 0.0
        %2248 = vmatprep.subr.mxu0 0.0
        %2249 = vmatpush1.xpose.msra.mxu0 0.0
        %2250 = vmatprep.subr.mxu0 0.0
        %2251 = vmatpush1.xpose.msra.mxu0 0.0
        %2252 = vmatprep.subr.mxu0 0.0
        %2253 = vmatpush1.xpose.msra.mxu0 0.0
        %2254 = vmatprep.subr.mxu0 0.0
        %2255 = vmatpush1.xpose.msra.mxu0 0.0
        %2256 = vmatprep.subr.mxu0 0.0
        %2257 = vmatpush1.xpose.msra.mxu0 0.0
        %2258 = vmatprep.subr.mxu0 0.0
        %2259 = vmatpush1.xpose.msra.mxu0 0.0
        %2260 = vmatprep.subr.mxu0 0.0
        %2261 = vmatpush1.xpose.msra.mxu0 0.0
        %2262 = vmatprep.subr.mxu0 0.0
        %2263 = vmatpush1.xpose.msra.mxu0 0.0
        %2264 = vmatprep.subr.mxu0 0.0
        %2265 = vmatpush1.xpose.msra.mxu0 0.0
        %2266 = vmatprep.subr.mxu0 0.0
        %2267 = vmatpush1.xpose.msra.mxu0 0.0
        %2268 = vmatprep.subr.mxu0 0.0
        %2269 = vmatpush1.xpose.msra.mxu0 0.0
        %2270 = vmatprep.subr.mxu0 0.0
        %2271 = vmatpush1.xpose.msra.mxu0 0.0
        %2272 = vmatprep.subr.mxu0 0.0
        %2273 = vmatpush1.xpose.msra.mxu0 0.0
        %2274 = vmatprep.subr.mxu0 0.0
        %2275 = vmatpush1.xpose.msra.mxu0 0.0
        %2276 = vmatprep.subr.mxu0 0.0
        %2277 = vmatpush1.xpose.msra.mxu0 0.0
        %2278 = vmatprep.subr.mxu0 0.0
        %2279 = vmatpush1.xpose.msra.mxu0 0.0
        %2280 = vmatprep.subr.mxu0 0.0
        %2281 = vmatpush1.xpose.msra.mxu0 0.0
        %2282 = vmatprep.subr.mxu0 0.0
        %2283 = vmatpush1.xpose.msra.mxu0 0.0
        %2284 = vmatprep.subr.mxu0 0.0
        %2285 = vmatpush1.xpose.msra.mxu0 0.0
        %2286 = vmatprep.subr.mxu0 0.0
        %2287 = vmatpush1.xpose.msra.mxu0 0.0
        %2288 = vmatprep.subr.mxu0 0.0
        %2289 = vmatpush1.xpose.msra.mxu0 0.0
        %2290 = vmatprep.subr.mxu0 0.0
        %2291 = vmatpush1.xpose.msra.mxu0 0.0
        %2292 = vmatprep.subr.mxu0 0.0
        %2293 = vmatpush1.xpose.msra.mxu0 0.0
        %2294 = vmatprep.subr.mxu0 0.0
        %2295 = vmatpush1.xpose.msra.mxu0 0.0
        %2296 = vmatprep.subr.mxu0 0.0
        %2297 = vmatpush1.xpose.msra.mxu0 0.0
        %2298 = vmatprep.subr.mxu0 0.0
        %2299 = vmatpush1.xpose.msra.mxu0 0.0
        %2300 = vmatprep.mubr.f32.mxu0 0.0
        %2301 = vmatmul.mubr.f32.gmra.mrb[0].mxu0 %v2232
        %v2302 = vpop.f32.mrb[0].mxu0
        %v2303 = vadd.f32 0.0, %v2302
        %v2304 = vpop.f32.mrb[0].mxu0
        %2305 = vdwg.mxu0
        %v2306 = vmul.f32 %v2303, 0.35355338
        %v2307 = vsel %vm1970, %v2306, -inf
        %2308 = vmax.xlane.f32.xlu0 %v2307
        %v2309 = vpop.xlane.xlu0 %2308
        %v2310 = vsub.f32 %v2306, %v2309
        %v2311 = vmul.f32 %v2310, 1.442695
        %v2312 = vpow.pop %v2311
        %v2313 = vsel %vm1970, %v2312, 0.0
        %2314 = vadd.xlane.f32.xlu0 %v2313
        %v2315 = vpop.xlane.xlu0 %2314
        %2316 = vrot.lane.b32.xlu0 %v1888, 48
        %v2317 = vpop.permute.xlu0 %2316
        %v2319 = vsel %vm1982, %v2312, 0
        %v2321 = vsel %vm1986, %v2317, 0
        %2323 = vmatprep.subr.mxu0 0.0
        %2324 = vmatpush1.msra.mxu0 %v2321
        %2325 = vmatprep.subr.mxu0 0.0
        %2326 = vmatpush1.msra.mxu0 0.0
        %2327 = vmatprep.subr.mxu0 0.0
        %2328 = vmatpush1.msra.mxu0 0.0
        %2329 = vmatprep.subr.mxu0 0.0
        %2330 = vmatpush1.msra.mxu0 0.0
        %2331 = vmatprep.subr.mxu0 0.0
        %2332 = vmatpush1.msra.mxu0 0.0
        %2333 = vmatprep.subr.mxu0 0.0
        %2334 = vmatpush1.msra.mxu0 0.0
        %2335 = vmatprep.subr.mxu0 0.0
        %2336 = vmatpush1.msra.mxu0 0.0
        %2337 = vmatprep.subr.mxu0 0.0
        %2338 = vmatpush1.msra.mxu0 0.0
        %2339 = vmatprep.subr.mxu0 0.0
        %2340 = vmatpush1.msra.mxu0 0.0
        %2341 = vmatprep.subr.mxu0 0.0
        %2342 = vmatpush1.msra.mxu0 0.0
        %2343 = vmatprep.subr.mxu0 0.0
        %2344 = vmatpush1.msra.mxu0 0.0
        %2345 = vmatprep.subr.mxu0 0.0
        %2346 = vmatpush1.msra.mxu0 0.0
        %2347 = vmatprep.subr.mxu0 0.0
        %2348 = vmatpush1.msra.mxu0 0.0
        %2349 = vmatprep.subr.mxu0 0.0
        %2350 = vmatpush1.msra.mxu0 0.0
        %2351 = vmatprep.subr.mxu0 0.0
        %2352 = vmatpush1.msra.mxu0 0.0
        %2353 = vmatprep.subr.mxu0 0.0
        %2354 = vmatpush1.msra.mxu0 0.0
        %2355 = vmatprep.subr.mxu0 0.0
        %2356 = vmatpush1.msra.mxu0 0.0
        %2357 = vmatprep.subr.mxu0 0.0
        %2358 = vmatpush1.msra.mxu0 0.0
        %2359 = vmatprep.subr.mxu0 0.0
        %2360 = vmatpush1.msra.mxu0 0.0
        %2361 = vmatprep.subr.mxu0 0.0
        %2362 = vmatpush1.msra.mxu0 0.0
        %2363 = vmatprep.subr.mxu0 0.0
        %2364 = vmatpush1.msra.mxu0 0.0
        %2365 = vmatprep.subr.mxu0 0.0
        %2366 = vmatpush1.msra.mxu0 0.0
        %2367 = vmatprep.subr.mxu0 0.0
        %2368 = vmatpush1.msra.mxu0 0.0
        %2369 = vmatprep.subr.mxu0 0.0
        %2370 = vmatpush1.msra.mxu0 0.0
        %2371 = vmatprep.subr.mxu0 0.0
        %2372 = vmatpush1.msra.mxu0 0.0
        %2373 = vmatprep.subr.mxu0 0.0
        %2374 = vmatpush1.msra.mxu0 0.0
        %2375 = vmatprep.subr.mxu0 0.0
        %2376 = vmatpush1.msra.mxu0 0.0
        %2377 = vmatprep.subr.mxu0 0.0
        %2378 = vmatpush1.msra.mxu0 0.0
        %2379 = vmatprep.subr.mxu0 0.0
        %2380 = vmatpush1.msra.mxu0 0.0
        %2381 = vmatprep.subr.mxu0 0.0
        %2382 = vmatpush1.msra.mxu0 0.0
        %2383 = vmatprep.subr.mxu0 0.0
        %2384 = vmatpush1.msra.mxu0 0.0
        %2385 = vmatprep.subr.mxu0 0.0
        %2386 = vmatpush1.msra.mxu0 0.0
        %2387 = vmatprep.mubr.f32.mxu0 0.0
        %2388 = vmatmul.mubr.f32.gmra.mrb[0].mxu0 %v2319
        %v2389 = vpop.f32.mrb[0].mxu0
        %v2390 = vadd.f32 0.0, %v2389
        %v2391 = vpop.f32.mrb[0].mxu0
        %2392 = vdwg.mxu0
        %v2393 = vrcp.pop %v2315
        %v2394 = vmul.f32 %v2390, %v2393
        %2395 = vrot.lane.b32.xlu0 %v1888, 104
        %v2396 = vpop.permute.xlu0 %2395
        %2397 = vrot.lane.b32.xlu0 %v1888, 72
        %v2398 = vpop.permute.xlu0 %2397
        %v2399 = vsel %vm1894, %v2396, 0
        %v2401 = vsel %vm1894, %v2398, 0
        %2403 = vmatprep.subr.mxu0 0.0
        %2404 = vmatpush1.xpose.msra.mxu0 %v2401
        %2405 = vmatprep.subr.mxu0 0.0
        %2406 = vmatpush1.xpose.msra.mxu0 0.0
        %2407 = vmatprep.subr.mxu0 0.0
        %2408 = vmatpush1.xpose.msra.mxu0 0.0
        %2409 = vmatprep.subr.mxu0 0.0
        %2410 = vmatpush1.xpose.msra.mxu0 0.0
        %2411 = vmatprep.subr.mxu0 0.0
        %2412 = vmatpush1.xpose.msra.mxu0 0.0
        %2413 = vmatprep.subr.mxu0 0.0
        %2414 = vmatpush1.xpose.msra.mxu0 0.0
        %2415 = vmatprep.subr.mxu0 0.0
        %2416 = vmatpush1.xpose.msra.mxu0 0.0
        %2417 = vmatprep.subr.mxu0 0.0
        %2418 = vmatpush1.xpose.msra.mxu0 0.0
        %2419 = vmatprep.subr.mxu0 0.0
        %2420 = vmatpush1.xpose.msra.mxu0 0.0
        %2421 = vmatprep.subr.mxu0 0.0
        %2422 = vmatpush1.xpose.msra.mxu0 0.0
        %2423 = vmatprep.subr.mxu0 0.0
        %2424 = vmatpush1.xpose.msra.mxu0 0.0
        %2425 = vmatprep.subr.mxu0 0.0
        %2426 = vmatpush1.xpose.msra.mxu0 0.0
        %2427 = vmatprep.subr.mxu0 0.0
        %2428 = vmatpush1.xpose.msra.mxu0 0.0
        %2429 = vmatprep.subr.mxu0 0.0
        %2430 = vmatpush1.xpose.msra.mxu0 0.0
        %2431 = vmatprep.subr.mxu0 0.0
        %2432 = vmatpush1.xpose.msra.mxu0 0.0
        %2433 = vmatprep.subr.mxu0 0.0
        %2434 = vmatpush1.xpose.msra.mxu0 0.0
        %2435 = vmatprep.subr.mxu0 0.0
        %2436 = vmatpush1.xpose.msra.mxu0 0.0
        %2437 = vmatprep.subr.mxu0 0.0
        %2438 = vmatpush1.xpose.msra.mxu0 0.0
        %2439 = vmatprep.subr.mxu0 0.0
        %2440 = vmatpush1.xpose.msra.mxu0 0.0
        %2441 = vmatprep.subr.mxu0 0.0
        %2442 = vmatpush1.xpose.msra.mxu0 0.0
        %2443 = vmatprep.subr.mxu0 0.0
        %2444 = vmatpush1.xpose.msra.mxu0 0.0
        %2445 = vmatprep.subr.mxu0 0.0
        %2446 = vmatpush1.xpose.msra.mxu0 0.0
        %2447 = vmatprep.subr.mxu0 0.0
        %2448 = vmatpush1.xpose.msra.mxu0 0.0
        %2449 = vmatprep.subr.mxu0 0.0
        %2450 = vmatpush1.xpose.msra.mxu0 0.0
        %2451 = vmatprep.subr.mxu0 0.0
        %2452 = vmatpush1.xpose.msra.mxu0 0.0
        %2453 = vmatprep.subr.mxu0 0.0
        %2454 = vmatpush1.xpose.msra.mxu0 0.0
        %2455 = vmatprep.subr.mxu0 0.0
        %2456 = vmatpush1.xpose.msra.mxu0 0.0
        %2457 = vmatprep.subr.mxu0 0.0
        %2458 = vmatpush1.xpose.msra.mxu0 0.0
        %2459 = vmatprep.subr.mxu0 0.0
        %2460 = vmatpush1.xpose.msra.mxu0 0.0
        %2461 = vmatprep.subr.mxu0 0.0
        %2462 = vmatpush1.xpose.msra.mxu0 0.0
        %2463 = vmatprep.subr.mxu0 0.0
        %2464 = vmatpush1.xpose.msra.mxu0 0.0
        %2465 = vmatprep.subr.mxu0 0.0
        %2466 = vmatpush1.xpose.msra.mxu0 0.0
        %2467 = vmatprep.mubr.f32.mxu0 0.0
        %2468 = vmatmul.mubr.f32.gmra.mrb[0].mxu0 %v2399
        %v2469 = vpop.f32.mrb[0].mxu0
        %v2470 = vadd.f32 0.0, %v2469
        %v2471 = vpop.f32.mrb[0].mxu0
        %2472 = vdwg.mxu0
        %v2473 = vmul.f32 %v2470, 0.35355338
        %v2474 = vsel %vm1970, %v2473, -inf
        %2475 = vmax.xlane.f32.xlu0 %v2474
        %v2476 = vpop.xlane.xlu0 %2475
        %v2477 = vsub.f32 %v2473, %v2476
        %v2478 = vmul.f32 %v2477, 1.442695
        %v2479 = vpow.pop %v2478
        %v2480 = vsel %vm1970, %v2479, 0.0
        %2481 = vadd.xlane.f32.xlu0 %v2480
        %v2482 = vpop.xlane.xlu0 %2481
        %2483 = vrot.lane.b32.xlu0 %v1888, 40
        %v2484 = vpop.permute.xlu0 %2483
        %v2486 = vsel %vm1982, %v2479, 0
        %v2488 = vsel %vm1986, %v2484, 0
        %2490 = vmatprep.subr.mxu0 0.0
        %2491 = vmatpush1.msra.mxu0 %v2488
        %2492 = vmatprep.subr.mxu0 0.0
        %2493 = vmatpush1.msra.mxu0 0.0
        %2494 = vmatprep.subr.mxu0 0.0
        %2495 = vmatpush1.msra.mxu0 0.0
        %2496 = vmatprep.subr.mxu0 0.0
        %2497 = vmatpush1.msra.mxu0 0.0
        %2498 = vmatprep.subr.mxu0 0.0
        %2499 = vmatpush1.msra.mxu0 0.0
        %2500 = vmatprep.subr.mxu0 0.0
        %2501 = vmatpush1.msra.mxu0 0.0
        %2502 = vmatprep.subr.mxu0 0.0
        %2503 = vmatpush1.msra.mxu0 0.0
        %2504 = vmatprep.subr.mxu0 0.0
        %2505 = vmatpush1.msra.mxu0 0.0
        %2506 = vmatprep.subr.mxu0 0.0
        %2507 = vmatpush1.msra.mxu0 0.0
        %2508 = vmatprep.subr.mxu0 0.0
        %2509 = vmatpush1.msra.mxu0 0.0
        %2510 = vmatprep.subr.mxu0 0.0
        %2511 = vmatpush1.msra.mxu0 0.0
        %2512 = vmatprep.subr.mxu0 0.0
        %2513 = vmatpush1.msra.mxu0 0.0
        %2514 = vmatprep.subr.mxu0 0.0
        %2515 = vmatpush1.msra.mxu0 0.0
        %2516 = vmatprep.subr.mxu0 0.0
        %2517 = vmatpush1.msra.mxu0 0.0
        %2518 = vmatprep.subr.mxu0 0.0
        %2519 = vmatpush1.msra.mxu0 0.0
        %2520 = vmatprep.subr.mxu0 0.0
        %2521 = vmatpush1.msra.mxu0 0.0
        %2522 = vmatprep.subr.mxu0 0.0
        %2523 = vmatpush1.msra.mxu0 0.0
        %2524 = vmatprep.subr.mxu0 0.0
        %2525 = vmatpush1.msra.mxu0 0.0
        %2526 = vmatprep.subr.mxu0 0.0
        %2527 = vmatpush1.msra.mxu0 0.0
        %2528 = vmatprep.subr.mxu0 0.0
        %2529 = vmatpush1.msra.mxu0 0.0
        %2530 = vmatprep.subr.mxu0 0.0
        %2531 = vmatpush1.msra.mxu0 0.0
        %2532 = vmatprep.subr.mxu0 0.0
        %2533 = vmatpush1.msra.mxu0 0.0
        %2534 = vmatprep.subr.mxu0 0.0
        %2535 = vmatpush1.msra.mxu0 0.0
        %2536 = vmatprep.subr.mxu0 0.0
        %2537 = vmatpush1.msra.mxu0 0.0
        %2538 = vmatprep.subr.mxu0 0.0
        %2539 = vmatpush1.msra.mxu0 0.0
        %2540 = vmatprep.subr.mxu0 0.0
        %2541 = vmatpush1.msra.mxu0 0.0
        %2542 = vmatprep.subr.mxu0 0.0
        %2543 = vmatpush1.msra.mxu0 0.0
        %2544 = vmatprep.subr.mxu0 0.0
        %2545 = vmatpush1.msra.mxu0 0.0
        %2546 = vmatprep.subr.mxu0 0.0
        %2547 = vmatpush1.msra.mxu0 0.0
        %2548 = vmatprep.subr.mxu0 0.0
        %2549 = vmatpush1.msra.mxu0 0.0
        %2550 = vmatprep.subr.mxu0 0.0
        %2551 = vmatpush1.msra.mxu0 0.0
        %2552 = vmatprep.subr.mxu0 0.0
        %2553 = vmatpush1.msra.mxu0 0.0
        %2554 = vmatprep.mubr.f32.mxu0 0.0
        %2555 = vmatmul.mubr.f32.gmra.mrb[0].mxu0 %v2486
        %v2556 = vpop.f32.mrb[0].mxu0
        %v2557 = vadd.f32 0.0, %v2556
        %v2558 = vpop.f32.mrb[0].mxu0
        %2559 = vdwg.mxu0
        %v2560 = vrcp.pop %v2482
        %v2561 = vmul.f32 %v2557, %v2560
        %2563 = vrot.lane.b32.xlu0 %v2227, 8
        %v2564 = vpop.permute.xlu0 %2563
        %2567 = vrot.lane.b32.xlu0 %v2394, 16
        %v2568 = vpop.permute.xlu0 %2567
        %2571 = vrot.lane.b32.xlu0 %v2561, 24
        %v2572 = vpop.permute.xlu0 %2571
        %v2574 = vsel %vm1894, %v2060, %v2564
        %vm2575 = vcmask 130048
        %v2576 = vsel %vm2575, %v2574, %v2568
        %vm2577 = vcmask 195584
        %v2578 = vsel %vm2577, %v2576, %v2572
        %v2579 = vld [vmem:[#allocation10] sm:$0xff]
        %v2580 = vld [vmem:[#allocation10 + $0x8] sm:$0xff]
        %v2581 = vld [vmem:[#allocation10 + $0x10] sm:$0xff]
        %v2582 = vld [vmem:[#allocation10 + $0x18] sm:$0xff]
        %v2583 = vld [vmem:[#allocation11] sm:$0x1]
        %v2585 = vlaneseq
        %v2586 = vshrl.u32 %v2585, 7
        %v2587 = vsub.s32 0, %v2586
        %v2588 = vrot.slane %v2583, %v2587
        %v2591 = vsel %vm1817, %v2578, 0
        %2593 = vmatprep.subr.mxu0 0.0
        %2594 = vmatpush1.msra.mxu0 %v2579
        %2595 = vmatprep.subr.mxu0 0.0
        %2596 = vmatpush1.msra.mxu0 %v2580
        %2597 = vmatprep.subr.mxu0 0.0
        %2598 = vmatpush1.msra.mxu0 %v2581
        %2599 = vmatprep.subr.mxu0 0.0
        %2600 = vmatpush1.msra.mxu0 %v2582
        %2601 = vmatprep.subr.mxu0 0.0
        %2602 = vmatpush1.msra.mxu0 0.0
        %2603 = vmatprep.subr.mxu0 0.0
        %2604 = vmatpush1.msra.mxu0 0.0
        %2605 = vmatprep.subr.mxu0 0.0
        %2606 = vmatpush1.msra.mxu0 0.0
        %2607 = vmatprep.subr.mxu0 0.0
        %2608 = vmatpush1.msra.mxu0 0.0
        %2609 = vmatprep.subr.mxu0 0.0
        %2610 = vmatpush1.msra.mxu0 0.0
        %2611 = vmatprep.subr.mxu0 0.0
        %2612 = vmatpush1.msra.mxu0 0.0
        %2613 = vmatprep.subr.mxu0 0.0
        %2614 = vmatpush1.msra.mxu0 0.0
        %2615 = vmatprep.subr.mxu0 0.0
        %2616 = vmatpush1.msra.mxu0 0.0
        %2617 = vmatprep.subr.mxu0 0.0
        %2618 = vmatpush1.msra.mxu0 0.0
        %2619 = vmatprep.subr.mxu0 0.0
        %2620 = vmatpush1.msra.mxu0 0.0
        %2621 = vmatprep.subr.mxu0 0.0
        %2622 = vmatpush1.msra.mxu0 0.0
        %2623 = vmatprep.subr.mxu0 0.0
        %2624 = vmatpush1.msra.mxu0 0.0
        %2625 = vmatprep.subr.mxu0 0.0
        %2626 = vmatpush1.msra.mxu0 0.0
        %2627 = vmatprep.subr.mxu0 0.0
        %2628 = vmatpush1.msra.mxu0 0.0
        %2629 = vmatprep.subr.mxu0 0.0
        %2630 = vmatpush1.msra.mxu0 0.0
        %2631 = vmatprep.subr.mxu0 0.0
        %2632 = vmatpush1.msra.mxu0 0.0
        %2633 = vmatprep.subr.mxu0 0.0
        %2634 = vmatpush1.msra.mxu0 0.0
        %2635 = vmatprep.subr.mxu0 0.0
        %2636 = vmatpush1.msra.mxu0 0.0
        %2637 = vmatprep.subr.mxu0 0.0
        %2638 = vmatpush1.msra.mxu0 0.0
        %2639 = vmatprep.subr.mxu0 0.0
        %2640 = vmatpush1.msra.mxu0 0.0
        %2641 = vmatprep.subr.mxu0 0.0
        %2642 = vmatpush1.msra.mxu0 0.0
        %2643 = vmatprep.subr.mxu0 0.0
        %2644 = vmatpush1.msra.mxu0 0.0
        %2645 = vmatprep.subr.mxu0 0.0
        %2646 = vmatpush1.msra.mxu0 0.0
        %2647 = vmatprep.subr.mxu0 0.0
        %2648 = vmatpush1.msra.mxu0 0.0
        %2649 = vmatprep.subr.mxu0 0.0
        %2650 = vmatpush1.msra.mxu0 0.0
        %2651 = vmatprep.subr.mxu0 0.0
        %2652 = vmatpush1.msra.mxu0 0.0
        %2653 = vmatprep.subr.mxu0 0.0
        %2654 = vmatpush1.msra.mxu0 0.0
        %2655 = vmatprep.subr.mxu0 0.0
        %2656 = vmatpush1.msra.mxu0 0.0
        %2657 = vmatprep.mubr.f32.mxu0 0.0
        %2658 = vmatmul.mubr.f32.gmra.mrb[0].mxu0 %v2591
        %v2659 = vpop.f32.mrb[0].mxu0
        %v2660 = vadd.f32 %v2588, %v2659
        %v2661 = vpop.f32.mrb[0].mxu0
        %2662 = vdwg.mxu0
        %v2663 = vadd.f32 %v1804, %v2660
        %vm2664 = vcmask 259072
        %v2665 = vsel %vm2664, %v2663, 0.0
        %2666 = vadd.xlane.f32.xlu0 %v2665
        %v2667 = vpop.xlane.xlu0 %2666
        %v2668 = vrcp.pop 32.0
        %v2669 = vmul.f32 %v2667, %v2668
        %v2670 = vsub.f32 %v2663, %v2669
        %v2671 = vmul.f32 %v2670, %v2670
        %v2672 = vsel %vm2664, %v2671, 0.0
        %2673 = vadd.xlane.f32.xlu0 %v2672
        %v2674 = vpop.xlane.xlu0 %2673
        %v2675 = vmul.f32 %v2674, %v2668
        %v2676 = vadd.f32 %v2675, 1e-05
        %v2677 = vrsqrt.pop %v2676
        %v2678 = vmul.f32 %v2670, %v2677
        %v2679 = vld [vmem:[%s15] sm:$0x1]
        %v2681 = vlaneseq
        %v2682 = vshrl.u32 %v2681, 7
        %v2683 = vsub.s32 0, %v2682
        %v2684 = vrot.slane %v2679, %v2683
        %v2686 = vmul.f32 %v2678, %v2684
        %v2687 = vld [vmem:[%s17] sm:$0x1]
        %v2689 = vlaneseq
        %v2690 = vshrl.u32 %v2689, 7
        %v2691 = vsub.s32 0, %v2690
        %v2692 = vrot.slane %v2687, %v2691
        %v2694 = vadd.f32 %v2686, %v2692
        %v2695 = vld [vmem:[#allocation13] sm:$0xff]
        %v2696 = vld [vmem:[#allocation13 + $0x8] sm:$0xff]
        %v2697 = vld [vmem:[#allocation13 + $0x10] sm:$0xff]
        %v2698 = vld [vmem:[#allocation13 + $0x18] sm:$0xff]
        %v2699 = vld [vmem:[#allocation14] sm:$0x1]
        %v2701 = vlaneseq
        %v2702 = vshrl.u32 %v2701, 7
        %v2703 = vsub.s32 0, %v2702
        %v2704 = vrot.slane %v2699, %v2703
        %v2707 = vsel %vm1817, %v2694, 0
        %2709 = vmatprep.subr.mxu0 0.0
        %2710 = vmatpush1.msra.mxu0 %v2695
        %2711 = vmatprep.subr.mxu0 0.0
        %2712 = vmatpush1.msra.mxu0 %v2696
        %2713 = vmatprep.subr.mxu0 0.0
        %2714 = vmatpush1.msra.mxu0 %v2697
        %2715 = vmatprep.subr.mxu0 0.0
        %2716 = vmatpush1.msra.mxu0 %v2698
        %2717 = vmatprep.subr.mxu0 0.0
        %2718 = vmatpush1.msra.mxu0 0.0
        %2719 = vmatprep.subr.mxu0 0.0
        %2720 = vmatpush1.msra.mxu0 0.0
        %2721 = vmatprep.subr.mxu0 0.0
        %2722 = vmatpush1.msra.mxu0 0.0
        %2723 = vmatprep.subr.mxu0 0.0
        %2724 = vmatpush1.msra.mxu0 0.0
        %2725 = vmatprep.subr.mxu0 0.0
        %2726 = vmatpush1.msra.mxu0 0.0
        %2727 = vmatprep.subr.mxu0 0.0
        %2728 = vmatpush1.msra.mxu0 0.0
        %2729 = vmatprep.subr.mxu0 0.0
        %2730 = vmatpush1.msra.mxu0 0.0
        %2731 = vmatprep.subr.mxu0 0.0
        %2732 = vmatpush1.msra.mxu0 0.0
        %2733 = vmatprep.subr.mxu0 0.0
        %2734 = vmatpush1.msra.mxu0 0.0
        %2735 = vmatprep.subr.mxu0 0.0
        %2736 = vmatpush1.msra.mxu0 0.0
        %2737 = vmatprep.subr.mxu0 0.0
        %2738 = vmatpush1.msra.mxu0 0.0
        %2739 = vmatprep.subr.mxu0 0.0
        %2740 = vmatpush1.msra.mxu0 0.0
        %2741 = vmatprep.subr.mxu0 0.0
        %2742 = vmatpush1.msra.mxu0 0.0
        %2743 = vmatprep.subr.mxu0 0.0
        %2744 = vmatpush1.msra.mxu0 0.0
        %2745 = vmatprep.subr.mxu0 0.0
        %2746 = vmatpush1.msra.mxu0 0.0
        %2747 = vmatprep.subr.mxu0 0.0
        %2748 = vmatpush1.msra.mxu0 0.0
        %2749 = vmatprep.subr.mxu0 0.0
        %2750 = vmatpush1.msra.mxu0 0.0
        %2751 = vmatprep.subr.mxu0 0.0
        %2752 = vmatpush1.msra.mxu0 0.0
        %2753 = vmatprep.subr.mxu0 0.0
        %2754 = vmatpush1.msra.mxu0 0.0
        %2755 = vmatprep.subr.mxu0 0.0
        %2756 = vmatpush1.msra.mxu0 0.0
        %2757 = vmatprep.subr.mxu0 0.0
        %2758 = vmatpush1.msra.mxu0 0.0
        %2759 = vmatprep.subr.mxu0 0.0
        %2760 = vmatpush1.msra.mxu0 0.0
        %2761 = vmatprep.subr.mxu0 0.0
        %2762 = vmatpush1.msra.mxu0 0.0
        %2763 = vmatprep.subr.mxu0 0.0
        %2764 = vmatpush1.msra.mxu0 0.0
        %2765 = vmatprep.subr.mxu0 0.0
        %2766 = vmatpush1.msra.mxu0 0.0
        %2767 = vmatprep.subr.mxu0 0.0
        %2768 = vmatpush1.msra.mxu0 0.0
        %2769 = vmatprep.subr.mxu0 0.0
        %2770 = vmatpush1.msra.mxu0 0.0
        %2771 = vmatprep.subr.mxu0 0.0
        %2772 = vmatpush1.msra.mxu0 0.0
        %2773 = vmatprep.mubr.f32.mxu0 0.0
        %2774 = vmatmul.mubr.f32.gmra.mrb[0].mxu0 %v2707
        %v2775 = vpop.f32.mrb[0].mxu0
        %v2776 = vadd.f32 %v2704, %v2775
        %v2777 = vpop.f32.mrb[0].mxu0
        %2778 = vdwg.mxu0
        %v2779 = vmax.f32 %v2776, 0.0
        %v2780 = vld [vmem:[#allocation16] sm:$0xff]
        %v2781 = vld [vmem:[#allocation16 + $0x8] sm:$0xff]
        %v2782 = vld [vmem:[#allocation16 + $0x10] sm:$0xff]
        %v2783 = vld [vmem:[#allocation16 + $0x18] sm:$0xff]
        %v2784 = vld [vmem:[#allocation16 + $0x20] sm:$0xff]
        %v2785 = vld [vmem:[#allocation16 + $0x28] sm:$0xff]
        %v2786 = vld [vmem:[#allocation16 + $0x30] sm:$0xff]
        %v2787 = vld [vmem:[#allocation16 + $0x38] sm:$0xff]
        %v2788 = vld [vmem:[#allocation17] sm:$0x1]
        %v2790 = vlaneseq
        %v2791 = vshrl.u32 %v2790, 7
        %v2792 = vsub.s32 0, %v2791
        %v2793 = vrot.slane %v2788, %v2792
        %vm2795 = vcmask 523264
        %v2797 = vsel %vm2795, %v2779, 0
        %2799 = vmatprep.subr.mxu0 0.0
        %2800 = vmatpush1.msra.mxu0 %v2780
        %2801 = vmatprep.subr.mxu0 0.0
        %2802 = vmatpush1.msra.mxu0 %v2781
        %2803 = vmatprep.subr.mxu0 0.0
        %2804 = vmatpush1.msra.mxu0 %v2782
        %2805 = vmatprep.subr.mxu0 0.0
        %2806 = vmatpush1.msra.mxu0 %v2783
        %2807 = vmatprep.subr.mxu0 0.0
        %2808 = vmatpush1.msra.mxu0 %v2784
        %2809 = vmatprep.subr.mxu0 0.0
        %2810 = vmatpush1.msra.mxu0 %v2785
        %2811 = vmatprep.subr.mxu0 0.0
        %2812 = vmatpush1.msra.mxu0 %v2786
        %2813 = vmatprep.subr.mxu0 0.0
        %2814 = vmatpush1.msra.mxu0 %v2787
        %2815 = vmatprep.subr.mxu0 0.0
        %2816 = vmatpush1.msra.mxu0 0.0
        %2817 = vmatprep.subr.mxu0 0.0
        %2818 = vmatpush1.msra.mxu0 0.0
        %2819 = vmatprep.subr.mxu0 0.0
        %2820 = vmatpush1.msra.mxu0 0.0
        %2821 = vmatprep.subr.mxu0 0.0
        %2822 = vmatpush1.msra.mxu0 0.0
        %2823 = vmatprep.subr.mxu0 0.0
        %2824 = vmatpush1.msra.mxu0 0.0
        %2825 = vmatprep.subr.mxu0 0.0
        %2826 = vmatpush1.msra.mxu0 0.0
        %2827 = vmatprep.subr.mxu0 0.0
        %2828 = vmatpush1.msra.mxu0 0.0
        %2829 = vmatprep.subr.mxu0 0.0
        %2830 = vmatpush1.msra.mxu0 0.0
        %2831 = vmatprep.subr.mxu0 0.0
        %2832 = vmatpush1.msra.mxu0 0.0
        %2833 = vmatprep.subr.mxu0 0.0
        %2834 = vmatpush1.msra.mxu0 0.0
        %2835 = vmatprep.subr.mxu0 0.0
        %2836 = vmatpush1.msra.mxu0 0.0
        %2837 = vmatprep.subr.mxu0 0.0
        %2838 = vmatpush1.msra.mxu0 0.0
        %2839 = vmatprep.subr.mxu0 0.0
        %2840 = vmatpush1.msra.mxu0 0.0
        %2841 = vmatprep.subr.mxu0 0.0
        %2842 = vmatpush1.msra.mxu0 0.0
        %2843 = vmatprep.subr.mxu0 0.0
        %2844 = vmatpush1.msra.mxu0 0.0
        %2845 = vmatprep.subr.mxu0 0.0
        %2846 = vmatpush1.msra.mxu0 0.0
        %2847 = vmatprep.subr.mxu0 0.0
        %2848 = vmatpush1.msra.mxu0 0.0
        %2849 = vmatprep.subr.mxu0 0.0
        %2850 = vmatpush1.msra.mxu0 0.0
        %2851 = vmatprep.subr.mxu0 0.0
        %2852 = vmatpush1.msra.mxu0 0.0
        %2853 = vmatprep.subr.mxu0 0.0
        %2854 = vmatpush1.msra.mxu0 0.0
        %2855 = vmatprep.subr.mxu0 0.0
        %2856 = vmatpush1.msra.mxu0 0.0
        %2857 = vmatprep.subr.mxu0 0.0
        %2858 = vmatpush1.msra.mxu0 0.0
        %2859 = vmatprep.subr.mxu0 0.0
        %2860 = vmatpush1.msra.mxu0 0.0
        %2861 = vmatprep.subr.mxu0 0.0
        %2862 = vmatpush1.msra.mxu0 0.0
        %2863 = vmatprep.mubr.f32.mxu0 0.0
        %2864 = vmatmul.mubr.f32.gmra.mrb[0].mxu0 %v2797
        %v2865 = vpop.f32.mrb[0].mxu0
        %v2866 = vadd.f32 %v2793, %v2865
        %v2867 = vpop.f32.mrb[0].mxu0
        %2868 = vdwg.mxu0
        %v2869 = vadd.f32 %v2694, %v2866
        %v2870 = vsel %vm2664, %v2869, 0.0
        %2871 = vadd.xlane.f32.xlu0 %v2870
        %v2872 = vpop.xlane.xlu0 %2871
        %v2873 = vmul.f32 %v2872, %v2668
        %v2874 = vsub.f32 %v2869, %v2873
        %v2875 = vmul.f32 %v2874, %v2874
        %v2876 = vsel %vm2664, %v2875, 0.0
        %2877 = vadd.xlane.f32.xlu0 %v2876
        %v2878 = vpop.xlane.xlu0 %2877
        %v2879 = vmul.f32 %v2878, %v2668
        %v2880 = vadd.f32 %v2879, 1e-05
        %v2881 = vrsqrt.pop %v2880
        %v2882 = vmul.f32 %v2874, %v2881
        %v2883 = vld [vmem:[%s27] sm:$0x1]
        %v2885 = vlaneseq
        %v2886 = vshrl.u32 %v2885, 7
        %v2887 = vsub.s32 0, %v2886
        %v2888 = vrot.slane %v2883, %v2887
        %v2890 = vmul.f32 %v2882, %v2888
        %v2891 = vld [vmem:[%s29] sm:$0x1]
        %v2893 = vlaneseq
        %v2894 = vshrl.u32 %v2893, 7
        %v2895 = vsub.s32 0, %v2894
        %v2896 = vrot.slane %v2891, %v2895
        %v2898 = vadd.f32 %v2890, %v2896
        %v2899 = vld [vmem:[#allocation19] sm:$0xff]
        %v2900 = vld [vmem:[#allocation19 + $0x8] sm:$0xff]
        %v2901 = vld [vmem:[#allocation19 + $0x10] sm:$0xff]
        %v2902 = vld [vmem:[#allocation19 + $0x18] sm:$0xff]
        %v2903 = vld [vmem:[#allocation20] sm:$0x1]
        %v2905 = vlaneseq
        %v2906 = vshrl.u32 %v2905, 7
        %v2907 = vsub.s32 0, %v2906
        %v2908 = vrot.slane %v2903, %v2907
        %2910 = vmatprep.subr.mxu0 0.0
        %2911 = vmatpush1.msra.mxu0 %v2899
        %2912 = vmatprep.subr.mxu0 0.0
        %2913 = vmatpush1.msra.mxu0 %v2900
        %2914 = vmatprep.subr.mxu0 0.0
        %2915 = vmatpush1.msra.mxu0 %v2901
        %2916 = vmatprep.subr.mxu0 0.0
        %2917 = vmatpush1.msra.mxu0 %v2902
        %2918 = vmatprep.subr.mxu0 0.0
        %2919 = vmatpush1.msra.mxu0 0.0
        %2920 = vmatprep.subr.mxu0 0.0
        %2921 = vmatpush1.msra.mxu0 0.0
        %2922 = vmatprep.subr.mxu0 0.0
        %2923 = vmatpush1.msra.mxu0 0.0
        %2924 = vmatprep.subr.mxu0 0.0
        %2925 = vmatpush1.msra.mxu0 0.0
        %2926 = vmatprep.subr.mxu0 0.0
        %2927 = vmatpush1.msra.mxu0 0.0
        %2928 = vmatprep.subr.mxu0 0.0
        %2929 = vmatpush1.msra.mxu0 0.0
        %2930 = vmatprep.subr.mxu0 0.0
        %2931 = vmatpush1.msra.mxu0 0.0
        %2932 = vmatprep.subr.mxu0 0.0
        %2933 = vmatpush1.msra.mxu0 0.0
        %2934 = vmatprep.subr.mxu0 0.0
        %2935 = vmatpush1.msra.mxu0 0.0
        %2936 = vmatprep.subr.mxu0 0.0
        %2937 = vmatpush1.msra.mxu0 0.0
        %2938 = vmatprep.subr.mxu0 0.0
        %2939 = vmatpush1.msra.mxu0 0.0
        %2940 = vmatprep.subr.mxu0 0.0
        %2941 = vmatpush1.msra.mxu0 0.0
        %2942 = vmatprep.subr.mxu0 0.0
        %2943 = vmatpush1.msra.mxu0 0.0
        %2944 = vmatprep.subr.mxu0 0.0
        %2945 = vmatpush1.msra.mxu0 0.0
        %2946 = vmatprep.subr.mxu0 0.0
        %2947 = vmatpush1.msra.mxu0 0.0
        %2948 = vmatprep.subr.mxu0 0.0
        %2949 = vmatpush1.msra.mxu0 0.0
        %2950 = vmatprep.subr.mxu0 0.0
        %2951 = vmatpush1.msra.mxu0 0.0
        %2952 = vmatprep.subr.mxu0 0.0
        %2953 = vmatpush1.msra.mxu0 0.0
        %2954 = vmatprep.subr.mxu0 0.0
        %2955 = vmatpush1.msra.mxu0 0.0
        %2956 = vmatprep.subr.mxu0 0.0
        %2957 = vmatpush1.msra.mxu0 0.0
        %2958 = vmatprep.subr.mxu0 0.0
        %2959 = vmatpush1.msra.mxu0 0.0
        %2960 = vmatprep.subr.mxu0 0.0
        %2961 = vmatpush1.msra.mxu0 0.0
        %2962 = vmatprep.subr.mxu0 0.0
        %2963 = vmatpush1.msra.mxu0 0.0
        %2964 = vmatprep.subr.mxu0 0.0
        %2965 = vmatpush1.msra.mxu0 0.0
        %2966 = vmatprep.subr.mxu0 0.0
        %2967 = vmatpush1.msra.mxu0 0.0
        %2968 = vmatprep.subr.mxu0 0.0
        %2969 = vmatpush1.msra.mxu0 0.0
        %2970 = vmatprep.subr.mxu0 0.0
        %2971 = vmatpush1.msra.mxu0 0.0
        %2972 = vmatprep.subr.mxu0 0.0
        %2973 = vmatpush1.msra.mxu0 0.0
        %2974 = vmatprep.mubr.f32.mxu0 0.0
        %2975 = vmatmul.mubr.f32.gmra.mrb[0].mxu0 %v1819
        %v2976 = vpop.f32.mrb[0].mxu0
        %v2977 = vadd.f32 %v2908, %v2976
        %v2978 = vpop.f32.mrb[0].mxu0
        %2979 = vdwg.mxu0
        %2981 = vrot.lane.b32.xlu0 %v2977, 96
        %v2982 = vpop.permute.xlu0 %2981
        %v2983 = vsel %vm1894, %v2977, 0
        %v2985 = vsel %vm1894, %v2982, 0
        %2987 = vmatprep.subr.mxu0 0.0
        %2988 = vmatpush1.xpose.msra.mxu0 %v2985
        %2989 = vmatprep.subr.mxu0 0.0
        %2990 = vmatpush1.xpose.msra.mxu0 0.0
        %2991 = vmatprep.subr.mxu0 0.0
        %2992 = vmatpush1.xpose.msra.mxu0 0.0
        %2993 = vmatprep.subr.mxu0 0.0
        %2994 = vmatpush1.xpose.msra.mxu0 0.0
        %2995 = vmatprep.subr.mxu0 0.0
        %2996 = vmatpush1.xpose.msra.mxu0 0.0
        %2997 = vmatprep.subr.mxu0 0.0
        %2998 = vmatpush1.xpose.msra.mxu0 0.0
        %2999 = vmatprep.subr.mxu0 0.0
        %3000 = vmatpush1.xpose.msra.mxu0 0.0
        %3001 = vmatprep.subr.mxu0 0.0
        %3002 = vmatpush1.xpose.msra.mxu0 0.0
        %3003 = vmatprep.subr.mxu0 0.0
        %3004 = vmatpush1.xpose.msra.mxu0 0.0
        %3005 = vmatprep.subr.mxu0 0.0
        %3006 = vmatpush1.xpose.msra.mxu0 0.0
        %3007 = vmatprep.subr.mxu0 0.0
        %3008 = vmatpush1.xpose.msra.mxu0 0.0
        %3009 = vmatprep.subr.mxu0 0.0
        %3010 = vmatpush1.xpose.msra.mxu0 0.0
        %3011 = vmatprep.subr.mxu0 0.0
        %3012 = vmatpush1.xpose.msra.mxu0 0.0
        %3013 = vmatprep.subr.mxu0 0.0
        %3014 = vmatpush1.xpose.msra.mxu0 0.0
        %3015 = vmatprep.subr.mxu0 0.0
        %3016 = vmatpush1.xpose.msra.mxu0 0.0
        %3017 = vmatprep.subr.mxu0 0.0
        %3018 = vmatpush1.xpose.msra.mxu0 0.0
        %3019 = vmatprep.subr.mxu0 0.0
        %3020 = vmatpush1.xpose.msra.mxu0 0.0
        %3021 = vmatprep.subr.mxu0 0.0
        %3022 = vmatpush1.xpose.msra.mxu0 0.0
        %3023 = vmatprep.subr.mxu0 0.0
        %3024 = vmatpush1.xpose.msra.mxu0 0.0
        %3025 = vmatprep.subr.mxu0 0.0
        %3026 = vmatpush1.xpose.msra.mxu0 0.0
        %3027 = vmatprep.subr.mxu0 0.0
        %3028 = vmatpush1.xpose.msra.mxu0 0.0
        %3029 = vmatprep.subr.mxu0 0.0
        %3030 = vmatpush1.xpose.msra.mxu0 0.0
        %3031 = vmatprep.subr.mxu0 0.0
        %3032 = vmatpush1.xpose.msra.mxu0 0.0
        %3033 = vmatprep.subr.mxu0 0.0
        %3034 = vmatpush1.xpose.msra.mxu0 0.0
        %3035 = vmatprep.subr.mxu0 0.0
        %3036 = vmatpush1.xpose.msra.mxu0 0.0
        %3037 = vmatprep.subr.mxu0 0.0
        %3038 = vmatpush1.xpose.msra.mxu0 0.0
        %3039 = vmatprep.subr.mxu0 0.0
        %3040 = vmatpush1.xpose.msra.mxu0 0.0
        %3041 = vmatprep.subr.mxu0 0.0
        %3042 = vmatpush1.xpose.msra.mxu0 0.0
        %3043 = vmatprep.subr.mxu0 0.0
        %3044 = vmatpush1.xpose.msra.mxu0 0.0
        %3045 = vmatprep.subr.mxu0 0.0
        %3046 = vmatpush1.xpose.msra.mxu0 0.0
        %3047 = vmatprep.subr.mxu0 0.0
        %3048 = vmatpush1.xpose.msra.mxu0 0.0
        %3049 = vmatprep.subr.mxu0 0.0
        %3050 = vmatpush1.xpose.msra.mxu0 0.0
        %3051 = vmatprep.mubr.f32.mxu0 0.0
        %3052 = vmatmul.mubr.f32.gmra.mrb[0].mxu0 %v2983
        %v3053 = vpop.f32.mrb[0].mxu0
        %v3054 = vadd.f32 0.0, %v3053
        %v3055 = vpop.f32.mrb[0].mxu0
        %3056 = vdwg.mxu0
        %v3057 = vmul.f32 %v3054, 0.35355338
        %v3058 = vadd.f32 %v3057, %v1805
        %v3059 = vsel %vm1970, %v3058, -inf
        %3060 = vmax.xlane.f32.xlu0 %v3059
        %v3061 = vpop.xlane.xlu0 %3060
        %v3062 = vsub.f32 %v3058, %v3061
        %v3063 = vmul.f32 %v3062, 1.442695
        %v3064 = vpow.pop %v3063
        %v3065 = vsel %vm1970, %v3064, 0.0
        %3066 = vadd.xlane.f32.xlu0 %v3065
        %v3067 = vpop.xlane.xlu0 %3066
        %3068 = vrot.lane.b32.xlu0 %v2977, 64
        %v3069 = vpop.permute.xlu0 %3068
        %v3071 = vsel %vm1982, %v3064, 0
        %v3073 = vsel %vm1986, %v3069, 0
        %3075 = vmatprep.subr.mxu0 0.0
        %3076 = vmatpush1.msra.mxu0 %v3073
        %3077 = vmatprep.subr.mxu0 0.0
        %3078 = vmatpush1.msra.mxu0 0.0
        %3079 = vmatprep.subr.mxu0 0.0
        %3080 = vmatpush1.msra.mxu0 0.0
        %3081 = vmatprep.subr.mxu0 0.0
        %3082 = vmatpush1.msra.mxu0 0.0
        %3083 = vmatprep.subr.mxu0 0.0
        %3084 = vmatpush1.msra.mxu0 0.0
        %3085 = vmatprep.subr.mxu0 0.0
        %3086 = vmatpush1.msra.mxu0 0.0
        %3087 = vmatprep.subr.mxu0 0.0
        %3088 = vmatpush1.msra.mxu0 0.0
        %3089 = vmatprep.subr.mxu0 0.0
        %3090 = vmatpush1.msra.mxu0 0.0
        %3091 = vmatprep.subr.mxu0 0.0
        %3092 = vmatpush1.msra.mxu0 0.0
        %3093 = vmatprep.subr.mxu0 0.0
        %3094 = vmatpush1.msra.mxu0 0.0
        %3095 = vmatprep.subr.mxu0 0.0
        %3096 = vmatpush1.msra.mxu0 0.0
        %3097 = vmatprep.subr.mxu0 0.0
        %3098 = vmatpush1.msra.mxu0 0.0
        %3099 = vmatprep.subr.mxu0 0.0
        %3100 = vmatpush1.msra.mxu0 0.0
        %3101 = vmatprep.subr.mxu0 0.0
        %3102 = vmatpush1.msra.mxu0 0.0
        %3103 = vmatprep.subr.mxu0 0.0
        %3104 = vmatpush1.msra.mxu0 0.0
        %3105 = vmatprep.subr.mxu0 0.0
        %3106 = vmatpush1.msra.mxu0 0.0
        %3107 = vmatprep.subr.mxu0 0.0
        %3108 = vmatpush1.msra.mxu0 0.0
        %3109 = vmatprep.subr.mxu0 0.0
        %3110 = vmatpush1.msra.mxu0 0.0
        %3111 = vmatprep.subr.mxu0 0.0
        %3112 = vmatpush1.msra.mxu0 0.0
        %3113 = vmatprep.subr.mxu0 0.0
        %3114 = vmatpush1.msra.mxu0 0.0
        %3115 = vmatprep.subr.mxu0 0.0
        %3116 = vmatpush1.msra.mxu0 0.0
        %3117 = vmatprep.subr.mxu0 0.0
        %3118 = vmatpush1.msra.mxu0 0.0
        %3119 = vmatprep.subr.mxu0 0.0
        %3120 = vmatpush1.msra.mxu0 0.0
        %3121 = vmatprep.subr.mxu0 0.0
        %3122 = vmatpush1.msra.mxu0 0.0
        %3123 = vmatprep.subr.mxu0 0.0
        %3124 = vmatpush1.msra.mxu0 0.0
        %3125 = vmatprep.subr.mxu0 0.0
        %3126 = vmatpush1.msra.mxu0 0.0
        %3127 = vmatprep.subr.mxu0 0.0
        %3128 = vmatpush1.msra.mxu0 0.0
        %3129 = vmatprep.subr.mxu0 0.0
        %3130 = vmatpush1.msra.mxu0 0.0
        %3131 = vmatprep.subr.mxu0 0.0
        %3132 = vmatpush1.msra.mxu0 0.0
        %3133 = vmatprep.subr.mxu0 0.0
        %3134 = vmatpush1.msra.mxu0 0.0
        %3135 = vmatprep.subr.mxu0 0.0
        %3136 = vmatpush1.msra.mxu0 0.0
        %3137 = vmatprep.subr.mxu0 0.0
        %3138 = vmatpush1.msra.mxu0 0.0
        %3139 = vmatprep.mubr.f32.mxu0 0.0
        %3140 = vmatmul.mubr.f32.gmra.mrb[0].mxu0 %v3071
        %v3141 = vpop.f32.mrb[0].mxu0
        %v3142 = vadd.f32 0.0, %v3141
        %v3143 = vpop.f32.mrb[0].mxu0
        %3144 = vdwg.mxu0
        %v3145 = vrcp.pop %v3067
        %v3146 = vmul.f32 %v3142, %v3145
        %3147 = vrot.lane.b32.xlu0 %v2977, 120
        %v3148 = vpop.permute.xlu0 %3147
        %3149 = vrot.lane.b32.xlu0 %v2977, 88
        %v3150 = vpop.permute.xlu0 %3149
        %v3151 = vsel %vm1894, %v3148, 0
        %v3153 = vsel %vm1894, %v3150, 0
        %3155 = vmatprep.subr.mxu0 0.0
        %3156 = vmatpush1.xpose.msra.mxu0 %v3153
        %3157 = vmatprep.subr.mxu0 0.0
        %3158 = vmatpush1.xpose.msra.mxu0 0.0
        %3159 = vmatprep.subr.mxu0 0.0
        %3160 = vmatpush1.xpose.msra.mxu0 0.0
        %3161 = vmatprep.subr.mxu0 0.0
        %3162 = vmatpush1.xpose.msra.mxu0 0.0
        %3163 = vmatprep.subr.mxu0 0.0
        %3164 = vmatpush1.xpose.msra.mxu0 0.0
        %3165 = vmatprep.subr.mxu0 0.0
        %3166 = vmatpush1.xpose.msra.mxu0 0.0
        %3167 = vmatprep.subr.mxu0 0.0
        %3168 = vmatpush1.xpose.msra.mxu0 0.0
        %3169 = vmatprep.subr.mxu0 0.0
        %3170 = vmatpush1.xpose.msra.mxu0 0.0
        %3171 = vmatprep.subr.mxu0 0.0
        %3172 = vmatpush1.xpose.msra.mxu0 0.0
        %3173 = vmatprep.subr.mxu0 0.0
        %3174 = vmatpush1.xpose.msra.mxu0 0.0
        %3175 = vmatprep.subr.mxu0 0.0
        %3176 = vmatpush1.xpose.msra.mxu0 0.0
        %3177 = vmatprep.subr.mxu0 0.0
        %3178 = vmatpush1.xpose.msra.mxu0 0.0
        %3179 = vmatprep.subr.mxu0 0.0
        %3180 = vmatpush1.xpose.msra.mxu0 0.0
        %3181 = vmatprep.subr.mxu0 0.0
        %3182 = vmatpush1.xpose.msra.mxu0 0.0
        %3183 = vmatprep.subr.mxu0 0.0
        %3184 = vmatpush1.xpose.msra.mxu0 0.0
        %3185 = vmatprep.subr.mxu0 0.0
        %3186 = vmatpush1.xpose.msra.mxu0 0.0
        %3187 = vmatprep.subr.mxu0 0.0
        %3188 = vmatpush1.xpose.msra.mxu0 0.0
        %3189 = vmatprep.subr.mxu0 0.0
        %3190 = vmatpush1.xpose.msra.mxu0 0.0
        %3191 = vmatprep.subr.mxu0 0.0
        %3192 = vmatpush1.xpose.msra.mxu0 0.0
        %3193 = vmatprep.subr.mxu0 0.0
        %3194 = vmatpush1.xpose.msra.mxu0 0.0
        %3195 = vmatprep.subr.mxu0 0.0
        %3196 = vmatpush1.xpose.msra.mxu0 0.0
        %3197 = vmatprep.subr.mxu0 0.0
        %3198 = vmatpush1.xpose.msra.mxu0 0.0
        %3199 = vmatprep.subr.mxu0 0.0
        %3200 = vmatpush1.xpose.msra.mxu0 0.0
        %3201 = vmatprep.subr.mxu0 0.0
        %3202 = vmatpush1.xpose.msra.mxu0 0.0
        %3203 = vmatprep.subr.mxu0 0.0
        %3204 = vmatpush1.xpose.msra.mxu0 0.0
        %3205 = vmatprep.subr.mxu0 0.0
        %3206 = vmatpush1.xpose.msra.mxu0 0.0
        %3207 = vmatprep.subr.mxu0 0.0
        %3208 = vmatpush1.xpose.msra.mxu0 0.0
        %3209 = vmatprep.subr.mxu0 0.0
        %3210 = vmatpush1.xpose.msra.mxu0 0.0
        %3211 = vmatprep.subr.mxu0 0.0
        %3212 = vmatpush1.xpose.msra.mxu0 0.0
        %3213 = vmatprep.subr.mxu0 0.0
        %3214 = vmatpush1.xpose.msra.mxu0 0.0
        %3215 = vmatprep.subr.mxu0 0.0
        %3216 = vmatpush1.xpose.msra.mxu0 0.0
        %3217 = vmatprep.subr.mxu0 0.0
        %3218 = vmatpush1.xpose.msra.mxu0 0.0
        %3219 = vmatprep.mubr.f32.mxu0 0.0
        %3220 = vmatmul.mubr.f32.gmra.mrb[0].mxu0 %v3151
        %v3221 = vpop.f32.mrb[0].mxu0
        %v3222 = vadd.f32 0.0, %v3221
        %v3223 = vpop.f32.mrb[0].mxu0
        %3224 = vdwg.mxu0
        %v3225 = vmul.f32 %v3222, 0.35355338
        %v3226 = vadd.f32 %v3225, %v1805
        %v3227 = vsel %vm1970, %v3226, -inf
        %3228 = vmax.xlane.f32.xlu0 %v3227
        %v3229 = vpop.xlane.xlu0 %3228
        %v3230 = vsub.f32 %v3226, %v3229
        %v3231 = vmul.f32 %v3230, 1.442695
        %v3232 = vpow.pop %v3231
        %v3233 = vsel %vm1970, %v3232, 0.0
        %3234 = vadd.xlane.f32.xlu0 %v3233
        %v3235 = vpop.xlane.xlu0 %3234
        %3236 = vrot.lane.b32.xlu0 %v2977, 56
        %v3237 = vpop.permute.xlu0 %3236
        %v3239 = vsel %vm1982, %v3232, 0
        %v3241 = vsel %vm1986, %v3237, 0
        %3243 = vmatprep.subr.mxu0 0.0
        %3244 = vmatpush1.msra.mxu0 %v3241
        %3245 = vmatprep.subr.mxu0 0.0
        %3246 = vmatpush1.msra.mxu0 0.0
        %3247 = vmatprep.subr.mxu0 0.0
        %3248 = vmatpush1.msra.mxu0 0.0
        %3249 = vmatprep.subr.mxu0 0.0
        %3250 = vmatpush1.msra.mxu0 0.0
        %3251 = vmatprep.subr.mxu0 0.0
        %3252 = vmatpush1.msra.mxu0 0.0
        %3253 = vmatprep.subr.mxu0 0.0
        %3254 = vmatpush1.msra.mxu0 0.0
        %3255 = vmatprep.subr.mxu0 0.0
        %3256 = vmatpush1.msra.mxu0 0.0
        %3257 = vmatprep.subr.mxu0 0.0
        %3258 = vmatpush1.msra.mxu0 0.0
        %3259 = vmatprep.subr.mxu0 0.0
        %3260 = vmatpush1.msra.mxu0 0.0
        %3261 = vmatprep.subr.mxu0 0.0
        %3262 = vmatpush1.msra.mxu0 0.0
        %3263 = vmatprep.subr.mxu0 0.0
        %3264 = vmatpush1.msra.mxu0 0.0
        %3265 = vmatprep.subr.mxu0 0.0
        %3266 = vmatpush1.msra.mxu0 0.0
        %3267 = vmatprep.subr.mxu0 0.0
        %3268 = vmatpush1.msra.mxu0 0.0
        %3269 = vmatprep.subr.mxu0 0.0
        %3270 = vmatpush1.msra.mxu0 0.0
        %3271 = vmatprep.subr.mxu0 0.0
        %3272 = vmatpush1.msra.mxu0 0.0
        %3273 = vmatprep.subr.mxu0 0.0
        %3274 = vmatpush1.msra.mxu0 0.0
        %3275 = vmatprep.subr.mxu0 0.0
        %3276 = vmatpush1.msra.mxu0 0.0
        %3277 = vmatprep.subr.mxu0 0.0
        %3278 = vmatpush1.msra.mxu0 0.0
        %3279 = vmatprep.subr.mxu0 0.0
        %3280 = vmatpush1.msra.mxu0 0.0
        %3281 = vmatprep.subr.mxu0 0.0
        %3282 = vmatpush1.msra.mxu0 0.0
        %3283 = vmatprep.subr.mxu0 0.0
        %3284 = vmatpush1.msra.mxu0 0.0
        %3285 = vmatprep.subr.mxu0 0.0
        %3286 = vmatpush1.msra.mxu0 0.0
        %3287 = vmatprep.subr.mxu0 0.0
        %3288 = vmatpush1.msra.mxu0 0.0
        %3289 = vmatprep.subr.mxu0 0.0
        %3290 = vmatpush1.msra.mxu0 0.0
        %3291 = vmatprep.subr.mxu0 0.0
        %3292 = vmatpush1.msra.mxu0 0.0
        %3293 = vmatprep.subr.mxu0 0.0
        %3294 = vmatpush1.msra.mxu0 0.0
        %3295 = vmatprep.subr.mxu0 0.0
        %3296 = vmatpush1.msra.mxu0 0.0
        %3297 = vmatprep.subr.mxu0 0.0
        %3298 = vmatpush1.msra.mxu0 0.0
        %3299 = vmatprep.subr.mxu0 0.0
        %3300 = vmatpush1.msra.mxu0 0.0
        %3301 = vmatprep.subr.mxu0 0.0
        %3302 = vmatpush1.msra.mxu0 0.0
        %3303 = vmatprep.subr.mxu0 0.0
        %3304 = vmatpush1.msra.mxu0 0.0
        %3305 = vmatprep.subr.mxu0 0.0
        %3306 = vmatpush1.msra.mxu0 0.0
        %3307 = vmatprep.mubr.f32.mxu0 0.0
        %3308 = vmatmul.mubr.f32.gmra.mrb[0].mxu0 %v3239
        %v3309 = vpop.f32.mrb[0].mxu0
        %v3310 = vadd.f32 0.0, %v3309
        %v3311 = vpop.f32.mrb[0].mxu0
        %3312 = vdwg.mxu0
        %v3313 = vrcp.pop %v3235
        %v3314 = vmul.f32 %v3310, %v3313
        %3315 = vrot.lane.b32.xlu0 %v2977, 112
        %v3316 = vpop.permute.xlu0 %3315
        %3317 = vrot.lane.b32.xlu0 %v2977, 80
        %v3318 = vpop.permute.xlu0 %3317
        %v3319 = vsel %vm1894, %v3316, 0
        %v3321 = vsel %vm1894, %v3318, 0
        %3323 = vmatprep.subr.mxu0 0.0
        %3324 = vmatpush1.xpose.msra.mxu0 %v3321
        %3325 = vmatprep.subr.mxu0 0.0
        %3326 = vmatpush1.xpose.msra.mxu0 0.0
        %3327 = vmatprep.subr.mxu0 0.0
        %3328 = vmatpush1.xpose.msra.mxu0 0.0
        %3329 = vmatprep.subr.mxu0 0.0
        %3330 = vmatpush1.xpose.msra.mxu0 0.0
        %3331 = vmatprep.subr.mxu0 0.0
        %3332 = vmatpush1.xpose.msra.mxu0 0.0
        %3333 = vmatprep.subr.mxu0 0.0
        %3334 = vmatpush1.xpose.msra.mxu0 0.0
        %3335 = vmatprep.subr.mxu0 0.0
        %3336 = vmatpush1.xpose.msra.mxu0 0.0
        %3337 = vmatprep.subr.mxu0 0.0
        %3338 = vmatpush1.xpose.msra.mxu0 0.0
        %3339 = vmatprep.subr.mxu0 0.0
        %3340 = vmatpush1.xpose.msra.mxu0 0.0
        %3341 = vmatprep.subr.mxu0 0.0
        %3342 = vmatpush1.xpose.msra.mxu0 0.0
        %3343 = vmatprep.subr.mxu0 0.0
        %3344 = vmatpush1.xpose.msra.mxu0 0.0
        %3345 = vmatprep.subr.mxu0 0.0
        %3346 = vmatpush1.xpose.msra.mxu0 0.0
        %3347 = vmatprep.subr.mxu0 0.0
        %3348 = vmatpush1.xpose.msra.mxu0 0.0
        %3349 = vmatprep.subr.mxu0 0.0
        %3350 = vmatpush1.xpose.msra.mxu0 0.0
        %3351 = vmatprep.subr.mxu0 0.0
        %3352 = vmatpush1.xpose.msra.mxu0 0.0
        %3353 = vmatprep.subr.mxu0 0.0
        %3354 = vmatpush1.xpose.msra.mxu0 0.0
        %3355 = vmatprep.subr.mxu0 0.0
        %3356 = vmatpush1.xpose.msra.mxu0 0.0
        %3357 = vmatprep.subr.mxu0 0.0
        %3358 = vmatpush1.xpose.msra.mxu0 0.0
        %3359 = vmatprep.subr.mxu0 0.0
        %3360 = vmatpush1.xpose.msra.mxu0 0.0
        %3361 = vmatprep.subr.mxu0 0.0
        %3362 = vmatpush1.xpose.msra.mxu0 0.0
        %3363 = vmatprep.subr.mxu0 0.0
        %3364 = vmatpush1.xpose.msra.mxu0 0.0
        %3365 = vmatprep.subr.mxu0 0.0
        %3366 = vmatpush1.xpose.msra.mxu0 0.0
        %3367 = vmatprep.subr.mxu0 0.0
        %3368 = vmatpush1.xpose.msra.mxu0 0.0
        %3369 = vmatprep.subr.mxu0 0.0
        %3370 = vmatpush1.xpose.msra.mxu0 0.0
        %3371 = vmatprep.subr.mxu0 0.0
        %3372 = vmatpush1.xpose.msra.mxu0 0.0
        %3373 = vmatprep.subr.mxu0 0.0
        %3374 = vmatpush1.xpose.msra.mxu0 0.0
        %3375 = vmatprep.subr.mxu0 0.0
        %3376 = vmatpush1.xpose.msra.mxu0 0.0
        %3377 = vmatprep.subr.mxu0 0.0
        %3378 = vmatpush1.xpose.msra.mxu0 0.0
        %3379 = vmatprep.subr.mxu0 0.0
        %3380 = vmatpush1.xpose.msra.mxu0 0.0
        %3381 = vmatprep.subr.mxu0 0.0
        %3382 = vmatpush1.xpose.msra.mxu0 0.0
        %3383 = vmatprep.subr.mxu0 0.0
        %3384 = vmatpush1.xpose.msra.mxu0 0.0
        %3385 = vmatprep.subr.mxu0 0.0
        %3386 = vmatpush1.xpose.msra.mxu0 0.0
        %3387 = vmatprep.mubr.f32.mxu0 0.0
        %3388 = vmatmul.mubr.f32.gmra.mrb[0].mxu0 %v3319
        %v3389 = vpop.f32.mrb[0].mxu0
        %v3390 = vadd.f32 0.0, %v3389
        %v3391 = vpop.f32.mrb[0].mxu0
        %3392 = vdwg.mxu0
        %v3393 = vmul.f32 %v3390, 0.35355338
        %v3394 = vadd.f32 %v3393, %v1805
        %v3395 = vsel %vm1970, %v3394, -inf
        %3396 = vmax.xlane.f32.xlu0 %v3395
        %v3397 = vpop.xlane.xlu0 %3396
        %v3398 = vsub.f32 %v3394, %v3397
        %v3399 = vmul.f32 %v3398, 1.442695
        %v3400 = vpow.pop %v3399
        %v3401 = vsel %vm1970, %v3400, 0.0
        %3402 = vadd.xlane.f32.xlu0 %v3401
        %v3403 = vpop.xlane.xlu0 %3402
        %3404 = vrot.lane.b32.xlu0 %v2977, 48
        %v3405 = vpop.permute.xlu0 %3404
        %v3407 = vsel %vm1982, %v3400, 0
        %v3409 = vsel %vm1986, %v3405, 0
        %3411 = vmatprep.subr.mxu0 0.0
        %3412 = vmatpush1.msra.mxu0 %v3409
        %3413 = vmatprep.subr.mxu0 0.0
        %3414 = vmatpush1.msra.mxu0 0.0
        %3415 = vmatprep.subr.mxu0 0.0
        %3416 = vmatpush1.msra.mxu0 0.0
        %3417 = vmatprep.subr.mxu0 0.0
        %3418 = vmatpush1.msra.mxu0 0.0
        %3419 = vmatprep.subr.mxu0 0.0
        %3420 = vmatpush1.msra.mxu0 0.0
        %3421 = vmatprep.subr.mxu0 0.0
        %3422 = vmatpush1.msra.mxu0 0.0
        %3423 = vmatprep.subr.mxu0 0.0
        %3424 = vmatpush1.msra.mxu0 0.0
        %3425 = vmatprep.subr.mxu0 0.0
        %3426 = vmatpush1.msra.mxu0 0.0
        %3427 = vmatprep.subr.mxu0 0.0
        %3428 = vmatpush1.msra.mxu0 0.0
        %3429 = vmatprep.subr.mxu0 0.0
        %3430 = vmatpush1.msra.mxu0 0.0
        %3431 = vmatprep.subr.mxu0 0.0
        %3432 = vmatpush1.msra.mxu0 0.0
        %3433 = vmatprep.subr.mxu0 0.0
        %3434 = vmatpush1.msra.mxu0 0.0
        %3435 = vmatprep.subr.mxu0 0.0
        %3436 = vmatpush1.msra.mxu0 0.0
        %3437 = vmatprep.subr.mxu0 0.0
        %3438 = vmatpush1.msra.mxu0 0.0
        %3439 = vmatprep.subr.mxu0 0.0
        %3440 = vmatpush1.msra.mxu0 0.0
        %3441 = vmatprep.subr.mxu0 0.0
        %3442 = vmatpush1.msra.mxu0 0.0
        %3443 = vmatprep.subr.mxu0 0.0
        %3444 = vmatpush1.msra.mxu0 0.0
        %3445 = vmatprep.subr.mxu0 0.0
        %3446 = vmatpush1.msra.mxu0 0.0
        %3447 = vmatprep.subr.mxu0 0.0
        %3448 = vmatpush1.msra.mxu0 0.0
        %3449 = vmatprep.subr.mxu0 0.0
        %3450 = vmatpush1.msra.mxu0 0.0
        %3451 = vmatprep.subr.mxu0 0.0
        %3452 = vmatpush1.msra.mxu0 0.0
        %3453 = vmatprep.subr.mxu0 0.0
        %3454 = vmatpush1.msra.mxu0 0.0
        %3455 = vmatprep.subr.mxu0 0.0
        %3456 = vmatpush1.msra.mxu0 0.0
        %3457 = vmatprep.subr.mxu0 0.0
        %3458 = vmatpush1.msra.mxu0 0.0
        %3459 = vmatprep.subr.mxu0 0.0
        %3460 = vmatpush1.msra.mxu0 0.0
        %3461 = vmatprep.subr.mxu0 0.0
        %3462 = vmatpush1.msra.mxu0 0.0
        %3463 = vmatprep.subr.mxu0 0.0
        %3464 = vmatpush1.msra.mxu0 0.0
        %3465 = vmatprep.subr.mxu0 0.0
        %3466 = vmatpush1.msra.mxu0 0.0
        %3467 = vmatprep.subr.mxu0 0.0
        %3468 = vmatpush1.msra.mxu0 0.0
        %3469 = vmatprep.subr.mxu0 0.0
        %3470 = vmatpush1.msra.mxu0 0.0
        %3471 = vmatprep.subr.mxu0 0.0
        %3472 = vmatpush1.msra.mxu0 0.0
        %3473 = vmatprep.subr.mxu0 0.0
        %3474 = vmatpush1.msra.mxu0 0.0
        %3475 = vmatprep.mubr.f32.mxu0 0.0
        %3476 = vmatmul.mubr.f32.gmra.mrb[0].mxu0 %v3407
        %v3477 = vpop.f32.mrb[0].mxu0
        %v3478 = vadd.f32 0.0, %v3477
        %v3479 = vpop.f32.mrb[0].mxu0
        %3480 = vdwg.mxu0
        %v3481 = vrcp.pop %v3403
        %v3482 = vmul.f32 %v3478, %v3481
        %3483 = vrot.lane.b32.xlu0 %v2977, 104
        %v3484 = vpop.permute.xlu0 %3483
        %3485 = vrot.lane.b32.xlu0 %v2977, 72
        %v3486 = vpop.permute.xlu0 %3485
        %v3487 = vsel %vm1894, %v3484, 0
        %v3489 = vsel %vm1894, %v3486, 0
        %3491 = vmatprep.subr.mxu0 0.0
        %3492 = vmatpush1.xpose.msra.mxu0 %v3489
        %3493 = vmatprep.subr.mxu0 0.0
        %3494 = vmatpush1.xpose.msra.mxu0 0.0
        %3495 = vmatprep.subr.mxu0 0.0
        %3496 = vmatpush1.xpose.msra.mxu0 0.0
        %3497 = vmatprep.subr.mxu0 0.0
        %3498 = vmatpush1.xpose.msra.mxu0 0.0
        %3499 = vmatprep.subr.mxu0 0.0
        %3500 = vmatpush1.xpose.msra.mxu0 0.0
        %3501 = vmatprep.subr.mxu0 0.0
        %3502 = vmatpush1.xpose.msra.mxu0 0.0
        %3503 = vmatprep.subr.mxu0 0.0
        %3504 = vmatpush1.xpose.msra.mxu0 0.0
        %3505 = vmatprep.subr.mxu0 0.0
        %3506 = vmatpush1.xpose.msra.mxu0 0.0
        %3507 = vmatprep.subr.mxu0 0.0
        %3508 = vmatpush1.xpose.msra.mxu0 0.0
        %3509 = vmatprep.subr.mxu0 0.0
        %3510 = vmatpush1.xpose.msra.mxu0 0.0
        %3511 = vmatprep.subr.mxu0 0.0
        %3512 = vmatpush1.xpose.msra.mxu0 0.0
        %3513 = vmatprep.subr.mxu0 0.0
        %3514 = vmatpush1.xpose.msra.mxu0 0.0
        %3515 = vmatprep.subr.mxu0 0.0
        %3516 = vmatpush1.xpose.msra.mxu0 0.0
        %3517 = vmatprep.subr.mxu0 0.0
        %3518 = vmatpush1.xpose.msra.mxu0 0.0
        %3519 = vmatprep.subr.mxu0 0.0
        %3520 = vmatpush1.xpose.msra.mxu0 0.0
        %3521 = vmatprep.subr.mxu0 0.0
        %3522 = vmatpush1.xpose.msra.mxu0 0.0
        %3523 = vmatprep.subr.mxu0 0.0
        %3524 = vmatpush1.xpose.msra.mxu0 0.0
        %3525 = vmatprep.subr.mxu0 0.0
        %3526 = vmatpush1.xpose.msra.mxu0 0.0
        %3527 = vmatprep.subr.mxu0 0.0
        %3528 = vmatpush1.xpose.msra.mxu0 0.0
        %3529 = vmatprep.subr.mxu0 0.0
        %3530 = vmatpush1.xpose.msra.mxu0 0.0
        %3531 = vmatprep.subr.mxu0 0.0
        %3532 = vmatpush1.xpose.msra.mxu0 0.0
        %3533 = vmatprep.subr.mxu0 0.0
        %3534 = vmatpush1.xpose.msra.mxu0 0.0
        %3535 = vmatprep.subr.mxu0 0.0
        %3536 = vmatpush1.xpose.msra.mxu0 0.0
        %3537 = vmatprep.subr.mxu0 0.0
        %3538 = vmatpush1.xpose.msra.mxu0 0.0
        %3539 = vmatprep.subr.mxu0 0.0
        %3540 = vmatpush1.xpose.msra.mxu0 0.0
        %3541 = vmatprep.subr.mxu0 0.0
        %3542 = vmatpush1.xpose.msra.mxu0 0.0
        %3543 = vmatprep.subr.mxu0 0.0
        %3544 = vmatpush1.xpose.msra.mxu0 0.0
        %3545 = vmatprep.subr.mxu0 0.0
        %3546 = vmatpush1.xpose.msra.mxu0 0.0
        %3547 = vmatprep.subr.mxu0 0.0
        %3548 = vmatpush1.xpose.msra.mxu0 0.0
        %3549 = vmatprep.subr.mxu0 0.0
        %3550 = vmatpush1.xpose.msra.mxu0 0.0
        %3551 = vmatprep.subr.mxu0 0.0
        %3552 = vmatpush1.xpose.msra.mxu0 0.0
        %3553 = vmatprep.subr.mxu0 0.0
        %3554 = vmatpush1.xpose.msra.mxu0 0.0
        %3555 = vmatprep.mubr.f32.mxu0 0.0
        %3556 = vmatmul.mubr.f32.gmra.mrb[0].mxu0 %v3487
        %v3557 = vpop.f32.mrb[0].mxu0
        %v3558 = vadd.f32 0.0, %v3557
        %v3559 = vpop.f32.mrb[0].mxu0
        %3560 = vdwg.mxu0
        %v3561 = vmul.f32 %v3558, 0.35355338
        %v3562 = vadd.f32 %v3561, %v1805
        %v3563 = vsel %vm1970, %v3562, -inf
        %3564 = vmax.xlane.f32.xlu0 %v3563
        %v3565 = vpop.xlane.xlu0 %3564
        %v3566 = vsub.f32 %v3562, %v3565
        %v3567 = vmul.f32 %v3566, 1.442695
        %v3568 = vpow.pop %v3567
        %v3569 = vsel %vm1970, %v3568, 0.0
        %3570 = vadd.xlane.f32.xlu0 %v3569
        %v3571 = vpop.xlane.xlu0 %3570
        %3572 = vrot.lane.b32.xlu0 %v2977, 40
        %v3573 = vpop.permute.xlu0 %3572
        %v3575 = vsel %vm1982, %v3568, 0
        %v3577 = vsel %vm1986, %v3573, 0
        %3579 = vmatprep.subr.mxu0 0.0
        %3580 = vmatpush1.msra.mxu0 %v3577
        %3581 = vmatprep.subr.mxu0 0.0
        %3582 = vmatpush1.msra.mxu0 0.0
        %3583 = vmatprep.subr.mxu0 0.0
        %3584 = vmatpush1.msra.mxu0 0.0
        %3585 = vmatprep.subr.mxu0 0.0
        %3586 = vmatpush1.msra.mxu0 0.0
        %3587 = vmatprep.subr.mxu0 0.0
        %3588 = vmatpush1.msra.mxu0 0.0
        %3589 = vmatprep.subr.mxu0 0.0
        %3590 = vmatpush1.msra.mxu0 0.0
        %3591 = vmatprep.subr.mxu0 0.0
        %3592 = vmatpush1.msra.mxu0 0.0
        %3593 = vmatprep.subr.mxu0 0.0
        %3594 = vmatpush1.msra.mxu0 0.0
        %3595 = vmatprep.subr.mxu0 0.0
        %3596 = vmatpush1.msra.mxu0 0.0
        %3597 = vmatprep.subr.mxu0 0.0
        %3598 = vmatpush1.msra.mxu0 0.0
        %3599 = vmatprep.subr.mxu0 0.0
        %3600 = vmatpush1.msra.mxu0 0.0
        %3601 = vmatprep.subr.mxu0 0.0
        %3602 = vmatpush1.msra.mxu0 0.0
        %3603 = vmatprep.subr.mxu0 0.0
        %3604 = vmatpush1.msra.mxu0 0.0
        %3605 = vmatprep.subr.mxu0 0.0
        %3606 = vmatpush1.msra.mxu0 0.0
        %3607 = vmatprep.subr.mxu0 0.0
        %3608 = vmatpush1.msra.mxu0 0.0
        %3609 = vmatprep.subr.mxu0 0.0
        %3610 = vmatpush1.msra.mxu0 0.0
        %3611 = vmatprep.subr.mxu0 0.0
        %3612 = vmatpush1.msra.mxu0 0.0
        %3613 = vmatprep.subr.mxu0 0.0
        %3614 = vmatpush1.msra.mxu0 0.0
        %3615 = vmatprep.subr.mxu0 0.0
        %3616 = vmatpush1.msra.mxu0 0.0
        %3617 = vmatprep.subr.mxu0 0.0
        %3618 = vmatpush1.msra.mxu0 0.0
        %3619 = vmatprep.subr.mxu0 0.0
        %3620 = vmatpush1.msra.mxu0 0.0
        %3621 = vmatprep.subr.mxu0 0.0
        %3622 = vmatpush1.msra.mxu0 0.0
        %3623 = vmatprep.subr.mxu0 0.0
        %3624 = vmatpush1.msra.mxu0 0.0
        %3625 = vmatprep.subr.mxu0 0.0
        %3626 = vmatpush1.msra.mxu0 0.0
        %3627 = vmatprep.subr.mxu0 0.0
        %3628 = vmatpush1.msra.mxu0 0.0
        %3629 = vmatprep.subr.mxu0 0.0
        %3630 = vmatpush1.msra.mxu0 0.0
        %3631 = vmatprep.subr.mxu0 0.0
        %3632 = vmatpush1.msra.mxu0 0.0
        %3633 = vmatprep.subr.mxu0 0.0
        %3634 = vmatpush1.msra.mxu0 0.0
        %3635 = vmatprep.subr.mxu0 0.0
        %3636 = vmatpush1.msra.mxu0 0.0
        %3637 = vmatprep.subr.mxu0 0.0
        %3638 = vmatpush1.msra.mxu0 0.0
        %3639 = vmatprep.subr.mxu0 0.0
        %3640 = vmatpush1.msra.mxu0 0.0
        %3641 = vmatprep.subr.mxu0 0.0
        %3642 = vmatpush1.msra.mxu0 0.0
        %3643 = vmatprep.mubr.f32.mxu0 0.0
        %3644 = vmatmul.mubr.f32.gmra.mrb[0].mxu0 %v3575
        %v3645 = vpop.f32.mrb[0].mxu0
        %v3646 = vadd.f32 0.0, %v3645
        %v3647 = vpop.f32.mrb[0].mxu0
        %3648 = vdwg.mxu0
        %v3649 = vrcp.pop %v3571
        %v3650 = vmul.f32 %v3646, %v3649
        %3652 = vrot.lane.b32.xlu0 %v3314, 8
        %v3653 = vpop.permute.xlu0 %3652
        %3656 = vrot.lane.b32.xlu0 %v3482, 16
        %v3657 = vpop.permute.xlu0 %3656
        %3660 = vrot.lane.b32.xlu0 %v3650, 24
        %v3661 = vpop.permute.xlu0 %3660
        %v3663 = vsel %vm1894, %v3146, %v3653
        %v3664 = vsel %vm2575, %v3663, %v3657
        %v3665 = vsel %vm2577, %v3664, %v3661
        %v3666 = vld [vmem:[#allocation22] sm:$0xff]
        %v3667 = vld [vmem:[#allocation22 + $0x8] sm:$0xff]
        %v3668 = vld [vmem:[#allocation22 + $0x10] sm:$0xff]
        %v3669 = vld [vmem:[#allocation22 + $0x18] sm:$0xff]
        %v3670 = vld [vmem:[#allocation23] sm:$0x1]
        %v3672 = vlaneseq
        %v3673 = vshrl.u32 %v3672, 7
        %v3674 = vsub.s32 0, %v3673
        %v3675 = vrot.slane %v3670, %v3674
        %v3678 = vsel %vm1817, %v3665, 0
        %3680 = vmatprep.subr.mxu0 0.0
        %3681 = vmatpush1.msra.mxu0 %v3666
        %3682 = vmatprep.subr.mxu0 0.0
        %3683 = vmatpush1.msra.mxu0 %v3667
        %3684 = vmatprep.subr.mxu0 0.0
        %3685 = vmatpush1.msra.mxu0 %v3668
        %3686 = vmatprep.subr.mxu0 0.0
        %3687 = vmatpush1.msra.mxu0 %v3669
        %3688 = vmatprep.subr.mxu0 0.0
        %3689 = vmatpush1.msra.mxu0 0.0
        %3690 = vmatprep.subr.mxu0 0.0
        %3691 = vmatpush1.msra.mxu0 0.0
        %3692 = vmatprep.subr.mxu0 0.0
        %3693 = vmatpush1.msra.mxu0 0.0
        %3694 = vmatprep.subr.mxu0 0.0
        %3695 = vmatpush1.msra.mxu0 0.0
        %3696 = vmatprep.subr.mxu0 0.0
        %3697 = vmatpush1.msra.mxu0 0.0
        %3698 = vmatprep.subr.mxu0 0.0
        %3699 = vmatpush1.msra.mxu0 0.0
        %3700 = vmatprep.subr.mxu0 0.0
        %3701 = vmatpush1.msra.mxu0 0.0
        %3702 = vmatprep.subr.mxu0 0.0
        %3703 = vmatpush1.msra.mxu0 0.0
        %3704 = vmatprep.subr.mxu0 0.0
        %3705 = vmatpush1.msra.mxu0 0.0
        %3706 = vmatprep.subr.mxu0 0.0
        %3707 = vmatpush1.msra.mxu0 0.0
        %3708 = vmatprep.subr.mxu0 0.0
        %3709 = vmatpush1.msra.mxu0 0.0
        %3710 = vmatprep.subr.mxu0 0.0
        %3711 = vmatpush1.msra.mxu0 0.0
        %3712 = vmatprep.subr.mxu0 0.0
        %3713 = vmatpush1.msra.mxu0 0.0
        %3714 = vmatprep.subr.mxu0 0.0
        %3715 = vmatpush1.msra.mxu0 0.0
        %3716 = vmatprep.subr.mxu0 0.0
        %3717 = vmatpush1.msra.mxu0 0.0
        %3718 = vmatprep.subr.mxu0 0.0
        %3719 = vmatpush1.msra.mxu0 0.0
        %3720 = vmatprep.subr.mxu0 0.0
        %3721 = vmatpush1.msra.mxu0 0.0
        %3722 = vmatprep.subr.mxu0 0.0
        %3723 = vmatpush1.msra.mxu0 0.0
        %3724 = vmatprep.subr.mxu0 0.0
        %3725 = vmatpush1.msra.mxu0 0.0
        %3726 = vmatprep.subr.mxu0 0.0
        %3727 = vmatpush1.msra.mxu0 0.0
        %3728 = vmatprep.subr.mxu0 0.0
        %3729 = vmatpush1.msra.mxu0 0.0
        %3730 = vmatprep.subr.mxu0 0.0
        %3731 = vmatpush1.msra.mxu0 0.0
        %3732 = vmatprep.subr.mxu0 0.0
        %3733 = vmatpush1.msra.mxu0 0.0
        %3734 = vmatprep.subr.mxu0 0.0
        %3735 = vmatpush1.msra.mxu0 0.0
        %3736 = vmatprep.subr.mxu0 0.0
        %3737 = vmatpush1.msra.mxu0 0.0
        %3738 = vmatprep.subr.mxu0 0.0
        %3739 = vmatpush1.msra.mxu0 0.0
        %3740 = vmatprep.subr.mxu0 0.0
        %3741 = vmatpush1.msra.mxu0 0.0
        %3742 = vmatprep.subr.mxu0 0.0
        %3743 = vmatpush1.msra.mxu0 0.0
        %3744 = vmatprep.mubr.f32.mxu0 0.0
        %3745 = vmatmul.mubr.f32.gmra.mrb[0].mxu0 %v3678
        %v3746 = vpop.f32.mrb[0].mxu0
        %v3747 = vadd.f32 %v3675, %v3746
        %v3748 = vpop.f32.mrb[0].mxu0
        %3749 = vdwg.mxu0
        %v3750 = vadd.f32 %v1804, %v3747
        %v3751 = vsel %vm2664, %v3750, 0.0
        %3752 = vadd.xlane.f32.xlu0 %v3751
        %v3753 = vpop.xlane.xlu0 %3752
        %v3754 = vmul.f32 %v3753, %v2668
        %v3755 = vsub.f32 %v3750, %v3754
        %v3756 = vmul.f32 %v3755, %v3755
        %v3757 = vsel %vm2664, %v3756, 0.0
        %3758 = vadd.xlane.f32.xlu0 %v3757
        %v3759 = vpop.xlane.xlu0 %3758
        %v3760 = vmul.f32 %v3759, %v2668
        %v3761 = vadd.f32 %v3760, 1e-05
        %v3762 = vrsqrt.pop %v3761
        %v3763 = vmul.f32 %v3755, %v3762
        %v3764 = vld [vmem:[%s39] sm:$0x1]
        %v3766 = vlaneseq
        %v3767 = vshrl.u32 %v3766, 7
        %v3768 = vsub.s32 0, %v3767
        %v3769 = vrot.slane %v3764, %v3768
        %v3771 = vmul.f32 %v3763, %v3769
        %v3772 = vld [vmem:[%s41] sm:$0x1]
        %v3774 = vlaneseq
        %v3775 = vshrl.u32 %v3774, 7
        %v3776 = vsub.s32 0, %v3775
        %v3777 = vrot.slane %v3772, %v3776
        %v3779 = vadd.f32 %v3771, %v3777
        %v3780 = vld [vmem:[#allocation25] sm:$0xff]
        %v3781 = vld [vmem:[#allocation25 + $0x8] sm:$0xff]
        %v3782 = vld [vmem:[#allocation25 + $0x10] sm:$0xff]
        %v3783 = vld [vmem:[#allocation25 + $0x18] sm:$0xff]
        %v3784 = vld [vmem:[#allocation26] sm:$0x1]
        %v3786 = vlaneseq
        %v3787 = vshrl.u32 %v3786, 7
        %v3788 = vsub.s32 0, %v3787
        %v3789 = vrot.slane %v3784, %v3788
        %v3792 = vsel %vm1817, %v3779, 0
        %3794 = vmatprep.subr.mxu0 0.0
        %3795 = vmatpush1.msra.mxu0 %v3780
        %3796 = vmatprep.subr.mxu0 0.0
        %3797 = vmatpush1.msra.mxu0 %v3781
        %3798 = vmatprep.subr.mxu0 0.0
        %3799 = vmatpush1.msra.mxu0 %v3782
        %3800 = vmatprep.subr.mxu0 0.0
        %3801 = vmatpush1.msra.mxu0 %v3783
        %3802 = vmatprep.subr.mxu0 0.0
        %3803 = vmatpush1.msra.mxu0 0.0
        %3804 = vmatprep.subr.mxu0 0.0
        %3805 = vmatpush1.msra.mxu0 0.0
        %3806 = vmatprep.subr.mxu0 0.0
        %3807 = vmatpush1.msra.mxu0 0.0
        %3808 = vmatprep.subr.mxu0 0.0
        %3809 = vmatpush1.msra.mxu0 0.0
        %3810 = vmatprep.subr.mxu0 0.0
        %3811 = vmatpush1.msra.mxu0 0.0
        %3812 = vmatprep.subr.mxu0 0.0
        %3813 = vmatpush1.msra.mxu0 0.0
        %3814 = vmatprep.subr.mxu0 0.0
        %3815 = vmatpush1.msra.mxu0 0.0
        %3816 = vmatprep.subr.mxu0 0.0
        %3817 = vmatpush1.msra.mxu0 0.0
        %3818 = vmatprep.subr.mxu0 0.0
        %3819 = vmatpush1.msra.mxu0 0.0
        %3820 = vmatprep.subr.mxu0 0.0
        %3821 = vmatpush1.msra.mxu0 0.0
        %3822 = vmatprep.subr.mxu0 0.0
        %3823 = vmatpush1.msra.mxu0 0.0
        %3824 = vmatprep.subr.mxu0 0.0
        %3825 = vmatpush1.msra.mxu0 0.0
        %3826 = vmatprep.subr.mxu0 0.0
        %3827 = vmatpush1.msra.mxu0 0.0
        %3828 = vmatprep.subr.mxu0 0.0
        %3829 = vmatpush1.msra.mxu0 0.0
        %3830 = vmatprep.subr.mxu0 0.0
        %3831 = vmatpush1.msra.mxu0 0.0
        %3832 = vmatprep.subr.mxu0 0.0
        %3833 = vmatpush1.msra.mxu0 0.0
        %3834 = vmatprep.subr.mxu0 0.0
        %3835 = vmatpush1.msra.mxu0 0.0
        %3836 = vmatprep.subr.mxu0 0.0
        %3837 = vmatpush1.msra.mxu0 0.0
        %3838 = vmatprep.subr.mxu0 0.0
        %3839 = vmatpush1.msra.mxu0 0.0
        %3840 = vmatprep.subr.mxu0 0.0
        %3841 = vmatpush1.msra.mxu0 0.0
        %3842 = vmatprep.subr.mxu0 0.0
        %3843 = vmatpush1.msra.mxu0 0.0
        %3844 = vmatprep.subr.mxu0 0.0
        %3845 = vmatpush1.msra.mxu0 0.0
        %3846 = vmatprep.subr.mxu0 0.0
        %3847 = vmatpush1.msra.mxu0 0.0
        %3848 = vmatprep.subr.mxu0 0.0
        %3849 = vmatpush1.msra.mxu0 0.0
        %3850 = vmatprep.subr.mxu0 0.0
        %3851 = vmatpush1.msra.mxu0 0.0
        %3852 = vmatprep.subr.mxu0 0.0
        %3853 = vmatpush1.msra.mxu0 0.0
        %3854 = vmatprep.subr.mxu0 0.0
        %3855 = vmatpush1.msra.mxu0 0.0
        %3856 = vmatprep.subr.mxu0 0.0
        %3857 = vmatpush1.msra.mxu0 0.0
        %3858 = vmatprep.mubr.f32.mxu0 0.0
        %3859 = vmatmul.mubr.f32.gmra.mrb[0].mxu0 %v3792
        %v3860 = vpop.f32.mrb[0].mxu0
        %v3861 = vadd.f32 %v3789, %v3860
        %v3862 = vpop.f32.mrb[0].mxu0
        %3863 = vdwg.mxu0
        %v3864 = vld [vmem:[#allocation28] sm:$0xff]
        %v3865 = vld [vmem:[#allocation28 + $0x8] sm:$0xff]
        %v3866 = vld [vmem:[#allocation28 + $0x10] sm:$0xff]
        %v3867 = vld [vmem:[#allocation28 + $0x18] sm:$0xff]
        %v3868 = vld [vmem:[#allocation29] sm:$0x1]
        %v3870 = vlaneseq
        %v3871 = vshrl.u32 %v3870, 7
        %v3872 = vsub.s32 0, %v3871
        %v3873 = vrot.slane %v3868, %v3872
        %v3876 = vsel %vm1817, %v2898, 0
        %3878 = vmatprep.subr.mxu0 0.0
        %3879 = vmatpush1.msra.mxu0 %v3864
        %3880 = vmatprep.subr.mxu0 0.0
        %3881 = vmatpush1.msra.mxu0 %v3865
        %3882 = vmatprep.subr.mxu0 0.0
        %3883 = vmatpush1.msra.mxu0 %v3866
        %3884 = vmatprep.subr.mxu0 0.0
        %3885 = vmatpush1.msra.mxu0 %v3867
        %3886 = vmatprep.subr.mxu0 0.0
        %3887 = vmatpush1.msra.mxu0 0.0
        %3888 = vmatprep.subr.mxu0 0.0
        %3889 = vmatpush1.msra.mxu0 0.0
        %3890 = vmatprep.subr.mxu0 0.0
        %3891 = vmatpush1.msra.mxu0 0.0
        %3892 = vmatprep.subr.mxu0 0.0
        %3893 = vmatpush1.msra.mxu0 0.0
        %3894 = vmatprep.subr.mxu0 0.0
        %3895 = vmatpush1.msra.mxu0 0.0
        %3896 = vmatprep.subr.mxu0 0.0
        %3897 = vmatpush1.msra.mxu0 0.0
        %3898 = vmatprep.subr.mxu0 0.0
        %3899 = vmatpush1.msra.mxu0 0.0
        %3900 = vmatprep.subr.mxu0 0.0
        %3901 = vmatpush1.msra.mxu0 0.0
        %3902 = vmatprep.subr.mxu0 0.0
        %3903 = vmatpush1.msra.mxu0 0.0
        %3904 = vmatprep.subr.mxu0 0.0
        %3905 = vmatpush1.msra.mxu0 0.0
        %3906 = vmatprep.subr.mxu0 0.0
        %3907 = vmatpush1.msra.mxu0 0.0
        %3908 = vmatprep.subr.mxu0 0.0
        %3909 = vmatpush1.msra.mxu0 0.0
        %3910 = vmatprep.subr.mxu0 0.0
        %3911 = vmatpush1.msra.mxu0 0.0
        %3912 = vmatprep.subr.mxu0 0.0
        %3913 = vmatpush1.msra.mxu0 0.0
        %3914 = vmatprep.subr.mxu0 0.0
        %3915 = vmatpush1.msra.mxu0 0.0
        %3916 = vmatprep.subr.mxu0 0.0
        %3917 = vmatpush1.msra.mxu0 0.0
        %3918 = vmatprep.subr.mxu0 0.0
        %3919 = vmatpush1.msra.mxu0 0.0
        %3920 = vmatprep.subr.mxu0 0.0
        %3921 = vmatpush1.msra.mxu0 0.0
        %3922 = vmatprep.subr.mxu0 0.0
        %3923 = vmatpush1.msra.mxu0 0.0
        %3924 = vmatprep.subr.mxu0 0.0
        %3925 = vmatpush1.msra.mxu0 0.0
        %3926 = vmatprep.subr.mxu0 0.0
        %3927 = vmatpush1.msra.mxu0 0.0
        %3928 = vmatprep.subr.mxu0 0.0
        %3929 = vmatpush1.msra.mxu0 0.0
        %3930 = vmatprep.subr.mxu0 0.0
        %3931 = vmatpush1.msra.mxu0 0.0
        %3932 = vmatprep.subr.mxu0 0.0
        %3933 = vmatpush1.msra.mxu0 0.0
        %3934 = vmatprep.subr.mxu0 0.0
        %3935 = vmatpush1.msra.mxu0 0.0
        %3936 = vmatprep.subr.mxu0 0.0
        %3937 = vmatpush1.msra.mxu0 0.0
        %3938 = vmatprep.subr.mxu0 0.0
        %3939 = vmatpush1.msra.mxu0 0.0
        %3940 = vmatprep.subr.mxu0 0.0
        %3941 = vmatpush1.msra.mxu0 0.0
        %3942 = vmatprep.mubr.f32.mxu0 0.0
        %3943 = vmatmul.mubr.f32.gmra.mrb[0].mxu0 %v3876
        %v3944 = vpop.f32.mrb[0].mxu0
        %v3945 = vadd.f32 %v3873, %v3944
        %v3946 = vpop.f32.mrb[0].mxu0
        %3947 = vdwg.mxu0
        %v3949 = vsel %vm1894, %v3861, 0
        %v3952 = vsel %vm1894, %v3945, 0
        %3954 = vmatprep.subr.mxu0 0.0
        %3955 = vmatpush1.xpose.msra.mxu0 %v3952
        %3956 = vmatprep.subr.mxu0 0.0
        %3957 = vmatpush1.xpose.msra.mxu0 0.0
        %3958 = vmatprep.subr.mxu0 0.0
        %3959 = vmatpush1.xpose.msra.mxu0 0.0
        %3960 = vmatprep.subr.mxu0 0.0
        %3961 = vmatpush1.xpose.msra.mxu0 0.0
        %3962 = vmatprep.subr.mxu0 0.0
        %3963 = vmatpush1.xpose.msra.mxu0 0.0
        %3964 = vmatprep.subr.mxu0 0.0
        %3965 = vmatpush1.xpose.msra.mxu0 0.0
        %3966 = vmatprep.subr.mxu0 0.0
        %3967 = vmatpush1.xpose.msra.mxu0 0.0
        %3968 = vmatprep.subr.mxu0 0.0
        %3969 = vmatpush1.xpose.msra.mxu0 0.0
        %3970 = vmatprep.subr.mxu0 0.0
        %3971 = vmatpush1.xpose.msra.mxu0 0.0
        %3972 = vmatprep.subr.mxu0 0.0
        %3973 = vmatpush1.xpose.msra.mxu0 0.0
        %3974 = vmatprep.subr.mxu0 0.0
        %3975 = vmatpush1.xpose.msra.mxu0 0.0
        %3976 = vmatprep.subr.mxu0 0.0
        %3977 = vmatpush1.xpose.msra.mxu0 0.0
        %3978 = vmatprep.subr.mxu0 0.0
        %3979 = vmatpush1.xpose.msra.mxu0 0.0
        %3980 = vmatprep.subr.mxu0 0.0
        %3981 = vmatpush1.xpose.msra.mxu0 0.0
        %3982 = vmatprep.subr.mxu0 0.0
        %3983 = vmatpush1.xpose.msra.mxu0 0.0
        %3984 = vmatprep.subr.mxu0 0.0
        %3985 = vmatpush1.xpose.msra.mxu0 0.0
        %3986 = vmatprep.subr.mxu0 0.0
        %3987 = vmatpush1.xpose.msra.mxu0 0.0
        %3988 = vmatprep.subr.mxu0 0.0
        %3989 = vmatpush1.xpose.msra.mxu0 0.0
        %3990 = vmatprep.subr.mxu0 0.0
        %3991 = vmatpush1.xpose.msra.mxu0 0.0
        %3992 = vmatprep.subr.mxu0 0.0
        %3993 = vmatpush1.xpose.msra.mxu0 0.0
        %3994 = vmatprep.subr.mxu0 0.0
        %3995 = vmatpush1.xpose.msra.mxu0 0.0
        %3996 = vmatprep.subr.mxu0 0.0
        %3997 = vmatpush1.xpose.msra.mxu0 0.0
        %3998 = vmatprep.subr.mxu0 0.0
        %3999 = vmatpush1.xpose.msra.mxu0 0.0
        %4000 = vmatprep.subr.mxu0 0.0
        %4001 = vmatpush1.xpose.msra.mxu0 0.0
        %4002 = vmatprep.subr.mxu0 0.0
        %4003 = vmatpush1.xpose.msra.mxu0 0.0
        %4004 = vmatprep.subr.mxu0 0.0
        %4005 = vmatpush1.xpose.msra.mxu0 0.0
        %4006 = vmatprep.subr.mxu0 0.0
        %4007 = vmatpush1.xpose.msra.mxu0 0.0
        %4008 = vmatprep.subr.mxu0 0.0
        %4009 = vmatpush1.xpose.msra.mxu0 0.0
        %4010 = vmatprep.subr.mxu0 0.0
        %4011 = vmatpush1.xpose.msra.mxu0 0.0
        %4012 = vmatprep.subr.mxu0 0.0
        %4013 = vmatpush1.xpose.msra.mxu0 0.0
        %4014 = vmatprep.subr.mxu0 0.0
        %4015 = vmatpush1.xpose.msra.mxu0 0.0
        %4016 = vmatprep.subr.mxu0 0.0
        %4017 = vmatpush1.xpose.msra.mxu0 0.0
        %4018 = vmatprep.mubr.f32.mxu0 0.0
        %4019 = vmatmul.mubr.f32.gmra.mrb[0].mxu0 %v3949
        %v4020 = vpop.f32.mrb[0].mxu0
        %v4021 = vadd.f32 0.0, %v4020
        %v4022 = vpop.f32.mrb[0].mxu0
        %4023 = vdwg.mxu0
        %v4024 = vmul.f32 %v4021, 0.35355338
        %v4025 = vsel %vm1970, %v4024, -inf
        %4026 = vmax.xlane.f32.xlu0 %v4025
        %v4027 = vpop.xlane.xlu0 %4026
        %v4028 = vsub.f32 %v4024, %v4027
        %v4029 = vmul.f32 %v4028, 1.442695
        %v4030 = vpow.pop %v4029
        %v4031 = vsel %vm1970, %v4030, 0.0
        %4032 = vadd.xlane.f32.xlu0 %v4031
        %v4033 = vpop.xlane.xlu0 %4032
        %4034 = vrot.lane.b32.xlu0 %v3945, 96
        %v4035 = vpop.permute.xlu0 %4034
        %v4037 = vsel %vm1982, %v4030, 0
        %v4039 = vsel %vm1986, %v4035, 0
        %4041 = vmatprep.subr.mxu0 0.0
        %4042 = vmatpush1.msra.mxu0 %v4039
        %4043 = vmatprep.subr.mxu0 0.0
        %4044 = vmatpush1.msra.mxu0 0.0
        %4045 = vmatprep.subr.mxu0 0.0
        %4046 = vmatpush1.msra.mxu0 0.0
        %4047 = vmatprep.subr.mxu0 0.0
        %4048 = vmatpush1.msra.mxu0 0.0
        %4049 = vmatprep.subr.mxu0 0.0
        %4050 = vmatpush1.msra.mxu0 0.0
        %4051 = vmatprep.subr.mxu0 0.0
        %4052 = vmatpush1.msra.mxu0 0.0
        %4053 = vmatprep.subr.mxu0 0.0
        %4054 = vmatpush1.msra.mxu0 0.0
        %4055 = vmatprep.subr.mxu0 0.0
        %4056 = vmatpush1.msra.mxu0 0.0
        %4057 = vmatprep.subr.mxu0 0.0
        %4058 = vmatpush1.msra.mxu0 0.0
        %4059 = vmatprep.subr.mxu0 0.0
        %4060 = vmatpush1.msra.mxu0 0.0
        %4061 = vmatprep.subr.mxu0 0.0
        %4062 = vmatpush1.msra.mxu0 0.0
        %4063 = vmatprep.subr.mxu0 0.0
        %4064 = vmatpush1.msra.mxu0 0.0
        %4065 = vmatprep.subr.mxu0 0.0
        %4066 = vmatpush1.msra.mxu0 0.0
        %4067 = vmatprep.subr.mxu0 0.0
        %4068 = vmatpush1.msra.mxu0 0.0
        %4069 = vmatprep.subr.mxu0 0.0
        %4070 = vmatpush1.msra.mxu0 0.0
        %4071 = vmatprep.subr.mxu0 0.0
        %4072 = vmatpush1.msra.mxu0 0.0
        %4073 = vmatprep.subr.mxu0 0.0
        %4074 = vmatpush1.msra.mxu0 0.0
        %4075 = vmatprep.subr.mxu0 0.0
        %4076 = vmatpush1.msra.mxu0 0.0
        %4077 = vmatprep.subr.mxu0 0.0
        %4078 = vmatpush1.msra.mxu0 0.0
        %4079 = vmatprep.subr.mxu0 0.0
        %4080 = vmatpush1.msra.mxu0 0.0
        %4081 = vmatprep.subr.mxu0 0.0
        %4082 = vmatpush1.msra.mxu0 0.0
        %4083 = vmatprep.subr.mxu0 0.0
        %4084 = vmatpush1.msra.mxu0 0.0
        %4085 = vmatprep.subr.mxu0 0.0
        %4086 = vmatpush1.msra.mxu0 0.0
        %4087 = vmatprep.subr.mxu0 0.0
        %4088 = vmatpush1.msra.mxu0 0.0
        %4089 = vmatprep.subr.mxu0 0.0
        %4090 = vmatpush1.msra.mxu0 0.0
        %4091 = vmatprep.subr.mxu0 0.0
        %4092 = vmatpush1.msra.mxu0 0.0
        %4093 = vmatprep.subr.mxu0 0.0
        %4094 = vmatpush1.msra.mxu0 0.0
        %4095 = vmatprep.subr.mxu0 0.0
        %4096 = vmatpush1.msra.mxu0 0.0
        %4097 = vmatprep.subr.mxu0 0.0
        %4098 = vmatpush1.msra.mxu0 0.0
        %4099 = vmatprep.subr.mxu0 0.0
        %4100 = vmatpush1.msra.mxu0 0.0
        %4101 = vmatprep.subr.mxu0 0.0
        %4102 = vmatpush1.msra.mxu0 0.0
        %4103 = vmatprep.subr.mxu0 0.0
        %4104 = vmatpush1.msra.mxu0 0.0
        %4105 = vmatprep.mubr.f32.mxu0 0.0
        %4106 = vmatmul.mubr.f32.gmra.mrb[0].mxu0 %v4037
        %v4107 = vpop.f32.mrb[0].mxu0
        %v4108 = vadd.f32 0.0, %v4107
        %v4109 = vpop.f32.mrb[0].mxu0
        %4110 = vdwg.mxu0
        %v4111 = vrcp.pop %v4033
        %v4112 = vmul.f32 %v4108, %v4111
        %4113 = vrot.lane.b32.xlu0 %v3861, 120
        %v4114 = vpop.permute.xlu0 %4113
        %4115 = vrot.lane.b32.xlu0 %v3945, 120
        %v4116 = vpop.permute.xlu0 %4115
        %v4117 = vsel %vm1894, %v4114, 0
        %v4119 = vsel %vm1894, %v4116, 0
        %4121 = vmatprep.subr.mxu0 0.0
        %4122 = vmatpush1.xpose.msra.mxu0 %v4119
        %4123 = vmatprep.subr.mxu0 0.0
        %4124 = vmatpush1.xpose.msra.mxu0 0.0
        %4125 = vmatprep.subr.mxu0 0.0
        %4126 = vmatpush1.xpose.msra.mxu0 0.0
        %4127 = vmatprep.subr.mxu0 0.0
        %4128 = vmatpush1.xpose.msra.mxu0 0.0
        %4129 = vmatprep.subr.mxu0 0.0
        %4130 = vmatpush1.xpose.msra.mxu0 0.0
        %4131 = vmatprep.subr.mxu0 0.0
        %4132 = vmatpush1.xpose.msra.mxu0 0.0
        %4133 = vmatprep.subr.mxu0 0.0
        %4134 = vmatpush1.xpose.msra.mxu0 0.0
        %4135 = vmatprep.subr.mxu0 0.0
        %4136 = vmatpush1.xpose.msra.mxu0 0.0
        %4137 = vmatprep.subr.mxu0 0.0
        %4138 = vmatpush1.xpose.msra.mxu0 0.0
        %4139 = vmatprep.subr.mxu0 0.0
        %4140 = vmatpush1.xpose.msra.mxu0 0.0
        %4141 = vmatprep.subr.mxu0 0.0
        %4142 = vmatpush1.xpose.msra.mxu0 0.0
        %4143 = vmatprep.subr.mxu0 0.0
        %4144 = vmatpush1.xpose.msra.mxu0 0.0
        %4145 = vmatprep.subr.mxu0 0.0
        %4146 = vmatpush1.xpose.msra.mxu0 0.0
        %4147 = vmatprep.subr.mxu0 0.0
        %4148 = vmatpush1.xpose.msra.mxu0 0.0
        %4149 = vmatprep.subr.mxu0 0.0
        %4150 = vmatpush1.xpose.msra.mxu0 0.0
        %4151 = vmatprep.subr.mxu0 0.0
        %4152 = vmatpush1.xpose.msra.mxu0 0.0
        %4153 = vmatprep.subr.mxu0 0.0
        %4154 = vmatpush1.xpose.msra.mxu0 0.0
        %4155 = vmatprep.subr.mxu0 0.0
        %4156 = vmatpush1.xpose.msra.mxu0 0.0
        %4157 = vmatprep.subr.mxu0 0.0
        %4158 = vmatpush1.xpose.msra.mxu0 0.0
        %4159 = vmatprep.subr.mxu0 0.0
        %4160 = vmatpush1.xpose.msra.mxu0 0.0
        %4161 = vmatprep.subr.mxu0 0.0
        %4162 = vmatpush1.xpose.msra.mxu0 0.0
        %4163 = vmatprep.subr.mxu0 0.0
        %4164 = vmatpush1.xpose.msra.mxu0 0.0
        %4165 = vmatprep.subr.mxu0 0.0
        %4166 = vmatpush1.xpose.msra.mxu0 0.0
        %4167 = vmatprep.subr.mxu0 0.0
        %4168 = vmatpush1.xpose.msra.mxu0 0.0
        %4169 = vmatprep.subr.mxu0 0.0
        %4170 = vmatpush1.xpose.msra.mxu0 0.0
        %4171 = vmatprep.subr.mxu0 0.0
        %4172 = vmatpush1.xpose.msra.mxu0 0.0
        %4173 = vmatprep.subr.mxu0 0.0
        %4174 = vmatpush1.xpose.msra.mxu0 0.0
        %4175 = vmatprep.subr.mxu0 0.0
        %4176 = vmatpush1.xpose.msra.mxu0 0.0
        %4177 = vmatprep.subr.mxu0 0.0
        %4178 = vmatpush1.xpose.msra.mxu0 0.0
        %4179 = vmatprep.subr.mxu0 0.0
        %4180 = vmatpush1.xpose.msra.mxu0 0.0
        %4181 = vmatprep.subr.mxu0 0.0
        %4182 = vmatpush1.xpose.msra.mxu0 0.0
        %4183 = vmatprep.subr.mxu0 0.0
        %4184 = vmatpush1.xpose.msra.mxu0 0.0
        %4185 = vmatprep.mubr.f32.mxu0 0.0
        %4186 = vmatmul.mubr.f32.gmra.mrb[0].mxu0 %v4117
        %v4187 = vpop.f32.mrb[0].mxu0
        %v4188 = vadd.f32 0.0, %v4187
        %v4189 = vpop.f32.mrb[0].mxu0
        %4190 = vdwg.mxu0
        %v4191 = vmul.f32 %v4188, 0.35355338
        %v4192 = vsel %vm1970, %v4191, -inf
        %4193 = vmax.xlane.f32.xlu0 %v4192
        %v4194 = vpop.xlane.xlu0 %4193
        %v4195 = vsub.f32 %v4191, %v4194
        %v4196 = vmul.f32 %v4195, 1.442695
        %v4197 = vpow.pop %v4196
        %v4198 = vsel %vm1970, %v4197, 0.0
        %4199 = vadd.xlane.f32.xlu0 %v4198
        %v4200 = vpop.xlane.xlu0 %4199
        %4201 = vrot.lane.b32.xlu0 %v3945, 88
        %v4202 = vpop.permute.xlu0 %4201
        %v4204 = vsel %vm1982, %v4197, 0
        %v4206 = vsel %vm1986, %v4202, 0
        %4208 = vmatprep.subr.mxu0 0.0
        %4209 = vmatpush1.msra.mxu0 %v4206
        %4210 = vmatprep.subr.mxu0 0.0
        %4211 = vmatpush1.msra.mxu0 0.0
        %4212 = vmatprep.subr.mxu0 0.0
        %4213 = vmatpush1.msra.mxu0 0.0
        %4214 = vmatprep.subr.mxu0 0.0
        %4215 = vmatpush1.msra.mxu0 0.0
        %4216 = vmatprep.subr.mxu0 0.0
        %4217 = vmatpush1.msra.mxu0 0.0
        %4218 = vmatprep.subr.mxu0 0.0
        %4219 = vmatpush1.msra.mxu0 0.0
        %4220 = vmatprep.subr.mxu0 0.0
        %4221 = vmatpush1.msra.mxu0 0.0
        %4222 = vmatprep.subr.mxu0 0.0
        %4223 = vmatpush1.msra.mxu0 0.0
        %4224 = vmatprep.subr.mxu0 0.0
        %4225 = vmatpush1.msra.mxu0 0.0
        %4226 = vmatprep.subr.mxu0 0.0
        %4227 = vmatpush1.msra.mxu0 0.0
        %4228 = vmatprep.subr.mxu0 0.0
        %4229 = vmatpush1.msra.mxu0 0.0
        %4230 = vmatprep.subr.mxu0 0.0
        %4231 = vmatpush1.msra.mxu0 0.0
        %4232 = vmatprep.subr.mxu0 0.0
        %4233 = vmatpush1.msra.mxu0 0.0
        %4234 = vmatprep.subr.mxu0 0.0
        %4235 = vmatpush1.msra.mxu0 0.0
        %4236 = vmatprep.subr.mxu0 0.0
        %4237 = vmatpush1.msra.mxu0 0.0
        %4238 = vmatprep.subr.mxu0 0.0
        %4239 = vmatpush1.msra.mxu0 0.0
        %4240 = vmatprep.subr.mxu0 0.0
        %4241 = vmatpush1.msra.mxu0 0.0
        %4242 = vmatprep.subr.mxu0 0.0
        %4243 = vmatpush1.msra.mxu0 0.0
        %4244 = vmatprep.subr.mxu0 0.0
        %4245 = vmatpush1.msra.mxu0 0.0
        %4246 = vmatprep.subr.mxu0 0.0
        %4247 = vmatpush1.msra.mxu0 0.0
        %4248 = vmatprep.subr.mxu0 0.0
        %4249 = vmatpush1.msra.mxu0 0.0
        %4250 = vmatprep.subr.mxu0 0.0
        %4251 = vmatpush1.msra.mxu0 0.0
        %4252 = vmatprep.subr.mxu0 0.0
        %4253 = vmatpush1.msra.mxu0 0.0
        %4254 = vmatprep.subr.mxu0 0.0
        %4255 = vmatpush1.msra.mxu0 0.0
        %4256 = vmatprep.subr.mxu0 0.0
        %4257 = vmatpush1.msra.mxu0 0.0
        %4258 = vmatprep.subr.mxu0 0.0
        %4259 = vmatpush1.msra.mxu0 0.0
        %4260 = vmatprep.subr.mxu0 0.0
        %4261 = vmatpush1.msra.mxu0 0.0
        %4262 = vmatprep.subr.mxu0 0.0
        %4263 = vmatpush1.msra.mxu0 0.0
        %4264 = vmatprep.subr.mxu0 0.0
        %4265 = vmatpush1.msra.mxu0 0.0
        %4266 = vmatprep.subr.mxu0 0.0
        %4267 = vmatpush1.msra.mxu0 0.0
        %4268 = vmatprep.subr.mxu0 0.0
        %4269 = vmatpush1.msra.mxu0 0.0
        %4270 = vmatprep.subr.mxu0 0.0
        %4271 = vmatpush1.msra.mxu0 0.0
        %4272 = vmatprep.mubr.f32.mxu0 0.0
        %4273 = vmatmul.mubr.f32.gmra.mrb[0].mxu0 %v4204
        %v4274 = vpop.f32.mrb[0].mxu0
        %v4275 = vadd.f32 0.0, %v4274
        %v4276 = vpop.f32.mrb[0].mxu0
        %4277 = vdwg.mxu0
        %v4278 = vrcp.pop %v4200
        %v4279 = vmul.f32 %v4275, %v4278
        %4280 = vrot.lane.b32.xlu0 %v3861, 112
        %v4281 = vpop.permute.xlu0 %4280
        %4282 = vrot.lane.b32.xlu0 %v3945, 112
        %v4283 = vpop.permute.xlu0 %4282
        %v4284 = vsel %vm1894, %v4281, 0
        %v4286 = vsel %vm1894, %v4283, 0
        %4288 = vmatprep.subr.mxu0 0.0
        %4289 = vmatpush1.xpose.msra.mxu0 %v4286
        %4290 = vmatprep.subr.mxu0 0.0
        %4291 = vmatpush1.xpose.msra.mxu0 0.0
        %4292 = vmatprep.subr.mxu0 0.0
        %4293 = vmatpush1.xpose.msra.mxu0 0.0
        %4294 = vmatprep.subr.mxu0 0.0
        %4295 = vmatpush1.xpose.msra.mxu0 0.0
        %4296 = vmatprep.subr.mxu0 0.0
        %4297 = vmatpush1.xpose.msra.mxu0 0.0
        %4298 = vmatprep.subr.mxu0 0.0
        %4299 = vmatpush1.xpose.msra.mxu0 0.0
        %4300 = vmatprep.subr.mxu0 0.0
        %4301 = vmatpush1.xpose.msra.mxu0 0.0
        %4302 = vmatprep.subr.mxu0 0.0
        %4303 = vmatpush1.xpose.msra.mxu0 0.0
        %4304 = vmatprep.subr.mxu0 0.0
        %4305 = vmatpush1.xpose.msra.mxu0 0.0
        %4306 = vmatprep.subr.mxu0 0.0
        %4307 = vmatpush1.xpose.msra.mxu0 0.0
        %4308 = vmatprep.subr.mxu0 0.0
        %4309 = vmatpush1.xpose.msra.mxu0 0.0
        %4310 = vmatprep.subr.mxu0 0.0
        %4311 = vmatpush1.xpose.msra.mxu0 0.0
        %4312 = vmatprep.subr.mxu0 0.0
        %4313 = vmatpush1.xpose.msra.mxu0 0.0
        %4314 = vmatprep.subr.mxu0 0.0
        %4315 = vmatpush1.xpose.msra.mxu0 0.0
        %4316 = vmatprep.subr.mxu0 0.0
        %4317 = vmatpush1.xpose.msra.mxu0 0.0
        %4318 = vmatprep.subr.mxu0 0.0
        %4319 = vmatpush1.xpose.msra.mxu0 0.0
        %4320 = vmatprep.subr.mxu0 0.0
        %4321 = vmatpush1.xpose.msra.mxu0 0.0
        %4322 = vmatprep.subr.mxu0 0.0
        %4323 = vmatpush1.xpose.msra.mxu0 0.0
        %4324 = vmatprep.subr.mxu0 0.0
        %4325 = vmatpush1.xpose.msra.mxu0 0.0
        %4326 = vmatprep.subr.mxu0 0.0
        %4327 = vmatpush1.xpose.msra.mxu0 0.0
        %4328 = vmatprep.subr.mxu0 0.0
        %4329 = vmatpush1.xpose.msra.mxu0 0.0
        %4330 = vmatprep.subr.mxu0 0.0
        %4331 = vmatpush1.xpose.msra.mxu0 0.0
        %4332 = vmatprep.subr.mxu0 0.0
        %4333 = vmatpush1.xpose.msra.mxu0 0.0
        %4334 = vmatprep.subr.mxu0 0.0
        %4335 = vmatpush1.xpose.msra.mxu0 0.0
        %4336 = vmatprep.subr.mxu0 0.0
        %4337 = vmatpush1.xpose.msra.mxu0 0.0
        %4338 = vmatprep.subr.mxu0 0.0
        %4339 = vmatpush1.xpose.msra.mxu0 0.0
        %4340 = vmatprep.subr.mxu0 0.0
        %4341 = vmatpush1.xpose.msra.mxu0 0.0
        %4342 = vmatprep.subr.mxu0 0.0
        %4343 = vmatpush1.xpose.msra.mxu0 0.0
        %4344 = vmatprep.subr.mxu0 0.0
        %4345 = vmatpush1.xpose.msra.mxu0 0.0
        %4346 = vmatprep.subr.mxu0 0.0
        %4347 = vmatpush1.xpose.msra.mxu0 0.0
        %4348 = vmatprep.subr.mxu0 0.0
        %4349 = vmatpush1.xpose.msra.mxu0 0.0
        %4350 = vmatprep.subr.mxu0 0.0
        %4351 = vmatpush1.xpose.msra.mxu0 0.0
        %4352 = vmatprep.mubr.f32.mxu0 0.0
        %4353 = vmatmul.mubr.f32.gmra.mrb[0].mxu0 %v4284
        %v4354 = vpop.f32.mrb[0].mxu0
        %v4355 = vadd.f32 0.0, %v4354
        %v4356 = vpop.f32.mrb[0].mxu0
        %4357 = vdwg.mxu0
        %v4358 = vmul.f32 %v4355, 0.35355338
        %v4359 = vsel %vm1970, %v4358, -inf
        %4360 = vmax.xlane.f32.xlu0 %v4359
        %v4361 = vpop.xlane.xlu0 %4360
        %v4362 = vsub.f32 %v4358, %v4361
        %v4363 = vmul.f32 %v4362, 1.442695
        %v4364 = vpow.pop %v4363
        %v4365 = vsel %vm1970, %v4364, 0.0
        %4366 = vadd.xlane.f32.xlu0 %v4365
        %v4367 = vpop.xlane.xlu0 %4366
        %4368 = vrot.lane.b32.xlu0 %v3945, 80
        %v4369 = vpop.permute.xlu0 %4368
        %v4371 = vsel %vm1982, %v4364, 0
        %v4373 = vsel %vm1986, %v4369, 0
        %4375 = vmatprep.subr.mxu0 0.0
        %4376 = vmatpush1.msra.mxu0 %v4373
        %4377 = vmatprep.subr.mxu0 0.0
        %4378 = vmatpush1.msra.mxu0 0.0
        %4379 = vmatprep.subr.mxu0 0.0
        %4380 = vmatpush1.msra.mxu0 0.0
        %4381 = vmatprep.subr.mxu0 0.0
        %4382 = vmatpush1.msra.mxu0 0.0
        %4383 = vmatprep.subr.mxu0 0.0
        %4384 = vmatpush1.msra.mxu0 0.0
        %4385 = vmatprep.subr.mxu0 0.0
        %4386 = vmatpush1.msra.mxu0 0.0
        %4387 = vmatprep.subr.mxu0 0.0
        %4388 = vmatpush1.msra.mxu0 0.0
        %4389 = vmatprep.subr.mxu0 0.0
        %4390 = vmatpush1.msra.mxu0 0.0
        %4391 = vmatprep.subr.mxu0 0.0
        %4392 = vmatpush1.msra.mxu0 0.0
        %4393 = vmatprep.subr.mxu0 0.0
        %4394 = vmatpush1.msra.mxu0 0.0
        %4395 = vmatprep.subr.mxu0 0.0
        %4396 = vmatpush1.msra.mxu0 0.0
        %4397 = vmatprep.subr.mxu0 0.0
        %4398 = vmatpush1.msra.mxu0 0.0
        %4399 = vmatprep.subr.mxu0 0.0
        %4400 = vmatpush1.msra.mxu0 0.0
        %4401 = vmatprep.subr.mxu0 0.0
        %4402 = vmatpush1.msra.mxu0 0.0
        %4403 = vmatprep.subr.mxu0 0.0
        %4404 = vmatpush1.msra.mxu0 0.0
        %4405 = vmatprep.subr.mxu0 0.0
        %4406 = vmatpush1.msra.mxu0 0.0
        %4407 = vmatprep.subr.mxu0 0.0
        %4408 = vmatpush1.msra.mxu0 0.0
        %4409 = vmatprep.subr.mxu0 0.0
        %4410 = vmatpush1.msra.mxu0 0.0
        %4411 = vmatprep.subr.mxu0 0.0
        %4412 = vmatpush1.msra.mxu0 0.0
        %4413 = vmatprep.subr.mxu0 0.0
        %4414 = vmatpush1.msra.mxu0 0.0
        %4415 = vmatprep.subr.mxu0 0.0
        %4416 = vmatpush1.msra.mxu0 0.0
        %4417 = vmatprep.subr.mxu0 0.0
        %4418 = vmatpush1.msra.mxu0 0.0
        %4419 = vmatprep.subr.mxu0 0.0
        %4420 = vmatpush1.msra.mxu0 0.0
        %4421 = vmatprep.subr.mxu0 0.0
        %4422 = vmatpush1.msra.mxu0 0.0
        %4423 = vmatprep.subr.mxu0 0.0
        %4424 = vmatpush1.msra.mxu0 0.0
        %4425 = vmatprep.subr.mxu0 0.0
        %4426 = vmatpush1.msra.mxu0 0.0
        %4427 = vmatprep.subr.mxu0 0.0
        %4428 = vmatpush1.msra.mxu0 0.0
        %4429 = vmatprep.subr.mxu0 0.0
        %4430 = vmatpush1.msra.mxu0 0.0
        %4431 = vmatprep.subr.mxu0 0.0
        %4432 = vmatpush1.msra.mxu0 0.0
        %4433 = vmatprep.subr.mxu0 0.0
        %4434 = vmatpush1.msra.mxu0 0.0
        %4435 = vmatprep.subr.mxu0 0.0
        %4436 = vmatpush1.msra.mxu0 0.0
        %4437 = vmatprep.subr.mxu0 0.0
        %4438 = vmatpush1.msra.mxu0 0.0
        %4439 = vmatprep.mubr.f32.mxu0 0.0
        %4440 = vmatmul.mubr.f32.gmra.mrb[0].mxu0 %v4371
        %v4441 = vpop.f32.mrb[0].mxu0
        %v4442 = vadd.f32 0.0, %v4441
        %v4443 = vpop.f32.mrb[0].mxu0
        %4444 = vdwg.mxu0
        %v4445 = vrcp.pop %v4367
        %v4446 = vmul.f32 %v4442, %v4445
        %4447 = vrot.lane.b32.xlu0 %v3861, 104
        %v4448 = vpop.permute.xlu0 %4447
        %4449 = vrot.lane.b32.xlu0 %v3945, 104
        %v4450 = vpop.permute.xlu0 %4449
        %v4451 = vsel %vm1894, %v4448, 0
        %v4453 = vsel %vm1894, %v4450, 0
        %4455 = vmatprep.subr.mxu0 0.0
        %4456 = vmatpush1.xpose.msra.mxu0 %v4453
        %4457 = vmatprep.subr.mxu0 0.0
        %4458 = vmatpush1.xpose.msra.mxu0 0.0
        %4459 = vmatprep.subr.mxu0 0.0
        %4460 = vmatpush1.xpose.msra.mxu0 0.0
        %4461 = vmatprep.subr.mxu0 0.0
        %4462 = vmatpush1.xpose.msra.mxu0 0.0
        %4463 = vmatprep.subr.mxu0 0.0
        %4464 = vmatpush1.xpose.msra.mxu0 0.0
        %4465 = vmatprep.subr.mxu0 0.0
        %4466 = vmatpush1.xpose.msra.mxu0 0.0
        %4467 = vmatprep.subr.mxu0 0.0
        %4468 = vmatpush1.xpose.msra.mxu0 0.0
        %4469 = vmatprep.subr.mxu0 0.0
        %4470 = vmatpush1.xpose.msra.mxu0 0.0
        %4471 = vmatprep.subr.mxu0 0.0
        %4472 = vmatpush1.xpose.msra.mxu0 0.0
        %4473 = vmatprep.subr.mxu0 0.0
        %4474 = vmatpush1.xpose.msra.mxu0 0.0
        %4475 = vmatprep.subr.mxu0 0.0
        %4476 = vmatpush1.xpose.msra.mxu0 0.0
        %4477 = vmatprep.subr.mxu0 0.0
        %4478 = vmatpush1.xpose.msra.mxu0 0.0
        %4479 = vmatprep.subr.mxu0 0.0
        %4480 = vmatpush1.xpose.msra.mxu0 0.0
        %4481 = vmatprep.subr.mxu0 0.0
        %4482 = vmatpush1.xpose.msra.mxu0 0.0
        %4483 = vmatprep.subr.mxu0 0.0
        %4484 = vmatpush1.xpose.msra.mxu0 0.0
        %4485 = vmatprep.subr.mxu0 0.0
        %4486 = vmatpush1.xpose.msra.mxu0 0.0
        %4487 = vmatprep.subr.mxu0 0.0
        %4488 = vmatpush1.xpose.msra.mxu0 0.0
        %4489 = vmatprep.subr.mxu0 0.0
        %4490 = vmatpush1.xpose.msra.mxu0 0.0
        %4491 = vmatprep.subr.mxu0 0.0
        %4492 = vmatpush1.xpose.msra.mxu0 0.0
        %4493 = vmatprep.subr.mxu0 0.0
        %4494 = vmatpush1.xpose.msra.mxu0 0.0
        %4495 = vmatprep.subr.mxu0 0.0
        %4496 = vmatpush1.xpose.msra.mxu0 0.0
        %4497 = vmatprep.subr.mxu0 0.0
        %4498 = vmatpush1.xpose.msra.mxu0 0.0
        %4499 = vmatprep.subr.mxu0 0.0
        %4500 = vmatpush1.xpose.msra.mxu0 0.0
        %4501 = vmatprep.subr.mxu0 0.0
        %4502 = vmatpush1.xpose.msra.mxu0 0.0
        %4503 = vmatprep.subr.mxu0 0.0
        %4504 = vmatpush1.xpose.msra.mxu0 0.0
        %4505 = vmatprep.subr.mxu0 0.0
        %4506 = vmatpush1.xpose.msra.mxu0 0.0
        %4507 = vmatprep.subr.mxu0 0.0
        %4508 = vmatpush1.xpose.msra.mxu0 0.0
        %4509 = vmatprep.subr.mxu0 0.0
        %4510 = vmatpush1.xpose.msra.mxu0 0.0
        %4511 = vmatprep.subr.mxu0 0.0
        %4512 = vmatpush1.xpose.msra.mxu0 0.0
        %4513 = vmatprep.subr.mxu0 0.0
        %4514 = vmatpush1.xpose.msra.mxu0 0.0
        %4515 = vmatprep.subr.mxu0 0.0
        %4516 = vmatpush1.xpose.msra.mxu0 0.0
        %4517 = vmatprep.subr.mxu0 0.0
        %4518 = vmatpush1.xpose.msra.mxu0 0.0
        %4519 = vmatprep.mubr.f32.mxu0 0.0
        %4520 = vmatmul.mubr.f32.gmra.mrb[0].mxu0 %v4451
        %v4521 = vpop.f32.mrb[0].mxu0
        %v4522 = vadd.f32 0.0, %v4521
        %v4523 = vpop.f32.mrb[0].mxu0
        %4524 = vdwg.mxu0
        %v4525 = vmul.f32 %v4522, 0.35355338
        %v4526 = vsel %vm1970, %v4525, -inf
        %4527 = vmax.xlane.f32.xlu0 %v4526
        %v4528 = vpop.xlane.xlu0 %4527
        %v4529 = vsub.f32 %v4525, %v4528
        %v4530 = vmul.f32 %v4529, 1.442695
        %v4531 = vpow.pop %v4530
        %v4532 = vsel %vm1970, %v4531, 0.0
        %4533 = vadd.xlane.f32.xlu0 %v4532
        %v4534 = vpop.xlane.xlu0 %4533
        %4535 = vrot.lane.b32.xlu0 %v3945, 72
        %v4536 = vpop.permute.xlu0 %4535
        %v4538 = vsel %vm1982, %v4531, 0
        %v4540 = vsel %vm1986, %v4536, 0
        %4542 = vmatprep.subr.mxu0 0.0
        %4543 = vmatpush1.msra.mxu0 %v4540
        %4544 = vmatprep.subr.mxu0 0.0
        %4545 = vmatpush1.msra.mxu0 0.0
        %4546 = vmatprep.subr.mxu0 0.0
        %4547 = vmatpush1.msra.mxu0 0.0
        %4548 = vmatprep.subr.mxu0 0.0
        %4549 = vmatpush1.msra.mxu0 0.0
        %4550 = vmatprep.subr.mxu0 0.0
        %4551 = vmatpush1.msra.mxu0 0.0
        %4552 = vmatprep.subr.mxu0 0.0
        %4553 = vmatpush1.msra.mxu0 0.0
        %4554 = vmatprep.subr.mxu0 0.0
        %4555 = vmatpush1.msra.mxu0 0.0
        %4556 = vmatprep.subr.mxu0 0.0
        %4557 = vmatpush1.msra.mxu0 0.0
        %4558 = vmatprep.subr.mxu0 0.0
        %4559 = vmatpush1.msra.mxu0 0.0
        %4560 = vmatprep.subr.mxu0 0.0
        %4561 = vmatpush1.msra.mxu0 0.0
        %4562 = vmatprep.subr.mxu0 0.0
        %4563 = vmatpush1.msra.mxu0 0.0
        %4564 = vmatprep.subr.mxu0 0.0
        %4565 = vmatpush1.msra.mxu0 0.0
        %4566 = vmatprep.subr.mxu0 0.0
        %4567 = vmatpush1.msra.mxu0 0.0
        %4568 = vmatprep.subr.mxu0 0.0
        %4569 = vmatpush1.msra.mxu0 0.0
        %4570 = vmatprep.subr.mxu0 0.0
        %4571 = vmatpush1.msra.mxu0 0.0
        %4572 = vmatprep.subr.mxu0 0.0
        %4573 = vmatpush1.msra.mxu0 0.0
        %4574 = vmatprep.subr.mxu0 0.0
        %4575 = vmatpush1.msra.mxu0 0.0
        %4576 = vmatprep.subr.mxu0 0.0
        %4577 = vmatpush1.msra.mxu0 0.0
        %4578 = vmatprep.subr.mxu0 0.0
        %4579 = vmatpush1.msra.mxu0 0.0
        %4580 = vmatprep.subr.mxu0 0.0
        %4581 = vmatpush1.msra.mxu0 0.0
        %4582 = vmatprep.subr.mxu0 0.0
        %4583 = vmatpush1.msra.mxu0 0.0
        %4584 = vmatprep.subr.mxu0 0.0
        %4585 = vmatpush1.msra.mxu0 0.0
        %4586 = vmatprep.subr.mxu0 0.0
        %4587 = vmatpush1.msra.mxu0 0.0
        %4588 = vmatprep.subr.mxu0 0.0
        %4589 = vmatpush1.msra.mxu0 0.0
        %4590 = vmatprep.subr.mxu0 0.0
        %4591 = vmatpush1.msra.mxu0 0.0
        %4592 = vmatprep.subr.mxu0 0.0
        %4593 = vmatpush1.msra.mxu0 0.0
        %4594 = vmatprep.subr.mxu0 0.0
        %4595 = vmatpush1.msra.mxu0 0.0
        %4596 = vmatprep.subr.mxu0 0.0
        %4597 = vmatpush1.msra.mxu0 0.0
        %4598 = vmatprep.subr.mxu0 0.0
        %4599 = vmatpush1.msra.mxu0 0.0
        %4600 = vmatprep.subr.mxu0 0.0
        %4601 = vmatpush1.msra.mxu0 0.0
        %4602 = vmatprep.subr.mxu0 0.0
        %4603 = vmatpush1.msra.mxu0 0.0
        %4604 = vmatprep.subr.mxu0 0.0
        %4605 = vmatpush1.msra.mxu0 0.0
        %4606 = vmatprep.mubr.f32.mxu0 0.0
        %4607 = vmatmul.mubr.f32.gmra.mrb[0].mxu0 %v4538
        %v4608 = vpop.f32.mrb[0].mxu0
        %v4609 = vadd.f32 0.0, %v4608
        %v4610 = vpop.f32.mrb[0].mxu0
        %4611 = vdwg.mxu0
        %v4612 = vrcp.pop %v4534
        %v4613 = vmul.f32 %v4609, %v4612
        %4615 = vrot.lane.b32.xlu0 %v4279, 8
        %v4616 = vpop.permute.xlu0 %4615
        %4619 = vrot.lane.b32.xlu0 %v4446, 16
        %v4620 = vpop.permute.xlu0 %4619
        %4623 = vrot.lane.b32.xlu0 %v4613, 24
        %v4624 = vpop.permute.xlu0 %4623
        %v4626 = vsel %vm1894, %v4112, %v4616
        %v4627 = vsel %vm2575, %v4626, %v4620
        %v4628 = vsel %vm2577, %v4627, %v4624
        %v4629 = vld [vmem:[#allocation31] sm:$0xff]
        %v4630 = vld [vmem:[#allocation31 + $0x8] sm:$0xff]
        %v4631 = vld [vmem:[#allocation31 + $0x10] sm:$0xff]
        %v4632 = vld [vmem:[#allocation31 + $0x18] sm:$0xff]
        %v4633 = vld [vmem:[#allocation32] sm:$0x1]
        %v4635 = vlaneseq
        %v4636 = vshrl.u32 %v4635, 7
        %v4637 = vsub.s32 0, %v4636
        %v4638 = vrot.slane %v4633, %v4637
        %v4641 = vsel %vm1817, %v4628, 0
        %4643 = vmatprep.subr.mxu0 0.0
        %4644 = vmatpush1.msra.mxu0 %v4629
        %4645 = vmatprep.subr.mxu0 0.0
        %4646 = vmatpush1.msra.mxu0 %v4630
        %4647 = vmatprep.subr.mxu0 0.0
        %4648 = vmatpush1.msra.mxu0 %v4631
        %4649 = vmatprep.subr.mxu0 0.0
        %4650 = vmatpush1.msra.mxu0 %v4632
        %4651 = vmatprep.subr.mxu0 0.0
        %4652 = vmatpush1.msra.mxu0 0.0
        %4653 = vmatprep.subr.mxu0 0.0
        %4654 = vmatpush1.msra.mxu0 0.0
        %4655 = vmatprep.subr.mxu0 0.0
        %4656 = vmatpush1.msra.mxu0 0.0
        %4657 = vmatprep.subr.mxu0 0.0
        %4658 = vmatpush1.msra.mxu0 0.0
        %4659 = vmatprep.subr.mxu0 0.0
        %4660 = vmatpush1.msra.mxu0 0.0
        %4661 = vmatprep.subr.mxu0 0.0
        %4662 = vmatpush1.msra.mxu0 0.0
        %4663 = vmatprep.subr.mxu0 0.0
        %4664 = vmatpush1.msra.mxu0 0.0
        %4665 = vmatprep.subr.mxu0 0.0
        %4666 = vmatpush1.msra.mxu0 0.0
        %4667 = vmatprep.subr.mxu0 0.0
        %4668 = vmatpush1.msra.mxu0 0.0
        %4669 = vmatprep.subr.mxu0 0.0
        %4670 = vmatpush1.msra.mxu0 0.0
        %4671 = vmatprep.subr.mxu0 0.0
        %4672 = vmatpush1.msra.mxu0 0.0
        %4673 = vmatprep.subr.mxu0 0.0
        %4674 = vmatpush1.msra.mxu0 0.0
        %4675 = vmatprep.subr.mxu0 0.0
        %4676 = vmatpush1.msra.mxu0 0.0
        %4677 = vmatprep.subr.mxu0 0.0
        %4678 = vmatpush1.msra.mxu0 0.0
        %4679 = vmatprep.subr.mxu0 0.0
        %4680 = vmatpush1.msra.mxu0 0.0
        %4681 = vmatprep.subr.mxu0 0.0
        %4682 = vmatpush1.msra.mxu0 0.0
        %4683 = vmatprep.subr.mxu0 0.0
        %4684 = vmatpush1.msra.mxu0 0.0
        %4685 = vmatprep.subr.mxu0 0.0
        %4686 = vmatpush1.msra.mxu0 0.0
        %4687 = vmatprep.subr.mxu0 0.0
        %4688 = vmatpush1.msra.mxu0 0.0
        %4689 = vmatprep.subr.mxu0 0.0
        %4690 = vmatpush1.msra.mxu0 0.0
        %4691 = vmatprep.subr.mxu0 0.0
        %4692 = vmatpush1.msra.mxu0 0.0
        %4693 = vmatprep.subr.mxu0 0.0
        %4694 = vmatpush1.msra.mxu0 0.0
        %4695 = vmatprep.subr.mxu0 0.0
        %4696 = vmatpush1.msra.mxu0 0.0
        %4697 = vmatprep.subr.mxu0 0.0
        %4698 = vmatpush1.msra.mxu0 0.0
        %4699 = vmatprep.subr.mxu0 0.0
        %4700 = vmatpush1.msra.mxu0 0.0
        %4701 = vmatprep.subr.mxu0 0.0
        %4702 = vmatpush1.msra.mxu0 0.0
        %4703 = vmatprep.subr.mxu0 0.0
        %4704 = vmatpush1.msra.mxu0 0.0
        %4705 = vmatprep.subr.mxu0 0.0
        %4706 = vmatpush1.msra.mxu0 0.0
        %4707 = vmatprep.mubr.f32.mxu0 0.0
        %4708 = vmatmul.mubr.f32.gmra.mrb[0].mxu0 %v4641
        %v4709 = vpop.f32.mrb[0].mxu0
        %v4710 = vadd.f32 %v4638, %v4709
        %v4711 = vpop.f32.mrb[0].mxu0
        %4712 = vdwg.mxu0
        %v4713 = vadd.f32 %v3779, %v4710
        %v4714 = vsel %vm2664, %v4713, 0.0
        %4715 = vadd.xlane.f32.xlu0 %v4714
        %v4716 = vpop.xlane.xlu0 %4715
        %v4717 = vmul.f32 %v4716, %v2668
        %v4718 = vsub.f32 %v4713, %v4717
        %v4719 = vmul.f32 %v4718, %v4718
        %v4720 = vsel %vm2664, %v4719, 0.0
        %4721 = vadd.xlane.f32.xlu0 %v4720
        %v4722 = vpop.xlane.xlu0 %4721
        %v4723 = vmul.f32 %v4722, %v2668
        %v4724 = vadd.f32 %v4723, 1e-05
        %v4725 = vrsqrt.pop %v4724
        %v4726 = vmul.f32 %v4718, %v4725
        %v4727 = vld [vmem:[%s55] sm:$0x1]
        %v4729 = vlaneseq
        %v4730 = vshrl.u32 %v4729, 7
        %v4731 = vsub.s32 0, %v4730
        %v4732 = vrot.slane %v4727, %v4731
        %v4734 = vmul.f32 %v4726, %v4732
        %v4735 = vld [vmem:[%s57] sm:$0x1]
        %v4737 = vlaneseq
        %v4738 = vshrl.u32 %v4737, 7
        %v4739 = vsub.s32 0, %v4738
        %v4740 = vrot.slane %v4735, %v4739
        %v4742 = vadd.f32 %v4734, %v4740
        %v4743 = vld [vmem:[#allocation34] sm:$0xff]
        %v4744 = vld [vmem:[#allocation34 + $0x8] sm:$0xff]
        %v4745 = vld [vmem:[#allocation34 + $0x10] sm:$0xff]
        %v4746 = vld [vmem:[#allocation34 + $0x18] sm:$0xff]
        %v4747 = vld [vmem:[#allocation35] sm:$0x1]
        %v4749 = vlaneseq
        %v4750 = vshrl.u32 %v4749, 7
        %v4751 = vsub.s32 0, %v4750
        %v4752 = vrot.slane %v4747, %v4751
        %v4755 = vsel %vm1817, %v4742, 0
        %4757 = vmatprep.subr.mxu0 0.0
        %4758 = vmatpush1.msra.mxu0 %v4743
        %4759 = vmatprep.subr.mxu0 0.0
        %4760 = vmatpush1.msra.mxu0 %v4744
        %4761 = vmatprep.subr.mxu0 0.0
        %4762 = vmatpush1.msra.mxu0 %v4745
        %4763 = vmatprep.subr.mxu0 0.0
        %4764 = vmatpush1.msra.mxu0 %v4746
        %4765 = vmatprep.subr.mxu0 0.0
        %4766 = vmatpush1.msra.mxu0 0.0
        %4767 = vmatprep.subr.mxu0 0.0
        %4768 = vmatpush1.msra.mxu0 0.0
        %4769 = vmatprep.subr.mxu0 0.0
        %4770 = vmatpush1.msra.mxu0 0.0
        %4771 = vmatprep.subr.mxu0 0.0
        %4772 = vmatpush1.msra.mxu0 0.0
        %4773 = vmatprep.subr.mxu0 0.0
        %4774 = vmatpush1.msra.mxu0 0.0
        %4775 = vmatprep.subr.mxu0 0.0
        %4776 = vmatpush1.msra.mxu0 0.0
        %4777 = vmatprep.subr.mxu0 0.0
        %4778 = vmatpush1.msra.mxu0 0.0
        %4779 = vmatprep.subr.mxu0 0.0
        %4780 = vmatpush1.msra.mxu0 0.0
        %4781 = vmatprep.subr.mxu0 0.0
        %4782 = vmatpush1.msra.mxu0 0.0
        %4783 = vmatprep.subr.mxu0 0.0
        %4784 = vmatpush1.msra.mxu0 0.0
        %4785 = vmatprep.subr.mxu0 0.0
        %4786 = vmatpush1.msra.mxu0 0.0
        %4787 = vmatprep.subr.mxu0 0.0
        %4788 = vmatpush1.msra.mxu0 0.0
        %4789 = vmatprep.subr.mxu0 0.0
        %4790 = vmatpush1.msra.mxu0 0.0
        %4791 = vmatprep.subr.mxu0 0.0
        %4792 = vmatpush1.msra.mxu0 0.0
        %4793 = vmatprep.subr.mxu0 0.0
        %4794 = vmatpush1.msra.mxu0 0.0
        %4795 = vmatprep.subr.mxu0 0.0
        %4796 = vmatpush1.msra.mxu0 0.0
        %4797 = vmatprep.subr.mxu0 0.0
        %4798 = vmatpush1.msra.mxu0 0.0
        %4799 = vmatprep.subr.mxu0 0.0
        %4800 = vmatpush1.msra.mxu0 0.0
        %4801 = vmatprep.subr.mxu0 0.0
        %4802 = vmatpush1.msra.mxu0 0.0
        %4803 = vmatprep.subr.mxu0 0.0
        %4804 = vmatpush1.msra.mxu0 0.0
        %4805 = vmatprep.subr.mxu0 0.0
        %4806 = vmatpush1.msra.mxu0 0.0
        %4807 = vmatprep.subr.mxu0 0.0
        %4808 = vmatpush1.msra.mxu0 0.0
        %4809 = vmatprep.subr.mxu0 0.0
        %4810 = vmatpush1.msra.mxu0 0.0
        %4811 = vmatprep.subr.mxu0 0.0
        %4812 = vmatpush1.msra.mxu0 0.0
        %4813 = vmatprep.subr.mxu0 0.0
        %4814 = vmatpush1.msra.mxu0 0.0
        %4815 = vmatprep.subr.mxu0 0.0
        %4816 = vmatpush1.msra.mxu0 0.0
        %4817 = vmatprep.subr.mxu0 0.0
        %4818 = vmatpush1.msra.mxu0 0.0
        %4819 = vmatprep.subr.mxu0 0.0
        %4820 = vmatpush1.msra.mxu0 0.0
        %4821 = vmatprep.mubr.f32.mxu0 0.0
        %4822 = vmatmul.mubr.f32.gmra.mrb[0].mxu0 %v4755
        %v4823 = vpop.f32.mrb[0].mxu0
        %v4824 = vadd.f32 %v4752, %v4823
        %v4825 = vpop.f32.mrb[0].mxu0
        %4826 = vdwg.mxu0
        %v4827 = vmax.f32 %v4824, 0.0
        %v4828 = vld [vmem:[%s63] sm:$0xff]
        %v4829 = vld [vmem:[%s63 + $0x8] sm:$0xff]
        %v4830 = vld [vmem:[%s63 + $0x10] sm:$0xff]
        %v4831 = vld [vmem:[%s63 + $0x18] sm:$0xff]
        %v4832 = vld [vmem:[%s63 + $0x20] sm:$0xff]
        %v4833 = vld [vmem:[%s63 + $0x28] sm:$0xff]
        %v4834 = vld [vmem:[%s63 + $0x30] sm:$0xff]
        %v4835 = vld [vmem:[%s63 + $0x38] sm:$0xff]
        %v4836 = vld [vmem:[#allocation37] sm:$0x1]
        %v4838 = vlaneseq
        %v4839 = vshrl.u32 %v4838, 7
        %v4840 = vsub.s32 0, %v4839
        %v4841 = vrot.slane %v4836, %v4840
        %v4844 = vsel %vm2795, %v4827, 0
        %4846 = vmatprep.subr.mxu0 0.0
        %4847 = vmatpush1.msra.mxu0 %v4828
        %4848 = vmatprep.subr.mxu0 0.0
        %4849 = vmatpush1.msra.mxu0 %v4829
        %4850 = vmatprep.subr.mxu0 0.0
        %4851 = vmatpush1.msra.mxu0 %v4830
        %4852 = vmatprep.subr.mxu0 0.0
        %4853 = vmatpush1.msra.mxu0 %v4831
        %4854 = vmatprep.subr.mxu0 0.0
        %4855 = vmatpush1.msra.mxu0 %v4832
        %4856 = vmatprep.subr.mxu0 0.0
        %4857 = vmatpush1.msra.mxu0 %v4833
        %4858 = vmatprep.subr.mxu0 0.0
        %4859 = vmatpush1.msra.mxu0 %v4834
        %4860 = vmatprep.subr.mxu0 0.0
        %4861 = vmatpush1.msra.mxu0 %v4835
        %4862 = vmatprep.subr.mxu0 0.0
        %4863 = vmatpush1.msra.mxu0 0.0
        %4864 = vmatprep.subr.mxu0 0.0
        %4865 = vmatpush1.msra.mxu0 0.0
        %4866 = vmatprep.subr.mxu0 0.0
        %4867 = vmatpush1.msra.mxu0 0.0
        %4868 = vmatprep.subr.mxu0 0.0
        %4869 = vmatpush1.msra.mxu0 0.0
        %4870 = vmatprep.subr.mxu0 0.0
        %4871 = vmatpush1.msra.mxu0 0.0
        %4872 = vmatprep.subr.mxu0 0.0
        %4873 = vmatpush1.msra.mxu0 0.0
        %4874 = vmatprep.subr.mxu0 0.0
        %4875 = vmatpush1.msra.mxu0 0.0
        %4876 = vmatprep.subr.mxu0 0.0
        %4877 = vmatpush1.msra.mxu0 0.0
        %4878 = vmatprep.subr.mxu0 0.0
        %4879 = vmatpush1.msra.mxu0 0.0
        %4880 = vmatprep.subr.mxu0 0.0
        %4881 = vmatpush1.msra.mxu0 0.0
        %4882 = vmatprep.subr.mxu0 0.0
        %4883 = vmatpush1.msra.mxu0 0.0
        %4884 = vmatprep.subr.mxu0 0.0
        %4885 = vmatpush1.msra.mxu0 0.0
        %4886 = vmatprep.subr.mxu0 0.0
        %4887 = vmatpush1.msra.mxu0 0.0
        %4888 = vmatprep.subr.mxu0 0.0
        %4889 = vmatpush1.msra.mxu0 0.0
        %4890 = vmatprep.subr.mxu0 0.0
        %4891 = vmatpush1.msra.mxu0 0.0
        %4892 = vmatprep.subr.mxu0 0.0
        %4893 = vmatpush1.msra.mxu0 0.0
        %4894 = vmatprep.subr.mxu0 0.0
        %4895 = vmatpush1.msra.mxu0 0.0
        %4896 = vmatprep.subr.mxu0 0.0
        %4897 = vmatpush1.msra.mxu0 0.0
        %4898 = vmatprep.subr.mxu0 0.0
        %4899 = vmatpush1.msra.mxu0 0.0
        %4900 = vmatprep.subr.mxu0 0.0
        %4901 = vmatpush1.msra.mxu0 0.0
        %4902 = vmatprep.subr.mxu0 0.0
        %4903 = vmatpush1.msra.mxu0 0.0
        %4904 = vmatprep.subr.mxu0 0.0
        %4905 = vmatpush1.msra.mxu0 0.0
        %4906 = vmatprep.subr.mxu0 0.0
        %4907 = vmatpush1.msra.mxu0 0.0
        %4908 = vmatprep.subr.mxu0 0.0
        %4909 = vmatpush1.msra.mxu0 0.0
        %4910 = vmatprep.mubr.f32.mxu0 0.0
        %4911 = vmatmul.mubr.f32.gmra.mrb[0].mxu0 %v4844
        %v4912 = vpop.f32.mrb[0].mxu0
        %v4913 = vadd.f32 %v4841, %v4912
        %v4914 = vpop.f32.mrb[0].mxu0
        %4915 = vdwg.mxu0
        %v4916 = vadd.f32 %v4742, %v4913
        %v4917 = vsel %vm2664, %v4916, 0.0
        %4918 = vadd.xlane.f32.xlu0 %v4917
        %v4919 = vpop.xlane.xlu0 %4918
        %v4920 = vmul.f32 %v4919, %v2668
        %v4921 = vsub.f32 %v4916, %v4920
        %v4922 = vmul.f32 %v4921, %v4921
        %v4923 = vsel %vm2664, %v4922, 0.0
        %4924 = vadd.xlane.f32.xlu0 %v4923
        %v4925 = vpop.xlane.xlu0 %4924
        %v4926 = vmul.f32 %v4925, %v2668
        %v4927 = vadd.f32 %v4926, 1e-05
        %v4928 = vrsqrt.pop %v4927
        %v4929 = vmul.f32 %v4921, %v4928
        %v4930 = vld [vmem:[%s67] sm:$0x1]
        %v4932 = vlaneseq
        %v4933 = vshrl.u32 %v4932, 7
        %v4934 = vsub.s32 0, %v4933
        %v4935 = vrot.slane %v4930, %v4934
        %v4937 = vmul.f32 %v4929, %v4935
        %v4938 = vld [vmem:[%s69] sm:$0x1]
        %v4940 = vlaneseq
        %v4941 = vshrl.u32 %v4940, 7
        %v4942 = vsub.s32 0, %v4941
        %v4943 = vrot.slane %v4938, %v4942
        %v4945 = vadd.f32 %v4937, %v4943
        %v4946 = vld [vmem:[#allocation38] sm:$0xff]
        %v4947 = vld [vmem:[#allocation38 + $0x8] sm:$0xff]
        %v4948 = vld [vmem:[#allocation38 + $0x10] sm:$0xff]
        %v4949 = vld [vmem:[#allocation38 + $0x18] sm:$0xff]
        %v4950 = vld [vmem:[#allocation40] sm:$0x1]
        %v4952 = vlaneseq
        %v4953 = vshrl.u32 %v4952, 7
        %v4954 = vsub.s32 0, %v4953
        %v4955 = vrot.slane %v4950, %v4954
        %v4958 = vsel %vm1817, %v4945, 0
        %4960 = vmatprep.subr.mxu0 0.0
        %4961 = vmatpush1.msra.mxu0 %v4946
        %4962 = vmatprep.subr.mxu0 0.0
        %4963 = vmatpush1.msra.mxu0 %v4947
        %4964 = vmatprep.subr.mxu0 0.0
        %4965 = vmatpush1.msra.mxu0 %v4948
        %4966 = vmatprep.subr.mxu0 0.0
        %4967 = vmatpush1.msra.mxu0 %v4949
        %4968 = vmatprep.subr.mxu0 0.0
        %4969 = vmatpush1.msra.mxu0 0.0
        %4970 = vmatprep.subr.mxu0 0.0
        %4971 = vmatpush1.msra.mxu0 0.0
        %4972 = vmatprep.subr.mxu0 0.0
        %4973 = vmatpush1.msra.mxu0 0.0
        %4974 = vmatprep.subr.mxu0 0.0
        %4975 = vmatpush1.msra.mxu0 0.0
        %4976 = vmatprep.subr.mxu0 0.0
        %4977 = vmatpush1.msra.mxu0 0.0
        %4978 = vmatprep.subr.mxu0 0.0
        %4979 = vmatpush1.msra.mxu0 0.0
        %4980 = vmatprep.subr.mxu0 0.0
        %4981 = vmatpush1.msra.mxu0 0.0
        %4982 = vmatprep.subr.mxu0 0.0
        %4983 = vmatpush1.msra.mxu0 0.0
        %4984 = vmatprep.subr.mxu0 0.0
        %4985 = vmatpush1.msra.mxu0 0.0
        %4986 = vmatprep.subr.mxu0 0.0
        %4987 = vmatpush1.msra.mxu0 0.0
        %4988 = vmatprep.subr.mxu0 0.0
        %4989 = vmatpush1.msra.mxu0 0.0
        %4990 = vmatprep.subr.mxu0 0.0
        %4991 = vmatpush1.msra.mxu0 0.0
        %4992 = vmatprep.subr.mxu0 0.0
        %4993 = vmatpush1.msra.mxu0 0.0
        %4994 = vmatprep.subr.mxu0 0.0
        %4995 = vmatpush1.msra.mxu0 0.0
        %4996 = vmatprep.subr.mxu0 0.0
        %4997 = vmatpush1.msra.mxu0 0.0
        %4998 = vmatprep.subr.mxu0 0.0
        %4999 = vmatpush1.msra.mxu0 0.0
        %5000 = vmatprep.subr.mxu0 0.0
        %5001 = vmatpush1.msra.mxu0 0.0
        %5002 = vmatprep.subr.mxu0 0.0
        %5003 = vmatpush1.msra.mxu0 0.0
        %5004 = vmatprep.subr.mxu0 0.0
        %5005 = vmatpush1.msra.mxu0 0.0
        %5006 = vmatprep.subr.mxu0 0.0
        %5007 = vmatpush1.msra.mxu0 0.0
        %5008 = vmatprep.subr.mxu0 0.0
        %5009 = vmatpush1.msra.mxu0 0.0
        %5010 = vmatprep.subr.mxu0 0.0
        %5011 = vmatpush1.msra.mxu0 0.0
        %5012 = vmatprep.subr.mxu0 0.0
        %5013 = vmatpush1.msra.mxu0 0.0
        %5014 = vmatprep.subr.mxu0 0.0
        %5015 = vmatpush1.msra.mxu0 0.0
        %5016 = vmatprep.subr.mxu0 0.0
        %5017 = vmatpush1.msra.mxu0 0.0
        %5018 = vmatprep.subr.mxu0 0.0
        %5019 = vmatpush1.msra.mxu0 0.0
        %5020 = vmatprep.subr.mxu0 0.0
        %5021 = vmatpush1.msra.mxu0 0.0
        %5022 = vmatprep.subr.mxu0 0.0
        %5023 = vmatpush1.msra.mxu0 0.0
        %5024 = vmatprep.mubr.f32.mxu0 0.0
        %5025 = vmatmul.mubr.f32.gmra.mrb[0].mxu0 %v4958
        %v5026 = vpop.f32.mrb[0].mxu0
        %v5027 = vadd.f32 %v4955, %v5026
        %v5028 = vpop.f32.mrb[0].mxu0
        %5029 = vdwg.mxu0
        %v5031 = vrot.slane %v5027, 1
        %5032 = vrot.lane.b32.xlu0 %v5031, 6
        %v5033 = vpop.permute.xlu0 %5032
        %v5035 = vrot.slane %v5027, 2
        %5036 = vrot.lane.b32.xlu0 %v5035, 12
        %v5037 = vpop.permute.xlu0 %5036
        %v5039 = vrot.slane %v5027, 3
        %5040 = vrot.lane.b32.xlu0 %v5039, 18
        %v5041 = vpop.permute.xlu0 %5040
        %v5043 = vrot.slane %v5027, 4
        %5044 = vrot.lane.b32.xlu0 %v5043, 24
        %v5045 = vpop.permute.xlu0 %5044
        %v5047 = vrot.slane %v5027, 5
        %5048 = vrot.lane.b32.xlu0 %v5047, 30
        %v5049 = vpop.permute.xlu0 %5048
        %v5051 = vsel %vm1982, %v5027, %v5033
        %vm5052 = vcmask 97280
        %v5053 = vsel %vm5052, %v5051, %v5037
        %vm5054 = vcmask 146432
        %v5055 = vsel %vm5054, %v5053, %v5041
        %v5056 = vsel %vm2577, %v5055, %v5045
        %vm5057 = vcmask 244736
        %v5058 = vsel %vm5057, %v5056, %v5049
        %v5059 = vld [vmem:[%s75] sm:$0xff]
        %v5060 = vld [vmem:[%s75 + $0x8] sm:$0xff]
        %v5061 = vld [vmem:[%s75 + $0x10] sm:$0xff]
        %v5062 = vld [vmem:[%s75 + $0x18] sm:$0xff]
        %v5063 = vld [vmem:[%s75 + $0x20] sm:$0xf]
        %v5064 = vld [vmem:[#allocation41] sm:$0x1]
        %vm5065 = vcmask 293888
        %v5067 = vsel %vm5065, %v5058, 0
        %vm5069 = vcmask 1043456
        %v5071 = vsel %vm5069, %v5063, 0
        %5073 = vmatprep.subr.mxu0 0.0
        %5074 = vmatpush1.msra.mxu0 %v5059
        %5075 = vmatprep.subr.mxu0 0.0
        %5076 = vmatpush1.msra.mxu0 %v5060
        %5077 = vmatprep.subr.mxu0 0.0
        %5078 = vmatpush1.msra.mxu0 %v5061
        %5079 = vmatprep.subr.mxu0 0.0
        %5080 = vmatpush1.msra.mxu0 %v5062
        %5081 = vmatprep.subr.mxu0 0.0
        %5082 = vmatpush1.msra.mxu0 %v5071
        %5083 = vmatprep.subr.mxu0 0.0
        %5084 = vmatpush1.msra.mxu0 0.0
        %5085 = vmatprep.subr.mxu0 0.0
        %5086 = vmatpush1.msra.mxu0 0.0
        %5087 = vmatprep.subr.mxu0 0.0
        %5088 = vmatpush1.msra.mxu0 0.0
        %5089 = vmatprep.subr.mxu0 0.0
        %5090 = vmatpush1.msra.mxu0 0.0
        %5091 = vmatprep.subr.mxu0 0.0
        %5092 = vmatpush1.msra.mxu0 0.0
        %5093 = vmatprep.subr.mxu0 0.0
        %5094 = vmatpush1.msra.mxu0 0.0
        %5095 = vmatprep.subr.mxu0 0.0
        %5096 = vmatpush1.msra.mxu0 0.0
        %5097 = vmatprep.subr.mxu0 0.0
        %5098 = vmatpush1.msra.mxu0 0.0
        %5099 = vmatprep.subr.mxu0 0.0
        %5100 = vmatpush1.msra.mxu0 0.0
        %5101 = vmatprep.subr.mxu0 0.0
        %5102 = vmatpush1.msra.mxu0 0.0
        %5103 = vmatprep.subr.mxu0 0.0
        %5104 = vmatpush1.msra.mxu0 0.0
        %5105 = vmatprep.subr.mxu0 0.0
        %5106 = vmatpush1.msra.mxu0 0.0
        %5107 = vmatprep.subr.mxu0 0.0
        %5108 = vmatpush1.msra.mxu0 0.0
        %5109 = vmatprep.subr.mxu0 0.0
        %5110 = vmatpush1.msra.mxu0 0.0
        %5111 = vmatprep.subr.mxu0 0.0
        %5112 = vmatpush1.msra.mxu0 0.0
        %5113 = vmatprep.subr.mxu0 0.0
        %5114 = vmatpush1.msra.mxu0 0.0
        %5115 = vmatprep.subr.mxu0 0.0
        %5116 = vmatpush1.msra.mxu0 0.0
        %5117 = vmatprep.subr.mxu0 0.0
        %5118 = vmatpush1.msra.mxu0 0.0
        %5119 = vmatprep.subr.mxu0 0.0
        %5120 = vmatpush1.msra.mxu0 0.0
        %5121 = vmatprep.subr.mxu0 0.0
        %5122 = vmatpush1.msra.mxu0 0.0
        %5123 = vmatprep.subr.mxu0 0.0
        %5124 = vmatpush1.msra.mxu0 0.0
        %5125 = vmatprep.subr.mxu0 0.0
        %5126 = vmatpush1.msra.mxu0 0.0
        %5127 = vmatprep.subr.mxu0 0.0
        %5128 = vmatpush1.msra.mxu0 0.0
        %5129 = vmatprep.subr.mxu0 0.0
        %5130 = vmatpush1.msra.mxu0 0.0
        %5131 = vmatprep.subr.mxu0 0.0
        %5132 = vmatpush1.msra.mxu0 0.0
        %5133 = vmatprep.subr.mxu0 0.0
        %5134 = vmatpush1.msra.mxu0 0.0
        %5135 = vmatprep.subr.mxu0 0.0
        %5136 = vmatpush1.msra.mxu0 0.0
        %5137 = vmatprep.mubr.f32.mxu0 0.0
        %5138 = vmatmul.mubr.f32.gmra.mrb[0].mxu0 %v5067
        %v5139 = vpop.f32.mrb[0].mxu0
        %v5140 = vadd.f32 %v5064, %v5139
        %v5141 = vpop.f32.mrb[0].mxu0
        %5142 = vdwg.mxu0
        %v5143 = vmax.f32 %v5140, 0.0
        %v5144 = vld [vmem:[#allocation43] sm:$0xff]
        %v5145 = vld [vmem:[#allocation43 + $0x8] sm:$0xff]
        %v5146 = vld [vmem:[#allocation43 + $0x10] sm:$0x3]
        %v5147 = vld [vmem:[#allocation44] sm:$0x1]
        %v5149 = vsel %vm5054, %v5143, 0
        %vm5151 = vcmask 1041408
        %v5153 = vsel %vm5151, %v5146, 0
        %5155 = vmatprep.subr.mxu0 0.0
        %5156 = vmatpush1.msra.mxu0 %v5144
        %5157 = vmatprep.subr.mxu0 0.0
        %5158 = vmatpush1.msra.mxu0 %v5145
        %5159 = vmatprep.subr.mxu0 0.0
        %5160 = vmatpush1.msra.mxu0 %v5153
        %5161 = vmatprep.subr.mxu0 0.0
        %5162 = vmatpush1.msra.mxu0 0.0
        %5163 = vmatprep.subr.mxu0 0.0
        %5164 = vmatpush1.msra.mxu0 0.0
        %5165 = vmatprep.subr.mxu0 0.0
        %5166 = vmatpush1.msra.mxu0 0.0
        %5167 = vmatprep.subr.mxu0 0.0
        %5168 = vmatpush1.msra.mxu0 0.0
        %5169 = vmatprep.subr.mxu0 0.0
        %5170 = vmatpush1.msra.mxu0 0.0
        %5171 = vmatprep.subr.mxu0 0.0
        %5172 = vmatpush1.msra.mxu0 0.0
        %5173 = vmatprep.subr.mxu0 0.0
        %5174 = vmatpush1.msra.mxu0 0.0
        %5175 = vmatprep.subr.mxu0 0.0
        %5176 = vmatpush1.msra.mxu0 0.0
        %5177 = vmatprep.subr.mxu0 0.0
        %5178 = vmatpush1.msra.mxu0 0.0
        %5179 = vmatprep.subr.mxu0 0.0
        %5180 = vmatpush1.msra.mxu0 0.0
        %5181 = vmatprep.subr.mxu0 0.0
        %5182 = vmatpush1.msra.mxu0 0.0
        %5183 = vmatprep.subr.mxu0 0.0
        %5184 = vmatpush1.msra.mxu0 0.0
        %5185 = vmatprep.subr.mxu0 0.0
        %5186 = vmatpush1.msra.mxu0 0.0
        %5187 = vmatprep.subr.mxu0 0.0
        %5188 = vmatpush1.msra.mxu0 0.0
        %5189 = vmatprep.subr.mxu0 0.0
        %5190 = vmatpush1.msra.mxu0 0.0
        %5191 = vmatprep.subr.mxu0 0.0
        %5192 = vmatpush1.msra.mxu0 0.0
        %5193 = vmatprep.subr.mxu0 0.0
        %5194 = vmatpush1.msra.mxu0 0.0
        %5195 = vmatprep.subr.mxu0 0.0
        %5196 = vmatpush1.msra.mxu0 0.0
        %5197 = vmatprep.subr.mxu0 0.0
        %5198 = vmatpush1.msra.mxu0 0.0
        %5199 = vmatprep.subr.mxu0 0.0
        %5200 = vmatpush1.msra.mxu0 0.0
        %5201 = vmatprep.subr.mxu0 0.0
        %5202 = vmatpush1.msra.mxu0 0.0
        %5203 = vmatprep.subr.mxu0 0.0
        %5204 = vmatpush1.msra.mxu0 0.0
        %5205 = vmatprep.subr.mxu0 0.0
        %5206 = vmatpush1.msra.mxu0 0.0
        %5207 = vmatprep.subr.mxu0 0.0
        %5208 = vmatpush1.msra.mxu0 0.0
        %5209 = vmatprep.subr.mxu0 0.0
        %5210 = vmatpush1.msra.mxu0 0.0
        %5211 = vmatprep.subr.mxu0 0.0
        %5212 = vmatpush1.msra.mxu0 0.0
        %5213 = vmatprep.subr.mxu0 0.0
        %5214 = vmatpush1.msra.mxu0 0.0
        %5215 = vmatprep.subr.mxu0 0.0
        %5216 = vmatpush1.msra.mxu0 0.0
        %5217 = vmatprep.subr.mxu0 0.0
        %5218 = vmatpush1.msra.mxu0 0.0
        %5219 = vmatprep.mubr.f32.mxu0 0.0
        %5220 = vmatmul.mubr.f32.gmra.mrb[0].mxu0 %v5149
        %v5221 = vpop.f32.mrb[0].mxu0
        %v5222 = vadd.f32 %v5147, %v5221
        %v5223 = vpop.f32.mrb[0].mxu0
        %5224 = vdwg.mxu0
        %v5225 = vmax.f32 %v5222, 0.0
        %v5226 = vld [vmem:[#allocation46] sm:$0x3f]
        %v5227 = vld [vmem:[#allocation47] sm:$0x1]
        %v5229 = vsel %vm1982, %v5225, 0
        %v5232 = vsel %vm1986, %v5226, 0
        %5234 = vmatprep.subr.mxu0 0.0
        %5235 = vmatpush1.msra.mxu0 %v5232
        %5236 = vmatprep.subr.mxu0 0.0
        %5237 = vmatpush1.msra.mxu0 0.0
        %5238 = vmatprep.subr.mxu0 0.0
        %5239 = vmatpush1.msra.mxu0 0.0
        %5240 = vmatprep.subr.mxu0 0.0
        %5241 = vmatpush1.msra.mxu0 0.0
        %5242 = vmatprep.subr.mxu0 0.0
        %5243 = vmatpush1.msra.mxu0 0.0
        %5244 = vmatprep.subr.mxu0 0.0
        %5245 = vmatpush1.msra.mxu0 0.0
        %5246 = vmatprep.subr.mxu0 0.0
        %5247 = vmatpush1.msra.mxu0 0.0
        %5248 = vmatprep.subr.mxu0 0.0
        %5249 = vmatpush1.msra.mxu0 0.0
        %5250 = vmatprep.subr.mxu0 0.0
        %5251 = vmatpush1.msra.mxu0 0.0
        %5252 = vmatprep.subr.mxu0 0.0
        %5253 = vmatpush1.msra.mxu0 0.0
        %5254 = vmatprep.subr.mxu0 0.0
        %5255 = vmatpush1.msra.mxu0 0.0
        %5256 = vmatprep.subr.mxu0 0.0
        %5257 = vmatpush1.msra.mxu0 0.0
        %5258 = vmatprep.subr.mxu0 0.0
        %5259 = vmatpush1.msra.mxu0 0.0
        %5260 = vmatprep.subr.mxu0 0.0
        %5261 = vmatpush1.msra.mxu0 0.0
        %5262 = vmatprep.subr.mxu0 0.0
        %5263 = vmatpush1.msra.mxu0 0.0
        %5264 = vmatprep.subr.mxu0 0.0
        %5265 = vmatpush1.msra.mxu0 0.0
        %5266 = vmatprep.subr.mxu0 0.0
        %5267 = vmatpush1.msra.mxu0 0.0
        %5268 = vmatprep.subr.mxu0 0.0
        %5269 = vmatpush1.msra.mxu0 0.0
        %5270 = vmatprep.subr.mxu0 0.0
        %5271 = vmatpush1.msra.mxu0 0.0
        %5272 = vmatprep.subr.mxu0 0.0
        %5273 = vmatpush1.msra.mxu0 0.0
        %5274 = vmatprep.subr.mxu0 0.0
        %5275 = vmatpush1.msra.mxu0 0.0
        %5276 = vmatprep.subr.mxu0 0.0
        %5277 = vmatpush1.msra.mxu0 0.0
        %5278 = vmatprep.subr.mxu0 0.0
        %5279 = vmatpush1.msra.mxu0 0.0
        %5280 = vmatprep.subr.mxu0 0.0
        %5281 = vmatpush1.msra.mxu0 0.0
        %5282 = vmatprep.subr.mxu0 0.0
        %5283 = vmatpush1.msra.mxu0 0.0
        %5284 = vmatprep.subr.mxu0 0.0
        %5285 = vmatpush1.msra.mxu0 0.0
        %5286 = vmatprep.subr.mxu0 0.0
        %5287 = vmatpush1.msra.mxu0 0.0
        %5288 = vmatprep.subr.mxu0 0.0
        %5289 = vmatpush1.msra.mxu0 0.0
        %5290 = vmatprep.subr.mxu0 0.0
        %5291 = vmatpush1.msra.mxu0 0.0
        %5292 = vmatprep.subr.mxu0 0.0
        %5293 = vmatpush1.msra.mxu0 0.0
        %5294 = vmatprep.subr.mxu0 0.0
        %5295 = vmatpush1.msra.mxu0 0.0
        %5296 = vmatprep.subr.mxu0 0.0
        %5297 = vmatpush1.msra.mxu0 0.0
        %5298 = vmatprep.mubr.f32.mxu0 0.0
        %5299 = vmatmul.mubr.f32.gmra.mrb[0].mxu0 %v5229
        %v5300 = vpop.f32.mrb[0].mxu0
        %v5301 = vadd.f32 %v5227, %v5300
        %v5302 = vpop.f32.mrb[0].mxu0
        %5303 = vdwg.mxu0
        %v5304 = vmax.f32 %v5301, 0.0
        %v5305 = vld [vmem:[%s87] sm:$0xff]
        %v5306 = vld [vmem:[%s87 + $0x8] sm:$0xff]
        %v5307 = vld [vmem:[%s87 + $0x10] sm:$0x3]
        %v5308 = vld [vmem:[%s89] sm:$0x1]
        %v5310 = vsel %vm5054, %v5304, 0
        %v5313 = vsel %vm5151, %v5307, 0
        %5315 = vmatprep.subr.mxu0 0.0
        %5316 = vmatpush1.msra.mxu0 %v5305
        %5317 = vmatprep.subr.mxu0 0.0
        %5318 = vmatpush1.msra.mxu0 %v5306
        %5319 = vmatprep.subr.mxu0 0.0
        %5320 = vmatpush1.msra.mxu0 %v5313
        %5321 = vmatprep.subr.mxu0 0.0
        %5322 = vmatpush1.msra.mxu0 0.0
        %5323 = vmatprep.subr.mxu0 0.0
        %5324 = vmatpush1.msra.mxu0 0.0
        %5325 = vmatprep.subr.mxu0 0.0
        %5326 = vmatpush1.msra.mxu0 0.0
        %5327 = vmatprep.subr.mxu0 0.0
        %5328 = vmatpush1.msra.mxu0 0.0
        %5329 = vmatprep.subr.mxu0 0.0
        %5330 = vmatpush1.msra.mxu0 0.0
        %5331 = vmatprep.subr.mxu0 0.0
        %5332 = vmatpush1.msra.mxu0 0.0
        %5333 = vmatprep.subr.mxu0 0.0
        %5334 = vmatpush1.msra.mxu0 0.0
        %5335 = vmatprep.subr.mxu0 0.0
        %5336 = vmatpush1.msra.mxu0 0.0
        %5337 = vmatprep.subr.mxu0 0.0
        %5338 = vmatpush1.msra.mxu0 0.0
        %5339 = vmatprep.subr.mxu0 0.0
        %5340 = vmatpush1.msra.mxu0 0.0
        %5341 = vmatprep.subr.mxu0 0.0
        %5342 = vmatpush1.msra.mxu0 0.0
        %5343 = vmatprep.subr.mxu0 0.0
        %5344 = vmatpush1.msra.mxu0 0.0
        %5345 = vmatprep.subr.mxu0 0.0
        %5346 = vmatpush1.msra.mxu0 0.0
        %5347 = vmatprep.subr.mxu0 0.0
        %5348 = vmatpush1.msra.mxu0 0.0
        %5349 = vmatprep.subr.mxu0 0.0
        %5350 = vmatpush1.msra.mxu0 0.0
        %5351 = vmatprep.subr.mxu0 0.0
        %5352 = vmatpush1.msra.mxu0 0.0
        %5353 = vmatprep.subr.mxu0 0.0
        %5354 = vmatpush1.msra.mxu0 0.0
        %5355 = vmatprep.subr.mxu0 0.0
        %5356 = vmatpush1.msra.mxu0 0.0
        %5357 = vmatprep.subr.mxu0 0.0
        %5358 = vmatpush1.msra.mxu0 0.0
        %5359 = vmatprep.subr.mxu0 0.0
        %5360 = vmatpush1.msra.mxu0 0.0
        %5361 = vmatprep.subr.mxu0 0.0
        %5362 = vmatpush1.msra.mxu0 0.0
        %5363 = vmatprep.subr.mxu0 0.0
        %5364 = vmatpush1.msra.mxu0 0.0
        %5365 = vmatprep.subr.mxu0 0.0
        %5366 = vmatpush1.msra.mxu0 0.0
        %5367 = vmatprep.subr.mxu0 0.0
        %5368 = vmatpush1.msra.mxu0 0.0
        %5369 = vmatprep.subr.mxu0 0.0
        %5370 = vmatpush1.msra.mxu0 0.0
        %5371 = vmatprep.subr.mxu0 0.0
        %5372 = vmatpush1.msra.mxu0 0.0
        %5373 = vmatprep.subr.mxu0 0.0
        %5374 = vmatpush1.msra.mxu0 0.0
        %5375 = vmatprep.subr.mxu0 0.0
        %5376 = vmatpush1.msra.mxu0 0.0
        %5377 = vmatprep.subr.mxu0 0.0
        %5378 = vmatpush1.msra.mxu0 0.0
        %5379 = vmatprep.mubr.f32.mxu0 0.0
        %5380 = vmatmul.mubr.f32.gmra.mrb[0].mxu0 %v5310
        %v5381 = vpop.f32.mrb[0].mxu0
        %v5382 = vadd.f32 %v5308, %v5381
        %v5383 = vpop.f32.mrb[0].mxu0
        %5384 = vdwg.mxu0
        %v5385 = vtanh.pop %v5382
        %v5386 = vld [vmem:[%s91] sm:$0xff]
        %v5387 = vld [vmem:[%s91 + $0x8] sm:$0xff]
        %v5388 = vld [vmem:[%s91 + $0x10] sm:$0xff]
        %v5389 = vld [vmem:[%s91 + $0x18] sm:$0xff]
        %v5390 = vld [vmem:[%s91 + $0x20] sm:$0xf]
        %v5391 = vld [vmem:[#allocation2] sm:$0x1]
        %v5393 = vsel %vm5065, %v5385, 0
        %v5396 = vsel %vm5069, %v5390, 0
        %5398 = vmatprep.subr.mxu0 0.0
        %5399 = vmatpush1.msra.mxu0 %v5386
        %5400 = vmatprep.subr.mxu0 0.0
        %5401 = vmatpush1.msra.mxu0 %v5387
        %5402 = vmatprep.subr.mxu0 0.0
        %5403 = vmatpush1.msra.mxu0 %v5388
        %5404 = vmatprep.subr.mxu0 0.0
        %5405 = vmatpush1.msra.mxu0 %v5389
        %5406 = vmatprep.subr.mxu0 0.0
        %5407 = vmatpush1.msra.mxu0 %v5396
        %5408 = vmatprep.subr.mxu0 0.0
        %5409 = vmatpush1.msra.mxu0 0.0
        %5410 = vmatprep.subr.mxu0 0.0
        %5411 = vmatpush1.msra.mxu0 0.0
        %5412 = vmatprep.subr.mxu0 0.0
        %5413 = vmatpush1.msra.mxu0 0.0
        %5414 = vmatprep.subr.mxu0 0.0
        %5415 = vmatpush1.msra.mxu0 0.0
        %5416 = vmatprep.subr.mxu0 0.0
        %5417 = vmatpush1.msra.mxu0 0.0
        %5418 = vmatprep.subr.mxu0 0.0
        %5419 = vmatpush1.msra.mxu0 0.0
        %5420 = vmatprep.subr.mxu0 0.0
        %5421 = vmatpush1.msra.mxu0 0.0
        %5422 = vmatprep.subr.mxu0 0.0
        %5423 = vmatpush1.msra.mxu0 0.0
        %5424 = vmatprep.subr.mxu0 0.0
        %5425 = vmatpush1.msra.mxu0 0.0
        %5426 = vmatprep.subr.mxu0 0.0
        %5427 = vmatpush1.msra.mxu0 0.0
        %5428 = vmatprep.subr.mxu0 0.0
        %5429 = vmatpush1.msra.mxu0 0.0
        %5430 = vmatprep.subr.mxu0 0.0
        %5431 = vmatpush1.msra.mxu0 0.0
        %5432 = vmatprep.subr.mxu0 0.0
        %5433 = vmatpush1.msra.mxu0 0.0
        %5434 = vmatprep.subr.mxu0 0.0
        %5435 = vmatpush1.msra.mxu0 0.0
        %5436 = vmatprep.subr.mxu0 0.0
        %5437 = vmatpush1.msra.mxu0 0.0
        %5438 = vmatprep.subr.mxu0 0.0
        %5439 = vmatpush1.msra.mxu0 0.0
        %5440 = vmatprep.subr.mxu0 0.0
        %5441 = vmatpush1.msra.mxu0 0.0
        %5442 = vmatprep.subr.mxu0 0.0
        %5443 = vmatpush1.msra.mxu0 0.0
        %5444 = vmatprep.subr.mxu0 0.0
        %5445 = vmatpush1.msra.mxu0 0.0
        %5446 = vmatprep.subr.mxu0 0.0
        %5447 = vmatpush1.msra.mxu0 0.0
        %5448 = vmatprep.subr.mxu0 0.0
        %5449 = vmatpush1.msra.mxu0 0.0
        %5450 = vmatprep.subr.mxu0 0.0
        %5451 = vmatpush1.msra.mxu0 0.0
        %5452 = vmatprep.subr.mxu0 0.0
        %5453 = vmatpush1.msra.mxu0 0.0
        %5454 = vmatprep.subr.mxu0 0.0
        %5455 = vmatpush1.msra.mxu0 0.0
        %5456 = vmatprep.subr.mxu0 0.0
        %5457 = vmatpush1.msra.mxu0 0.0
        %5458 = vmatprep.subr.mxu0 0.0
        %5459 = vmatpush1.msra.mxu0 0.0
        %5460 = vmatprep.subr.mxu0 0.0
        %5461 = vmatpush1.msra.mxu0 0.0
        %5462 = vmatprep.mubr.f32.mxu0 0.0
        %5463 = vmatmul.mubr.f32.gmra.mrb[0].mxu0 %v5393
        %v5464 = vpop.f32.mrb[0].mxu0
        %v5465 = vadd.f32 %v5391, %v5464
        %v5466 = vpop.f32.mrb[0].mxu0
        %5467 = vdwg.mxu0
        %v5468 = vxor.u32 %v5465, 2147483648
        %v5469 = vmul.f32 %v5468, 1.442695
        %v5470 = vpow.pop %v5469
        %v5471 = vadd.f32 %v5470, 1.0
        %v5472 = vrcp.pop %v5471
        %v5473 = vmul.f32 1.0, %v5472
        %vm5474 = vcmask 0
        %5475 = vst.msk [vmem:[%s1801] sm:$0x1] %vm5474, %v5473
        %p5476 = scmp.lt.s32.totalorder %s124, 1
        %s5477 = scalar_select %p5476, %s124, 1
        %s5478 = scalar_lea.vmem %s95, %s5477
        // Predicated region
        $region329: #{_lambda_.1} parent=207 // pred_check
          %p5479 = pneg %p1134
        $region330: #{_lambda_.1} parent=207 // pred_check_branch
          %5481 = sbr.rel (%p5479) target = $region332
        $region331: #{_lambda_.1} parent=207 // pred_region
          _
        $region332: #{_lambda_.1} parent=207 // pred_fallthru
          _
      $region208: #{_lambda_.1} parent=5 // pred_fallthru
        _
      %p5482 = scmp.le.s32.totalorder 2, %s119
      // Predicated region
      $region333: #{_lambda_.1} parent=5 // pred_check
        %p5483 = pneg %p5482
      $region334: #{_lambda_.1} parent=5 // pred_check_branch
        %5485 = sbr.rel (%p5483) target = $region336
      $region335: #{_lambda_.1} parent=5 // pred_region
        %s5486 = ssub.s32 %s119, 2
        // Predicated region
        $region337: #{_lambda_.1} parent=335 // pred_check
          %p5487 = pneg %p1140
        $region338: #{_lambda_.1} parent=335 // pred_check_branch
          %5489 = sbr.rel (%p5487) target = $region340
        $region339: #{_lambda_.1} parent=335 // pred_region
          %p5490 = scmp.lt.s32.totalorder %s125, 1
          %s5491 = scalar_select %p5490, %s125, 1
          %s5492 = scalar_lea.vmem %s95, %s5491
        $region340: #{_lambda_.1} parent=335 // pred_fallthru
          _
      $region336: #{_lambda_.1} parent=5 // pred_fallthru
        _
    $region6: #{_lambda_.1} parent=1 // loop_footer
      %s123 = sadd.s32 1, %s119
    $region7: #{_lambda_.1} parent=1 // loop_footer_branch
      %118 = sbr.rel target = $region3
    $region8: #{_lambda_.1} parent=1 // loop_exit
      _
    %5493 = vsyncpa [#allocation4], 1
    %s5494 = scalar_lea.sflag [#allocation4], 1
    %5495 = vsyncpa %s5494, 1
    %5496 = vsyncpa [#allocation6], 1
    %5497 = vsyncpa [#allocation9], 1
    %5498 = vsyncpa [#allocation12], 1
    %5499 = vsyncpa [#allocation15], 1
    %5500 = vsyncpa [#allocation18], 1
    %5501 = vsyncpa [#allocation21], 1
    %5502 = vsyncpa [#allocation24], 1
    %5503 = vsyncpa [#allocation27], 1
    %5504 = vsyncpa [#allocation30], 1
    %5505 = vsyncpa [#allocation33], 1
    %5506 = vsyncpa [#allocation36], 1
    %5507 = vsyncpa [#allocation39], 1
    %5508 = vsyncpa [#allocation42], 1
    %5509 = vsyncpa [#allocation45], 1
    %5510 = vsyncpa [#allocation48], 1

</llo_original>
